<compile_context>
chip_gen: v7x
topology: tpu7x:2x2x1
jax: 0.10.0
libtpu: 0.0.40
codegen_flags: <defaults>
</compile_context>

<pallas_src>
import numpy as np
import jax
import jax.numpy as jnp
from jax.experimental import pallas as pl
from jax.experimental.pallas import tpu as pltpu

EPS = 1e-5


def _round_up(v, m):
    return (v + m - 1) // m * m


def _conv_out_len(L, stride):
    # Conv1d(k=3, padding=1): stride 1 keeps L, stride 2 gives floor((L-1)/2)+1.
    return L if stride == 1 else (L - 1) // 2 + 1


def block_configs(layers):
    """Mirror of Sequence_disc_michael._make_layer bookkeeping."""
    cfgs = []
    inplanes = 64
    for planes, count in zip((64, 32), layers):
        for b in range(count):
            stride = 2 if b == 0 else 1
            down = (stride != 1) or (inplanes != planes)
            cfgs.append(dict(inplanes=inplanes, planes=planes, stride=stride,
                             down=down))
            inplanes = planes
    return cfgs


def sequence_disc_forward(x, params, *, layers, out_dim=1):
    """Forward pass of Sequence_disc_michael as a single fused Pallas kernel.

    x: (N, n_kps, L) float32.
    Returns (logits (N, out_dim), features (N, 32, L_final)).
    """
    N, n_kps, L0 = x.shape
    cfgs = block_configs(layers)

    # ---- static shape bookkeeping --------------------------------------
    L = L0
    for c in cfgs:
        c["L_in"] = L
        L = _conv_out_len(L, c["stride"])
        c["L_out"] = L
    C2 = cfgs[-1]["planes"]
    L2 = L
    assert params["fc_w"].shape == (out_dim, C2 * L2), (
        "fc expects flattened feature dim == %d" % (C2 * L2))

    # Per-sample padded lengths: last stage rounded to 16 lanes, earlier stages
    # derived so Lp_in = stride * Lp_out (stride-2 -> even-lane selection) and
    # every stage keeps >= 1 trailing zero-pad lane per sample (conv boundaries).
    lp = _round_up(L2 + 1, 16)
    for c in reversed(cfgs):
        c["Lp_out"] = lp
        lp *= c["stride"]
        c["Lp_in"] = lp
    Lp0 = lp
    Lp2 = cfgs[-1]["Lp_out"]

    # Keypoint channels padded to a bf16 sublane-tile multiple (zero channels +
    # zero weight columns -> output unchanged, tap concat stays tile aligned).
    C0 = max(16, _round_up(n_kps, 16))

    # Fold B samples into the lane axis per grid step.  B is capped so every
    # helper matrix stays small and so real batches give >= 2 grid steps.
    B = 16 if N >= 32 else (8 if N >= 8 else N)
    N_pad = _round_up(N, B)
    n_chunks = N_pad // B

    # ---- wrapper-side operand preparation ------------------------------
    x_p = jnp.pad(x.astype(jnp.float32),
                  ((0, N_pad - N), (0, C0 - n_kps), (0, Lp0 - L0)))
    x_fold = jnp.transpose(x_p, (1, 0, 2)).reshape(C0, N_pad * Lp0)

    def wcat(w, cin_pad=None):
        # torch (Cout, Cin, 3) -> concatenated-tap matrix (Cout, 3*Cin),
        # columns ordered [tap(l-1) | tap(l) | tap(l+1)], bf16 for the MXU.
        w = jnp.asarray(w, jnp.float32)
        if cin_pad is not None and cin_pad != w.shape[1]:
            w = jnp.pad(w, ((0, 0), (0, cin_pad - w.shape[1]), (0, 0)))
        cout, cin, _ = w.shape
        return jnp.transpose(w, (0, 2, 1)).reshape(cout, 3 * cin).astype(jnp.bfloat16)

    def gbpack(gamma, beta):
        return jnp.stack([jnp.asarray(gamma, jnp.float32),
                          jnp.asarray(beta, jnp.float32)], axis=1)

    names, arrays = [], []

    def add(name, arr):
        names.append(name)
        arrays.append(arr)

    add("x", x_fold)
    add("stem_w", wcat(params["stem_w"], C0))
    add("stem_gb", gbpack(params["stem_g"], params["stem_b"]))
    for i, (c, blk) in enumerate(zip(cfgs, params["blocks"])):
        if c["down"]:
            # Fuse conv1 + downsample conv into one (2*planes, 3*Cin) matmul.
            add("b%d_w1d" % i,
                jnp.concatenate([wcat(blk["w1"]), wcat(blk["wd"])], axis=0))
            add("b%d_gbd" % i, gbpack(blk["gd"], blk["bd"]))
        else:
            add("b%d_w1" % i, wcat(blk["w1"]))
        add("b%d_gb1" % i, gbpack(blk["g1"], blk["b1"]))
        add("b%d_w2" % i, wcat(blk["w2"]))
        add("b%d_gb2" % i, gbpack(blk["g2"], blk["b2"]))
    wfc = jnp.asarray(params["fc_w"], jnp.float32).reshape(out_dim, C2, L2)
    wfc = jnp.pad(wfc, ((0, 0), (0, 0), (0, Lp2 - L2))).reshape(out_dim * C2, Lp2)
    add("fc_w", wfc)

    # Static 0/1 helper matrices, built once on the host (numpy) and passed as
    # grid-invariant operands — nothing is rebuilt inside the grid-loop body.
    seg_keys = {(Lp0, L0)} | {(c["Lp_out"], c["L_out"]) for c in cfgs}
    grp_keys = ({(4, 64)} | {(4, c["planes"]) for c in cfgs}
                | {(16, c["planes"]) for c in cfgs if c["down"]})
    dec_keys = {(c["Lp_in"], c["Lp_out"]) for c in cfgs if c["stride"] == 2}

    for (Lp, Lv) in sorted(seg_keys):
        NL = B * Lp
        P = np.zeros((NL, B), np.float32)          # valid lane -> sample
        for n in range(B):
            P[n * Lp:n * Lp + Lv, n] = 1.0
        add("P_%d_%d" % (Lp, Lv), jnp.asarray(P))
        add("PT_%d_%d" % (Lp, Lv), jnp.asarray(P.T.copy()))
    for (G, C) in sorted(grp_keys):
        cg = C // G
        M = np.zeros((G, C), np.float32)           # channel -> group
        for g in range(G):
            M[g, g * cg:(g + 1) * cg] = 1.0
        Ms = np.zeros((2 * G, 2 * C), np.float32)  # block-diag for [h; h*h]
        Ms[:G, :C] = M
        Ms[G:, C:] = M
        add("Ms_%d_%d" % (G, C), jnp.asarray(Ms))
        add("MT_%d_%d" % (G, C), jnp.asarray(M.T.copy()))
    for (Lpi, Lpo) in sorted(dec_keys):
        NLi, NLo = B * Lpi, B * Lpo
        D = np.zeros((NLi, NLo), np.float32)       # even-lane selection
        D[2 * np.arange(NLo), np.arange(NLo)] = 1.0
        add("D_%d_%d" % (Lpi, Lpo), jnp.asarray(D, dtype=jnp.bfloat16))
    Pfc = np.zeros((B * Lp2, 128), np.float32)     # valid lane -> logits lane
    for n in range(B):
        Pfc[n * Lp2:n * Lp2 + L2, n] = 1.0
    add("Pfc", jnp.asarray(Pfc))

    in_specs = []
    for nm, a in zip(names, arrays):
        if nm == "x":
            in_specs.append(pl.BlockSpec((C0, B * Lp0), lambda i: (0, i)))
        else:
            in_specs.append(pl.BlockSpec(a.shape, lambda i, _z=(0,) * a.ndim: _z))

    num_in = len(arrays)
    name_idx = {nm: k for k, nm in enumerate(names)}

    # ---- kernel ---------------------------------------------------------
    def kernel(*args):
        in_refs = args[:num_in]
        logits_ref = args[num_in]
        feat_ref = args[num_in + 1]
        R = {nm: in_refs[k] for nm, k in name_idx.items()}

        def conv(h, w_ref):
            # Conv1d(k=3, p=1, no bias) as one deep bf16 MXU matmul.  Per-sample
            # trailing zero pad lanes make the roll wrap-around exact (no masks).
            hb = h.astype(jnp.bfloat16)
            hm = jnp.roll(hb, 1, axis=1)    # h[:, l-1]
            hp = jnp.roll(hb, -1, axis=1)   # h[:, l+1]
            hcat = jnp.concatenate([hm, hb, hp], axis=0)
            return jnp.dot(w_ref[...], hcat, preferred_element_type=jnp.float32)

        def decimate(acc, d_ref):
            # Stride-2: even-lane selection (0/1 matrix, exact in bf16), applied
            # after the conv matmul so it acts on Cout rows only.
            return jnp.dot(acc.astype(jnp.bfloat16), d_ref[...],
                           preferred_element_type=jnp.float32)

        def group_norm(h, G, C, Lp, Lv, gb_ref):
            # Per-(sample, group) GroupNorm with fused stats ([h; h*h] stacked)
            # and fused scale/shift epilogue.  PT only covers valid lanes, so the
            # epilogue also re-zeroes every per-sample pad lane.
            inv_n = 1.0 / float((C // G) * Lv)
            Ms = R["Ms_%d_%d" % (G, C)][...]
            MT = R["MT_%d_%d" % (G, C)][...]
            P = R["P_%d_%d" % (Lp, Lv)][...]
            PT = R["PT_%d_%d" % (Lp, Lv)][...]
            hh = jnp.concatenate([h, h * h], axis=0)                       # (2C, NL)
            s = jnp.dot(jnp.dot(Ms, hh, preferred_element_type=jnp.float32), P,
                        preferred_element_type=jnp.float32)                # (2G, B)
            mean = s[:G] * inv_n
            var = jnp.maximum(s[G:] * inv_n - mean * mean, 0.0)            # clamp
            rstd = jax.lax.rsqrt(var + EPS)                                # EUP
            gamma = gb_ref[:, 0:1]
            beta = gb_ref[:, 1:2]
            scale_cb = jnp.dot(MT, rstd, preferred_element_type=jnp.float32) * gamma
            shift_cb = beta - jnp.dot(MT, mean,
                                      preferred_element_type=jnp.float32) * scale_cb
            scale = jnp.dot(scale_cb, PT, preferred_element_type=jnp.float32)
            shift = jnp.dot(shift_cb, PT, preferred_element_type=jnp.float32)
            return h * scale + shift                                       # 2 VPU passes

        h = R["x"][...]                                                    # (C0, B*Lp0)

        # Stem: conv -> GN(4, 64) -> ReLU.
        h = jnp.maximum(group_norm(conv(h, R["stem_w"]), 4, 64, Lp0, L0,
                                   R["stem_gb"]), 0.0)

        # Residual blocks.
        for i, c in enumerate(cfgs):
            planes, Lpo, Lvo = c["planes"], c["Lp_out"], c["L_out"]
            if c["down"]:
                acc = conv(h, R["b%d_w1d" % i])          # conv1 & downsample fused
                if c["stride"] == 2:
                    acc = decimate(acc, R["D_%d_%d" % (c["Lp_in"], Lpo)])
                o = acc[:planes]
                res = group_norm(acc[planes:], 16, planes, Lpo, Lvo,
                                 R["b%d_gbd" % i])
            else:
                o = conv(h, R["b%d_w1" % i])
                res = h
            o = jnp.maximum(group_norm(o, 4, planes, Lpo, Lvo,
                                       R["b%d_gb1" % i]), 0.0)
            o = group_norm(conv(o, R["b%d_w2" % i]), 4, planes, Lpo, Lvo,
                           R["b%d_gb2" % i])
            h = jnp.maximum(o + res, 0.0)

        # Feature-map output (second return value of the torch forward).
        feat_ref[...] = h                                                  # (C2, B*Lp2)

        # fc (Linear, no bias) on the flattened per-sample features.  The weight
        # is passed once and tiled in-kernel; pad lanes of h and of the weight
        # are zero, so including them in the sum is exact.
        wfc_all = R["fc_w"][...]                                           # (out_dim*C2, Lp2)
        Pfc_v = R["Pfc"][...]                                              # (B*Lp2, 128)
        rows = []
        for d in range(out_dim):
            wd = wfc_all[d * C2:(d + 1) * C2]                              # (C2, Lp2)
            wrep = jnp.concatenate([wd] * B, axis=1) if B > 1 else wd      # (C2, B*Lp2)
            v = jnp.sum(h * wrep, axis=0, keepdims=True)                   # (1, B*Lp2)
            rows.append(jnp.dot(v, Pfc_v, preferred_element_type=jnp.float32))
        logits_ref[...] = rows[0] if out_dim == 1 else jnp.concatenate(rows, axis=0)

    out_shape = (
        jax.ShapeDtypeStruct((n_chunks, out_dim, 128), jnp.float32),       # lane-dense
        jax.ShapeDtypeStruct((C2, N_pad * Lp2), jnp.float32),
    )
    out_specs = (
        pl.BlockSpec((pl.Squeezed(), out_dim, 128), lambda i: (i, 0, 0)),
        pl.BlockSpec((C2, B * Lp2), lambda i: (0, i)),
    )

    logits_pad, feat_fold = pl.pallas_call(
        kernel,
        out_shape=out_shape,
        grid_spec=pltpu.PrefetchScalarGridSpec(
            num_scalar_prefetch=0,
            grid=(n_chunks,),
            in_specs=in_specs,
            out_specs=out_specs,
        ),
        compiler_params=pltpu.CompilerParams(dimension_semantics=("parallel",)),
    )(*arrays)

    logits = logits_pad[:, :, :B].transpose(0, 2, 1).reshape(N_pad, out_dim)[:N]
    feats = feat_fold.reshape(C2, N_pad, Lp2)[:, :N, :L2].transpose(1, 0, 2)
    return logits, feats


def init_params(key, layers, n_kps, out_dim, linear_dim):
    """Deterministic parameters mirroring the torch module structure."""
    cfgs = block_configs(layers)
    kit = iter(jax.random.split(key, 12 * (len(cfgs) + 2)))

    def conv_w(cout, cin):
        # xavier_normal_ for Conv1d: std = sqrt(2 / (3*(cin + cout))).
        std = (2.0 / (3.0 * (cin + cout))) ** 0.5
        return std * jax.random.normal(next(kit), (cout, cin, 3), jnp.float32)

    def gn_params(c):
        g = 1.0 + 0.1 * jax.random.normal(next(kit), (c,), jnp.float32)
        b = 0.1 * jax.random.normal(next(kit), (c,), jnp.float32)
        return g, b

    params = {"stem_w": conv_w(64, n_kps)}
    params["stem_g"], params["stem_b"] = gn_params(64)
    blocks = []
    for c in cfgs:
        blk = {"w1": conv_w(c["planes"], c["inplanes"])}
        blk["g1"], blk["b1"] = gn_params(c["planes"])
        blk["w2"] = conv_w(c["planes"], c["planes"])
        blk["g2"], blk["b2"] = gn_params(c["planes"])
        if c["down"]:
            blk["wd"] = conv_w(c["planes"], c["inplanes"])
            blk["gd"], blk["bd"] = gn_params(c["planes"])
        blocks.append(blk)
    params["blocks"] = blocks
    params["fc_w"] = (jax.random.normal(next(kit), (out_dim, linear_dim), jnp.float32)
                      / (linear_dim ** 0.5))
    return params


def ref_forward(x, params, *, layers, out_dim=1):
    """Pure-JAX reference matching the PyTorch forward semantics (f32)."""
    del out_dim
    cfgs = block_configs(layers)

    def conv(y, w, stride):
        return jax.lax.conv_general_dilated(
            y, w, window_strides=(stride,), padding=((1, 1),),
            dimension_numbers=("NCH", "OIH", "NCH"))

    def gn(y, gamma, beta, groups):
        n, c, l = y.shape
        g = y.reshape(n, groups, (c // groups) * l)
        mean = g.mean(axis=2, keepdims=True)
        var = g.var(axis=2, keepdims=True)
        g = (g - mean) * jax.lax.rsqrt(var + EPS)
        return g.reshape(n, c, l) * gamma[None, :, None] + beta[None, :, None]

    y = jax.nn.relu(gn(conv(x, params["stem_w"], 1),
                       params["stem_g"], params["stem_b"], 4))
    for c, blk in zip(cfgs, params["blocks"]):
        res = y
        o = jax.nn.relu(gn(conv(y, blk["w1"], c["stride"]), blk["g1"], blk["b1"], 4))
        o = gn(conv(o, blk["w2"], 1), blk["g2"], blk["b2"], 4)
        if c["down"]:
            res = gn(conv(y, blk["wd"], c["stride"]), blk["gd"], blk["bd"], 16)
        y = jax.nn.relu(o + res)
    logits = y.reshape(y.shape[0], -1) @ params["fc_w"].T
    return logits, y


if __name__ == "__main__":
    # Smallest config consistent with the module: layers=[1, 1], 17 keypoints,
    # sequence length 50 -> 25 -> 13 (matches the hardcoded linear_dim = 13*32).
    layers = [1, 1]
    n_kps = 17
    out_dim = 1
    L_in = 50
    L_final = _conv_out_len(_conv_out_len(L_in, 2), 2)
    linear_dim = 32 * L_final
    assert linear_dim == 13 * 32

    key = jax.random.PRNGKey(0)
    kp, kx1, kx2 = jax.random.split(key, 3)
    params = init_params(kp, layers, n_kps, out_dim, linear_dim)

    # N=2 exercises the single-chunk path; N=12 exercises real chunking
    # (B=8, batch zero-padded to 16, grid of 2 "parallel" steps).
    for N, kx in ((2, kx1), (12, kx2)):
        x = jax.random.normal(kx, (N, n_kps, L_in), jnp.float32)
        logits, feats = sequence_disc_forward(x, params, layers=layers,
                                              out_dim=out_dim)
        logits, feats = jax.block_until_ready((logits, feats))

        ref_logits, ref_feats = ref_forward(x, params, layers=layers,
                                            out_dim=out_dim)
        assert logits.shape == (N, out_dim) and feats.shape == (N, 32, L_final)
        # bf16 MXU operands with f32 accumulation -> bf16-level tolerance.
        assert jnp.allclose(feats, ref_feats, rtol=5e-2, atol=5e-2), \
            "features mismatch (N=%d)" % N
        assert jnp.allclose(logits, ref_logits, rtol=5e-2, atol=5e-2), \
            "logits mismatch (N=%d)" % N

    print("KERNEL_OK")
</pallas_src>

<mosaic_0001>
module attributes {stable_mosaic.version = 11 : i64} {
  func.func @kernel(%arg0: i32, %arg1: memref<32x128xf32, #tpu.memory_space<vmem>>, %arg2: memref<64x96xbf16, #tpu.memory_space<vmem>>, %arg3: memref<64x2xf32, #tpu.memory_space<vmem>>, %arg4: memref<128x192xbf16, #tpu.memory_space<vmem>>, %arg5: memref<64x2xf32, #tpu.memory_space<vmem>>, %arg6: memref<64x2xf32, #tpu.memory_space<vmem>>, %arg7: memref<64x192xbf16, #tpu.memory_space<vmem>>, %arg8: memref<64x2xf32, #tpu.memory_space<vmem>>, %arg9: memref<64x192xbf16, #tpu.memory_space<vmem>>, %arg10: memref<32x2xf32, #tpu.memory_space<vmem>>, %arg11: memref<32x2xf32, #tpu.memory_space<vmem>>, %arg12: memref<32x96xbf16, #tpu.memory_space<vmem>>, %arg13: memref<32x2xf32, #tpu.memory_space<vmem>>, %arg14: memref<32x16xf32, #tpu.memory_space<vmem>>, %arg15: memref<32x2xf32, #tpu.memory_space<vmem>>, %arg16: memref<2x32xf32, #tpu.memory_space<vmem>>, %arg17: memref<64x2xf32, #tpu.memory_space<vmem>>, %arg18: memref<2x64xf32, #tpu.memory_space<vmem>>, %arg19: memref<128x2xf32, #tpu.memory_space<vmem>>, %arg20: memref<2x128xf32, #tpu.memory_space<vmem>>, %arg21: memref<8x64xf32, #tpu.memory_space<vmem>>, %arg22: memref<32x4xf32, #tpu.memory_space<vmem>>, %arg23: memref<8x128xf32, #tpu.memory_space<vmem>>, %arg24: memref<64x4xf32, #tpu.memory_space<vmem>>, %arg25: memref<32x64xf32, #tpu.memory_space<vmem>>, %arg26: memref<32x16xf32, #tpu.memory_space<vmem>>, %arg27: memref<32x128xf32, #tpu.memory_space<vmem>>, %arg28: memref<64x16xf32, #tpu.memory_space<vmem>>, %arg29: memref<64x32xbf16, #tpu.memory_space<vmem>>, %arg30: memref<128x64xbf16, #tpu.memory_space<vmem>>, %arg31: memref<32x128xf32, #tpu.memory_space<vmem>>, %arg32: memref<1x1x128xf32, #tpu.memory_space<vmem>>, %arg33: memref<32x32xf32, #tpu.memory_space<vmem>>) attributes {dimension_semantics = [#tpu.dimension_semantics<parallel>], iteration_bounds = array<i64: 1>, scalar_prefetch = 0 : i64, scratch_operands = 0 : i64, tpu.core_type = #tpu.core_type<tc>, window_params = [{transform_indices = @transform_0, window_bounds = array<i64: 32, 128>}, {pipeline_mode = #tpu.pipeline_mode<synchronous>, transform_indices = @transform_1, window_bounds = array<i64: 64, 96>}, {pipeline_mode = #tpu.pipeline_mode<synchronous>, transform_indices = @transform_2, window_bounds = array<i64: 64, 2>}, {pipeline_mode = #tpu.pipeline_mode<synchronous>, transform_indices = @transform_3, window_bounds = array<i64: 128, 192>}, {pipeline_mode = #tpu.pipeline_mode<synchronous>, transform_indices = @transform_4, window_bounds = array<i64: 64, 2>}, {pipeline_mode = #tpu.pipeline_mode<synchronous>, transform_indices = @transform_5, window_bounds = array<i64: 64, 2>}, {pipeline_mode = #tpu.pipeline_mode<synchronous>, transform_indices = @transform_6, window_bounds = array<i64: 64, 192>}, {pipeline_mode = #tpu.pipeline_mode<synchronous>, transform_indices = @transform_7, window_bounds = array<i64: 64, 2>}, {pipeline_mode = #tpu.pipeline_mode<synchronous>, transform_indices = @transform_8, window_bounds = array<i64: 64, 192>}, {pipeline_mode = #tpu.pipeline_mode<synchronous>, transform_indices = @transform_9, window_bounds = array<i64: 32, 2>}, {pipeline_mode = #tpu.pipeline_mode<synchronous>, transform_indices = @transform_10, window_bounds = array<i64: 32, 2>}, {pipeline_mode = #tpu.pipeline_mode<synchronous>, transform_indices = @transform_11, window_bounds = array<i64: 32, 96>}, {pipeline_mode = #tpu.pipeline_mode<synchronous>, transform_indices = @transform_12, window_bounds = array<i64: 32, 2>}, {pipeline_mode = #tpu.pipeline_mode<synchronous>, transform_indices = @transform_13, window_bounds = array<i64: 32, 16>}, {pipeline_mode = #tpu.pipeline_mode<synchronous>, transform_indices = @transform_14, window_bounds = array<i64: 32, 2>}, {pipeline_mode = #tpu.pipeline_mode<synchronous>, transform_indices = @transform_15, window_bounds = array<i64: 2, 32>}, {pipeline_mode = #tpu.pipeline_mode<synchronous>, transform_indices = @transform_16, window_bounds = array<i64: 64, 2>}, {pipeline_mode = #tpu.pipeline_mode<synchronous>, transform_indices = @transform_17, window_bounds = array<i64: 2, 64>}, {pipeline_mode = #tpu.pipeline_mode<synchronous>, transform_indices = @transform_18, window_bounds = array<i64: 128, 2>}, {pipeline_mode = #tpu.pipeline_mode<synchronous>, transform_indices = @transform_19, window_bounds = array<i64: 2, 128>}, {pipeline_mode = #tpu.pipeline_mode<synchronous>, transform_indices = @transform_20, window_bounds = array<i64: 8, 64>}, {pipeline_mode = #tpu.pipeline_mode<synchronous>, transform_indices = @transform_21, window_bounds = array<i64: 32, 4>}, {pipeline_mode = #tpu.pipeline_mode<synchronous>, transform_indices = @transform_22, window_bounds = array<i64: 8, 128>}, {pipeline_mode = #tpu.pipeline_mode<synchronous>, transform_indices = @transform_23, window_bounds = array<i64: 64, 4>}, {pipeline_mode = #tpu.pipeline_mode<synchronous>, transform_indices = @transform_24, window_bounds = array<i64: 32, 64>}, {pipeline_mode = #tpu.pipeline_mode<synchronous>, transform_indices = @transform_25, window_bounds = array<i64: 32, 16>}, {pipeline_mode = #tpu.pipeline_mode<synchronous>, transform_indices = @transform_26, window_bounds = array<i64: 32, 128>}, {pipeline_mode = #tpu.pipeline_mode<synchronous>, transform_indices = @transform_27, window_bounds = array<i64: 64, 16>}, {pipeline_mode = #tpu.pipeline_mode<synchronous>, transform_indices = @transform_28, window_bounds = array<i64: 64, 32>}, {pipeline_mode = #tpu.pipeline_mode<synchronous>, transform_indices = @transform_29, window_bounds = array<i64: 128, 64>}, {pipeline_mode = #tpu.pipeline_mode<synchronous>, transform_indices = @transform_30, window_bounds = array<i64: 32, 128>}, {transform_indices = @transform_31, window_bounds = array<i64: 1, 1, 128>}, {transform_indices = @transform_32, window_bounds = array<i64: 32, 32>}]} {
    %c0 = arith.constant 0 : index
    %c0_0 = arith.constant 0 : index
    %0 = vector.load %arg1[%c0, %c0_0] : memref<32x128xf32, #tpu.memory_space<vmem>>, vector<32x128xf32>
    %1 = arith.truncf %0 : vector<32x128xf32> to vector<32x128xbf16>
    %2 = vector.extract_strided_slice %1 {offsets = [0, 127], sizes = [32, 1], strides = [1, 1]} : vector<32x128xbf16> to vector<32x1xbf16>
    %3 = vector.extract_strided_slice %1 {offsets = [0, 0], sizes = [32, 127], strides = [1, 1]} : vector<32x128xbf16> to vector<32x127xbf16>
    %4 = tpu.concatenate %2, %3 in 1 : vector<32x1xbf16>, vector<32x127xbf16> -> vector<32x128xbf16>
    %5 = vector.extract_strided_slice %1 {offsets = [0, 1], sizes = [32, 127], strides = [1, 1]} : vector<32x128xbf16> to vector<32x127xbf16>
    %6 = vector.extract_strided_slice %1 {offsets = [0, 0], sizes = [32, 1], strides = [1, 1]} : vector<32x128xbf16> to vector<32x1xbf16>
    %7 = tpu.concatenate %5, %6 in 1 : vector<32x127xbf16>, vector<32x1xbf16> -> vector<32x128xbf16>
    %8 = tpu.concatenate %4, %1, %7 in 0 : vector<32x128xbf16>, vector<32x128xbf16>, vector<32x128xbf16> -> vector<96x128xbf16>
    %c0_1 = arith.constant 0 : index
    %c0_2 = arith.constant 0 : index
    %9 = vector.load %arg2[%c0_1, %c0_2] : memref<64x96xbf16, #tpu.memory_space<vmem>>, vector<64x96xbf16>
    %cst = arith.constant dense<0.000000e+00> : vector<64x128xf32>
    %10 = tpu.matmul %9, %8, %cst {dimension_numbers = #tpu.dot_dimension_numbers<[1], [0], [0], [1], [0, 0, 1, 1], [], []>} : vector<64x96xbf16>, vector<96x128xbf16>, vector<64x128xf32> -> vector<64x128xf32>
    %c0_3 = arith.constant 0 : index
    %c0_4 = arith.constant 0 : index
    %11 = vector.load %arg23[%c0_3, %c0_4] : memref<8x128xf32, #tpu.memory_space<vmem>>, vector<8x128xf32>
    %c0_5 = arith.constant 0 : index
    %c0_6 = arith.constant 0 : index
    %12 = vector.load %arg24[%c0_5, %c0_6] : memref<64x4xf32, #tpu.memory_space<vmem>>, vector<64x4xf32>
    %c0_7 = arith.constant 0 : index
    %c0_8 = arith.constant 0 : index
    %13 = vector.load %arg19[%c0_7, %c0_8] : memref<128x2xf32, #tpu.memory_space<vmem>>, vector<128x2xf32>
    %c0_9 = arith.constant 0 : index
    %c0_10 = arith.constant 0 : index
    %14 = vector.load %arg20[%c0_9, %c0_10] : memref<2x128xf32, #tpu.memory_space<vmem>>, vector<2x128xf32>
    %15 = arith.mulf %10, %10 : vector<64x128xf32>
    %16 = tpu.concatenate %10, %15 in 0 : vector<64x128xf32>, vector<64x128xf32> -> vector<128x128xf32>
    %cst_11 = arith.constant dense<0.000000e+00> : vector<8x128xf32>
    %17 = tpu.matmul %11, %16, %cst_11 {dimension_numbers = #tpu.dot_dimension_numbers<[1], [0], [0], [1], [0, 0, 1, 1], [], []>} : vector<8x128xf32>, vector<128x128xf32>, vector<8x128xf32> -> vector<8x128xf32>
    %cst_12 = arith.constant dense<0.000000e+00> : vector<8x2xf32>
    %18 = tpu.matmul %17, %13, %cst_12 {dimension_numbers = #tpu.dot_dimension_numbers<[1], [0], [0], [1], [0, 0, 1, 1], [], []>} : vector<8x128xf32>, vector<128x2xf32>, vector<8x2xf32> -> vector<8x2xf32>
    %19 = vector.extract_strided_slice %18 {offsets = [0, 0], sizes = [4, 2], strides = [1, 1]} : vector<8x2xf32> to vector<4x2xf32>
    %cst_13 = arith.constant 1.250000e-03 : f32
    %20 = vector.broadcast %cst_13 : f32 to vector<4x2xf32>
    %21 = arith.mulf %19, %20 : vector<4x2xf32>
    %22 = vector.extract_strided_slice %18 {offsets = [4, 0], sizes = [4, 2], strides = [1, 1]} : vector<8x2xf32> to vector<4x2xf32>
    %cst_14 = arith.constant 1.250000e-03 : f32
    %23 = vector.broadcast %cst_14 : f32 to vector<4x2xf32>
    %24 = arith.mulf %22, %23 : vector<4x2xf32>
    %25 = arith.mulf %21, %21 : vector<4x2xf32>
    %26 = arith.subf %24, %25 : vector<4x2xf32>
    %cst_15 = arith.constant 0.000000e+00 : f32
    %27 = vector.broadcast %cst_15 : f32 to vector<4x2xf32>
    %28 = arith.maximumf %26, %27 : vector<4x2xf32>
    %cst_16 = arith.constant 9.99999974E-6 : f32
    %29 = vector.broadcast %cst_16 : f32 to vector<4x2xf32>
    %30 = arith.addf %28, %29 : vector<4x2xf32>
    %31 = math.rsqrt %30 : vector<4x2xf32>
    %c0_17 = arith.constant 0 : index
    %c0_18 = arith.constant 0 : index
    %32 = vector.load %arg3[%c0_17, %c0_18] : memref<64x2xf32, #tpu.memory_space<vmem>>, vector<64x1xf32>
    %c0_19 = arith.constant 0 : index
    %c1 = arith.constant 1 : index
    %33 = vector.load %arg3[%c0_19, %c1] : memref<64x2xf32, #tpu.memory_space<vmem>>, vector<64x1xf32>
    %cst_20 = arith.constant dense<0.000000e+00> : vector<64x2xf32>
    %34 = tpu.matmul %12, %31, %cst_20 {dimension_numbers = #tpu.dot_dimension_numbers<[1], [0], [0], [1], [0, 0, 1, 1], [], []>} : vector<64x4xf32>, vector<4x2xf32>, vector<64x2xf32> -> vector<64x2xf32>
    %35 = vector.broadcast %32 : vector<64x1xf32> to vector<64x2xf32>
    %36 = arith.mulf %34, %35 : vector<64x2xf32>
    %cst_21 = arith.constant dense<0.000000e+00> : vector<64x2xf32>
    %37 = tpu.matmul %12, %21, %cst_21 {dimension_numbers = #tpu.dot_dimension_numbers<[1], [0], [0], [1], [0, 0, 1, 1], [], []>} : vector<64x4xf32>, vector<4x2xf32>, vector<64x2xf32> -> vector<64x2xf32>
    %38 = arith.mulf %37, %36 : vector<64x2xf32>
    %39 = vector.broadcast %33 : vector<64x1xf32> to vector<64x2xf32>
    %40 = arith.subf %39, %38 : vector<64x2xf32>
    %cst_22 = arith.constant dense<0.000000e+00> : vector<64x128xf32>
    %41 = tpu.matmul %36, %14, %cst_22 {dimension_numbers = #tpu.dot_dimension_numbers<[1], [0], [0], [1], [0, 0, 1, 1], [], []>} : vector<64x2xf32>, vector<2x128xf32>, vector<64x128xf32> -> vector<64x128xf32>
    %cst_23 = arith.constant dense<0.000000e+00> : vector<64x128xf32>
    %42 = tpu.matmul %40, %14, %cst_23 {dimension_numbers = #tpu.dot_dimension_numbers<[1], [0], [0], [1], [0, 0, 1, 1], [], []>} : vector<64x2xf32>, vector<2x128xf32>, vector<64x128xf32> -> vector<64x128xf32>
    %43 = arith.mulf %10, %41 : vector<64x128xf32>
    %44 = arith.addf %43, %42 : vector<64x128xf32>
    %cst_24 = arith.constant 0.000000e+00 : f32
    %45 = vector.broadcast %cst_24 : f32 to vector<64x128xf32>
    %46 = arith.maximumf %44, %45 : vector<64x128xf32>
    %47 = arith.truncf %46 : vector<64x128xf32> to vector<64x128xbf16>
    %48 = vector.extract_strided_slice %47 {offsets = [0, 127], sizes = [64, 1], strides = [1, 1]} : vector<64x128xbf16> to vector<64x1xbf16>
    %49 = vector.extract_strided_slice %47 {offsets = [0, 0], sizes = [64, 127], strides = [1, 1]} : vector<64x128xbf16> to vector<64x127xbf16>
    %50 = tpu.concatenate %48, %49 in 1 : vector<64x1xbf16>, vector<64x127xbf16> -> vector<64x128xbf16>
    %51 = vector.extract_strided_slice %47 {offsets = [0, 1], sizes = [64, 127], strides = [1, 1]} : vector<64x128xbf16> to vector<64x127xbf16>
    %52 = vector.extract_strided_slice %47 {offsets = [0, 0], sizes = [64, 1], strides = [1, 1]} : vector<64x128xbf16> to vector<64x1xbf16>
    %53 = tpu.concatenate %51, %52 in 1 : vector<64x127xbf16>, vector<64x1xbf16> -> vector<64x128xbf16>
    %54 = tpu.concatenate %50, %47, %53 in 0 : vector<64x128xbf16>, vector<64x128xbf16>, vector<64x128xbf16> -> vector<192x128xbf16>
    %c0_25 = arith.constant 0 : index
    %c0_26 = arith.constant 0 : index
    %55 = vector.load %arg4[%c0_25, %c0_26] : memref<128x192xbf16, #tpu.memory_space<vmem>>, vector<128x192xbf16>
    %cst_27 = arith.constant dense<0.000000e+00> : vector<128x128xf32>
    %56 = tpu.matmul %55, %54, %cst_27 {dimension_numbers = #tpu.dot_dimension_numbers<[1], [0], [0], [1], [0, 0, 1, 1], [], []>} : vector<128x192xbf16>, vector<192x128xbf16>, vector<128x128xf32> -> vector<128x128xf32>
    %57 = arith.truncf %56 : vector<128x128xf32> to vector<128x128xbf16>
    %c0_28 = arith.constant 0 : index
    %c0_29 = arith.constant 0 : index
    %58 = vector.load %arg30[%c0_28, %c0_29] : memref<128x64xbf16, #tpu.memory_space<vmem>>, vector<128x64xbf16>
    %cst_30 = arith.constant dense<0.000000e+00> : vector<128x64xf32>
    %59 = tpu.matmul %57, %58, %cst_30 {dimension_numbers = #tpu.dot_dimension_numbers<[1], [0], [0], [1], [0, 0, 1, 1], [], []>} : vector<128x128xbf16>, vector<128x64xbf16>, vector<128x64xf32> -> vector<128x64xf32>
    %60 = vector.extract_strided_slice %59 {offsets = [0, 0], sizes = [64, 64], strides = [1, 1]} : vector<128x64xf32> to vector<64x64xf32>
    %61 = vector.extract_strided_slice %59 {offsets = [64, 0], sizes = [64, 64], strides = [1, 1]} : vector<128x64xf32> to vector<64x64xf32>
    %c0_31 = arith.constant 0 : index
    %c0_32 = arith.constant 0 : index
    %62 = vector.load %arg27[%c0_31, %c0_32] : memref<32x128xf32, #tpu.memory_space<vmem>>, vector<32x128xf32>
    %c0_33 = arith.constant 0 : index
    %c0_34 = arith.constant 0 : index
    %63 = vector.load %arg28[%c0_33, %c0_34] : memref<64x16xf32, #tpu.memory_space<vmem>>, vector<64x16xf32>
    %c0_35 = arith.constant 0 : index
    %c0_36 = arith.constant 0 : index
    %64 = vector.load %arg17[%c0_35, %c0_36] : memref<64x2xf32, #tpu.memory_space<vmem>>, vector<64x2xf32>
    %c0_37 = arith.constant 0 : index
    %c0_38 = arith.constant 0 : index
    %65 = vector.load %arg18[%c0_37, %c0_38] : memref<2x64xf32, #tpu.memory_space<vmem>>, vector<2x64xf32>
    %66 = arith.mulf %61, %61 : vector<64x64xf32>
    %67 = tpu.concatenate %61, %66 in 0 : vector<64x64xf32>, vector<64x64xf32> -> vector<128x64xf32>
    %cst_39 = arith.constant dense<0.000000e+00> : vector<32x64xf32>
    %68 = tpu.matmul %62, %67, %cst_39 {dimension_numbers = #tpu.dot_dimension_numbers<[1], [0], [0], [1], [0, 0, 1, 1], [], []>} : vector<32x128xf32>, vector<128x64xf32>, vector<32x64xf32> -> vector<32x64xf32>
    %cst_40 = arith.constant dense<0.000000e+00> : vector<32x2xf32>
    %69 = tpu.matmul %68, %64, %cst_40 {dimension_numbers = #tpu.dot_dimension_numbers<[1], [0], [0], [1], [0, 0, 1, 1], [], []>} : vector<32x64xf32>, vector<64x2xf32>, vector<32x2xf32> -> vector<32x2xf32>
    %70 = vector.extract_strided_slice %69 {offsets = [0, 0], sizes = [16, 2], strides = [1, 1]} : vector<32x2xf32> to vector<16x2xf32>
    %cst_41 = arith.constant 0.00999999977 : f32
    %71 = vector.broadcast %cst_41 : f32 to vector<16x2xf32>
    %72 = arith.mulf %70, %71 : vector<16x2xf32>
    %73 = vector.extract_strided_slice %69 {offsets = [16, 0], sizes = [16, 2], strides = [1, 1]} : vector<32x2xf32> to vector<16x2xf32>
    %cst_42 = arith.constant 0.00999999977 : f32
    %74 = vector.broadcast %cst_42 : f32 to vector<16x2xf32>
    %75 = arith.mulf %73, %74 : vector<16x2xf32>
    %76 = arith.mulf %72, %72 : vector<16x2xf32>
    %77 = arith.subf %75, %76 : vector<16x2xf32>
    %cst_43 = arith.constant 0.000000e+00 : f32
    %78 = vector.broadcast %cst_43 : f32 to vector<16x2xf32>
    %79 = arith.maximumf %77, %78 : vector<16x2xf32>
    %cst_44 = arith.constant 9.99999974E-6 : f32
    %80 = vector.broadcast %cst_44 : f32 to vector<16x2xf32>
    %81 = arith.addf %79, %80 : vector<16x2xf32>
    %82 = math.rsqrt %81 : vector<16x2xf32>
    %c0_45 = arith.constant 0 : index
    %c0_46 = arith.constant 0 : index
    %83 = vector.load %arg5[%c0_45, %c0_46] : memref<64x2xf32, #tpu.memory_space<vmem>>, vector<64x1xf32>
    %c0_47 = arith.constant 0 : index
    %c1_48 = arith.constant 1 : index
    %84 = vector.load %arg5[%c0_47, %c1_48] : memref<64x2xf32, #tpu.memory_space<vmem>>, vector<64x1xf32>
    %cst_49 = arith.constant dense<0.000000e+00> : vector<64x2xf32>
    %85 = tpu.matmul %63, %82, %cst_49 {dimension_numbers = #tpu.dot_dimension_numbers<[1], [0], [0], [1], [0, 0, 1, 1], [], []>} : vector<64x16xf32>, vector<16x2xf32>, vector<64x2xf32> -> vector<64x2xf32>
    %86 = vector.broadcast %83 : vector<64x1xf32> to vector<64x2xf32>
    %87 = arith.mulf %85, %86 : vector<64x2xf32>
    %cst_50 = arith.constant dense<0.000000e+00> : vector<64x2xf32>
    %88 = tpu.matmul %63, %72, %cst_50 {dimension_numbers = #tpu.dot_dimension_numbers<[1], [0], [0], [1], [0, 0, 1, 1], [], []>} : vector<64x16xf32>, vector<16x2xf32>, vector<64x2xf32> -> vector<64x2xf32>
    %89 = arith.mulf %88, %87 : vector<64x2xf32>
    %90 = vector.broadcast %84 : vector<64x1xf32> to vector<64x2xf32>
    %91 = arith.subf %90, %89 : vector<64x2xf32>
    %cst_51 = arith.constant dense<0.000000e+00> : vector<64x64xf32>
    %92 = tpu.matmul %87, %65, %cst_51 {dimension_numbers = #tpu.dot_dimension_numbers<[1], [0], [0], [1], [0, 0, 1, 1], [], []>} : vector<64x2xf32>, vector<2x64xf32>, vector<64x64xf32> -> vector<64x64xf32>
    %cst_52 = arith.constant dense<0.000000e+00> : vector<64x64xf32>
    %93 = tpu.matmul %91, %65, %cst_52 {dimension_numbers = #tpu.dot_dimension_numbers<[1], [0], [0], [1], [0, 0, 1, 1], [], []>} : vector<64x2xf32>, vector<2x64xf32>, vector<64x64xf32> -> vector<64x64xf32>
    %94 = arith.mulf %61, %92 : vector<64x64xf32>
    %95 = arith.addf %94, %93 : vector<64x64xf32>
    %c0_53 = arith.constant 0 : index
    %c0_54 = arith.constant 0 : index
    %96 = vector.load %arg23[%c0_53, %c0_54] : memref<8x128xf32, #tpu.memory_space<vmem>>, vector<8x128xf32>
    %c0_55 = arith.constant 0 : index
    %c0_56 = arith.constant 0 : index
    %97 = vector.load %arg24[%c0_55, %c0_56] : memref<64x4xf32, #tpu.memory_space<vmem>>, vector<64x4xf32>
    %c0_57 = arith.constant 0 : index
    %c0_58 = arith.constant 0 : index
    %98 = vector.load %arg17[%c0_57, %c0_58] : memref<64x2xf32, #tpu.memory_space<vmem>>, vector<64x2xf32>
    %c0_59 = arith.constant 0 : index
    %c0_60 = arith.constant 0 : index
    %99 = vector.load %arg18[%c0_59, %c0_60] : memref<2x64xf32, #tpu.memory_space<vmem>>, vector<2x64xf32>
    %100 = arith.mulf %60, %60 : vector<64x64xf32>
    %101 = tpu.concatenate %60, %100 in 0 : vector<64x64xf32>, vector<64x64xf32> -> vector<128x64xf32>
    %cst_61 = arith.constant dense<0.000000e+00> : vector<8x64xf32>
    %102 = tpu.matmul %96, %101, %cst_61 {dimension_numbers = #tpu.dot_dimension_numbers<[1], [0], [0], [1], [0, 0, 1, 1], [], []>} : vector<8x128xf32>, vector<128x64xf32>, vector<8x64xf32> -> vector<8x64xf32>
    %cst_62 = arith.constant dense<0.000000e+00> : vector<8x2xf32>
    %103 = tpu.matmul %102, %98, %cst_62 {dimension_numbers = #tpu.dot_dimension_numbers<[1], [0], [0], [1], [0, 0, 1, 1], [], []>} : vector<8x64xf32>, vector<64x2xf32>, vector<8x2xf32> -> vector<8x2xf32>
    %104 = vector.extract_strided_slice %103 {offsets = [0, 0], sizes = [4, 2], strides = [1, 1]} : vector<8x2xf32> to vector<4x2xf32>
    %cst_63 = arith.constant 2.500000e-03 : f32
    %105 = vector.broadcast %cst_63 : f32 to vector<4x2xf32>
    %106 = arith.mulf %104, %105 : vector<4x2xf32>
    %107 = vector.extract_strided_slice %103 {offsets = [4, 0], sizes = [4, 2], strides = [1, 1]} : vector<8x2xf32> to vector<4x2xf32>
    %cst_64 = arith.constant 2.500000e-03 : f32
    %108 = vector.broadcast %cst_64 : f32 to vector<4x2xf32>
    %109 = arith.mulf %107, %108 : vector<4x2xf32>
    %110 = arith.mulf %106, %106 : vector<4x2xf32>
    %111 = arith.subf %109, %110 : vector<4x2xf32>
    %cst_65 = arith.constant 0.000000e+00 : f32
    %112 = vector.broadcast %cst_65 : f32 to vector<4x2xf32>
    %113 = arith.maximumf %111, %112 : vector<4x2xf32>
    %cst_66 = arith.constant 9.99999974E-6 : f32
    %114 = vector.broadcast %cst_66 : f32 to vector<4x2xf32>
    %115 = arith.addf %113, %114 : vector<4x2xf32>
    %116 = math.rsqrt %115 : vector<4x2xf32>
    %c0_67 = arith.constant 0 : index
    %c0_68 = arith.constant 0 : index
    %117 = vector.load %arg6[%c0_67, %c0_68] : memref<64x2xf32, #tpu.memory_space<vmem>>, vector<64x1xf32>
    %c0_69 = arith.constant 0 : index
    %c1_70 = arith.constant 1 : index
    %118 = vector.load %arg6[%c0_69, %c1_70] : memref<64x2xf32, #tpu.memory_space<vmem>>, vector<64x1xf32>
    %cst_71 = arith.constant dense<0.000000e+00> : vector<64x2xf32>
    %119 = tpu.matmul %97, %116, %cst_71 {dimension_numbers = #tpu.dot_dimension_numbers<[1], [0], [0], [1], [0, 0, 1, 1], [], []>} : vector<64x4xf32>, vector<4x2xf32>, vector<64x2xf32> -> vector<64x2xf32>
    %120 = vector.broadcast %117 : vector<64x1xf32> to vector<64x2xf32>
    %121 = arith.mulf %119, %120 : vector<64x2xf32>
    %cst_72 = arith.constant dense<0.000000e+00> : vector<64x2xf32>
    %122 = tpu.matmul %97, %106, %cst_72 {dimension_numbers = #tpu.dot_dimension_numbers<[1], [0], [0], [1], [0, 0, 1, 1], [], []>} : vector<64x4xf32>, vector<4x2xf32>, vector<64x2xf32> -> vector<64x2xf32>
    %123 = arith.mulf %122, %121 : vector<64x2xf32>
    %124 = vector.broadcast %118 : vector<64x1xf32> to vector<64x2xf32>
    %125 = arith.subf %124, %123 : vector<64x2xf32>
    %cst_73 = arith.constant dense<0.000000e+00> : vector<64x64xf32>
    %126 = tpu.matmul %121, %99, %cst_73 {dimension_numbers = #tpu.dot_dimension_numbers<[1], [0], [0], [1], [0, 0, 1, 1], [], []>} : vector<64x2xf32>, vector<2x64xf32>, vector<64x64xf32> -> vector<64x64xf32>
    %cst_74 = arith.constant dense<0.000000e+00> : vector<64x64xf32>
    %127 = tpu.matmul %125, %99, %cst_74 {dimension_numbers = #tpu.dot_dimension_numbers<[1], [0], [0], [1], [0, 0, 1, 1], [], []>} : vector<64x2xf32>, vector<2x64xf32>, vector<64x64xf32> -> vector<64x64xf32>
    %128 = arith.mulf %60, %126 : vector<64x64xf32>
    %129 = arith.addf %128, %127 : vector<64x64xf32>
    %cst_75 = arith.constant 0.000000e+00 : f32
    %130 = vector.broadcast %cst_75 : f32 to vector<64x64xf32>
    %131 = arith.maximumf %129, %130 : vector<64x64xf32>
    %132 = arith.truncf %131 : vector<64x64xf32> to vector<64x64xbf16>
    %133 = vector.extract_strided_slice %132 {offsets = [0, 63], sizes = [64, 1], strides = [1, 1]} : vector<64x64xbf16> to vector<64x1xbf16>
    %134 = vector.extract_strided_slice %132 {offsets = [0, 0], sizes = [64, 63], strides = [1, 1]} : vector<64x64xbf16> to vector<64x63xbf16>
    %135 = tpu.concatenate %133, %134 in 1 : vector<64x1xbf16>, vector<64x63xbf16> -> vector<64x64xbf16>
    %136 = vector.extract_strided_slice %132 {offsets = [0, 1], sizes = [64, 63], strides = [1, 1]} : vector<64x64xbf16> to vector<64x63xbf16>
    %137 = vector.extract_strided_slice %132 {offsets = [0, 0], sizes = [64, 1], strides = [1, 1]} : vector<64x64xbf16> to vector<64x1xbf16>
    %138 = tpu.concatenate %136, %137 in 1 : vector<64x63xbf16>, vector<64x1xbf16> -> vector<64x64xbf16>
    %139 = tpu.concatenate %135, %132, %138 in 0 : vector<64x64xbf16>, vector<64x64xbf16>, vector<64x64xbf16> -> vector<192x64xbf16>
    %c0_76 = arith.constant 0 : index
    %c0_77 = arith.constant 0 : index
    %140 = vector.load %arg7[%c0_76, %c0_77] : memref<64x192xbf16, #tpu.memory_space<vmem>>, vector<64x192xbf16>
    %cst_78 = arith.constant dense<0.000000e+00> : vector<64x64xf32>
    %141 = tpu.matmul %140, %139, %cst_78 {dimension_numbers = #tpu.dot_dimension_numbers<[1], [0], [0], [1], [0, 0, 1, 1], [], []>} : vector<64x192xbf16>, vector<192x64xbf16>, vector<64x64xf32> -> vector<64x64xf32>
    %c0_79 = arith.constant 0 : index
    %c0_80 = arith.constant 0 : index
    %142 = vector.load %arg23[%c0_79, %c0_80] : memref<8x128xf32, #tpu.memory_space<vmem>>, vector<8x128xf32>
    %c0_81 = arith.constant 0 : index
    %c0_82 = arith.constant 0 : index
    %143 = vector.load %arg24[%c0_81, %c0_82] : memref<64x4xf32, #tpu.memory_space<vmem>>, vector<64x4xf32>
    %c0_83 = arith.constant 0 : index
    %c0_84 = arith.constant 0 : index
    %144 = vector.load %arg17[%c0_83, %c0_84] : memref<64x2xf32, #tpu.memory_space<vmem>>, vector<64x2xf32>
    %c0_85 = arith.constant 0 : index
    %c0_86 = arith.constant 0 : index
    %145 = vector.load %arg18[%c0_85, %c0_86] : memref<2x64xf32, #tpu.memory_space<vmem>>, vector<2x64xf32>
    %146 = arith.mulf %141, %141 : vector<64x64xf32>
    %147 = tpu.concatenate %141, %146 in 0 : vector<64x64xf32>, vector<64x64xf32> -> vector<128x64xf32>
    %cst_87 = arith.constant dense<0.000000e+00> : vector<8x64xf32>
    %148 = tpu.matmul %142, %147, %cst_87 {dimension_numbers = #tpu.dot_dimension_numbers<[1], [0], [0], [1], [0, 0, 1, 1], [], []>} : vector<8x128xf32>, vector<128x64xf32>, vector<8x64xf32> -> vector<8x64xf32>
    %cst_88 = arith.constant dense<0.000000e+00> : vector<8x2xf32>
    %149 = tpu.matmul %148, %144, %cst_88 {dimension_numbers = #tpu.dot_dimension_numbers<[1], [0], [0], [1], [0, 0, 1, 1], [], []>} : vector<8x64xf32>, vector<64x2xf32>, vector<8x2xf32> -> vector<8x2xf32>
    %150 = vector.extract_strided_slice %149 {offsets = [0, 0], sizes = [4, 2], strides = [1, 1]} : vector<8x2xf32> to vector<4x2xf32>
    %cst_89 = arith.constant 2.500000e-03 : f32
    %151 = vector.broadcast %cst_89 : f32 to vector<4x2xf32>
    %152 = arith.mulf %150, %151 : vector<4x2xf32>
    %153 = vector.extract_strided_slice %149 {offsets = [4, 0], sizes = [4, 2], strides = [1, 1]} : vector<8x2xf32> to vector<4x2xf32>
    %cst_90 = arith.constant 2.500000e-03 : f32
    %154 = vector.broadcast %cst_90 : f32 to vector<4x2xf32>
    %155 = arith.mulf %153, %154 : vector<4x2xf32>
    %156 = arith.mulf %152, %152 : vector<4x2xf32>
    %157 = arith.subf %155, %156 : vector<4x2xf32>
    %cst_91 = arith.constant 0.000000e+00 : f32
    %158 = vector.broadcast %cst_91 : f32 to vector<4x2xf32>
    %159 = arith.maximumf %157, %158 : vector<4x2xf32>
    %cst_92 = arith.constant 9.99999974E-6 : f32
    %160 = vector.broadcast %cst_92 : f32 to vector<4x2xf32>
    %161 = arith.addf %159, %160 : vector<4x2xf32>
    %162 = math.rsqrt %161 : vector<4x2xf32>
    %c0_93 = arith.constant 0 : index
    %c0_94 = arith.constant 0 : index
    %163 = vector.load %arg8[%c0_93, %c0_94] : memref<64x2xf32, #tpu.memory_space<vmem>>, vector<64x1xf32>
    %c0_95 = arith.constant 0 : index
    %c1_96 = arith.constant 1 : index
    %164 = vector.load %arg8[%c0_95, %c1_96] : memref<64x2xf32, #tpu.memory_space<vmem>>, vector<64x1xf32>
    %cst_97 = arith.constant dense<0.000000e+00> : vector<64x2xf32>
    %165 = tpu.matmul %143, %162, %cst_97 {dimension_numbers = #tpu.dot_dimension_numbers<[1], [0], [0], [1], [0, 0, 1, 1], [], []>} : vector<64x4xf32>, vector<4x2xf32>, vector<64x2xf32> -> vector<64x2xf32>
    %166 = vector.broadcast %163 : vector<64x1xf32> to vector<64x2xf32>
    %167 = arith.mulf %165, %166 : vector<64x2xf32>
    %cst_98 = arith.constant dense<0.000000e+00> : vector<64x2xf32>
    %168 = tpu.matmul %143, %152, %cst_98 {dimension_numbers = #tpu.dot_dimension_numbers<[1], [0], [0], [1], [0, 0, 1, 1], [], []>} : vector<64x4xf32>, vector<4x2xf32>, vector<64x2xf32> -> vector<64x2xf32>
    %169 = arith.mulf %168, %167 : vector<64x2xf32>
    %170 = vector.broadcast %164 : vector<64x1xf32> to vector<64x2xf32>
    %171 = arith.subf %170, %169 : vector<64x2xf32>
    %cst_99 = arith.constant dense<0.000000e+00> : vector<64x64xf32>
    %172 = tpu.matmul %167, %145, %cst_99 {dimension_numbers = #tpu.dot_dimension_numbers<[1], [0], [0], [1], [0, 0, 1, 1], [], []>} : vector<64x2xf32>, vector<2x64xf32>, vector<64x64xf32> -> vector<64x64xf32>
    %cst_100 = arith.constant dense<0.000000e+00> : vector<64x64xf32>
    %173 = tpu.matmul %171, %145, %cst_100 {dimension_numbers = #tpu.dot_dimension_numbers<[1], [0], [0], [1], [0, 0, 1, 1], [], []>} : vector<64x2xf32>, vector<2x64xf32>, vector<64x64xf32> -> vector<64x64xf32>
    %174 = arith.mulf %141, %172 : vector<64x64xf32>
    %175 = arith.addf %174, %173 : vector<64x64xf32>
    %176 = arith.addf %175, %95 : vector<64x64xf32>
    %cst_101 = arith.constant 0.000000e+00 : f32
    %177 = vector.broadcast %cst_101 : f32 to vector<64x64xf32>
    %178 = arith.maximumf %176, %177 : vector<64x64xf32>
    %179 = arith.truncf %178 : vector<64x64xf32> to vector<64x64xbf16>
    %180 = vector.extract_strided_slice %179 {offsets = [0, 63], sizes = [64, 1], strides = [1, 1]} : vector<64x64xbf16> to vector<64x1xbf16>
    %181 = vector.extract_strided_slice %179 {offsets = [0, 0], sizes = [64, 63], strides = [1, 1]} : vector<64x64xbf16> to vector<64x63xbf16>
    %182 = tpu.concatenate %180, %181 in 1 : vector<64x1xbf16>, vector<64x63xbf16> -> vector<64x64xbf16>
    %183 = vector.extract_strided_slice %179 {offsets = [0, 1], sizes = [64, 63], strides = [1, 1]} : vector<64x64xbf16> to vector<64x63xbf16>
    %184 = vector.extract_strided_slice %179 {offsets = [0, 0], sizes = [64, 1], strides = [1, 1]} : vector<64x64xbf16> to vector<64x1xbf16>
    %185 = tpu.concatenate %183, %184 in 1 : vector<64x63xbf16>, vector<64x1xbf16> -> vector<64x64xbf16>
    %186 = tpu.concatenate %182, %179, %185 in 0 : vector<64x64xbf16>, vector<64x64xbf16>, vector<64x64xbf16> -> vector<192x64xbf16>
    %c0_102 = arith.constant 0 : index
    %c0_103 = arith.constant 0 : index
    %187 = vector.load %arg9[%c0_102, %c0_103] : memref<64x192xbf16, #tpu.memory_space<vmem>>, vector<64x192xbf16>
    %cst_104 = arith.constant dense<0.000000e+00> : vector<64x64xf32>
    %188 = tpu.matmul %187, %186, %cst_104 {dimension_numbers = #tpu.dot_dimension_numbers<[1], [0], [0], [1], [0, 0, 1, 1], [], []>} : vector<64x192xbf16>, vector<192x64xbf16>, vector<64x64xf32> -> vector<64x64xf32>
    %189 = arith.truncf %188 : vector<64x64xf32> to vector<64x64xbf16>
    %c0_105 = arith.constant 0 : index
    %c0_106 = arith.constant 0 : index
    %190 = vector.load %arg29[%c0_105, %c0_106] : memref<64x32xbf16, #tpu.memory_space<vmem>>, vector<64x32xbf16>
    %cst_107 = arith.constant dense<0.000000e+00> : vector<64x32xf32>
    %191 = tpu.matmul %189, %190, %cst_107 {dimension_numbers = #tpu.dot_dimension_numbers<[1], [0], [0], [1], [0, 0, 1, 1], [], []>} : vector<64x64xbf16>, vector<64x32xbf16>, vector<64x32xf32> -> vector<64x32xf32>
    %192 = vector.extract_strided_slice %191 {offsets = [0, 0], sizes = [32, 32], strides = [1, 1]} : vector<64x32xf32> to vector<32x32xf32>
    %193 = vector.extract_strided_slice %191 {offsets = [32, 0], sizes = [32, 32], strides = [1, 1]} : vector<64x32xf32> to vector<32x32xf32>
    %c0_108 = arith.constant 0 : index
    %c0_109 = arith.constant 0 : index
    %194 = vector.load %arg25[%c0_108, %c0_109] : memref<32x64xf32, #tpu.memory_space<vmem>>, vector<32x64xf32>
    %c0_110 = arith.constant 0 : index
    %c0_111 = arith.constant 0 : index
    %195 = vector.load %arg26[%c0_110, %c0_111] : memref<32x16xf32, #tpu.memory_space<vmem>>, vector<32x16xf32>
    %c0_112 = arith.constant 0 : index
    %c0_113 = arith.constant 0 : index
    %196 = vector.load %arg15[%c0_112, %c0_113] : memref<32x2xf32, #tpu.memory_space<vmem>>, vector<32x2xf32>
    %c0_114 = arith.constant 0 : index
    %c0_115 = arith.constant 0 : index
    %197 = vector.load %arg16[%c0_114, %c0_115] : memref<2x32xf32, #tpu.memory_space<vmem>>, vector<2x32xf32>
    %198 = arith.mulf %193, %193 : vector<32x32xf32>
    %199 = tpu.concatenate %193, %198 in 0 : vector<32x32xf32>, vector<32x32xf32> -> vector<64x32xf32>
    %cst_116 = arith.constant dense<0.000000e+00> : vector<32x32xf32>
    %200 = tpu.matmul %194, %199, %cst_116 {dimension_numbers = #tpu.dot_dimension_numbers<[1], [0], [0], [1], [0, 0, 1, 1], [], []>} : vector<32x64xf32>, vector<64x32xf32>, vector<32x32xf32> -> vector<32x32xf32>
    %cst_117 = arith.constant dense<0.000000e+00> : vector<32x2xf32>
    %201 = tpu.matmul %200, %196, %cst_117 {dimension_numbers = #tpu.dot_dimension_numbers<[1], [0], [0], [1], [0, 0, 1, 1], [], []>} : vector<32x32xf32>, vector<32x2xf32>, vector<32x2xf32> -> vector<32x2xf32>
    %202 = vector.extract_strided_slice %201 {offsets = [0, 0], sizes = [16, 2], strides = [1, 1]} : vector<32x2xf32> to vector<16x2xf32>
    %cst_118 = arith.constant 0.0384615399 : f32
    %203 = vector.broadcast %cst_118 : f32 to vector<16x2xf32>
    %204 = arith.mulf %202, %203 : vector<16x2xf32>
    %205 = vector.extract_strided_slice %201 {offsets = [16, 0], sizes = [16, 2], strides = [1, 1]} : vector<32x2xf32> to vector<16x2xf32>
    %cst_119 = arith.constant 0.0384615399 : f32
    %206 = vector.broadcast %cst_119 : f32 to vector<16x2xf32>
    %207 = arith.mulf %205, %206 : vector<16x2xf32>
    %208 = arith.mulf %204, %204 : vector<16x2xf32>
    %209 = arith.subf %207, %208 : vector<16x2xf32>
    %cst_120 = arith.constant 0.000000e+00 : f32
    %210 = vector.broadcast %cst_120 : f32 to vector<16x2xf32>
    %211 = arith.maximumf %209, %210 : vector<16x2xf32>
    %cst_121 = arith.constant 9.99999974E-6 : f32
    %212 = vector.broadcast %cst_121 : f32 to vector<16x2xf32>
    %213 = arith.addf %211, %212 : vector<16x2xf32>
    %214 = math.rsqrt %213 : vector<16x2xf32>
    %c0_122 = arith.constant 0 : index
    %c0_123 = arith.constant 0 : index
    %215 = vector.load %arg10[%c0_122, %c0_123] : memref<32x2xf32, #tpu.memory_space<vmem>>, vector<32x1xf32>
    %c0_124 = arith.constant 0 : index
    %c1_125 = arith.constant 1 : index
    %216 = vector.load %arg10[%c0_124, %c1_125] : memref<32x2xf32, #tpu.memory_space<vmem>>, vector<32x1xf32>
    %cst_126 = arith.constant dense<0.000000e+00> : vector<32x2xf32>
    %217 = tpu.matmul %195, %214, %cst_126 {dimension_numbers = #tpu.dot_dimension_numbers<[1], [0], [0], [1], [0, 0, 1, 1], [], []>} : vector<32x16xf32>, vector<16x2xf32>, vector<32x2xf32> -> vector<32x2xf32>
    %218 = vector.broadcast %215 : vector<32x1xf32> to vector<32x2xf32>
    %219 = arith.mulf %217, %218 : vector<32x2xf32>
    %cst_127 = arith.constant dense<0.000000e+00> : vector<32x2xf32>
    %220 = tpu.matmul %195, %204, %cst_127 {dimension_numbers = #tpu.dot_dimension_numbers<[1], [0], [0], [1], [0, 0, 1, 1], [], []>} : vector<32x16xf32>, vector<16x2xf32>, vector<32x2xf32> -> vector<32x2xf32>
    %221 = arith.mulf %220, %219 : vector<32x2xf32>
    %222 = vector.broadcast %216 : vector<32x1xf32> to vector<32x2xf32>
    %223 = arith.subf %222, %221 : vector<32x2xf32>
    %cst_128 = arith.constant dense<0.000000e+00> : vector<32x32xf32>
    %224 = tpu.matmul %219, %197, %cst_128 {dimension_numbers = #tpu.dot_dimension_numbers<[1], [0], [0], [1], [0, 0, 1, 1], [], []>} : vector<32x2xf32>, vector<2x32xf32>, vector<32x32xf32> -> vector<32x32xf32>
    %cst_129 = arith.constant dense<0.000000e+00> : vector<32x32xf32>
    %225 = tpu.matmul %223, %197, %cst_129 {dimension_numbers = #tpu.dot_dimension_numbers<[1], [0], [0], [1], [0, 0, 1, 1], [], []>} : vector<32x2xf32>, vector<2x32xf32>, vector<32x32xf32> -> vector<32x32xf32>
    %226 = arith.mulf %193, %224 : vector<32x32xf32>
    %227 = arith.addf %226, %225 : vector<32x32xf32>
    %c0_130 = arith.constant 0 : index
    %c0_131 = arith.constant 0 : index
    %228 = vector.load %arg21[%c0_130, %c0_131] : memref<8x64xf32, #tpu.memory_space<vmem>>, vector<8x64xf32>
    %c0_132 = arith.constant 0 : index
    %c0_133 = arith.constant 0 : index
    %229 = vector.load %arg22[%c0_132, %c0_133] : memref<32x4xf32, #tpu.memory_space<vmem>>, vector<32x4xf32>
    %c0_134 = arith.constant 0 : index
    %c0_135 = arith.constant 0 : index
    %230 = vector.load %arg15[%c0_134, %c0_135] : memref<32x2xf32, #tpu.memory_space<vmem>>, vector<32x2xf32>
    %c0_136 = arith.constant 0 : index
    %c0_137 = arith.constant 0 : index
    %231 = vector.load %arg16[%c0_136, %c0_137] : memref<2x32xf32, #tpu.memory_space<vmem>>, vector<2x32xf32>
    %232 = arith.mulf %192, %192 : vector<32x32xf32>
    %233 = tpu.concatenate %192, %232 in 0 : vector<32x32xf32>, vector<32x32xf32> -> vector<64x32xf32>
    %cst_138 = arith.constant dense<0.000000e+00> : vector<8x32xf32>
    %234 = tpu.matmul %228, %233, %cst_138 {dimension_numbers = #tpu.dot_dimension_numbers<[1], [0], [0], [1], [0, 0, 1, 1], [], []>} : vector<8x64xf32>, vector<64x32xf32>, vector<8x32xf32> -> vector<8x32xf32>
    %cst_139 = arith.constant dense<0.000000e+00> : vector<8x2xf32>
    %235 = tpu.matmul %234, %230, %cst_139 {dimension_numbers = #tpu.dot_dimension_numbers<[1], [0], [0], [1], [0, 0, 1, 1], [], []>} : vector<8x32xf32>, vector<32x2xf32>, vector<8x2xf32> -> vector<8x2xf32>
    %236 = vector.extract_strided_slice %235 {offsets = [0, 0], sizes = [4, 2], strides = [1, 1]} : vector<8x2xf32> to vector<4x2xf32>
    %cst_140 = arith.constant 0.00961538497 : f32
    %237 = vector.broadcast %cst_140 : f32 to vector<4x2xf32>
    %238 = arith.mulf %236, %237 : vector<4x2xf32>
    %239 = vector.extract_strided_slice %235 {offsets = [4, 0], sizes = [4, 2], strides = [1, 1]} : vector<8x2xf32> to vector<4x2xf32>
    %cst_141 = arith.constant 0.00961538497 : f32
    %240 = vector.broadcast %cst_141 : f32 to vector<4x2xf32>
    %241 = arith.mulf %239, %240 : vector<4x2xf32>
    %242 = arith.mulf %238, %238 : vector<4x2xf32>
    %243 = arith.subf %241, %242 : vector<4x2xf32>
    %cst_142 = arith.constant 0.000000e+00 : f32
    %244 = vector.broadcast %cst_142 : f32 to vector<4x2xf32>
    %245 = arith.maximumf %243, %244 : vector<4x2xf32>
    %cst_143 = arith.constant 9.99999974E-6 : f32
    %246 = vector.broadcast %cst_143 : f32 to vector<4x2xf32>
    %247 = arith.addf %245, %246 : vector<4x2xf32>
    %248 = math.rsqrt %247 : vector<4x2xf32>
    %c0_144 = arith.constant 0 : index
    %c0_145 = arith.constant 0 : index
    %249 = vector.load %arg11[%c0_144, %c0_145] : memref<32x2xf32, #tpu.memory_space<vmem>>, vector<32x1xf32>
    %c0_146 = arith.constant 0 : index
    %c1_147 = arith.constant 1 : index
    %250 = vector.load %arg11[%c0_146, %c1_147] : memref<32x2xf32, #tpu.memory_space<vmem>>, vector<32x1xf32>
    %cst_148 = arith.constant dense<0.000000e+00> : vector<32x2xf32>
    %251 = tpu.matmul %229, %248, %cst_148 {dimension_numbers = #tpu.dot_dimension_numbers<[1], [0], [0], [1], [0, 0, 1, 1], [], []>} : vector<32x4xf32>, vector<4x2xf32>, vector<32x2xf32> -> vector<32x2xf32>
    %252 = vector.broadcast %249 : vector<32x1xf32> to vector<32x2xf32>
    %253 = arith.mulf %251, %252 : vector<32x2xf32>
    %cst_149 = arith.constant dense<0.000000e+00> : vector<32x2xf32>
    %254 = tpu.matmul %229, %238, %cst_149 {dimension_numbers = #tpu.dot_dimension_numbers<[1], [0], [0], [1], [0, 0, 1, 1], [], []>} : vector<32x4xf32>, vector<4x2xf32>, vector<32x2xf32> -> vector<32x2xf32>
    %255 = arith.mulf %254, %253 : vector<32x2xf32>
    %256 = vector.broadcast %250 : vector<32x1xf32> to vector<32x2xf32>
    %257 = arith.subf %256, %255 : vector<32x2xf32>
    %cst_150 = arith.constant dense<0.000000e+00> : vector<32x32xf32>
    %258 = tpu.matmul %253, %231, %cst_150 {dimension_numbers = #tpu.dot_dimension_numbers<[1], [0], [0], [1], [0, 0, 1, 1], [], []>} : vector<32x2xf32>, vector<2x32xf32>, vector<32x32xf32> -> vector<32x32xf32>
    %cst_151 = arith.constant dense<0.000000e+00> : vector<32x32xf32>
    %259 = tpu.matmul %257, %231, %cst_151 {dimension_numbers = #tpu.dot_dimension_numbers<[1], [0], [0], [1], [0, 0, 1, 1], [], []>} : vector<32x2xf32>, vector<2x32xf32>, vector<32x32xf32> -> vector<32x32xf32>
    %260 = arith.mulf %192, %258 : vector<32x32xf32>
    %261 = arith.addf %260, %259 : vector<32x32xf32>
    %cst_152 = arith.constant 0.000000e+00 : f32
    %262 = vector.broadcast %cst_152 : f32 to vector<32x32xf32>
    %263 = arith.maximumf %261, %262 : vector<32x32xf32>
    %264 = arith.truncf %263 : vector<32x32xf32> to vector<32x32xbf16>
    %265 = vector.extract_strided_slice %264 {offsets = [0, 31], sizes = [32, 1], strides = [1, 1]} : vector<32x32xbf16> to vector<32x1xbf16>
    %266 = vector.extract_strided_slice %264 {offsets = [0, 0], sizes = [32, 31], strides = [1, 1]} : vector<32x32xbf16> to vector<32x31xbf16>
    %267 = tpu.concatenate %265, %266 in 1 : vector<32x1xbf16>, vector<32x31xbf16> -> vector<32x32xbf16>
    %268 = vector.extract_strided_slice %264 {offsets = [0, 1], sizes = [32, 31], strides = [1, 1]} : vector<32x32xbf16> to vector<32x31xbf16>
    %269 = vector.extract_strided_slice %264 {offsets = [0, 0], sizes = [32, 1], strides = [1, 1]} : vector<32x32xbf16> to vector<32x1xbf16>
    %270 = tpu.concatenate %268, %269 in 1 : vector<32x31xbf16>, vector<32x1xbf16> -> vector<32x32xbf16>
    %271 = tpu.concatenate %267, %264, %270 in 0 : vector<32x32xbf16>, vector<32x32xbf16>, vector<32x32xbf16> -> vector<96x32xbf16>
    %c0_153 = arith.constant 0 : index
    %c0_154 = arith.constant 0 : index
    %272 = vector.load %arg12[%c0_153, %c0_154] : memref<32x96xbf16, #tpu.memory_space<vmem>>, vector<32x96xbf16>
    %cst_155 = arith.constant dense<0.000000e+00> : vector<32x32xf32>
    %273 = tpu.matmul %272, %271, %cst_155 {dimension_numbers = #tpu.dot_dimension_numbers<[1], [0], [0], [1], [0, 0, 1, 1], [], []>} : vector<32x96xbf16>, vector<96x32xbf16>, vector<32x32xf32> -> vector<32x32xf32>
    %c0_156 = arith.constant 0 : index
    %c0_157 = arith.constant 0 : index
    %274 = vector.load %arg21[%c0_156, %c0_157] : memref<8x64xf32, #tpu.memory_space<vmem>>, vector<8x64xf32>
    %c0_158 = arith.constant 0 : index
    %c0_159 = arith.constant 0 : index
    %275 = vector.load %arg22[%c0_158, %c0_159] : memref<32x4xf32, #tpu.memory_space<vmem>>, vector<32x4xf32>
    %c0_160 = arith.constant 0 : index
    %c0_161 = arith.constant 0 : index
    %276 = vector.load %arg15[%c0_160, %c0_161] : memref<32x2xf32, #tpu.memory_space<vmem>>, vector<32x2xf32>
    %c0_162 = arith.constant 0 : index
    %c0_163 = arith.constant 0 : index
    %277 = vector.load %arg16[%c0_162, %c0_163] : memref<2x32xf32, #tpu.memory_space<vmem>>, vector<2x32xf32>
    %278 = arith.mulf %273, %273 : vector<32x32xf32>
    %279 = tpu.concatenate %273, %278 in 0 : vector<32x32xf32>, vector<32x32xf32> -> vector<64x32xf32>
    %cst_164 = arith.constant dense<0.000000e+00> : vector<8x32xf32>
    %280 = tpu.matmul %274, %279, %cst_164 {dimension_numbers = #tpu.dot_dimension_numbers<[1], [0], [0], [1], [0, 0, 1, 1], [], []>} : vector<8x64xf32>, vector<64x32xf32>, vector<8x32xf32> -> vector<8x32xf32>
    %cst_165 = arith.constant dense<0.000000e+00> : vector<8x2xf32>
    %281 = tpu.matmul %280, %276, %cst_165 {dimension_numbers = #tpu.dot_dimension_numbers<[1], [0], [0], [1], [0, 0, 1, 1], [], []>} : vector<8x32xf32>, vector<32x2xf32>, vector<8x2xf32> -> vector<8x2xf32>
    %282 = vector.extract_strided_slice %281 {offsets = [0, 0], sizes = [4, 2], strides = [1, 1]} : vector<8x2xf32> to vector<4x2xf32>
    %cst_166 = arith.constant 0.00961538497 : f32
    %283 = vector.broadcast %cst_166 : f32 to vector<4x2xf32>
    %284 = arith.mulf %282, %283 : vector<4x2xf32>
    %285 = vector.extract_strided_slice %281 {offsets = [4, 0], sizes = [4, 2], strides = [1, 1]} : vector<8x2xf32> to vector<4x2xf32>
    %cst_167 = arith.constant 0.00961538497 : f32
    %286 = vector.broadcast %cst_167 : f32 to vector<4x2xf32>
    %287 = arith.mulf %285, %286 : vector<4x2xf32>
    %288 = arith.mulf %284, %284 : vector<4x2xf32>
    %289 = arith.subf %287, %288 : vector<4x2xf32>
    %cst_168 = arith.constant 0.000000e+00 : f32
    %290 = vector.broadcast %cst_168 : f32 to vector<4x2xf32>
    %291 = arith.maximumf %289, %290 : vector<4x2xf32>
    %cst_169 = arith.constant 9.99999974E-6 : f32
    %292 = vector.broadcast %cst_169 : f32 to vector<4x2xf32>
    %293 = arith.addf %291, %292 : vector<4x2xf32>
    %294 = math.rsqrt %293 : vector<4x2xf32>
    %c0_170 = arith.constant 0 : index
    %c0_171 = arith.constant 0 : index
    %295 = vector.load %arg13[%c0_170, %c0_171] : memref<32x2xf32, #tpu.memory_space<vmem>>, vector<32x1xf32>
    %c0_172 = arith.constant 0 : index
    %c1_173 = arith.constant 1 : index
    %296 = vector.load %arg13[%c0_172, %c1_173] : memref<32x2xf32, #tpu.memory_space<vmem>>, vector<32x1xf32>
    %cst_174 = arith.constant dense<0.000000e+00> : vector<32x2xf32>
    %297 = tpu.matmul %275, %294, %cst_174 {dimension_numbers = #tpu.dot_dimension_numbers<[1], [0], [0], [1], [0, 0, 1, 1], [], []>} : vector<32x4xf32>, vector<4x2xf32>, vector<32x2xf32> -> vector<32x2xf32>
    %298 = vector.broadcast %295 : vector<32x1xf32> to vector<32x2xf32>
    %299 = arith.mulf %297, %298 : vector<32x2xf32>
    %cst_175 = arith.constant dense<0.000000e+00> : vector<32x2xf32>
    %300 = tpu.matmul %275, %284, %cst_175 {dimension_numbers = #tpu.dot_dimension_numbers<[1], [0], [0], [1], [0, 0, 1, 1], [], []>} : vector<32x4xf32>, vector<4x2xf32>, vector<32x2xf32> -> vector<32x2xf32>
    %301 = arith.mulf %300, %299 : vector<32x2xf32>
    %302 = vector.broadcast %296 : vector<32x1xf32> to vector<32x2xf32>
    %303 = arith.subf %302, %301 : vector<32x2xf32>
    %cst_176 = arith.constant dense<0.000000e+00> : vector<32x32xf32>
    %304 = tpu.matmul %299, %277, %cst_176 {dimension_numbers = #tpu.dot_dimension_numbers<[1], [0], [0], [1], [0, 0, 1, 1], [], []>} : vector<32x2xf32>, vector<2x32xf32>, vector<32x32xf32> -> vector<32x32xf32>
    %cst_177 = arith.constant dense<0.000000e+00> : vector<32x32xf32>
    %305 = tpu.matmul %303, %277, %cst_177 {dimension_numbers = #tpu.dot_dimension_numbers<[1], [0], [0], [1], [0, 0, 1, 1], [], []>} : vector<32x2xf32>, vector<2x32xf32>, vector<32x32xf32> -> vector<32x32xf32>
    %306 = arith.mulf %273, %304 : vector<32x32xf32>
    %307 = arith.addf %306, %305 : vector<32x32xf32>
    %308 = arith.addf %307, %227 : vector<32x32xf32>
    %cst_178 = arith.constant 0.000000e+00 : f32
    %309 = vector.broadcast %cst_178 : f32 to vector<32x32xf32>
    %310 = arith.maximumf %308, %309 : vector<32x32xf32>
    %c0_179 = arith.constant 0 : index
    %c0_180 = arith.constant 0 : index
    %311 = vector.load %arg33[%c0_179, %c0_180] : memref<32x32xf32, #tpu.memory_space<vmem>>, vector<32x32xf32>
    tpu.vector_store %arg33[%c0_179, %c0_180], %310 {strides = array<i32>} : memref<32x32xf32, #tpu.memory_space<vmem>>, vector<32x32xf32>,
    %c0_181 = arith.constant 0 : index
    %c0_182 = arith.constant 0 : index
    %312 = vector.load %arg14[%c0_181, %c0_182] : memref<32x16xf32, #tpu.memory_space<vmem>>, vector<32x16xf32>
    %c0_183 = arith.constant 0 : index
    %c0_184 = arith.constant 0 : index
    %313 = vector.load %arg31[%c0_183, %c0_184] : memref<32x128xf32, #tpu.memory_space<vmem>>, vector<32x128xf32>
    %314 = tpu.concatenate %312, %312 in 1 : vector<32x16xf32>, vector<32x16xf32> -> vector<32x32xf32>
    %315 = arith.mulf %310, %314 : vector<32x32xf32>
    %cst_185 = arith.constant dense<0.000000e+00> : vector<32xf32>
    %316 = vector.multi_reduction <add>, %315, %cst_185 [0] : vector<32x32xf32> to vector<32xf32>
    %317 = vector.shape_cast %316 : vector<32xf32> to vector<1x32xf32>
    %cst_186 = arith.constant dense<0.000000e+00> : vector<1x128xf32>
    %318 = tpu.matmul %317, %313, %cst_186 {dimension_numbers = #tpu.dot_dimension_numbers<[1], [0], [0], [1], [0, 0, 1, 1], [], []>} : vector<1x32xf32>, vector<32x128xf32>, vector<1x128xf32> -> vector<1x128xf32>
    %c0_187 = arith.constant 0 : index
    %c0_188 = arith.constant 0 : index
    %c0_189 = arith.constant 0 : index
    %319 = vector.load %arg32[%c0_187, %c0_188, %c0_189] : memref<1x1x128xf32, #tpu.memory_space<vmem>>, vector<1x1x128xf32>
    %320 = vector.shape_cast %319 : vector<1x1x128xf32> to vector<1x128xf32>
    %321 = vector.shape_cast %318 : vector<1x128xf32> to vector<1x1x128xf32>
    tpu.vector_store %arg32[%c0_187, %c0_188, %c0_189], %321 {strides = array<i32>} : memref<1x1x128xf32, #tpu.memory_space<vmem>>, vector<1x1x128xf32>,
    return
  }
  func.func @transform_0(%arg0: i32) -> (i32, i32) {
    %c0_i32 = arith.constant 0 : i32
    %c0_i32_0 = arith.constant 0 : i32
    return %c0_i32, %arg0 : i32, i32
  }
  func.func @transform_1(%arg0: i32) -> (i32, i32) {
    %c0_i32 = arith.constant 0 : i32
    %c0_i32_0 = arith.constant 0 : i32
    %c0_i32_1 = arith.constant 0 : i32
    return %c0_i32, %c0_i32_0 : i32, i32
  }
  func.func @transform_2(%arg0: i32) -> (i32, i32) {
    %c0_i32 = arith.constant 0 : i32
    %c0_i32_0 = arith.constant 0 : i32
    %c0_i32_1 = arith.constant 0 : i32
    return %c0_i32, %c0_i32_0 : i32, i32
  }
  func.func @transform_3(%arg0: i32) -> (i32, i32) {
    %c0_i32 = arith.constant 0 : i32
    %c0_i32_0 = arith.constant 0 : i32
    %c0_i32_1 = arith.constant 0 : i32
    return %c0_i32, %c0_i32_0 : i32, i32
  }
  func.func @transform_4(%arg0: i32) -> (i32, i32) {
    %c0_i32 = arith.constant 0 : i32
    %c0_i32_0 = arith.constant 0 : i32
    %c0_i32_1 = arith.constant 0 : i32
    return %c0_i32, %c0_i32_0 : i32, i32
  }
  func.func @transform_5(%arg0: i32) -> (i32, i32) {
    %c0_i32 = arith.constant 0 : i32
    %c0_i32_0 = arith.constant 0 : i32
    %c0_i32_1 = arith.constant 0 : i32
    return %c0_i32, %c0_i32_0 : i32, i32
  }
  func.func @transform_6(%arg0: i32) -> (i32, i32) {
    %c0_i32 = arith.constant 0 : i32
    %c0_i32_0 = arith.constant 0 : i32
    %c0_i32_1 = arith.constant 0 : i32
    return %c0_i32, %c0_i32_0 : i32, i32
  }
  func.func @transform_7(%arg0: i32) -> (i32, i32) {
    %c0_i32 = arith.constant 0 : i32
    %c0_i32_0 = arith.constant 0 : i32
    %c0_i32_1 = arith.constant 0 : i32
    return %c0_i32, %c0_i32_0 : i32, i32
  }
  func.func @transform_8(%arg0: i32) -> (i32, i32) {
    %c0_i32 = arith.constant 0 : i32
    %c0_i32_0 = arith.constant 0 : i32
    %c0_i32_1 = arith.constant 0 : i32
    return %c0_i32, %c0_i32_0 : i32, i32
  }
  func.func @transform_9(%arg0: i32) -> (i32, i32) {
    %c0_i32 = arith.constant 0 : i32
    %c0_i32_0 = arith.constant 0 : i32
    %c0_i32_1 = arith.constant 0 : i32
    return %c0_i32, %c0_i32_0 : i32, i32
  }
  func.func @transform_10(%arg0: i32) -> (i32, i32) {
    %c0_i32 = arith.constant 0 : i32
    %c0_i32_0 = arith.constant 0 : i32
    %c0_i32_1 = arith.constant 0 : i32
    return %c0_i32, %c0_i32_0 : i32, i32
  }
  func.func @transform_11(%arg0: i32) -> (i32, i32) {
    %c0_i32 = arith.constant 0 : i32
    %c0_i32_0 = arith.constant 0 : i32
    %c0_i32_1 = arith.constant 0 : i32
    return %c0_i32, %c0_i32_0 : i32, i32
  }
  func.func @transform_12(%arg0: i32) -> (i32, i32) {
    %c0_i32 = arith.constant 0 : i32
    %c0_i32_0 = arith.constant 0 : i32
    %c0_i32_1 = arith.constant 0 : i32
    return %c0_i32, %c0_i32_0 : i32, i32
  }
  func.func @transform_13(%arg0: i32) -> (i32, i32) {
    %c0_i32 = arith.constant 0 : i32
    %c0_i32_0 = arith.constant 0 : i32
    %c0_i32_1 = arith.constant 0 : i32
    return %c0_i32, %c0_i32_0 : i32, i32
  }
  func.func @transform_14(%arg0: i32) -> (i32, i32) {
    %c0_i32 = arith.constant 0 : i32
    %c0_i32_0 = arith.constant 0 : i32
    %c0_i32_1 = arith.constant 0 : i32
    return %c0_i32, %c0_i32_0 : i32, i32
  }
  func.func @transform_15(%arg0: i32) -> (i32, i32) {
    %c0_i32 = arith.constant 0 : i32
    %c0_i32_0 = arith.constant 0 : i32
    %c0_i32_1 = arith.constant 0 : i32
    return %c0_i32, %c0_i32_0 : i32, i32
  }
  func.func @transform_16(%arg0: i32) -> (i32, i32) {
    %c0_i32 = arith.constant 0 : i32
    %c0_i32_0 = arith.constant 0 : i32
    %c0_i32_1 = arith.constant 0 : i32
    return %c0_i32, %c0_i32_0 : i32, i32
  }
  func.func @transform_17(%arg0: i32) -> (i32, i32) {
    %c0_i32 = arith.constant 0 : i32
    %c0_i32_0 = arith.constant 0 : i32
    %c0_i32_1 = arith.constant 0 : i32
    return %c0_i32, %c0_i32_0 : i32, i32
  }
  func.func @transform_18(%arg0: i32) -> (i32, i32) {
    %c0_i32 = arith.constant 0 : i32
    %c0_i32_0 = arith.constant 0 : i32
    %c0_i32_1 = arith.constant 0 : i32
    return %c0_i32, %c0_i32_0 : i32, i32
  }
  func.func @transform_19(%arg0: i32) -> (i32, i32) {
    %c0_i32 = arith.constant 0 : i32
    %c0_i32_0 = arith.constant 0 : i32
    %c0_i32_1 = arith.constant 0 : i32
    return %c0_i32, %c0_i32_0 : i32, i32
  }
  func.func @transform_20(%arg0: i32) -> (i32, i32) {
    %c0_i32 = arith.constant 0 : i32
    %c0_i32_0 = arith.constant 0 : i32
    %c0_i32_1 = arith.constant 0 : i32
    return %c0_i32, %c0_i32_0 : i32, i32
  }
  func.func @transform_21(%arg0: i32) -> (i32, i32) {
    %c0_i32 = arith.constant 0 : i32
    %c0_i32_0 = arith.constant 0 : i32
    %c0_i32_1 = arith.constant 0 : i32
    return %c0_i32, %c0_i32_0 : i32, i32
  }
  func.func @transform_22(%arg0: i32) -> (i32, i32) {
    %c0_i32 = arith.constant 0 : i32
    %c0_i32_0 = arith.constant 0 : i32
    %c0_i32_1 = arith.constant 0 : i32
    return %c0_i32, %c0_i32_0 : i32, i32
  }
  func.func @transform_23(%arg0: i32) -> (i32, i32) {
    %c0_i32 = arith.constant 0 : i32
    %c0_i32_0 = arith.constant 0 : i32
    %c0_i32_1 = arith.constant 0 : i32
    return %c0_i32, %c0_i32_0 : i32, i32
  }
  func.func @transform_24(%arg0: i32) -> (i32, i32) {
    %c0_i32 = arith.constant 0 : i32
    %c0_i32_0 = arith.constant 0 : i32
    %c0_i32_1 = arith.constant 0 : i32
    return %c0_i32, %c0_i32_0 : i32, i32
  }
  func.func @transform_25(%arg0: i32) -> (i32, i32) {
    %c0_i32 = arith.constant 0 : i32
    %c0_i32_0 = arith.constant 0 : i32
    %c0_i32_1 = arith.constant 0 : i32
    return %c0_i32, %c0_i32_0 : i32, i32
  }
  func.func @transform_26(%arg0: i32) -> (i32, i32) {
    %c0_i32 = arith.constant 0 : i32
    %c0_i32_0 = arith.constant 0 : i32
    %c0_i32_1 = arith.constant 0 : i32
    return %c0_i32, %c0_i32_0 : i32, i32
  }
  func.func @transform_27(%arg0: i32) -> (i32, i32) {
    %c0_i32 = arith.constant 0 : i32
    %c0_i32_0 = arith.constant 0 : i32
    %c0_i32_1 = arith.constant 0 : i32
    return %c0_i32, %c0_i32_0 : i32, i32
  }
  func.func @transform_28(%arg0: i32) -> (i32, i32) {
    %c0_i32 = arith.constant 0 : i32
    %c0_i32_0 = arith.constant 0 : i32
    %c0_i32_1 = arith.constant 0 : i32
    return %c0_i32, %c0_i32_0 : i32, i32
  }
  func.func @transform_29(%arg0: i32) -> (i32, i32) {
    %c0_i32 = arith.constant 0 : i32
    %c0_i32_0 = arith.constant 0 : i32
    %c0_i32_1 = arith.constant 0 : i32
    return %c0_i32, %c0_i32_0 : i32, i32
  }
  func.func @transform_30(%arg0: i32) -> (i32, i32) {
    %c0_i32 = arith.constant 0 : i32
    %c0_i32_0 = arith.constant 0 : i32
    %c0_i32_1 = arith.constant 0 : i32
    return %c0_i32, %c0_i32_0 : i32, i32
  }
  func.func @transform_31(%arg0: i32) -> (i32, i32, i32) {
    %c0_i32 = arith.constant 0 : i32
    %c0_i32_0 = arith.constant 0 : i32
    %c0_i32_1 = arith.constant 0 : i32
    return %arg0, %c0_i32, %c0_i32_0 : i32, i32, i32
  }
  func.func @transform_32(%arg0: i32) -> (i32, i32) {
    %c0_i32 = arith.constant 0 : i32
    %c0_i32_0 = arith.constant 0 : i32
    return %c0_i32, %arg0 : i32, i32
  }
}

</mosaic_0001>

<llo_original>
// kernel: tpu_custom_call.1
$region0: #{tpu_custom_call.1}
  #allocation0 [shape = 'u32[]', space=smem, size = 0x4, offset = 0x4, fixed_abs, tag = 'smem constant byte address 0x4 - core index']
  #allocation1 [shape = 'u32[144,128]{1,0:T(1,128)}', space=vmem, size = 0x12000, scoped, tag = 'internal scratch']
  %s0 = inlined_call_operand.smem [shape: u32[33], index: -1, kind: input, shape index: {}]
  %s1 = sld [smem:[%s0]]
  %s2 = scalar_lea.smem %s0, 1
  %s3 = sld [smem:[%s2]]
  %s4 = scalar_lea.smem %s0, 2
  %s5 = sld [smem:[%s4]]
  %s6 = scalar_lea.smem %s0, 3
  %s7 = sld [smem:[%s6]]
  %s8 = scalar_lea.smem %s0, 4
  %s9 = sld [smem:[%s8]]
  %s10 = scalar_lea.smem %s0, 5
  %s11 = sld [smem:[%s10]]
  %s12 = scalar_lea.smem %s0, 6
  %s13 = sld [smem:[%s12]]
  %s14 = scalar_lea.smem %s0, 7
  %s15 = sld [smem:[%s14]]
  %s16 = scalar_lea.smem %s0, 8
  %s17 = sld [smem:[%s16]]
  %s18 = scalar_lea.smem %s0, 9
  %s19 = sld [smem:[%s18]]
  %s20 = scalar_lea.smem %s0, 10
  %s21 = sld [smem:[%s20]]
  %s22 = scalar_lea.smem %s0, 11
  %s23 = sld [smem:[%s22]]
  %s24 = scalar_lea.smem %s0, 12
  %s25 = sld [smem:[%s24]]
  %s26 = scalar_lea.smem %s0, 13
  %s27 = sld [smem:[%s26]]
  %s28 = scalar_lea.smem %s0, 14
  %s29 = sld [smem:[%s28]]
  %s30 = scalar_lea.smem %s0, 15
  %s31 = sld [smem:[%s30]]
  %s32 = scalar_lea.smem %s0, 16
  %s33 = sld [smem:[%s32]]
  %s34 = scalar_lea.smem %s0, 17
  %s35 = sld [smem:[%s34]]
  %s36 = scalar_lea.smem %s0, 18
  %s37 = sld [smem:[%s36]]
  %s38 = scalar_lea.smem %s0, 19
  %s39 = sld [smem:[%s38]]
  %s40 = scalar_lea.smem %s0, 20
  %s41 = sld [smem:[%s40]]
  %s42 = scalar_lea.smem %s0, 21
  %s43 = sld [smem:[%s42]]
  %s44 = scalar_lea.smem %s0, 22
  %s45 = sld [smem:[%s44]]
  %s46 = scalar_lea.smem %s0, 23
  %s47 = sld [smem:[%s46]]
  %s48 = scalar_lea.smem %s0, 24
  %s49 = sld [smem:[%s48]]
  %s50 = scalar_lea.smem %s0, 25
  %s51 = sld [smem:[%s50]]
  %s52 = scalar_lea.smem %s0, 26
  %s53 = sld [smem:[%s52]]
  %s54 = scalar_lea.smem %s0, 27
  %s55 = sld [smem:[%s54]]
  %s56 = scalar_lea.smem %s0, 28
  %s57 = sld [smem:[%s56]]
  %s58 = scalar_lea.smem %s0, 29
  %s59 = sld [smem:[%s58]]
  %s60 = scalar_lea.smem %s0, 30
  %s61 = sld [smem:[%s60]]
  %s62 = scalar_lea.smem %s0, 31
  %s63 = sld [smem:[%s62]]
  %s64 = scalar_lea.smem %s0, 32
  %s65 = sld [smem:[%s64]]
  %66 = xla_tuple %s63, %s65
  %s67 = sld [smem:[#allocation0]]
  $region142: #{tpu_custom_call.1} parent=0
    _
  %s69 = ssub.s32 1, %s67
  %s70 = scalar_select 0, %s69, %s67
  $region1: #{tpu_custom_call.1} parent=0
    #allocation2 [shape = 'u8[512]{0}', space=vmem, size = 0x400, scoped, tag = 'output window, operand 0, single buffered']
    #allocation3 [shape = 's32[1]{0}', space=sflag, size = 0x4, scoped, tag = 'scoped memory for tpu_custom_call.1']
    #allocation4 [shape = 'u8[16384]{0}', space=vmem, size = 0x4000, scoped, tag = 'output window, operand 1, single buffered']
    #allocation5 [shape = 's32[1]{0}', space=sflag, size = 0x4, scoped, tag = 'scoped memory for tpu_custom_call.1']
    %71 = vsyncpa [#allocation3], 0
    %72 = vsyncpa [#allocation5], 0
    // Predicated region
    $region2: #{tpu_custom_call.1} parent=1 // pred_check
      _
    $region3: #{tpu_custom_call.1} parent=1 // pred_check_branch
      %74 = sbr.rel (0) target = $region5
    $region4: #{tpu_custom_call.1} parent=1 // pred_region
      _
    $region5: #{tpu_custom_call.1} parent=1 // pred_fallthru
      _
    // Predicated region
    $region6: #{tpu_custom_call.1} parent=1 // pred_check
      _
    $region7: #{tpu_custom_call.1} parent=1 // pred_check_branch
      %76 = sbr.rel (0) target = $region9
    $region8: #{tpu_custom_call.1} parent=1 // pred_region
      _
    $region9: #{tpu_custom_call.1} parent=1 // pred_fallthru
      _
    // Predicated region
    $region10: #{tpu_custom_call.1} parent=1 // pred_check
      _
    $region11: #{tpu_custom_call.1} parent=1 // pred_check_branch
      %78 = sbr.rel (0) target = $region13
    $region12: #{tpu_custom_call.1} parent=1 // pred_region
      _
    $region13: #{tpu_custom_call.1} parent=1 // pred_fallthru
      _
    // Predicated region
    $region14: #{tpu_custom_call.1} parent=1 // pred_check
      _
    $region15: #{tpu_custom_call.1} parent=1 // pred_check_branch
      %80 = sbr.rel (0) target = $region17
    $region16: #{tpu_custom_call.1} parent=1 // pred_region
      _
    $region17: #{tpu_custom_call.1} parent=1 // pred_fallthru
      _
    // Predicated region
    $region18: #{tpu_custom_call.1} parent=1 // pred_check
      _
    $region19: #{tpu_custom_call.1} parent=1 // pred_check_branch
      %82 = sbr.rel (0) target = $region21
    $region20: #{tpu_custom_call.1} parent=1 // pred_region
      _
    $region21: #{tpu_custom_call.1} parent=1 // pred_fallthru
      _
    // Predicated region
    $region22: #{tpu_custom_call.1} parent=1 // pred_check
      _
    $region23: #{tpu_custom_call.1} parent=1 // pred_check_branch
      %84 = sbr.rel (0) target = $region25
    $region24: #{tpu_custom_call.1} parent=1 // pred_region
      _
    $region25: #{tpu_custom_call.1} parent=1 // pred_fallthru
      _
    // Predicated region
    $region26: #{tpu_custom_call.1} parent=1 // pred_check
      _
    $region27: #{tpu_custom_call.1} parent=1 // pred_check_branch
      %86 = sbr.rel (0) target = $region29
    $region28: #{tpu_custom_call.1} parent=1 // pred_region
      _
    $region29: #{tpu_custom_call.1} parent=1 // pred_fallthru
      _
    // Predicated region
    $region30: #{tpu_custom_call.1} parent=1 // pred_check
      _
    $region31: #{tpu_custom_call.1} parent=1 // pred_check_branch
      %88 = sbr.rel (0) target = $region33
    $region32: #{tpu_custom_call.1} parent=1 // pred_region
      _
    $region33: #{tpu_custom_call.1} parent=1 // pred_fallthru
      _
    // Predicated region
    $region34: #{tpu_custom_call.1} parent=1 // pred_check
      _
    $region35: #{tpu_custom_call.1} parent=1 // pred_check_branch
      %90 = sbr.rel (0) target = $region37
    $region36: #{tpu_custom_call.1} parent=1 // pred_region
      _
    $region37: #{tpu_custom_call.1} parent=1 // pred_fallthru
      _
    // Predicated region
    $region38: #{tpu_custom_call.1} parent=1 // pred_check
      _
    $region39: #{tpu_custom_call.1} parent=1 // pred_check_branch
      %92 = sbr.rel (0) target = $region41
    $region40: #{tpu_custom_call.1} parent=1 // pred_region
      _
    $region41: #{tpu_custom_call.1} parent=1 // pred_fallthru
      _
    // Predicated region
    $region42: #{tpu_custom_call.1} parent=1 // pred_check
      _
    $region43: #{tpu_custom_call.1} parent=1 // pred_check_branch
      %94 = sbr.rel (0) target = $region45
    $region44: #{tpu_custom_call.1} parent=1 // pred_region
      _
    $region45: #{tpu_custom_call.1} parent=1 // pred_fallthru
      _
    // Predicated region
    $region46: #{tpu_custom_call.1} parent=1 // pred_check
      _
    $region47: #{tpu_custom_call.1} parent=1 // pred_check_branch
      %96 = sbr.rel (0) target = $region49
    $region48: #{tpu_custom_call.1} parent=1 // pred_region
      _
    $region49: #{tpu_custom_call.1} parent=1 // pred_fallthru
      _
    // Predicated region
    $region50: #{tpu_custom_call.1} parent=1 // pred_check
      _
    $region51: #{tpu_custom_call.1} parent=1 // pred_check_branch
      %98 = sbr.rel (0) target = $region53
    $region52: #{tpu_custom_call.1} parent=1 // pred_region
      _
    $region53: #{tpu_custom_call.1} parent=1 // pred_fallthru
      _
    // Predicated region
    $region54: #{tpu_custom_call.1} parent=1 // pred_check
      _
    $region55: #{tpu_custom_call.1} parent=1 // pred_check_branch
      %100 = sbr.rel (0) target = $region57
    $region56: #{tpu_custom_call.1} parent=1 // pred_region
      _
    $region57: #{tpu_custom_call.1} parent=1 // pred_fallthru
      _
    // Predicated region
    $region58: #{tpu_custom_call.1} parent=1 // pred_check
      _
    $region59: #{tpu_custom_call.1} parent=1 // pred_check_branch
      %102 = sbr.rel (0) target = $region61
    $region60: #{tpu_custom_call.1} parent=1 // pred_region
      _
    $region61: #{tpu_custom_call.1} parent=1 // pred_fallthru
      _
    // Predicated region
    $region62: #{tpu_custom_call.1} parent=1 // pred_check
      _
    $region63: #{tpu_custom_call.1} parent=1 // pred_check_branch
      %104 = sbr.rel (0) target = $region65
    $region64: #{tpu_custom_call.1} parent=1 // pred_region
      _
    $region65: #{tpu_custom_call.1} parent=1 // pred_fallthru
      _
    // Predicated region
    $region66: #{tpu_custom_call.1} parent=1 // pred_check
      _
    $region67: #{tpu_custom_call.1} parent=1 // pred_check_branch
      %106 = sbr.rel (0) target = $region69
    $region68: #{tpu_custom_call.1} parent=1 // pred_region
      _
    $region69: #{tpu_custom_call.1} parent=1 // pred_fallthru
      _
    // Predicated region
    $region70: #{tpu_custom_call.1} parent=1 // pred_check
      _
    $region71: #{tpu_custom_call.1} parent=1 // pred_check_branch
      %108 = sbr.rel (0) target = $region73
    $region72: #{tpu_custom_call.1} parent=1 // pred_region
      _
    $region73: #{tpu_custom_call.1} parent=1 // pred_fallthru
      _
    // Predicated region
    $region74: #{tpu_custom_call.1} parent=1 // pred_check
      _
    $region75: #{tpu_custom_call.1} parent=1 // pred_check_branch
      %110 = sbr.rel (0) target = $region77
    $region76: #{tpu_custom_call.1} parent=1 // pred_region
      _
    $region77: #{tpu_custom_call.1} parent=1 // pred_fallthru
      _
    // Predicated region
    $region78: #{tpu_custom_call.1} parent=1 // pred_check
      _
    $region79: #{tpu_custom_call.1} parent=1 // pred_check_branch
      %112 = sbr.rel (0) target = $region81
    $region80: #{tpu_custom_call.1} parent=1 // pred_region
      _
    $region81: #{tpu_custom_call.1} parent=1 // pred_fallthru
      _
    // Predicated region
    $region82: #{tpu_custom_call.1} parent=1 // pred_check
      _
    $region83: #{tpu_custom_call.1} parent=1 // pred_check_branch
      %114 = sbr.rel (0) target = $region85
    $region84: #{tpu_custom_call.1} parent=1 // pred_region
      _
    $region85: #{tpu_custom_call.1} parent=1 // pred_fallthru
      _
    // Predicated region
    $region86: #{tpu_custom_call.1} parent=1 // pred_check
      _
    $region87: #{tpu_custom_call.1} parent=1 // pred_check_branch
      %116 = sbr.rel (0) target = $region89
    $region88: #{tpu_custom_call.1} parent=1 // pred_region
      _
    $region89: #{tpu_custom_call.1} parent=1 // pred_fallthru
      _
    // Predicated region
    $region90: #{tpu_custom_call.1} parent=1 // pred_check
      _
    $region91: #{tpu_custom_call.1} parent=1 // pred_check_branch
      %118 = sbr.rel (0) target = $region93
    $region92: #{tpu_custom_call.1} parent=1 // pred_region
      _
    $region93: #{tpu_custom_call.1} parent=1 // pred_fallthru
      _
    // Predicated region
    $region94: #{tpu_custom_call.1} parent=1 // pred_check
      _
    $region95: #{tpu_custom_call.1} parent=1 // pred_check_branch
      %120 = sbr.rel (0) target = $region97
    $region96: #{tpu_custom_call.1} parent=1 // pred_region
      _
    $region97: #{tpu_custom_call.1} parent=1 // pred_fallthru
      _
    // Predicated region
    $region98: #{tpu_custom_call.1} parent=1 // pred_check
      _
    $region99: #{tpu_custom_call.1} parent=1 // pred_check_branch
      %122 = sbr.rel (0) target = $region101
    $region100: #{tpu_custom_call.1} parent=1 // pred_region
      _
    $region101: #{tpu_custom_call.1} parent=1 // pred_fallthru
      _
    // Predicated region
    $region102: #{tpu_custom_call.1} parent=1 // pred_check
      _
    $region103: #{tpu_custom_call.1} parent=1 // pred_check_branch
      %124 = sbr.rel (0) target = $region105
    $region104: #{tpu_custom_call.1} parent=1 // pred_region
      _
    $region105: #{tpu_custom_call.1} parent=1 // pred_fallthru
      _
    // Predicated region
    $region106: #{tpu_custom_call.1} parent=1 // pred_check
      _
    $region107: #{tpu_custom_call.1} parent=1 // pred_check_branch
      %126 = sbr.rel (0) target = $region109
    $region108: #{tpu_custom_call.1} parent=1 // pred_region
      _
    $region109: #{tpu_custom_call.1} parent=1 // pred_fallthru
      _
    // Predicated region
    $region110: #{tpu_custom_call.1} parent=1 // pred_check
      _
    $region111: #{tpu_custom_call.1} parent=1 // pred_check_branch
      %128 = sbr.rel (0) target = $region113
    $region112: #{tpu_custom_call.1} parent=1 // pred_region
      _
    $region113: #{tpu_custom_call.1} parent=1 // pred_fallthru
      _
    // Predicated region
    $region114: #{tpu_custom_call.1} parent=1 // pred_check
      _
    $region115: #{tpu_custom_call.1} parent=1 // pred_check_branch
      %130 = sbr.rel (0) target = $region117
    $region116: #{tpu_custom_call.1} parent=1 // pred_region
      _
    $region117: #{tpu_custom_call.1} parent=1 // pred_fallthru
      _
    // Predicated region
    $region118: #{tpu_custom_call.1} parent=1 // pred_check
      _
    $region119: #{tpu_custom_call.1} parent=1 // pred_check_branch
      %132 = sbr.rel (0) target = $region121
    $region120: #{tpu_custom_call.1} parent=1 // pred_region
      _
    $region121: #{tpu_custom_call.1} parent=1 // pred_fallthru
      _
    // Predicated region
    $region122: #{tpu_custom_call.1} parent=1 // pred_check
      _
    $region123: #{tpu_custom_call.1} parent=1 // pred_check_branch
      %134 = sbr.rel (0) target = $region125
    $region124: #{tpu_custom_call.1} parent=1 // pred_region
      _
    $region125: #{tpu_custom_call.1} parent=1 // pred_fallthru
      _
    %v136 = vld [vmem:[%s1] sm:$0xff]
    %v137 = vld [vmem:[%s1 + $0x8] sm:$0xff]
    %v138 = vld [vmem:[%s1 + $0x10] sm:$0xff]
    %v139 = vld [vmem:[%s1 + $0x18] sm:$0xff]
    %v140 = vpack.c.bf16 %v137, %v136
    %v141 = vpack.c.bf16 %v139, %v138
    %144 = vrot.lane.b32.xlu0 %v140, 1
    %v145 = vpop.permute.xlu0 %144
    %146 = vrot.lane.b32.xlu0 %v141, 1
    %v147 = vpop.permute.xlu0 %146
    %vm148 = vcmask 7168
    %153 = vrot.lane.b32.xlu0 %v140, 127
    %v154 = vpop.permute.xlu0 %153
    %155 = vrot.lane.b32.xlu0 %v141, 127
    %v156 = vpop.permute.xlu0 %155
    %v161 = vld [vmem:[%s3] sm:$0xf]
    %v162 = vld [vmem:[%s3 + $0x4] sm:$0xf]
    %v163 = vld [vmem:[%s3 + $0x8] sm:$0xf]
    %v164 = vld [vmem:[%s3 + $0xc] sm:$0xf]
    %v165 = vld [vmem:[%s3 + $0x10] sm:$0xf]
    %v166 = vld [vmem:[%s3 + $0x14] sm:$0xf]
    %v167 = vld [vmem:[%s3 + $0x18] sm:$0xf]
    %v168 = vld [vmem:[%s3 + $0x1c] sm:$0xf]
    %v177 = vunpack.c.l.b16 %v161
    %v178 = vunpack.c.l.b16 %v162
    %v179 = vunpack.c.l.b16 %v163
    %v180 = vunpack.c.l.b16 %v164
    %v181 = vunpack.c.l.b16 %v165
    %v182 = vunpack.c.l.b16 %v166
    %v183 = vunpack.c.l.b16 %v167
    %v184 = vunpack.c.l.b16 %v168
    %v185 = vpack.c.b16 %v178, %v177
    %v186 = vpack.c.b16 %v180, %v179
    %v187 = vpack.c.b16 %v182, %v181
    %v188 = vpack.c.b16 %v184, %v183
    %vm189 = vcmask 785408
    %v191 = vsel %vm189, %v185, 0
    %v194 = vsel %vm189, %v186, 0
    %v197 = vsel %vm189, %v187, 0
    %v200 = vsel %vm189, %v188, 0
    %202 = vmatprep.subr.bf16.mxu0 0
    %203 = vmatpush1.bf16.msra.mxu0 %v145
    %204 = vmatprep.subr.bf16.mxu0 0
    %205 = vmatpush1.bf16.msra.mxu0 %v147
    %206 = vmatprep.subr.bf16.mxu0 0
    %207 = vmatpush1.bf16.msra.mxu0 %v140
    %208 = vmatprep.subr.bf16.mxu0 0
    %209 = vmatpush1.bf16.msra.mxu0 %v141
    %210 = vmatprep.subr.bf16.mxu0 0
    %211 = vmatpush1.bf16.msra.mxu0 %v154
    %212 = vmatprep.subr.bf16.mxu0 0
    %213 = vmatpush1.bf16.msra.mxu0 %v156
    %214 = vmatprep.subr.bf16.mxu0 0
    %215 = vmatpush1.bf16.msra.mxu0 0
    %216 = vmatprep.subr.bf16.mxu0 0
    %217 = vmatpush1.bf16.msra.mxu0 0
    %218 = vmatprep.subr.bf16.mxu0 0
    %219 = vmatpush1.bf16.msra.mxu0 0
    %220 = vmatprep.subr.bf16.mxu0 0
    %221 = vmatpush1.bf16.msra.mxu0 0
    %222 = vmatprep.subr.bf16.mxu0 0
    %223 = vmatpush1.bf16.msra.mxu0 0
    %224 = vmatprep.subr.bf16.mxu0 0
    %225 = vmatpush1.bf16.msra.mxu0 0
    %226 = vmatprep.subr.bf16.mxu0 0
    %227 = vmatpush1.bf16.msra.mxu0 0
    %228 = vmatprep.subr.bf16.mxu0 0
    %229 = vmatpush1.bf16.msra.mxu0 0
    %230 = vmatprep.subr.bf16.mxu0 0
    %231 = vmatpush1.bf16.msra.mxu0 0
    %232 = vmatprep.subr.bf16.mxu0 0
    %233 = vmatpush1.bf16.msra.mxu0 0
    %234 = vmatprep.mubr.bf16.mxu0 0
    %235 = vmatmul.mubr.bf16.gmra.mrb[0].mxu0 %v191
    %v236 = vpop.f32.mrb[0].mxu0
    %v237 = vadd.f32 0.0, %v236
    %v238 = vpop.f32.mrb[0].mxu0
    %v239 = vpop.f32.mrb[0].mxu0
    %v240 = vadd.f32 0.0, %v239
    %v241 = vpop.f32.mrb[0].mxu0
    %242 = vmatprep.mubr.bf16.mxu0 0
    %243 = vmatmul.mubr.bf16.gmra.mrb[0].mxu0 %v194
    %v244 = vpop.f32.mrb[0].mxu0
    %v245 = vadd.f32 0.0, %v244
    %v246 = vpop.f32.mrb[0].mxu0
    %v247 = vpop.f32.mrb[0].mxu0
    %v248 = vadd.f32 0.0, %v247
    %v249 = vpop.f32.mrb[0].mxu0
    %250 = vmatprep.mubr.bf16.mxu0 0
    %251 = vmatmul.mubr.bf16.gmra.mrb[0].mxu0 %v197
    %v252 = vpop.f32.mrb[0].mxu0
    %v253 = vadd.f32 0.0, %v252
    %v254 = vpop.f32.mrb[0].mxu0
    %v255 = vpop.f32.mrb[0].mxu0
    %v256 = vadd.f32 0.0, %v255
    %v257 = vpop.f32.mrb[0].mxu0
    %258 = vmatprep.mubr.bf16.mxu0 0
    %259 = vmatmul.mubr.bf16.gmra.mrb[0].mxu0 %v200
    %v260 = vpop.f32.mrb[0].mxu0
    %v261 = vadd.f32 0.0, %v260
    %v262 = vpop.f32.mrb[0].mxu0
    %v263 = vpop.f32.mrb[0].mxu0
    %v264 = vadd.f32 0.0, %v263
    %v265 = vpop.f32.mrb[0].mxu0
    %266 = vdwg.mxu0
    %v267 = vld [vmem:[%s45] sm:$0xff]
    %v268 = vld [vmem:[%s47] sm:$0xff]
    %v269 = vld [vmem:[%s47 + $0x8] sm:$0xff]
    %v270 = vld [vmem:[%s47 + $0x10] sm:$0xff]
    %v271 = vld [vmem:[%s47 + $0x18] sm:$0xff]
    %v272 = vld [vmem:[%s47 + $0x20] sm:$0xff]
    %v273 = vld [vmem:[%s47 + $0x28] sm:$0xff]
    %v274 = vld [vmem:[%s47 + $0x30] sm:$0xff]
    %v275 = vld [vmem:[%s47 + $0x38] sm:$0xff]
    %v276 = vld [vmem:[%s37] sm:$0xff]
    %v277 = vld [vmem:[%s37 + $0x8] sm:$0xff]
    %v278 = vld [vmem:[%s37 + $0x10] sm:$0xff]
    %v279 = vld [vmem:[%s37 + $0x18] sm:$0xff]
    %v280 = vld [vmem:[%s37 + $0x20] sm:$0xff]
    %v281 = vld [vmem:[%s37 + $0x28] sm:$0xff]
    %v282 = vld [vmem:[%s37 + $0x30] sm:$0xff]
    %v283 = vld [vmem:[%s37 + $0x38] sm:$0xff]
    %v284 = vld [vmem:[%s37 + $0x40] sm:$0xff]
    %v285 = vld [vmem:[%s37 + $0x48] sm:$0xff]
    %v286 = vld [vmem:[%s37 + $0x50] sm:$0xff]
    %v287 = vld [vmem:[%s37 + $0x58] sm:$0xff]
    %v288 = vld [vmem:[%s37 + $0x60] sm:$0xff]
    %v289 = vld [vmem:[%s37 + $0x68] sm:$0xff]
    %v290 = vld [vmem:[%s37 + $0x70] sm:$0xff]
    %v291 = vld [vmem:[%s37 + $0x78] sm:$0xff]
    %v292 = vld [vmem:[%s39] sm:$0x3]
    %v293 = vmul.f32 %v237, %v237
    %v294 = vmul.f32 %v240, %v240
    %v295 = vmul.f32 %v245, %v245
    %v296 = vmul.f32 %v248, %v248
    %v297 = vmul.f32 %v253, %v253
    %v298 = vmul.f32 %v256, %v256
    %v299 = vmul.f32 %v261, %v261
    %v300 = vmul.f32 %v264, %v264
    %301 = vmatprep.subr.mxu0 0.0
    %302 = vmatpush1.msra.mxu0 %v237
    %303 = vmatprep.subr.mxu0 0.0
    %304 = vmatpush1.msra.mxu0 %v240
    %305 = vmatprep.subr.mxu0 0.0
    %306 = vmatpush1.msra.mxu0 %v245
    %307 = vmatprep.subr.mxu0 0.0
    %308 = vmatpush1.msra.mxu0 %v248
    %309 = vmatprep.subr.mxu0 0.0
    %310 = vmatpush1.msra.mxu0 %v253
    %311 = vmatprep.subr.mxu0 0.0
    %312 = vmatpush1.msra.mxu0 %v256
    %313 = vmatprep.subr.mxu0 0.0
    %314 = vmatpush1.msra.mxu0 %v261
    %315 = vmatprep.subr.mxu0 0.0
    %316 = vmatpush1.msra.mxu0 %v264
    %317 = vmatprep.subr.mxu0 0.0
    %318 = vmatpush1.msra.mxu0 %v293
    %319 = vmatprep.subr.mxu0 0.0
    %320 = vmatpush1.msra.mxu0 %v294
    %321 = vmatprep.subr.mxu0 0.0
    %322 = vmatpush1.msra.mxu0 %v295
    %323 = vmatprep.subr.mxu0 0.0
    %324 = vmatpush1.msra.mxu0 %v296
    %325 = vmatprep.subr.mxu0 0.0
    %326 = vmatpush1.msra.mxu0 %v297
    %327 = vmatprep.subr.mxu0 0.0
    %328 = vmatpush1.msra.mxu0 %v298
    %329 = vmatprep.subr.mxu0 0.0
    %330 = vmatpush1.msra.mxu0 %v299
    %331 = vmatprep.subr.mxu0 0.0
    %332 = vmatpush1.msra.mxu0 %v300
    %333 = vmatprep.subr.mxu0 0.0
    %334 = vmatpush1.msra.mxu0 0.0
    %335 = vmatprep.subr.mxu0 0.0
    %336 = vmatpush1.msra.mxu0 0.0
    %337 = vmatprep.subr.mxu0 0.0
    %338 = vmatpush1.msra.mxu0 0.0
    %339 = vmatprep.subr.mxu0 0.0
    %340 = vmatpush1.msra.mxu0 0.0
    %341 = vmatprep.subr.mxu0 0.0
    %342 = vmatpush1.msra.mxu0 0.0
    %343 = vmatprep.subr.mxu0 0.0
    %344 = vmatpush1.msra.mxu0 0.0
    %345 = vmatprep.subr.mxu0 0.0
    %346 = vmatpush1.msra.mxu0 0.0
    %347 = vmatprep.subr.mxu0 0.0
    %348 = vmatpush1.msra.mxu0 0.0
    %349 = vmatprep.subr.mxu0 0.0
    %350 = vmatpush1.msra.mxu0 0.0
    %351 = vmatprep.subr.mxu0 0.0
    %352 = vmatpush1.msra.mxu0 0.0
    %353 = vmatprep.subr.mxu0 0.0
    %354 = vmatpush1.msra.mxu0 0.0
    %355 = vmatprep.subr.mxu0 0.0
    %356 = vmatpush1.msra.mxu0 0.0
    %357 = vmatprep.subr.mxu0 0.0
    %358 = vmatpush1.msra.mxu0 0.0
    %359 = vmatprep.subr.mxu0 0.0
    %360 = vmatpush1.msra.mxu0 0.0
    %361 = vmatprep.subr.mxu0 0.0
    %362 = vmatpush1.msra.mxu0 0.0
    %363 = vmatprep.subr.mxu0 0.0
    %364 = vmatpush1.msra.mxu0 0.0
    %365 = vmatprep.mubr.f32.mxu0 0.0
    %366 = vmatmul.mubr.f32.gmra.mrb[0].mxu0 %v267
    %v367 = vpop.f32.mrb[0].mxu0
    %v368 = vadd.f32 0.0, %v367
    %v369 = vpop.f32.mrb[0].mxu0
    %370 = vdwg.mxu0
    %371 = vmatprep.subr.mxu0 0.0
    %372 = vmatpush1.msra.mxu0 %v276
    %373 = vmatprep.subr.mxu0 0.0
    %374 = vmatpush1.msra.mxu0 %v277
    %375 = vmatprep.subr.mxu0 0.0
    %376 = vmatpush1.msra.mxu0 %v278
    %377 = vmatprep.subr.mxu0 0.0
    %378 = vmatpush1.msra.mxu0 %v279
    %379 = vmatprep.subr.mxu0 0.0
    %380 = vmatpush1.msra.mxu0 %v280
    %381 = vmatprep.subr.mxu0 0.0
    %382 = vmatpush1.msra.mxu0 %v281
    %383 = vmatprep.subr.mxu0 0.0
    %384 = vmatpush1.msra.mxu0 %v282
    %385 = vmatprep.subr.mxu0 0.0
    %386 = vmatpush1.msra.mxu0 %v283
    %387 = vmatprep.subr.mxu0 0.0
    %388 = vmatpush1.msra.mxu0 %v284
    %389 = vmatprep.subr.mxu0 0.0
    %390 = vmatpush1.msra.mxu0 %v285
    %391 = vmatprep.subr.mxu0 0.0
    %392 = vmatpush1.msra.mxu0 %v286
    %393 = vmatprep.subr.mxu0 0.0
    %394 = vmatpush1.msra.mxu0 %v287
    %395 = vmatprep.subr.mxu0 0.0
    %396 = vmatpush1.msra.mxu0 %v288
    %397 = vmatprep.subr.mxu0 0.0
    %398 = vmatpush1.msra.mxu0 %v289
    %399 = vmatprep.subr.mxu0 0.0
    %400 = vmatpush1.msra.mxu0 %v290
    %401 = vmatprep.subr.mxu0 0.0
    %402 = vmatpush1.msra.mxu0 %v291
    %403 = vmatprep.subr.mxu0 0.0
    %404 = vmatpush1.msra.mxu0 0.0
    %405 = vmatprep.subr.mxu0 0.0
    %406 = vmatpush1.msra.mxu0 0.0
    %407 = vmatprep.subr.mxu0 0.0
    %408 = vmatpush1.msra.mxu0 0.0
    %409 = vmatprep.subr.mxu0 0.0
    %410 = vmatpush1.msra.mxu0 0.0
    %411 = vmatprep.subr.mxu0 0.0
    %412 = vmatpush1.msra.mxu0 0.0
    %413 = vmatprep.subr.mxu0 0.0
    %414 = vmatpush1.msra.mxu0 0.0
    %415 = vmatprep.subr.mxu0 0.0
    %416 = vmatpush1.msra.mxu0 0.0
    %417 = vmatprep.subr.mxu0 0.0
    %418 = vmatpush1.msra.mxu0 0.0
    %419 = vmatprep.subr.mxu0 0.0
    %420 = vmatpush1.msra.mxu0 0.0
    %421 = vmatprep.subr.mxu0 0.0
    %422 = vmatpush1.msra.mxu0 0.0
    %423 = vmatprep.subr.mxu0 0.0
    %424 = vmatpush1.msra.mxu0 0.0
    %425 = vmatprep.subr.mxu0 0.0
    %426 = vmatpush1.msra.mxu0 0.0
    %427 = vmatprep.subr.mxu0 0.0
    %428 = vmatpush1.msra.mxu0 0.0
    %429 = vmatprep.subr.mxu0 0.0
    %430 = vmatpush1.msra.mxu0 0.0
    %431 = vmatprep.subr.mxu0 0.0
    %432 = vmatpush1.msra.mxu0 0.0
    %433 = vmatprep.subr.mxu0 0.0
    %434 = vmatpush1.msra.mxu0 0.0
    %435 = vmatprep.mubr.f32.mxu0 0.0
    %436 = vmatmul.mubr.f32.gmra.mrb[0].mxu0 %v368
    %v437 = vpop.f32.mrb[0].mxu0
    %v438 = vadd.f32 0.0, %v437
    %v439 = vpop.f32.mrb[0].mxu0
    %440 = vdwg.mxu0
    %v441 = vmul.f32 %v438, 0.00125
    %v442 = vmul.f32 %v441, %v441
    %v444 = vrot.slane %v442, 4
    %v446 = vsub.f32 %v441, %v444
    %v447 = vmax.f32 %v446, 0.0
    %v448 = vadd.f32 %v447, 1e-05
    %v449 = vrsqrt.pop %v448
    %v450 = vld [vmem:[%s5] sm:$0xff]
    %v451 = vld [vmem:[%s5 + $0x8] sm:$0xff]
    %v452 = vld [vmem:[%s5 + $0x10] sm:$0xff]
    %v453 = vld [vmem:[%s5 + $0x18] sm:$0xff]
    %v454 = vld [vmem:[%s5 + $0x20] sm:$0xff]
    %v455 = vld [vmem:[%s5 + $0x28] sm:$0xff]
    %v456 = vld [vmem:[%s5 + $0x30] sm:$0xff]
    %v457 = vld [vmem:[%s5 + $0x38] sm:$0xff]
    %v459 = vrot.slane %v449, 4
    %vm460 = vcmask 31744
    %v462 = vsel %vm460, %v268, 0
    %v465 = vsel %vm460, %v269, 0
    %v468 = vsel %vm460, %v270, 0
    %v471 = vsel %vm460, %v271, 0
    %v474 = vsel %vm460, %v272, 0
    %v477 = vsel %vm460, %v273, 0
    %v480 = vsel %vm460, %v274, 0
    %v483 = vsel %vm460, %v275, 0
    %vm485 = vcmask 1043456
    %v486 = vsel %vm485, %v459, 0
    %488 = vmatprep.subr.mxu0 0.0
    %489 = vmatpush1.msra.mxu0 %v486
    %490 = vmatprep.subr.mxu0 0.0
    %491 = vmatpush1.msra.mxu0 0.0
    %492 = vmatprep.subr.mxu0 0.0
    %493 = vmatpush1.msra.mxu0 0.0
    %494 = vmatprep.subr.mxu0 0.0
    %495 = vmatpush1.msra.mxu0 0.0
    %496 = vmatprep.subr.mxu0 0.0
    %497 = vmatpush1.msra.mxu0 0.0
    %498 = vmatprep.subr.mxu0 0.0
    %499 = vmatpush1.msra.mxu0 0.0
    %500 = vmatprep.subr.mxu0 0.0
    %501 = vmatpush1.msra.mxu0 0.0
    %502 = vmatprep.subr.mxu0 0.0
    %503 = vmatpush1.msra.mxu0 0.0
    %504 = vmatprep.subr.mxu0 0.0
    %505 = vmatpush1.msra.mxu0 0.0
    %506 = vmatprep.subr.mxu0 0.0
    %507 = vmatpush1.msra.mxu0 0.0
    %508 = vmatprep.subr.mxu0 0.0
    %509 = vmatpush1.msra.mxu0 0.0
    %510 = vmatprep.subr.mxu0 0.0
    %511 = vmatpush1.msra.mxu0 0.0
    %512 = vmatprep.subr.mxu0 0.0
    %513 = vmatpush1.msra.mxu0 0.0
    %514 = vmatprep.subr.mxu0 0.0
    %515 = vmatpush1.msra.mxu0 0.0
    %516 = vmatprep.subr.mxu0 0.0
    %517 = vmatpush1.msra.mxu0 0.0
    %518 = vmatprep.subr.mxu0 0.0
    %519 = vmatpush1.msra.mxu0 0.0
    %520 = vmatprep.subr.mxu0 0.0
    %521 = vmatpush1.msra.mxu0 0.0
    %522 = vmatprep.subr.mxu0 0.0
    %523 = vmatpush1.msra.mxu0 0.0
    %524 = vmatprep.subr.mxu0 0.0
    %525 = vmatpush1.msra.mxu0 0.0
    %526 = vmatprep.subr.mxu0 0.0
    %527 = vmatpush1.msra.mxu0 0.0
    %528 = vmatprep.subr.mxu0 0.0
    %529 = vmatpush1.msra.mxu0 0.0
    %530 = vmatprep.subr.mxu0 0.0
    %531 = vmatpush1.msra.mxu0 0.0
    %532 = vmatprep.subr.mxu0 0.0
    %533 = vmatpush1.msra.mxu0 0.0
    %534 = vmatprep.subr.mxu0 0.0
    %535 = vmatpush1.msra.mxu0 0.0
    %536 = vmatprep.subr.mxu0 0.0
    %537 = vmatpush1.msra.mxu0 0.0
    %538 = vmatprep.subr.mxu0 0.0
    %539 = vmatpush1.msra.mxu0 0.0
    %540 = vmatprep.subr.mxu0 0.0
    %541 = vmatpush1.msra.mxu0 0.0
    %542 = vmatprep.subr.mxu0 0.0
    %543 = vmatpush1.msra.mxu0 0.0
    %544 = vmatprep.subr.mxu0 0.0
    %545 = vmatpush1.msra.mxu0 0.0
    %546 = vmatprep.subr.mxu0 0.0
    %547 = vmatpush1.msra.mxu0 0.0
    %548 = vmatprep.subr.mxu0 0.0
    %549 = vmatpush1.msra.mxu0 0.0
    %550 = vmatprep.subr.mxu0 0.0
    %551 = vmatpush1.msra.mxu0 0.0
    %552 = vmatprep.mubr.f32.mxu0 0.0
    %553 = vmatmul.mubr.f32.gmra.mrb[0].mxu0 %v462
    %v554 = vpop.f32.mrb[0].mxu0
    %v555 = vadd.f32 0.0, %v554
    %v556 = vpop.f32.mrb[0].mxu0
    %557 = vmatprep.mubr.f32.mxu0 0.0
    %558 = vmatmul.mubr.f32.gmra.mrb[0].mxu0 %v465
    %v559 = vpop.f32.mrb[0].mxu0
    %v560 = vadd.f32 0.0, %v559
    %v561 = vpop.f32.mrb[0].mxu0
    %562 = vmatprep.mubr.f32.mxu0 0.0
    %563 = vmatmul.mubr.f32.gmra.mrb[0].mxu0 %v468
    %v564 = vpop.f32.mrb[0].mxu0
    %v565 = vadd.f32 0.0, %v564
    %v566 = vpop.f32.mrb[0].mxu0
    %567 = vmatprep.mubr.f32.mxu0 0.0
    %568 = vmatmul.mubr.f32.gmra.mrb[0].mxu0 %v471
    %v569 = vpop.f32.mrb[0].mxu0
    %v570 = vadd.f32 0.0, %v569
    %v571 = vpop.f32.mrb[0].mxu0
    %572 = vmatprep.mubr.f32.mxu0 0.0
    %573 = vmatmul.mubr.f32.gmra.mrb[0].mxu0 %v474
    %v574 = vpop.f32.mrb[0].mxu0
    %v575 = vadd.f32 0.0, %v574
    %v576 = vpop.f32.mrb[0].mxu0
    %577 = vmatprep.mubr.f32.mxu0 0.0
    %578 = vmatmul.mubr.f32.gmra.mrb[0].mxu0 %v477
    %v579 = vpop.f32.mrb[0].mxu0
    %v580 = vadd.f32 0.0, %v579
    %v581 = vpop.f32.mrb[0].mxu0
    %582 = vmatprep.mubr.f32.mxu0 0.0
    %583 = vmatmul.mubr.f32.gmra.mrb[0].mxu0 %v480
    %v584 = vpop.f32.mrb[0].mxu0
    %v585 = vadd.f32 0.0, %v584
    %v586 = vpop.f32.mrb[0].mxu0
    %587 = vmatprep.mubr.f32.mxu0 0.0
    %588 = vmatmul.mubr.f32.gmra.mrb[0].mxu0 %v483
    %v589 = vpop.f32.mrb[0].mxu0
    %v590 = vadd.f32 0.0, %v589
    %v591 = vpop.f32.mrb[0].mxu0
    %592 = vdwg.mxu0
    %594 = vset.pattern.permute.xlu0 0
    %595 = vperm.xlu0 %594, %v450
    %v596 = vpop.permute.xlu0 %595
    %599 = vset.pattern.permute.xlu0 0
    %600 = vperm.xlu0 %599, %v451
    %v601 = vpop.permute.xlu0 %600
    %604 = vset.pattern.permute.xlu0 0
    %605 = vperm.xlu0 %604, %v452
    %v606 = vpop.permute.xlu0 %605
    %609 = vset.pattern.permute.xlu0 0
    %610 = vperm.xlu0 %609, %v453
    %v611 = vpop.permute.xlu0 %610
    %614 = vset.pattern.permute.xlu0 0
    %615 = vperm.xlu0 %614, %v454
    %v616 = vpop.permute.xlu0 %615
    %619 = vset.pattern.permute.xlu0 0
    %620 = vperm.xlu0 %619, %v455
    %v621 = vpop.permute.xlu0 %620
    %624 = vset.pattern.permute.xlu0 0
    %625 = vperm.xlu0 %624, %v456
    %v626 = vpop.permute.xlu0 %625
    %629 = vset.pattern.permute.xlu0 0
    %630 = vperm.xlu0 %629, %v457
    %v631 = vpop.permute.xlu0 %630
    %v633 = vmul.f32 %v555, %v596
    %v634 = vmul.f32 %v560, %v601
    %v635 = vmul.f32 %v565, %v606
    %v636 = vmul.f32 %v570, %v611
    %v637 = vmul.f32 %v575, %v616
    %v638 = vmul.f32 %v580, %v621
    %v639 = vmul.f32 %v585, %v626
    %v640 = vmul.f32 %v590, %v631
    %v642 = vsel %vm485, %v441, 0
    %644 = vmatprep.subr.mxu0 0.0
    %645 = vmatpush1.msra.mxu0 %v642
    %646 = vmatprep.subr.mxu0 0.0
    %647 = vmatpush1.msra.mxu0 0.0
    %648 = vmatprep.subr.mxu0 0.0
    %649 = vmatpush1.msra.mxu0 0.0
    %650 = vmatprep.subr.mxu0 0.0
    %651 = vmatpush1.msra.mxu0 0.0
    %652 = vmatprep.subr.mxu0 0.0
    %653 = vmatpush1.msra.mxu0 0.0
    %654 = vmatprep.subr.mxu0 0.0
    %655 = vmatpush1.msra.mxu0 0.0
    %656 = vmatprep.subr.mxu0 0.0
    %657 = vmatpush1.msra.mxu0 0.0
    %658 = vmatprep.subr.mxu0 0.0
    %659 = vmatpush1.msra.mxu0 0.0
    %660 = vmatprep.subr.mxu0 0.0
    %661 = vmatpush1.msra.mxu0 0.0
    %662 = vmatprep.subr.mxu0 0.0
    %663 = vmatpush1.msra.mxu0 0.0
    %664 = vmatprep.subr.mxu0 0.0
    %665 = vmatpush1.msra.mxu0 0.0
    %666 = vmatprep.subr.mxu0 0.0
    %667 = vmatpush1.msra.mxu0 0.0
    %668 = vmatprep.subr.mxu0 0.0
    %669 = vmatpush1.msra.mxu0 0.0
    %670 = vmatprep.subr.mxu0 0.0
    %671 = vmatpush1.msra.mxu0 0.0
    %672 = vmatprep.subr.mxu0 0.0
    %673 = vmatpush1.msra.mxu0 0.0
    %674 = vmatprep.subr.mxu0 0.0
    %675 = vmatpush1.msra.mxu0 0.0
    %676 = vmatprep.subr.mxu0 0.0
    %677 = vmatpush1.msra.mxu0 0.0
    %678 = vmatprep.subr.mxu0 0.0
    %679 = vmatpush1.msra.mxu0 0.0
    %680 = vmatprep.subr.mxu0 0.0
    %681 = vmatpush1.msra.mxu0 0.0
    %682 = vmatprep.subr.mxu0 0.0
    %683 = vmatpush1.msra.mxu0 0.0
    %684 = vmatprep.subr.mxu0 0.0
    %685 = vmatpush1.msra.mxu0 0.0
    %686 = vmatprep.subr.mxu0 0.0
    %687 = vmatpush1.msra.mxu0 0.0
    %688 = vmatprep.subr.mxu0 0.0
    %689 = vmatpush1.msra.mxu0 0.0
    %690 = vmatprep.subr.mxu0 0.0
    %691 = vmatpush1.msra.mxu0 0.0
    %692 = vmatprep.subr.mxu0 0.0
    %693 = vmatpush1.msra.mxu0 0.0
    %694 = vmatprep.subr.mxu0 0.0
    %695 = vmatpush1.msra.mxu0 0.0
    %696 = vmatprep.subr.mxu0 0.0
    %697 = vmatpush1.msra.mxu0 0.0
    %698 = vmatprep.subr.mxu0 0.0
    %699 = vmatpush1.msra.mxu0 0.0
    %700 = vmatprep.subr.mxu0 0.0
    %701 = vmatpush1.msra.mxu0 0.0
    %702 = vmatprep.subr.mxu0 0.0
    %703 = vmatpush1.msra.mxu0 0.0
    %704 = vmatprep.subr.mxu0 0.0
    %705 = vmatpush1.msra.mxu0 0.0
    %706 = vmatprep.subr.mxu0 0.0
    %707 = vmatpush1.msra.mxu0 0.0
    %708 = vmatprep.mubr.f32.mxu0 0.0
    %709 = vmatmul.mubr.f32.gmra.mrb[0].mxu0 %v462
    %v710 = vpop.f32.mrb[0].mxu0
    %v711 = vadd.f32 0.0, %v710
    %v712 = vpop.f32.mrb[0].mxu0
    %713 = vmatprep.mubr.f32.mxu0 0.0
    %714 = vmatmul.mubr.f32.gmra.mrb[0].mxu0 %v465
    %v715 = vpop.f32.mrb[0].mxu0
    %v716 = vadd.f32 0.0, %v715
    %v717 = vpop.f32.mrb[0].mxu0
    %718 = vmatprep.mubr.f32.mxu0 0.0
    %719 = vmatmul.mubr.f32.gmra.mrb[0].mxu0 %v468
    %v720 = vpop.f32.mrb[0].mxu0
    %v721 = vadd.f32 0.0, %v720
    %v722 = vpop.f32.mrb[0].mxu0
    %723 = vmatprep.mubr.f32.mxu0 0.0
    %724 = vmatmul.mubr.f32.gmra.mrb[0].mxu0 %v471
    %v725 = vpop.f32.mrb[0].mxu0
    %v726 = vadd.f32 0.0, %v725
    %v727 = vpop.f32.mrb[0].mxu0
    %728 = vmatprep.mubr.f32.mxu0 0.0
    %729 = vmatmul.mubr.f32.gmra.mrb[0].mxu0 %v474
    %v730 = vpop.f32.mrb[0].mxu0
    %v731 = vadd.f32 0.0, %v730
    %v732 = vpop.f32.mrb[0].mxu0
    %733 = vmatprep.mubr.f32.mxu0 0.0
    %734 = vmatmul.mubr.f32.gmra.mrb[0].mxu0 %v477
    %v735 = vpop.f32.mrb[0].mxu0
    %v736 = vadd.f32 0.0, %v735
    %v737 = vpop.f32.mrb[0].mxu0
    %738 = vmatprep.mubr.f32.mxu0 0.0
    %739 = vmatmul.mubr.f32.gmra.mrb[0].mxu0 %v480
    %v740 = vpop.f32.mrb[0].mxu0
    %v741 = vadd.f32 0.0, %v740
    %v742 = vpop.f32.mrb[0].mxu0
    %743 = vmatprep.mubr.f32.mxu0 0.0
    %744 = vmatmul.mubr.f32.gmra.mrb[0].mxu0 %v483
    %v745 = vpop.f32.mrb[0].mxu0
    %v746 = vadd.f32 0.0, %v745
    %v747 = vpop.f32.mrb[0].mxu0
    %748 = vdwg.mxu0
    %v749 = vmul.f32 %v711, %v633
    %v750 = vmul.f32 %v716, %v634
    %v751 = vmul.f32 %v721, %v635
    %v752 = vmul.f32 %v726, %v636
    %v753 = vmul.f32 %v731, %v637
    %v754 = vmul.f32 %v736, %v638
    %v755 = vmul.f32 %v741, %v639
    %v756 = vmul.f32 %v746, %v640
    %757 = vset.pattern.permute.xlu0 1
    %758 = vperm.xlu0 %757, %v450
    %v759 = vpop.permute.xlu0 %758
    %761 = vset.pattern.permute.xlu0 1
    %762 = vperm.xlu0 %761, %v451
    %v763 = vpop.permute.xlu0 %762
    %765 = vset.pattern.permute.xlu0 1
    %766 = vperm.xlu0 %765, %v452
    %v767 = vpop.permute.xlu0 %766
    %769 = vset.pattern.permute.xlu0 1
    %770 = vperm.xlu0 %769, %v453
    %v771 = vpop.permute.xlu0 %770
    %773 = vset.pattern.permute.xlu0 1
    %774 = vperm.xlu0 %773, %v454
    %v775 = vpop.permute.xlu0 %774
    %777 = vset.pattern.permute.xlu0 1
    %778 = vperm.xlu0 %777, %v455
    %v779 = vpop.permute.xlu0 %778
    %781 = vset.pattern.permute.xlu0 1
    %782 = vperm.xlu0 %781, %v456
    %v783 = vpop.permute.xlu0 %782
    %785 = vset.pattern.permute.xlu0 1
    %786 = vperm.xlu0 %785, %v457
    %v787 = vpop.permute.xlu0 %786
    %v789 = vsub.f32 %v759, %v749
    %v790 = vsub.f32 %v763, %v750
    %v791 = vsub.f32 %v767, %v751
    %v792 = vsub.f32 %v771, %v752
    %v793 = vsub.f32 %v775, %v753
    %v794 = vsub.f32 %v779, %v754
    %v795 = vsub.f32 %v783, %v755
    %v796 = vsub.f32 %v787, %v756
    %vm797 = vcmask 15360
    %v799 = vsel %vm797, %v633, 0
    %v802 = vsel %vm797, %v634, 0
    %v805 = vsel %vm797, %v635, 0
    %v808 = vsel %vm797, %v636, 0
    %v811 = vsel %vm797, %v637, 0
    %v814 = vsel %vm797, %v638, 0
    %v817 = vsel %vm797, %v639, 0
    %v820 = vsel %vm797, %v640, 0
    %vm822 = vcmask 1041408
    %v824 = vsel %vm822, %v292, 0
    %826 = vmatprep.subr.mxu0 0.0
    %827 = vmatpush1.msra.mxu0 %v824
    %828 = vmatprep.subr.mxu0 0.0
    %829 = vmatpush1.msra.mxu0 0.0
    %830 = vmatprep.subr.mxu0 0.0
    %831 = vmatpush1.msra.mxu0 0.0
    %832 = vmatprep.subr.mxu0 0.0
    %833 = vmatpush1.msra.mxu0 0.0
    %834 = vmatprep.subr.mxu0 0.0
    %835 = vmatpush1.msra.mxu0 0.0
    %836 = vmatprep.subr.mxu0 0.0
    %837 = vmatpush1.msra.mxu0 0.0
    %838 = vmatprep.subr.mxu0 0.0
    %839 = vmatpush1.msra.mxu0 0.0
    %840 = vmatprep.subr.mxu0 0.0
    %841 = vmatpush1.msra.mxu0 0.0
    %842 = vmatprep.subr.mxu0 0.0
    %843 = vmatpush1.msra.mxu0 0.0
    %844 = vmatprep.subr.mxu0 0.0
    %845 = vmatpush1.msra.mxu0 0.0
    %846 = vmatprep.subr.mxu0 0.0
    %847 = vmatpush1.msra.mxu0 0.0
    %848 = vmatprep.subr.mxu0 0.0
    %849 = vmatpush1.msra.mxu0 0.0
    %850 = vmatprep.subr.mxu0 0.0
    %851 = vmatpush1.msra.mxu0 0.0
    %852 = vmatprep.subr.mxu0 0.0
    %853 = vmatpush1.msra.mxu0 0.0
    %854 = vmatprep.subr.mxu0 0.0
    %855 = vmatpush1.msra.mxu0 0.0
    %856 = vmatprep.subr.mxu0 0.0
    %857 = vmatpush1.msra.mxu0 0.0
    %858 = vmatprep.subr.mxu0 0.0
    %859 = vmatpush1.msra.mxu0 0.0
    %860 = vmatprep.subr.mxu0 0.0
    %861 = vmatpush1.msra.mxu0 0.0
    %862 = vmatprep.subr.mxu0 0.0
    %863 = vmatpush1.msra.mxu0 0.0
    %864 = vmatprep.subr.mxu0 0.0
    %865 = vmatpush1.msra.mxu0 0.0
    %866 = vmatprep.subr.mxu0 0.0
    %867 = vmatpush1.msra.mxu0 0.0
    %868 = vmatprep.subr.mxu0 0.0
    %869 = vmatpush1.msra.mxu0 0.0
    %870 = vmatprep.subr.mxu0 0.0
    %871 = vmatpush1.msra.mxu0 0.0
    %872 = vmatprep.subr.mxu0 0.0
    %873 = vmatpush1.msra.mxu0 0.0
    %874 = vmatprep.subr.mxu0 0.0
    %875 = vmatpush1.msra.mxu0 0.0
    %876 = vmatprep.subr.mxu0 0.0
    %877 = vmatpush1.msra.mxu0 0.0
    %878 = vmatprep.subr.mxu0 0.0
    %879 = vmatpush1.msra.mxu0 0.0
    %880 = vmatprep.subr.mxu0 0.0
    %881 = vmatpush1.msra.mxu0 0.0
    %882 = vmatprep.subr.mxu0 0.0
    %883 = vmatpush1.msra.mxu0 0.0
    %884 = vmatprep.subr.mxu0 0.0
    %885 = vmatpush1.msra.mxu0 0.0
    %886 = vmatprep.subr.mxu0 0.0
    %887 = vmatpush1.msra.mxu0 0.0
    %888 = vmatprep.subr.mxu0 0.0
    %889 = vmatpush1.msra.mxu0 0.0
    %890 = vmatprep.mubr.f32.mxu0 0.0
    %891 = vmatmul.mubr.f32.gmra.mrb[0].mxu0 %v799
    %v892 = vpop.f32.mrb[0].mxu0
    %v893 = vadd.f32 0.0, %v892
    %v894 = vpop.f32.mrb[0].mxu0
    %895 = vmatprep.mubr.f32.mxu0 0.0
    %896 = vmatmul.mubr.f32.gmra.mrb[0].mxu0 %v802
    %v897 = vpop.f32.mrb[0].mxu0
    %v898 = vadd.f32 0.0, %v897
    %v899 = vpop.f32.mrb[0].mxu0
    %900 = vmatprep.mubr.f32.mxu0 0.0
    %901 = vmatmul.mubr.f32.gmra.mrb[0].mxu0 %v805
    %v902 = vpop.f32.mrb[0].mxu0
    %v903 = vadd.f32 0.0, %v902
    %v904 = vpop.f32.mrb[0].mxu0
    %905 = vmatprep.mubr.f32.mxu0 0.0
    %906 = vmatmul.mubr.f32.gmra.mrb[0].mxu0 %v808
    %v907 = vpop.f32.mrb[0].mxu0
    %v908 = vadd.f32 0.0, %v907
    %v909 = vpop.f32.mrb[0].mxu0
    %910 = vmatprep.mubr.f32.mxu0 0.0
    %911 = vmatmul.mubr.f32.gmra.mrb[0].mxu0 %v811
    %v912 = vpop.f32.mrb[0].mxu0
    %v913 = vadd.f32 0.0, %v912
    %v914 = vpop.f32.mrb[0].mxu0
    %915 = vmatprep.mubr.f32.mxu0 0.0
    %916 = vmatmul.mubr.f32.gmra.mrb[0].mxu0 %v814
    %v917 = vpop.f32.mrb[0].mxu0
    %v918 = vadd.f32 0.0, %v917
    %v919 = vpop.f32.mrb[0].mxu0
    %920 = vmatprep.mubr.f32.mxu0 0.0
    %921 = vmatmul.mubr.f32.gmra.mrb[0].mxu0 %v817
    %v922 = vpop.f32.mrb[0].mxu0
    %v923 = vadd.f32 0.0, %v922
    %v924 = vpop.f32.mrb[0].mxu0
    %925 = vmatprep.mubr.f32.mxu0 0.0
    %926 = vmatmul.mubr.f32.gmra.mrb[0].mxu0 %v820
    %v927 = vpop.f32.mrb[0].mxu0
    %v928 = vadd.f32 0.0, %v927
    %v929 = vpop.f32.mrb[0].mxu0
    %930 = vdwg.mxu0
    %v932 = vsel %vm797, %v789, 0
    %v935 = vsel %vm797, %v790, 0
    %v938 = vsel %vm797, %v791, 0
    %v941 = vsel %vm797, %v792, 0
    %v944 = vsel %vm797, %v793, 0
    %v947 = vsel %vm797, %v794, 0
    %v950 = vsel %vm797, %v795, 0
    %v953 = vsel %vm797, %v796, 0
    %955 = vmatprep.subr.mxu0 0.0
    %956 = vmatpush1.msra.mxu0 %v824
    %957 = vmatprep.subr.mxu0 0.0
    %958 = vmatpush1.msra.mxu0 0.0
    %959 = vmatprep.subr.mxu0 0.0
    %960 = vmatpush1.msra.mxu0 0.0
    %961 = vmatprep.subr.mxu0 0.0
    %962 = vmatpush1.msra.mxu0 0.0
    %963 = vmatprep.subr.mxu0 0.0
    %964 = vmatpush1.msra.mxu0 0.0
    %965 = vmatprep.subr.mxu0 0.0
    %966 = vmatpush1.msra.mxu0 0.0
    %967 = vmatprep.subr.mxu0 0.0
    %968 = vmatpush1.msra.mxu0 0.0
    %969 = vmatprep.subr.mxu0 0.0
    %970 = vmatpush1.msra.mxu0 0.0
    %971 = vmatprep.subr.mxu0 0.0
    %972 = vmatpush1.msra.mxu0 0.0
    %973 = vmatprep.subr.mxu0 0.0
    %974 = vmatpush1.msra.mxu0 0.0
    %975 = vmatprep.subr.mxu0 0.0
    %976 = vmatpush1.msra.mxu0 0.0
    %977 = vmatprep.subr.mxu0 0.0
    %978 = vmatpush1.msra.mxu0 0.0
    %979 = vmatprep.subr.mxu0 0.0
    %980 = vmatpush1.msra.mxu0 0.0
    %981 = vmatprep.subr.mxu0 0.0
    %982 = vmatpush1.msra.mxu0 0.0
    %983 = vmatprep.subr.mxu0 0.0
    %984 = vmatpush1.msra.mxu0 0.0
    %985 = vmatprep.subr.mxu0 0.0
    %986 = vmatpush1.msra.mxu0 0.0
    %987 = vmatprep.subr.mxu0 0.0
    %988 = vmatpush1.msra.mxu0 0.0
    %989 = vmatprep.subr.mxu0 0.0
    %990 = vmatpush1.msra.mxu0 0.0
    %991 = vmatprep.subr.mxu0 0.0
    %992 = vmatpush1.msra.mxu0 0.0
    %993 = vmatprep.subr.mxu0 0.0
    %994 = vmatpush1.msra.mxu0 0.0
    %995 = vmatprep.subr.mxu0 0.0
    %996 = vmatpush1.msra.mxu0 0.0
    %997 = vmatprep.subr.mxu0 0.0
    %998 = vmatpush1.msra.mxu0 0.0
    %999 = vmatprep.subr.mxu0 0.0
    %1000 = vmatpush1.msra.mxu0 0.0
    %1001 = vmatprep.subr.mxu0 0.0
    %1002 = vmatpush1.msra.mxu0 0.0
    %1003 = vmatprep.subr.mxu0 0.0
    %1004 = vmatpush1.msra.mxu0 0.0
    %1005 = vmatprep.subr.mxu0 0.0
    %1006 = vmatpush1.msra.mxu0 0.0
    %1007 = vmatprep.subr.mxu0 0.0
    %1008 = vmatpush1.msra.mxu0 0.0
    %1009 = vmatprep.subr.mxu0 0.0
    %1010 = vmatpush1.msra.mxu0 0.0
    %1011 = vmatprep.subr.mxu0 0.0
    %1012 = vmatpush1.msra.mxu0 0.0
    %1013 = vmatprep.subr.mxu0 0.0
    %1014 = vmatpush1.msra.mxu0 0.0
    %1015 = vmatprep.subr.mxu0 0.0
    %1016 = vmatpush1.msra.mxu0 0.0
    %1017 = vmatprep.subr.mxu0 0.0
    %1018 = vmatpush1.msra.mxu0 0.0
    %1019 = vmatprep.mubr.f32.mxu0 0.0
    %1020 = vmatmul.mubr.f32.gmra.mrb[0].mxu0 %v932
    %v1021 = vpop.f32.mrb[0].mxu0
    %v1022 = vadd.f32 0.0, %v1021
    %v1023 = vpop.f32.mrb[0].mxu0
    %1024 = vmatprep.mubr.f32.mxu0 0.0
    %1025 = vmatmul.mubr.f32.gmra.mrb[0].mxu0 %v935
    %v1026 = vpop.f32.mrb[0].mxu0
    %v1027 = vadd.f32 0.0, %v1026
    %v1028 = vpop.f32.mrb[0].mxu0
    %1029 = vmatprep.mubr.f32.mxu0 0.0
    %1030 = vmatmul.mubr.f32.gmra.mrb[0].mxu0 %v938
    %v1031 = vpop.f32.mrb[0].mxu0
    %v1032 = vadd.f32 0.0, %v1031
    %v1033 = vpop.f32.mrb[0].mxu0
    %1034 = vmatprep.mubr.f32.mxu0 0.0
    %1035 = vmatmul.mubr.f32.gmra.mrb[0].mxu0 %v941
    %v1036 = vpop.f32.mrb[0].mxu0
    %v1037 = vadd.f32 0.0, %v1036
    %v1038 = vpop.f32.mrb[0].mxu0
    %1039 = vmatprep.mubr.f32.mxu0 0.0
    %1040 = vmatmul.mubr.f32.gmra.mrb[0].mxu0 %v944
    %v1041 = vpop.f32.mrb[0].mxu0
    %v1042 = vadd.f32 0.0, %v1041
    %v1043 = vpop.f32.mrb[0].mxu0
    %1044 = vmatprep.mubr.f32.mxu0 0.0
    %1045 = vmatmul.mubr.f32.gmra.mrb[0].mxu0 %v947
    %v1046 = vpop.f32.mrb[0].mxu0
    %v1047 = vadd.f32 0.0, %v1046
    %v1048 = vpop.f32.mrb[0].mxu0
    %1049 = vmatprep.mubr.f32.mxu0 0.0
    %1050 = vmatmul.mubr.f32.gmra.mrb[0].mxu0 %v950
    %v1051 = vpop.f32.mrb[0].mxu0
    %v1052 = vadd.f32 0.0, %v1051
    %v1053 = vpop.f32.mrb[0].mxu0
    %1054 = vmatprep.mubr.f32.mxu0 0.0
    %1055 = vmatmul.mubr.f32.gmra.mrb[0].mxu0 %v953
    %v1056 = vpop.f32.mrb[0].mxu0
    %v1057 = vadd.f32 0.0, %v1056
    %v1058 = vpop.f32.mrb[0].mxu0
    %1059 = vdwg.mxu0
    %v1060 = vmul.f32 %v237, %v893
    %v1061 = vmul.f32 %v240, %v898
    %v1062 = vmul.f32 %v245, %v903
    %v1063 = vmul.f32 %v248, %v908
    %v1064 = vmul.f32 %v253, %v913
    %v1065 = vmul.f32 %v256, %v918
    %v1066 = vmul.f32 %v261, %v923
    %v1067 = vmul.f32 %v264, %v928
    %v1068 = vadd.f32 %v1060, %v1022
    %v1069 = vadd.f32 %v1061, %v1027
    %v1070 = vadd.f32 %v1062, %v1032
    %v1071 = vadd.f32 %v1063, %v1037
    %v1072 = vadd.f32 %v1064, %v1042
    %v1073 = vadd.f32 %v1065, %v1047
    %v1074 = vadd.f32 %v1066, %v1052
    %v1075 = vadd.f32 %v1067, %v1057
    %v1076 = vmax.f32 %v1068, 0.0
    %v1077 = vmax.f32 %v1069, 0.0
    %v1078 = vmax.f32 %v1070, 0.0
    %v1079 = vmax.f32 %v1071, 0.0
    %v1080 = vmax.f32 %v1072, 0.0
    %v1081 = vmax.f32 %v1073, 0.0
    %v1082 = vmax.f32 %v1074, 0.0
    %v1083 = vmax.f32 %v1075, 0.0
    %v1084 = vpack.c.bf16 %v1077, %v1076
    %v1085 = vpack.c.bf16 %v1079, %v1078
    %v1086 = vpack.c.bf16 %v1081, %v1080
    %v1087 = vpack.c.bf16 %v1083, %v1082
    %1092 = vrot.lane.b32.xlu0 %v1084, 1
    %v1093 = vpop.permute.xlu0 %1092
    %1094 = vrot.lane.b32.xlu0 %v1085, 1
    %v1095 = vpop.permute.xlu0 %1094
    %1096 = vrot.lane.b32.xlu0 %v1086, 1
    %v1097 = vpop.permute.xlu0 %1096
    %1098 = vrot.lane.b32.xlu0 %v1087, 1
    %v1099 = vpop.permute.xlu0 %1098
    %1108 = vrot.lane.b32.xlu0 %v1084, 127
    %v1109 = vpop.permute.xlu0 %1108
    %1110 = vrot.lane.b32.xlu0 %v1085, 127
    %v1111 = vpop.permute.xlu0 %1110
    %1112 = vrot.lane.b32.xlu0 %v1086, 127
    %v1113 = vpop.permute.xlu0 %1112
    %1114 = vrot.lane.b32.xlu0 %v1087, 127
    %v1115 = vpop.permute.xlu0 %1114
    %v1124 = vld [vmem:[%s7] sm:$0xff]
    %v1125 = vld [vmem:[%s7 + $0x8] sm:$0xff]
    %v1126 = vld [vmem:[%s7 + $0x10] sm:$0xff]
    %v1127 = vld [vmem:[%s7 + $0x18] sm:$0xff]
    %v1128 = vld [vmem:[%s7 + $0x20] sm:$0xff]
    %v1129 = vld [vmem:[%s7 + $0x28] sm:$0xff]
    %v1130 = vld [vmem:[%s7 + $0x30] sm:$0xff]
    %v1131 = vld [vmem:[%s7 + $0x38] sm:$0xff]
    %v1132 = vld [vmem:[%s7 + $0x40] sm:$0xff]
    %v1133 = vld [vmem:[%s7 + $0x48] sm:$0xff]
    %v1134 = vld [vmem:[%s7 + $0x50] sm:$0xff]
    %v1135 = vld [vmem:[%s7 + $0x58] sm:$0xff]
    %v1136 = vld [vmem:[%s7 + $0x60] sm:$0xff]
    %v1137 = vld [vmem:[%s7 + $0x68] sm:$0xff]
    %v1138 = vld [vmem:[%s7 + $0x70] sm:$0xff]
    %v1139 = vld [vmem:[%s7 + $0x78] sm:$0xff]
    %v1156 = vunpack.c.l.b16 %v1124
    %v1157 = vunpack.c.h.b16 %v1124
    %v1158 = vunpack.c.l.b16 %v1125
    %v1159 = vunpack.c.h.b16 %v1125
    %v1160 = vunpack.c.l.b16 %v1126
    %v1161 = vunpack.c.h.b16 %v1126
    %v1162 = vunpack.c.l.b16 %v1127
    %v1163 = vunpack.c.h.b16 %v1127
    %v1164 = vunpack.c.l.b16 %v1128
    %v1165 = vunpack.c.h.b16 %v1128
    %v1166 = vunpack.c.l.b16 %v1129
    %v1167 = vunpack.c.h.b16 %v1129
    %v1168 = vunpack.c.l.b16 %v1130
    %v1169 = vunpack.c.h.b16 %v1130
    %v1170 = vunpack.c.l.b16 %v1131
    %v1171 = vunpack.c.h.b16 %v1131
    %v1172 = vunpack.c.l.b16 %v1132
    %v1173 = vunpack.c.h.b16 %v1132
    %v1174 = vunpack.c.l.b16 %v1133
    %v1175 = vunpack.c.h.b16 %v1133
    %v1176 = vunpack.c.l.b16 %v1134
    %v1177 = vunpack.c.h.b16 %v1134
    %v1178 = vunpack.c.l.b16 %v1135
    %v1179 = vunpack.c.h.b16 %v1135
    %v1180 = vunpack.c.l.b16 %v1136
    %v1181 = vunpack.c.h.b16 %v1136
    %v1182 = vunpack.c.l.b16 %v1137
    %v1183 = vunpack.c.h.b16 %v1137
    %v1184 = vunpack.c.l.b16 %v1138
    %v1185 = vunpack.c.h.b16 %v1138
    %v1186 = vunpack.c.l.b16 %v1139
    %v1187 = vunpack.c.h.b16 %v1139
    %v1188 = vpack.c.b16 %v1158, %v1156
    %v1189 = vpack.c.b16 %v1159, %v1157
    %v1190 = vpack.c.b16 %v1162, %v1160
    %v1191 = vpack.c.b16 %v1163, %v1161
    %v1192 = vpack.c.b16 %v1166, %v1164
    %v1193 = vpack.c.b16 %v1167, %v1165
    %v1194 = vpack.c.b16 %v1170, %v1168
    %v1195 = vpack.c.b16 %v1171, %v1169
    %v1196 = vpack.c.b16 %v1174, %v1172
    %v1197 = vpack.c.b16 %v1175, %v1173
    %v1198 = vpack.c.b16 %v1178, %v1176
    %v1199 = vpack.c.b16 %v1179, %v1177
    %v1200 = vpack.c.b16 %v1182, %v1180
    %v1201 = vpack.c.b16 %v1183, %v1181
    %v1202 = vpack.c.b16 %v1186, %v1184
    %v1203 = vpack.c.b16 %v1187, %v1185
    %vm1212 = vcmask 523264
    %v1214 = vsel %vm1212, %v1189, 0
    %v1217 = vsel %vm1212, %v1191, 0
    %v1220 = vsel %vm1212, %v1193, 0
    %v1223 = vsel %vm1212, %v1195, 0
    %v1226 = vsel %vm1212, %v1197, 0
    %v1229 = vsel %vm1212, %v1199, 0
    %v1232 = vsel %vm1212, %v1201, 0
    %v1235 = vsel %vm1212, %v1203, 0
    %1237 = vmatprep.subr.bf16.mxu0 0
    %1238 = vmatpush1.bf16.msra.mxu0 %v1093
    %1239 = vmatprep.subr.bf16.mxu0 0
    %1240 = vmatpush1.bf16.msra.mxu0 %v1095
    %1241 = vmatprep.subr.bf16.mxu0 0
    %1242 = vmatpush1.bf16.msra.mxu0 %v1097
    %1243 = vmatprep.subr.bf16.mxu0 0
    %1244 = vmatpush1.bf16.msra.mxu0 %v1099
    %1245 = vmatprep.subr.bf16.mxu0 0
    %1246 = vmatpush1.bf16.msra.mxu0 %v1084
    %1247 = vmatprep.subr.bf16.mxu0 0
    %1248 = vmatpush1.bf16.msra.mxu0 %v1085
    %1249 = vmatprep.subr.bf16.mxu0 0
    %1250 = vmatpush1.bf16.msra.mxu0 %v1086
    %1251 = vmatprep.subr.bf16.mxu0 0
    %1252 = vmatpush1.bf16.msra.mxu0 %v1087
    %1253 = vmatprep.subr.bf16.mxu0 0
    %1254 = vmatpush1.bf16.msra.mxu0 %v1109
    %1255 = vmatprep.subr.bf16.mxu0 0
    %1256 = vmatpush1.bf16.msra.mxu0 %v1111
    %1257 = vmatprep.subr.bf16.mxu0 0
    %1258 = vmatpush1.bf16.msra.mxu0 %v1113
    %1259 = vmatprep.subr.bf16.mxu0 0
    %1260 = vmatpush1.bf16.msra.mxu0 %v1115
    %1261 = vmatprep.subr.bf16.mxu0 0
    %1262 = vmatpush1.bf16.msra.mxu0 0
    %1263 = vmatprep.subr.bf16.mxu0 0
    %1264 = vmatpush1.bf16.msra.mxu0 0
    %1265 = vmatprep.subr.bf16.mxu0 0
    %1266 = vmatpush1.bf16.msra.mxu0 0
    %1267 = vmatprep.subr.bf16.mxu0 0
    %1268 = vmatpush1.bf16.msra.mxu0 0
    %1269 = vmatprep.mubr.bf16.mxu0 %v1214
    %1270 = vmatmul.mubr.bf16.gmra.mrb[0].mxu0 %v1188
    %v1271 = vpop.f32.mrb[0].mxu0
    %v1272 = vadd.f32 0.0, %v1271
    %v1273 = vpop.f32.mrb[0].mxu0
    %v1274 = vpop.f32.mrb[0].mxu0
    %v1275 = vadd.f32 0.0, %v1274
    %v1276 = vpop.f32.mrb[0].mxu0
    %1277 = vmatprep.mubr.bf16.mxu0 %v1217
    %1278 = vmatmul.mubr.bf16.gmra.mrb[0].mxu0 %v1190
    %v1279 = vpop.f32.mrb[0].mxu0
    %v1280 = vadd.f32 0.0, %v1279
    %v1281 = vpop.f32.mrb[0].mxu0
    %v1282 = vpop.f32.mrb[0].mxu0
    %v1283 = vadd.f32 0.0, %v1282
    %v1284 = vpop.f32.mrb[0].mxu0
    %1285 = vmatprep.mubr.bf16.mxu0 %v1220
    %1286 = vmatmul.mubr.bf16.gmra.mrb[0].mxu0 %v1192
    %v1287 = vpop.f32.mrb[0].mxu0
    %v1288 = vadd.f32 0.0, %v1287
    %v1289 = vpop.f32.mrb[0].mxu0
    %v1290 = vpop.f32.mrb[0].mxu0
    %v1291 = vadd.f32 0.0, %v1290
    %v1292 = vpop.f32.mrb[0].mxu0
    %1293 = vmatprep.mubr.bf16.mxu0 %v1223
    %1294 = vmatmul.mubr.bf16.gmra.mrb[0].mxu0 %v1194
    %v1295 = vpop.f32.mrb[0].mxu0
    %v1296 = vadd.f32 0.0, %v1295
    %v1297 = vpop.f32.mrb[0].mxu0
    %v1298 = vpop.f32.mrb[0].mxu0
    %v1299 = vadd.f32 0.0, %v1298
    %v1300 = vpop.f32.mrb[0].mxu0
    %1301 = vmatprep.mubr.bf16.mxu0 %v1226
    %1302 = vmatmul.mubr.bf16.gmra.mrb[0].mxu0 %v1196
    %v1303 = vpop.f32.mrb[0].mxu0
    %v1304 = vadd.f32 0.0, %v1303
    %v1305 = vpop.f32.mrb[0].mxu0
    %v1306 = vpop.f32.mrb[0].mxu0
    %v1307 = vadd.f32 0.0, %v1306
    %v1308 = vpop.f32.mrb[0].mxu0
    %1309 = vmatprep.mubr.bf16.mxu0 %v1229
    %1310 = vmatmul.mubr.bf16.gmra.mrb[0].mxu0 %v1198
    %v1311 = vpop.f32.mrb[0].mxu0
    %v1312 = vadd.f32 0.0, %v1311
    %v1313 = vpop.f32.mrb[0].mxu0
    %v1314 = vpop.f32.mrb[0].mxu0
    %v1315 = vadd.f32 0.0, %v1314
    %v1316 = vpop.f32.mrb[0].mxu0
    %1317 = vmatprep.mubr.bf16.mxu0 %v1232
    %1318 = vmatmul.mubr.bf16.gmra.mrb[0].mxu0 %v1200
    %v1319 = vpop.f32.mrb[0].mxu0
    %v1320 = vadd.f32 0.0, %v1319
    %v1321 = vpop.f32.mrb[0].mxu0
    %v1322 = vpop.f32.mrb[0].mxu0
    %v1323 = vadd.f32 0.0, %v1322
    %v1324 = vpop.f32.mrb[0].mxu0
    %1325 = vmatprep.mubr.bf16.mxu0 %v1235
    %1326 = vmatmul.mubr.bf16.gmra.mrb[0].mxu0 %v1202
    %v1327 = vpop.f32.mrb[0].mxu0
    %v1328 = vadd.f32 0.0, %v1327
    %v1329 = vpop.f32.mrb[0].mxu0
    %v1330 = vpop.f32.mrb[0].mxu0
    %v1331 = vadd.f32 0.0, %v1330
    %v1332 = vpop.f32.mrb[0].mxu0
    %1333 = vdwg.mxu0
    %v1334 = vpack.c.bf16 %v1275, %v1272
    %v1335 = vpack.c.bf16 %v1283, %v1280
    %v1336 = vpack.c.bf16 %v1291, %v1288
    %v1337 = vpack.c.bf16 %v1299, %v1296
    %v1338 = vpack.c.bf16 %v1307, %v1304
    %v1339 = vpack.c.bf16 %v1315, %v1312
    %v1340 = vpack.c.bf16 %v1323, %v1320
    %v1341 = vpack.c.bf16 %v1331, %v1328
    %v1342 = vld [vmem:[%s59] sm:$0xf]
    %v1343 = vld [vmem:[%s59 + $0x4] sm:$0xf]
    %v1344 = vld [vmem:[%s59 + $0x8] sm:$0xf]
    %v1345 = vld [vmem:[%s59 + $0xc] sm:$0xf]
    %v1346 = vld [vmem:[%s59 + $0x10] sm:$0xf]
    %v1347 = vld [vmem:[%s59 + $0x14] sm:$0xf]
    %v1348 = vld [vmem:[%s59 + $0x18] sm:$0xf]
    %v1349 = vld [vmem:[%s59 + $0x1c] sm:$0xf]
    %v1350 = vld [vmem:[%s59 + $0x20] sm:$0xf]
    %v1351 = vld [vmem:[%s59 + $0x24] sm:$0xf]
    %v1352 = vld [vmem:[%s59 + $0x28] sm:$0xf]
    %v1353 = vld [vmem:[%s59 + $0x2c] sm:$0xf]
    %v1354 = vld [vmem:[%s59 + $0x30] sm:$0xf]
    %v1355 = vld [vmem:[%s59 + $0x34] sm:$0xf]
    %v1356 = vld [vmem:[%s59 + $0x38] sm:$0xf]
    %v1357 = vld [vmem:[%s59 + $0x3c] sm:$0xf]
    %v1374 = vunpack.c.l.b16 %v1342
    %v1375 = vunpack.c.l.b16 %v1343
    %v1376 = vunpack.c.l.b16 %v1344
    %v1377 = vunpack.c.l.b16 %v1345
    %v1378 = vunpack.c.l.b16 %v1346
    %v1379 = vunpack.c.l.b16 %v1347
    %v1380 = vunpack.c.l.b16 %v1348
    %v1381 = vunpack.c.l.b16 %v1349
    %v1382 = vunpack.c.l.b16 %v1350
    %v1383 = vunpack.c.l.b16 %v1351
    %v1384 = vunpack.c.l.b16 %v1352
    %v1385 = vunpack.c.l.b16 %v1353
    %v1386 = vunpack.c.l.b16 %v1354
    %v1387 = vunpack.c.l.b16 %v1355
    %v1388 = vunpack.c.l.b16 %v1356
    %v1389 = vunpack.c.l.b16 %v1357
    %v1390 = vpack.c.b16 %v1375, %v1374
    %v1391 = vpack.c.b16 %v1377, %v1376
    %v1392 = vpack.c.b16 %v1379, %v1378
    %v1393 = vpack.c.b16 %v1381, %v1380
    %v1394 = vpack.c.b16 %v1383, %v1382
    %v1395 = vpack.c.b16 %v1385, %v1384
    %v1396 = vpack.c.b16 %v1387, %v1386
    %v1397 = vpack.c.b16 %v1389, %v1388
    %1406 = vmatprep.subr.bf16.mxu0 0
    %1407 = vmatpush1.bf16.msra.mxu0 %v1390
    %1408 = vmatprep.subr.bf16.mxu0 0
    %1409 = vmatpush1.bf16.msra.mxu0 %v1391
    %1410 = vmatprep.subr.bf16.mxu0 0
    %1411 = vmatpush1.bf16.msra.mxu0 %v1392
    %1412 = vmatprep.subr.bf16.mxu0 0
    %1413 = vmatpush1.bf16.msra.mxu0 %v1393
    %1414 = vmatprep.subr.bf16.mxu0 0
    %1415 = vmatpush1.bf16.msra.mxu0 %v1394
    %1416 = vmatprep.subr.bf16.mxu0 0
    %1417 = vmatpush1.bf16.msra.mxu0 %v1395
    %1418 = vmatprep.subr.bf16.mxu0 0
    %1419 = vmatpush1.bf16.msra.mxu0 %v1396
    %1420 = vmatprep.subr.bf16.mxu0 0
    %1421 = vmatpush1.bf16.msra.mxu0 %v1397
    %1422 = vmatprep.subr.bf16.mxu0 0
    %1423 = vmatpush1.bf16.msra.mxu0 0
    %1424 = vmatprep.subr.bf16.mxu0 0
    %1425 = vmatpush1.bf16.msra.mxu0 0
    %1426 = vmatprep.subr.bf16.mxu0 0
    %1427 = vmatpush1.bf16.msra.mxu0 0
    %1428 = vmatprep.subr.bf16.mxu0 0
    %1429 = vmatpush1.bf16.msra.mxu0 0
    %1430 = vmatprep.subr.bf16.mxu0 0
    %1431 = vmatpush1.bf16.msra.mxu0 0
    %1432 = vmatprep.subr.bf16.mxu0 0
    %1433 = vmatpush1.bf16.msra.mxu0 0
    %1434 = vmatprep.subr.bf16.mxu0 0
    %1435 = vmatpush1.bf16.msra.mxu0 0
    %1436 = vmatprep.subr.bf16.mxu0 0
    %1437 = vmatpush1.bf16.msra.mxu0 0
    %1438 = vmatprep.mubr.bf16.mxu0 0
    %1439 = vmatmul.mubr.bf16.gmra.mrb[0].mxu0 %v1334
    %v1440 = vpop.f32.mrb[0].mxu0
    %v1441 = vadd.f32 0.0, %v1440
    %v1442 = vpop.f32.mrb[0].mxu0
    %v1443 = vpop.f32.mrb[0].mxu0
    %v1444 = vadd.f32 0.0, %v1443
    %v1445 = vpop.f32.mrb[0].mxu0
    %1446 = vmatprep.mubr.bf16.mxu0 0
    %1447 = vmatmul.mubr.bf16.gmra.mrb[0].mxu0 %v1335
    %v1448 = vpop.f32.mrb[0].mxu0
    %v1449 = vadd.f32 0.0, %v1448
    %v1450 = vpop.f32.mrb[0].mxu0
    %v1451 = vpop.f32.mrb[0].mxu0
    %v1452 = vadd.f32 0.0, %v1451
    %v1453 = vpop.f32.mrb[0].mxu0
    %1454 = vmatprep.mubr.bf16.mxu0 0
    %1455 = vmatmul.mubr.bf16.gmra.mrb[0].mxu0 %v1336
    %v1456 = vpop.f32.mrb[0].mxu0
    %v1457 = vadd.f32 0.0, %v1456
    %v1458 = vpop.f32.mrb[0].mxu0
    %v1459 = vpop.f32.mrb[0].mxu0
    %v1460 = vadd.f32 0.0, %v1459
    %v1461 = vpop.f32.mrb[0].mxu0
    %1462 = vmatprep.mubr.bf16.mxu0 0
    %1463 = vmatmul.mubr.bf16.gmra.mrb[0].mxu0 %v1337
    %v1464 = vpop.f32.mrb[0].mxu0
    %v1465 = vadd.f32 0.0, %v1464
    %v1466 = vpop.f32.mrb[0].mxu0
    %v1467 = vpop.f32.mrb[0].mxu0
    %v1468 = vadd.f32 0.0, %v1467
    %v1469 = vpop.f32.mrb[0].mxu0
    %1470 = vmatprep.mubr.bf16.mxu0 0
    %1471 = vmatmul.mubr.bf16.gmra.mrb[0].mxu0 %v1338
    %v1472 = vpop.f32.mrb[0].mxu0
    %v1473 = vadd.f32 0.0, %v1472
    %v1474 = vpop.f32.mrb[0].mxu0
    %v1475 = vpop.f32.mrb[0].mxu0
    %v1476 = vadd.f32 0.0, %v1475
    %v1477 = vpop.f32.mrb[0].mxu0
    %1478 = vmatprep.mubr.bf16.mxu0 0
    %1479 = vmatmul.mubr.bf16.gmra.mrb[0].mxu0 %v1339
    %v1480 = vpop.f32.mrb[0].mxu0
    %v1481 = vadd.f32 0.0, %v1480
    %v1482 = vpop.f32.mrb[0].mxu0
    %v1483 = vpop.f32.mrb[0].mxu0
    %v1484 = vadd.f32 0.0, %v1483
    %v1485 = vpop.f32.mrb[0].mxu0
    %1486 = vmatprep.mubr.bf16.mxu0 0
    %1487 = vmatmul.mubr.bf16.gmra.mrb[0].mxu0 %v1340
    %v1488 = vpop.f32.mrb[0].mxu0
    %v1489 = vadd.f32 0.0, %v1488
    %v1490 = vpop.f32.mrb[0].mxu0
    %v1491 = vpop.f32.mrb[0].mxu0
    %v1492 = vadd.f32 0.0, %v1491
    %v1493 = vpop.f32.mrb[0].mxu0
    %1494 = vmatprep.mubr.bf16.mxu0 0
    %1495 = vmatmul.mubr.bf16.gmra.mrb[0].mxu0 %v1341
    %v1496 = vpop.f32.mrb[0].mxu0
    %v1497 = vadd.f32 0.0, %v1496
    %v1498 = vpop.f32.mrb[0].mxu0
    %v1499 = vpop.f32.mrb[0].mxu0
    %v1500 = vadd.f32 0.0, %v1499
    %v1501 = vpop.f32.mrb[0].mxu0
    %1502 = vdwg.mxu0
    %v1503 = vld [vmem:[%s53] sm:$0xff]
    %v1504 = vld [vmem:[%s53 + $0x8] sm:$0xff]
    %v1505 = vld [vmem:[%s53 + $0x10] sm:$0xff]
    %v1506 = vld [vmem:[%s53 + $0x18] sm:$0xff]
    %v1507 = vld [vmem:[%s55] sm:$0xff]
    %v1508 = vld [vmem:[%s55 + $0x8] sm:$0xff]
    %v1509 = vld [vmem:[%s55 + $0x10] sm:$0xff]
    %v1510 = vld [vmem:[%s55 + $0x18] sm:$0xff]
    %v1511 = vld [vmem:[%s55 + $0x20] sm:$0xff]
    %v1512 = vld [vmem:[%s55 + $0x28] sm:$0xff]
    %v1513 = vld [vmem:[%s55 + $0x30] sm:$0xff]
    %v1514 = vld [vmem:[%s55 + $0x38] sm:$0xff]
    %v1515 = vld [vmem:[%s33] sm:$0xff]
    %v1516 = vld [vmem:[%s33 + $0x8] sm:$0xff]
    %v1517 = vld [vmem:[%s33 + $0x10] sm:$0xff]
    %v1518 = vld [vmem:[%s33 + $0x18] sm:$0xff]
    %v1519 = vld [vmem:[%s33 + $0x20] sm:$0xff]
    %v1520 = vld [vmem:[%s33 + $0x28] sm:$0xff]
    %v1521 = vld [vmem:[%s33 + $0x30] sm:$0xff]
    %v1522 = vld [vmem:[%s33 + $0x38] sm:$0xff]
    %v1523 = vld [vmem:[%s35] sm:$0x3]
    %v1524 = vmul.f32 %v1473, %v1473
    %v1525 = vmul.f32 %v1476, %v1476
    %v1526 = vmul.f32 %v1481, %v1481
    %v1527 = vmul.f32 %v1484, %v1484
    %v1528 = vmul.f32 %v1489, %v1489
    %v1529 = vmul.f32 %v1492, %v1492
    %v1530 = vmul.f32 %v1497, %v1497
    %v1531 = vmul.f32 %v1500, %v1500
    %1532 = vmatprep.subr.mxu0 0.0
    %1533 = vmatpush1.msra.mxu0 %v1473
    %1534 = vmatprep.subr.mxu0 0.0
    %1535 = vmatpush1.msra.mxu0 %v1476
    %1536 = vmatprep.subr.mxu0 0.0
    %1537 = vmatpush1.msra.mxu0 %v1481
    %1538 = vmatprep.subr.mxu0 0.0
    %1539 = vmatpush1.msra.mxu0 %v1484
    %1540 = vmatprep.subr.mxu0 0.0
    %1541 = vmatpush1.msra.mxu0 %v1489
    %1542 = vmatprep.subr.mxu0 0.0
    %1543 = vmatpush1.msra.mxu0 %v1492
    %1544 = vmatprep.subr.mxu0 0.0
    %1545 = vmatpush1.msra.mxu0 %v1497
    %1546 = vmatprep.subr.mxu0 0.0
    %1547 = vmatpush1.msra.mxu0 %v1500
    %1548 = vmatprep.subr.mxu0 0.0
    %1549 = vmatpush1.msra.mxu0 %v1524
    %1550 = vmatprep.subr.mxu0 0.0
    %1551 = vmatpush1.msra.mxu0 %v1525
    %1552 = vmatprep.subr.mxu0 0.0
    %1553 = vmatpush1.msra.mxu0 %v1526
    %1554 = vmatprep.subr.mxu0 0.0
    %1555 = vmatpush1.msra.mxu0 %v1527
    %1556 = vmatprep.subr.mxu0 0.0
    %1557 = vmatpush1.msra.mxu0 %v1528
    %1558 = vmatprep.subr.mxu0 0.0
    %1559 = vmatpush1.msra.mxu0 %v1529
    %1560 = vmatprep.subr.mxu0 0.0
    %1561 = vmatpush1.msra.mxu0 %v1530
    %1562 = vmatprep.subr.mxu0 0.0
    %1563 = vmatpush1.msra.mxu0 %v1531
    %1564 = vmatprep.subr.mxu0 0.0
    %1565 = vmatpush1.msra.mxu0 0.0
    %1566 = vmatprep.subr.mxu0 0.0
    %1567 = vmatpush1.msra.mxu0 0.0
    %1568 = vmatprep.subr.mxu0 0.0
    %1569 = vmatpush1.msra.mxu0 0.0
    %1570 = vmatprep.subr.mxu0 0.0
    %1571 = vmatpush1.msra.mxu0 0.0
    %1572 = vmatprep.subr.mxu0 0.0
    %1573 = vmatpush1.msra.mxu0 0.0
    %1574 = vmatprep.subr.mxu0 0.0
    %1575 = vmatpush1.msra.mxu0 0.0
    %1576 = vmatprep.subr.mxu0 0.0
    %1577 = vmatpush1.msra.mxu0 0.0
    %1578 = vmatprep.subr.mxu0 0.0
    %1579 = vmatpush1.msra.mxu0 0.0
    %1580 = vmatprep.subr.mxu0 0.0
    %1581 = vmatpush1.msra.mxu0 0.0
    %1582 = vmatprep.subr.mxu0 0.0
    %1583 = vmatpush1.msra.mxu0 0.0
    %1584 = vmatprep.subr.mxu0 0.0
    %1585 = vmatpush1.msra.mxu0 0.0
    %1586 = vmatprep.subr.mxu0 0.0
    %1587 = vmatpush1.msra.mxu0 0.0
    %1588 = vmatprep.subr.mxu0 0.0
    %1589 = vmatpush1.msra.mxu0 0.0
    %1590 = vmatprep.subr.mxu0 0.0
    %1591 = vmatpush1.msra.mxu0 0.0
    %1592 = vmatprep.subr.mxu0 0.0
    %1593 = vmatpush1.msra.mxu0 0.0
    %1594 = vmatprep.subr.mxu0 0.0
    %1595 = vmatpush1.msra.mxu0 0.0
    %1596 = vmatprep.mubr.f32.mxu0 0.0
    %1597 = vmatmul.mubr.f32.gmra.mrb[0].mxu0 %v1503
    %v1598 = vpop.f32.mrb[0].mxu0
    %v1599 = vadd.f32 0.0, %v1598
    %v1600 = vpop.f32.mrb[0].mxu0
    %1601 = vmatprep.mubr.f32.mxu0 0.0
    %1602 = vmatmul.mubr.f32.gmra.mrb[0].mxu0 %v1504
    %v1603 = vpop.f32.mrb[0].mxu0
    %v1604 = vadd.f32 0.0, %v1603
    %v1605 = vpop.f32.mrb[0].mxu0
    %1606 = vmatprep.mubr.f32.mxu0 0.0
    %1607 = vmatmul.mubr.f32.gmra.mrb[0].mxu0 %v1505
    %v1608 = vpop.f32.mrb[0].mxu0
    %v1609 = vadd.f32 0.0, %v1608
    %v1610 = vpop.f32.mrb[0].mxu0
    %1611 = vmatprep.mubr.f32.mxu0 0.0
    %1612 = vmatmul.mubr.f32.gmra.mrb[0].mxu0 %v1506
    %v1613 = vpop.f32.mrb[0].mxu0
    %v1614 = vadd.f32 0.0, %v1613
    %v1615 = vpop.f32.mrb[0].mxu0
    %1616 = vdwg.mxu0
    %v1618 = vsel %vm1212, %v1599, 0
    %v1621 = vsel %vm1212, %v1604, 0
    %v1624 = vsel %vm1212, %v1609, 0
    %v1627 = vsel %vm1212, %v1614, 0
    %1629 = vmatprep.subr.mxu0 0.0
    %1630 = vmatpush1.msra.mxu0 %v1515
    %1631 = vmatprep.subr.mxu0 0.0
    %1632 = vmatpush1.msra.mxu0 %v1516
    %1633 = vmatprep.subr.mxu0 0.0
    %1634 = vmatpush1.msra.mxu0 %v1517
    %1635 = vmatprep.subr.mxu0 0.0
    %1636 = vmatpush1.msra.mxu0 %v1518
    %1637 = vmatprep.subr.mxu0 0.0
    %1638 = vmatpush1.msra.mxu0 %v1519
    %1639 = vmatprep.subr.mxu0 0.0
    %1640 = vmatpush1.msra.mxu0 %v1520
    %1641 = vmatprep.subr.mxu0 0.0
    %1642 = vmatpush1.msra.mxu0 %v1521
    %1643 = vmatprep.subr.mxu0 0.0
    %1644 = vmatpush1.msra.mxu0 %v1522
    %1645 = vmatprep.subr.mxu0 0.0
    %1646 = vmatpush1.msra.mxu0 0.0
    %1647 = vmatprep.subr.mxu0 0.0
    %1648 = vmatpush1.msra.mxu0 0.0
    %1649 = vmatprep.subr.mxu0 0.0
    %1650 = vmatpush1.msra.mxu0 0.0
    %1651 = vmatprep.subr.mxu0 0.0
    %1652 = vmatpush1.msra.mxu0 0.0
    %1653 = vmatprep.subr.mxu0 0.0
    %1654 = vmatpush1.msra.mxu0 0.0
    %1655 = vmatprep.subr.mxu0 0.0
    %1656 = vmatpush1.msra.mxu0 0.0
    %1657 = vmatprep.subr.mxu0 0.0
    %1658 = vmatpush1.msra.mxu0 0.0
    %1659 = vmatprep.subr.mxu0 0.0
    %1660 = vmatpush1.msra.mxu0 0.0
    %1661 = vmatprep.subr.mxu0 0.0
    %1662 = vmatpush1.msra.mxu0 0.0
    %1663 = vmatprep.subr.mxu0 0.0
    %1664 = vmatpush1.msra.mxu0 0.0
    %1665 = vmatprep.subr.mxu0 0.0
    %1666 = vmatpush1.msra.mxu0 0.0
    %1667 = vmatprep.subr.mxu0 0.0
    %1668 = vmatpush1.msra.mxu0 0.0
    %1669 = vmatprep.subr.mxu0 0.0
    %1670 = vmatpush1.msra.mxu0 0.0
    %1671 = vmatprep.subr.mxu0 0.0
    %1672 = vmatpush1.msra.mxu0 0.0
    %1673 = vmatprep.subr.mxu0 0.0
    %1674 = vmatpush1.msra.mxu0 0.0
    %1675 = vmatprep.subr.mxu0 0.0
    %1676 = vmatpush1.msra.mxu0 0.0
    %1677 = vmatprep.subr.mxu0 0.0
    %1678 = vmatpush1.msra.mxu0 0.0
    %1679 = vmatprep.subr.mxu0 0.0
    %1680 = vmatpush1.msra.mxu0 0.0
    %1681 = vmatprep.subr.mxu0 0.0
    %1682 = vmatpush1.msra.mxu0 0.0
    %1683 = vmatprep.subr.mxu0 0.0
    %1684 = vmatpush1.msra.mxu0 0.0
    %1685 = vmatprep.subr.mxu0 0.0
    %1686 = vmatpush1.msra.mxu0 0.0
    %1687 = vmatprep.subr.mxu0 0.0
    %1688 = vmatpush1.msra.mxu0 0.0
    %1689 = vmatprep.subr.mxu0 0.0
    %1690 = vmatpush1.msra.mxu0 0.0
    %1691 = vmatprep.subr.mxu0 0.0
    %1692 = vmatpush1.msra.mxu0 0.0
    %1693 = vmatprep.mubr.f32.mxu0 0.0
    %1694 = vmatmul.mubr.f32.gmra.mrb[0].mxu0 %v1618
    %v1695 = vpop.f32.mrb[0].mxu0
    %v1696 = vadd.f32 0.0, %v1695
    %v1697 = vpop.f32.mrb[0].mxu0
    %1698 = vmatprep.mubr.f32.mxu0 0.0
    %1699 = vmatmul.mubr.f32.gmra.mrb[0].mxu0 %v1621
    %v1700 = vpop.f32.mrb[0].mxu0
    %v1701 = vadd.f32 0.0, %v1700
    %v1702 = vpop.f32.mrb[0].mxu0
    %1703 = vmatprep.mubr.f32.mxu0 0.0
    %1704 = vmatmul.mubr.f32.gmra.mrb[0].mxu0 %v1624
    %v1705 = vpop.f32.mrb[0].mxu0
    %v1706 = vadd.f32 0.0, %v1705
    %v1707 = vpop.f32.mrb[0].mxu0
    %1708 = vmatprep.mubr.f32.mxu0 0.0
    %1709 = vmatmul.mubr.f32.gmra.mrb[0].mxu0 %v1627
    %v1710 = vpop.f32.mrb[0].mxu0
    %v1711 = vadd.f32 0.0, %v1710
    %v1712 = vpop.f32.mrb[0].mxu0
    %1713 = vdwg.mxu0
    %v1714 = vmul.f32 %v1696, 0.01
    %v1715 = vmul.f32 %v1701, 0.01
    %v1716 = vmul.f32 %v1706, 0.01
    %v1717 = vmul.f32 %v1711, 0.01
    %v1718 = vmul.f32 %v1714, %v1714
    %v1719 = vmul.f32 %v1715, %v1715
    %v1720 = vsub.f32 %v1716, %v1718
    %v1721 = vsub.f32 %v1717, %v1719
    %v1722 = vmax.f32 %v1720, 0.0
    %v1723 = vmax.f32 %v1721, 0.0
    %v1724 = vadd.f32 %v1722, 1e-05
    %v1725 = vadd.f32 %v1723, 1e-05
    %v1726 = vrsqrt.pop %v1724
    %v1727 = vrsqrt.pop %v1725
    %v1728 = vld [vmem:[%s9] sm:$0xff]
    %v1729 = vld [vmem:[%s9 + $0x8] sm:$0xff]
    %v1730 = vld [vmem:[%s9 + $0x10] sm:$0xff]
    %v1731 = vld [vmem:[%s9 + $0x18] sm:$0xff]
    %v1732 = vld [vmem:[%s9 + $0x20] sm:$0xff]
    %v1733 = vld [vmem:[%s9 + $0x28] sm:$0xff]
    %v1734 = vld [vmem:[%s9 + $0x30] sm:$0xff]
    %v1735 = vld [vmem:[%s9 + $0x38] sm:$0xff]
    %vm1736 = vcmask 130048
    %v1738 = vsel %vm1736, %v1507, 0
    %v1741 = vsel %vm1736, %v1508, 0
    %v1744 = vsel %vm1736, %v1509, 0
    %v1747 = vsel %vm1736, %v1510, 0
    %v1750 = vsel %vm1736, %v1511, 0
    %v1753 = vsel %vm1736, %v1512, 0
    %v1756 = vsel %vm1736, %v1513, 0
    %v1759 = vsel %vm1736, %v1514, 0
    %1761 = vmatprep.subr.mxu0 0.0
    %1762 = vmatpush1.msra.mxu0 %v1726
    %1763 = vmatprep.subr.mxu0 0.0
    %1764 = vmatpush1.msra.mxu0 %v1727
    %1765 = vmatprep.subr.mxu0 0.0
    %1766 = vmatpush1.msra.mxu0 0.0
    %1767 = vmatprep.subr.mxu0 0.0
    %1768 = vmatpush1.msra.mxu0 0.0
    %1769 = vmatprep.subr.mxu0 0.0
    %1770 = vmatpush1.msra.mxu0 0.0
    %1771 = vmatprep.subr.mxu0 0.0
    %1772 = vmatpush1.msra.mxu0 0.0
    %1773 = vmatprep.subr.mxu0 0.0
    %1774 = vmatpush1.msra.mxu0 0.0
    %1775 = vmatprep.subr.mxu0 0.0
    %1776 = vmatpush1.msra.mxu0 0.0
    %1777 = vmatprep.subr.mxu0 0.0
    %1778 = vmatpush1.msra.mxu0 0.0
    %1779 = vmatprep.subr.mxu0 0.0
    %1780 = vmatpush1.msra.mxu0 0.0
    %1781 = vmatprep.subr.mxu0 0.0
    %1782 = vmatpush1.msra.mxu0 0.0
    %1783 = vmatprep.subr.mxu0 0.0
    %1784 = vmatpush1.msra.mxu0 0.0
    %1785 = vmatprep.subr.mxu0 0.0
    %1786 = vmatpush1.msra.mxu0 0.0
    %1787 = vmatprep.subr.mxu0 0.0
    %1788 = vmatpush1.msra.mxu0 0.0
    %1789 = vmatprep.subr.mxu0 0.0
    %1790 = vmatpush1.msra.mxu0 0.0
    %1791 = vmatprep.subr.mxu0 0.0
    %1792 = vmatpush1.msra.mxu0 0.0
    %1793 = vmatprep.subr.mxu0 0.0
    %1794 = vmatpush1.msra.mxu0 0.0
    %1795 = vmatprep.subr.mxu0 0.0
    %1796 = vmatpush1.msra.mxu0 0.0
    %1797 = vmatprep.subr.mxu0 0.0
    %1798 = vmatpush1.msra.mxu0 0.0
    %1799 = vmatprep.subr.mxu0 0.0
    %1800 = vmatpush1.msra.mxu0 0.0
    %1801 = vmatprep.subr.mxu0 0.0
    %1802 = vmatpush1.msra.mxu0 0.0
    %1803 = vmatprep.subr.mxu0 0.0
    %1804 = vmatpush1.msra.mxu0 0.0
    %1805 = vmatprep.subr.mxu0 0.0
    %1806 = vmatpush1.msra.mxu0 0.0
    %1807 = vmatprep.subr.mxu0 0.0
    %1808 = vmatpush1.msra.mxu0 0.0
    %1809 = vmatprep.subr.mxu0 0.0
    %1810 = vmatpush1.msra.mxu0 0.0
    %1811 = vmatprep.subr.mxu0 0.0
    %1812 = vmatpush1.msra.mxu0 0.0
    %1813 = vmatprep.subr.mxu0 0.0
    %1814 = vmatpush1.msra.mxu0 0.0
    %1815 = vmatprep.subr.mxu0 0.0
    %1816 = vmatpush1.msra.mxu0 0.0
    %1817 = vmatprep.subr.mxu0 0.0
    %1818 = vmatpush1.msra.mxu0 0.0
    %1819 = vmatprep.subr.mxu0 0.0
    %1820 = vmatpush1.msra.mxu0 0.0
    %1821 = vmatprep.subr.mxu0 0.0
    %1822 = vmatpush1.msra.mxu0 0.0
    %1823 = vmatprep.subr.mxu0 0.0
    %1824 = vmatpush1.msra.mxu0 0.0
    %1825 = vmatprep.mubr.f32.mxu0 0.0
    %1826 = vmatmul.mubr.f32.gmra.mrb[0].mxu0 %v1738
    %v1827 = vpop.f32.mrb[0].mxu0
    %v1828 = vadd.f32 0.0, %v1827
    %v1829 = vpop.f32.mrb[0].mxu0
    %1830 = vmatprep.mubr.f32.mxu0 0.0
    %1831 = vmatmul.mubr.f32.gmra.mrb[0].mxu0 %v1741
    %v1832 = vpop.f32.mrb[0].mxu0
    %v1833 = vadd.f32 0.0, %v1832
    %v1834 = vpop.f32.mrb[0].mxu0
    %1835 = vmatprep.mubr.f32.mxu0 0.0
    %1836 = vmatmul.mubr.f32.gmra.mrb[0].mxu0 %v1744
    %v1837 = vpop.f32.mrb[0].mxu0
    %v1838 = vadd.f32 0.0, %v1837
    %v1839 = vpop.f32.mrb[0].mxu0
    %1840 = vmatprep.mubr.f32.mxu0 0.0
    %1841 = vmatmul.mubr.f32.gmra.mrb[0].mxu0 %v1747
    %v1842 = vpop.f32.mrb[0].mxu0
    %v1843 = vadd.f32 0.0, %v1842
    %v1844 = vpop.f32.mrb[0].mxu0
    %1845 = vmatprep.mubr.f32.mxu0 0.0
    %1846 = vmatmul.mubr.f32.gmra.mrb[0].mxu0 %v1750
    %v1847 = vpop.f32.mrb[0].mxu0
    %v1848 = vadd.f32 0.0, %v1847
    %v1849 = vpop.f32.mrb[0].mxu0
    %1850 = vmatprep.mubr.f32.mxu0 0.0
    %1851 = vmatmul.mubr.f32.gmra.mrb[0].mxu0 %v1753
    %v1852 = vpop.f32.mrb[0].mxu0
    %v1853 = vadd.f32 0.0, %v1852
    %v1854 = vpop.f32.mrb[0].mxu0
    %1855 = vmatprep.mubr.f32.mxu0 0.0
    %1856 = vmatmul.mubr.f32.gmra.mrb[0].mxu0 %v1756
    %v1857 = vpop.f32.mrb[0].mxu0
    %v1858 = vadd.f32 0.0, %v1857
    %v1859 = vpop.f32.mrb[0].mxu0
    %1860 = vmatprep.mubr.f32.mxu0 0.0
    %1861 = vmatmul.mubr.f32.gmra.mrb[0].mxu0 %v1759
    %v1862 = vpop.f32.mrb[0].mxu0
    %v1863 = vadd.f32 0.0, %v1862
    %v1864 = vpop.f32.mrb[0].mxu0
    %1865 = vdwg.mxu0
    %1867 = vset.pattern.permute.xlu0 0
    %1868 = vperm.xlu0 %1867, %v1728
    %v1869 = vpop.permute.xlu0 %1868
    %1872 = vset.pattern.permute.xlu0 0
    %1873 = vperm.xlu0 %1872, %v1729
    %v1874 = vpop.permute.xlu0 %1873
    %1877 = vset.pattern.permute.xlu0 0
    %1878 = vperm.xlu0 %1877, %v1730
    %v1879 = vpop.permute.xlu0 %1878
    %1882 = vset.pattern.permute.xlu0 0
    %1883 = vperm.xlu0 %1882, %v1731
    %v1884 = vpop.permute.xlu0 %1883
    %1887 = vset.pattern.permute.xlu0 0
    %1888 = vperm.xlu0 %1887, %v1732
    %v1889 = vpop.permute.xlu0 %1888
    %1892 = vset.pattern.permute.xlu0 0
    %1893 = vperm.xlu0 %1892, %v1733
    %v1894 = vpop.permute.xlu0 %1893
    %1897 = vset.pattern.permute.xlu0 0
    %1898 = vperm.xlu0 %1897, %v1734
    %v1899 = vpop.permute.xlu0 %1898
    %1902 = vset.pattern.permute.xlu0 0
    %1903 = vperm.xlu0 %1902, %v1735
    %v1904 = vpop.permute.xlu0 %1903
    %v1906 = vmul.f32 %v1828, %v1869
    %v1907 = vmul.f32 %v1833, %v1874
    %v1908 = vmul.f32 %v1838, %v1879
    %v1909 = vmul.f32 %v1843, %v1884
    %v1910 = vmul.f32 %v1848, %v1889
    %v1911 = vmul.f32 %v1853, %v1894
    %v1912 = vmul.f32 %v1858, %v1899
    %v1913 = vmul.f32 %v1863, %v1904
    %1914 = vmatprep.subr.mxu0 0.0
    %1915 = vmatpush1.msra.mxu0 %v1714
    %1916 = vmatprep.subr.mxu0 0.0
    %1917 = vmatpush1.msra.mxu0 %v1715
    %1918 = vmatprep.subr.mxu0 0.0
    %1919 = vmatpush1.msra.mxu0 0.0
    %1920 = vmatprep.subr.mxu0 0.0
    %1921 = vmatpush1.msra.mxu0 0.0
    %1922 = vmatprep.subr.mxu0 0.0
    %1923 = vmatpush1.msra.mxu0 0.0
    %1924 = vmatprep.subr.mxu0 0.0
    %1925 = vmatpush1.msra.mxu0 0.0
    %1926 = vmatprep.subr.mxu0 0.0
    %1927 = vmatpush1.msra.mxu0 0.0
    %1928 = vmatprep.subr.mxu0 0.0
    %1929 = vmatpush1.msra.mxu0 0.0
    %1930 = vmatprep.subr.mxu0 0.0
    %1931 = vmatpush1.msra.mxu0 0.0
    %1932 = vmatprep.subr.mxu0 0.0
    %1933 = vmatpush1.msra.mxu0 0.0
    %1934 = vmatprep.subr.mxu0 0.0
    %1935 = vmatpush1.msra.mxu0 0.0
    %1936 = vmatprep.subr.mxu0 0.0
    %1937 = vmatpush1.msra.mxu0 0.0
    %1938 = vmatprep.subr.mxu0 0.0
    %1939 = vmatpush1.msra.mxu0 0.0
    %1940 = vmatprep.subr.mxu0 0.0
    %1941 = vmatpush1.msra.mxu0 0.0
    %1942 = vmatprep.subr.mxu0 0.0
    %1943 = vmatpush1.msra.mxu0 0.0
    %1944 = vmatprep.subr.mxu0 0.0
    %1945 = vmatpush1.msra.mxu0 0.0
    %1946 = vmatprep.subr.mxu0 0.0
    %1947 = vmatpush1.msra.mxu0 0.0
    %1948 = vmatprep.subr.mxu0 0.0
    %1949 = vmatpush1.msra.mxu0 0.0
    %1950 = vmatprep.subr.mxu0 0.0
    %1951 = vmatpush1.msra.mxu0 0.0
    %1952 = vmatprep.subr.mxu0 0.0
    %1953 = vmatpush1.msra.mxu0 0.0
    %1954 = vmatprep.subr.mxu0 0.0
    %1955 = vmatpush1.msra.mxu0 0.0
    %1956 = vmatprep.subr.mxu0 0.0
    %1957 = vmatpush1.msra.mxu0 0.0
    %1958 = vmatprep.subr.mxu0 0.0
    %1959 = vmatpush1.msra.mxu0 0.0
    %1960 = vmatprep.subr.mxu0 0.0
    %1961 = vmatpush1.msra.mxu0 0.0
    %1962 = vmatprep.subr.mxu0 0.0
    %1963 = vmatpush1.msra.mxu0 0.0
    %1964 = vmatprep.subr.mxu0 0.0
    %1965 = vmatpush1.msra.mxu0 0.0
    %1966 = vmatprep.subr.mxu0 0.0
    %1967 = vmatpush1.msra.mxu0 0.0
    %1968 = vmatprep.subr.mxu0 0.0
    %1969 = vmatpush1.msra.mxu0 0.0
    %1970 = vmatprep.subr.mxu0 0.0
    %1971 = vmatpush1.msra.mxu0 0.0
    %1972 = vmatprep.subr.mxu0 0.0
    %1973 = vmatpush1.msra.mxu0 0.0
    %1974 = vmatprep.subr.mxu0 0.0
    %1975 = vmatpush1.msra.mxu0 0.0
    %1976 = vmatprep.subr.mxu0 0.0
    %1977 = vmatpush1.msra.mxu0 0.0
    %1978 = vmatprep.mubr.f32.mxu0 0.0
    %1979 = vmatmul.mubr.f32.gmra.mrb[0].mxu0 %v1738
    %v1980 = vpop.f32.mrb[0].mxu0
    %v1981 = vadd.f32 0.0, %v1980
    %v1982 = vpop.f32.mrb[0].mxu0
    %1983 = vmatprep.mubr.f32.mxu0 0.0
    %1984 = vmatmul.mubr.f32.gmra.mrb[0].mxu0 %v1741
    %v1985 = vpop.f32.mrb[0].mxu0
    %v1986 = vadd.f32 0.0, %v1985
    %v1987 = vpop.f32.mrb[0].mxu0
    %1988 = vmatprep.mubr.f32.mxu0 0.0
    %1989 = vmatmul.mubr.f32.gmra.mrb[0].mxu0 %v1744
    %v1990 = vpop.f32.mrb[0].mxu0
    %v1991 = vadd.f32 0.0, %v1990
    %v1992 = vpop.f32.mrb[0].mxu0
    %1993 = vmatprep.mubr.f32.mxu0 0.0
    %1994 = vmatmul.mubr.f32.gmra.mrb[0].mxu0 %v1747
    %v1995 = vpop.f32.mrb[0].mxu0
    %v1996 = vadd.f32 0.0, %v1995
    %v1997 = vpop.f32.mrb[0].mxu0
    %1998 = vmatprep.mubr.f32.mxu0 0.0
    %1999 = vmatmul.mubr.f32.gmra.mrb[0].mxu0 %v1750
    %v2000 = vpop.f32.mrb[0].mxu0
    %v2001 = vadd.f32 0.0, %v2000
    %v2002 = vpop.f32.mrb[0].mxu0
    %2003 = vmatprep.mubr.f32.mxu0 0.0
    %2004 = vmatmul.mubr.f32.gmra.mrb[0].mxu0 %v1753
    %v2005 = vpop.f32.mrb[0].mxu0
    %v2006 = vadd.f32 0.0, %v2005
    %v2007 = vpop.f32.mrb[0].mxu0
    %2008 = vmatprep.mubr.f32.mxu0 0.0
    %2009 = vmatmul.mubr.f32.gmra.mrb[0].mxu0 %v1756
    %v2010 = vpop.f32.mrb[0].mxu0
    %v2011 = vadd.f32 0.0, %v2010
    %v2012 = vpop.f32.mrb[0].mxu0
    %2013 = vmatprep.mubr.f32.mxu0 0.0
    %2014 = vmatmul.mubr.f32.gmra.mrb[0].mxu0 %v1759
    %v2015 = vpop.f32.mrb[0].mxu0
    %v2016 = vadd.f32 0.0, %v2015
    %v2017 = vpop.f32.mrb[0].mxu0
    %2018 = vdwg.mxu0
    %v2019 = vmul.f32 %v1981, %v1906
    %v2020 = vmul.f32 %v1986, %v1907
    %v2021 = vmul.f32 %v1991, %v1908
    %v2022 = vmul.f32 %v1996, %v1909
    %v2023 = vmul.f32 %v2001, %v1910
    %v2024 = vmul.f32 %v2006, %v1911
    %v2025 = vmul.f32 %v2011, %v1912
    %v2026 = vmul.f32 %v2016, %v1913
    %2027 = vset.pattern.permute.xlu0 1
    %2028 = vperm.xlu0 %2027, %v1728
    %v2029 = vpop.permute.xlu0 %2028
    %2031 = vset.pattern.permute.xlu0 1
    %2032 = vperm.xlu0 %2031, %v1729
    %v2033 = vpop.permute.xlu0 %2032
    %2035 = vset.pattern.permute.xlu0 1
    %2036 = vperm.xlu0 %2035, %v1730
    %v2037 = vpop.permute.xlu0 %2036
    %2039 = vset.pattern.permute.xlu0 1
    %2040 = vperm.xlu0 %2039, %v1731
    %v2041 = vpop.permute.xlu0 %2040
    %2043 = vset.pattern.permute.xlu0 1
    %2044 = vperm.xlu0 %2043, %v1732
    %v2045 = vpop.permute.xlu0 %2044
    %2047 = vset.pattern.permute.xlu0 1
    %2048 = vperm.xlu0 %2047, %v1733
    %v2049 = vpop.permute.xlu0 %2048
    %2051 = vset.pattern.permute.xlu0 1
    %2052 = vperm.xlu0 %2051, %v1734
    %v2053 = vpop.permute.xlu0 %2052
    %2055 = vset.pattern.permute.xlu0 1
    %2056 = vperm.xlu0 %2055, %v1735
    %v2057 = vpop.permute.xlu0 %2056
    %v2059 = vsub.f32 %v2029, %v2019
    %v2060 = vsub.f32 %v2033, %v2020
    %v2061 = vsub.f32 %v2037, %v2021
    %v2062 = vsub.f32 %v2041, %v2022
    %v2063 = vsub.f32 %v2045, %v2023
    %v2064 = vsub.f32 %v2049, %v2024
    %v2065 = vsub.f32 %v2053, %v2025
    %v2066 = vsub.f32 %v2057, %v2026
    %v2068 = vsel %vm797, %v1906, 0
    %v2071 = vsel %vm797, %v1907, 0
    %v2074 = vsel %vm797, %v1908, 0
    %v2077 = vsel %vm797, %v1909, 0
    %v2080 = vsel %vm797, %v1910, 0
    %v2083 = vsel %vm797, %v1911, 0
    %v2086 = vsel %vm797, %v1912, 0
    %v2089 = vsel %vm797, %v1913, 0
    %v2092 = vsel %vm822, %v1523, 0
    %2094 = vmatprep.subr.mxu0 0.0
    %2095 = vmatpush1.msra.mxu0 %v2092
    %2096 = vmatprep.subr.mxu0 0.0
    %2097 = vmatpush1.msra.mxu0 0.0
    %2098 = vmatprep.subr.mxu0 0.0
    %2099 = vmatpush1.msra.mxu0 0.0
    %2100 = vmatprep.subr.mxu0 0.0
    %2101 = vmatpush1.msra.mxu0 0.0
    %2102 = vmatprep.subr.mxu0 0.0
    %2103 = vmatpush1.msra.mxu0 0.0
    %2104 = vmatprep.subr.mxu0 0.0
    %2105 = vmatpush1.msra.mxu0 0.0
    %2106 = vmatprep.subr.mxu0 0.0
    %2107 = vmatpush1.msra.mxu0 0.0
    %2108 = vmatprep.subr.mxu0 0.0
    %2109 = vmatpush1.msra.mxu0 0.0
    %2110 = vmatprep.subr.mxu0 0.0
    %2111 = vmatpush1.msra.mxu0 0.0
    %2112 = vmatprep.subr.mxu0 0.0
    %2113 = vmatpush1.msra.mxu0 0.0
    %2114 = vmatprep.subr.mxu0 0.0
    %2115 = vmatpush1.msra.mxu0 0.0
    %2116 = vmatprep.subr.mxu0 0.0
    %2117 = vmatpush1.msra.mxu0 0.0
    %2118 = vmatprep.subr.mxu0 0.0
    %2119 = vmatpush1.msra.mxu0 0.0
    %2120 = vmatprep.subr.mxu0 0.0
    %2121 = vmatpush1.msra.mxu0 0.0
    %2122 = vmatprep.subr.mxu0 0.0
    %2123 = vmatpush1.msra.mxu0 0.0
    %2124 = vmatprep.subr.mxu0 0.0
    %2125 = vmatpush1.msra.mxu0 0.0
    %2126 = vmatprep.subr.mxu0 0.0
    %2127 = vmatpush1.msra.mxu0 0.0
    %2128 = vmatprep.subr.mxu0 0.0
    %2129 = vmatpush1.msra.mxu0 0.0
    %2130 = vmatprep.subr.mxu0 0.0
    %2131 = vmatpush1.msra.mxu0 0.0
    %2132 = vmatprep.subr.mxu0 0.0
    %2133 = vmatpush1.msra.mxu0 0.0
    %2134 = vmatprep.subr.mxu0 0.0
    %2135 = vmatpush1.msra.mxu0 0.0
    %2136 = vmatprep.subr.mxu0 0.0
    %2137 = vmatpush1.msra.mxu0 0.0
    %2138 = vmatprep.subr.mxu0 0.0
    %2139 = vmatpush1.msra.mxu0 0.0
    %2140 = vmatprep.subr.mxu0 0.0
    %2141 = vmatpush1.msra.mxu0 0.0
    %2142 = vmatprep.subr.mxu0 0.0
    %2143 = vmatpush1.msra.mxu0 0.0
    %2144 = vmatprep.subr.mxu0 0.0
    %2145 = vmatpush1.msra.mxu0 0.0
    %2146 = vmatprep.subr.mxu0 0.0
    %2147 = vmatpush1.msra.mxu0 0.0
    %2148 = vmatprep.subr.mxu0 0.0
    %2149 = vmatpush1.msra.mxu0 0.0
    %2150 = vmatprep.subr.mxu0 0.0
    %2151 = vmatpush1.msra.mxu0 0.0
    %2152 = vmatprep.subr.mxu0 0.0
    %2153 = vmatpush1.msra.mxu0 0.0
    %2154 = vmatprep.subr.mxu0 0.0
    %2155 = vmatpush1.msra.mxu0 0.0
    %2156 = vmatprep.subr.mxu0 0.0
    %2157 = vmatpush1.msra.mxu0 0.0
    %2158 = vmatprep.mubr.f32.mxu0 0.0
    %2159 = vmatmul.mubr.f32.gmra.mrb[0].mxu0 %v2068
    %v2160 = vpop.f32.mrb[0].mxu0
    %v2161 = vadd.f32 0.0, %v2160
    %v2162 = vpop.f32.mrb[0].mxu0
    %2163 = vmatprep.mubr.f32.mxu0 0.0
    %2164 = vmatmul.mubr.f32.gmra.mrb[0].mxu0 %v2071
    %v2165 = vpop.f32.mrb[0].mxu0
    %v2166 = vadd.f32 0.0, %v2165
    %v2167 = vpop.f32.mrb[0].mxu0
    %2168 = vmatprep.mubr.f32.mxu0 0.0
    %2169 = vmatmul.mubr.f32.gmra.mrb[0].mxu0 %v2074
    %v2170 = vpop.f32.mrb[0].mxu0
    %v2171 = vadd.f32 0.0, %v2170
    %v2172 = vpop.f32.mrb[0].mxu0
    %2173 = vmatprep.mubr.f32.mxu0 0.0
    %2174 = vmatmul.mubr.f32.gmra.mrb[0].mxu0 %v2077
    %v2175 = vpop.f32.mrb[0].mxu0
    %v2176 = vadd.f32 0.0, %v2175
    %v2177 = vpop.f32.mrb[0].mxu0
    %2178 = vmatprep.mubr.f32.mxu0 0.0
    %2179 = vmatmul.mubr.f32.gmra.mrb[0].mxu0 %v2080
    %v2180 = vpop.f32.mrb[0].mxu0
    %v2181 = vadd.f32 0.0, %v2180
    %v2182 = vpop.f32.mrb[0].mxu0
    %2183 = vmatprep.mubr.f32.mxu0 0.0
    %2184 = vmatmul.mubr.f32.gmra.mrb[0].mxu0 %v2083
    %v2185 = vpop.f32.mrb[0].mxu0
    %v2186 = vadd.f32 0.0, %v2185
    %v2187 = vpop.f32.mrb[0].mxu0
    %2188 = vmatprep.mubr.f32.mxu0 0.0
    %2189 = vmatmul.mubr.f32.gmra.mrb[0].mxu0 %v2086
    %v2190 = vpop.f32.mrb[0].mxu0
    %v2191 = vadd.f32 0.0, %v2190
    %v2192 = vpop.f32.mrb[0].mxu0
    %2193 = vmatprep.mubr.f32.mxu0 0.0
    %2194 = vmatmul.mubr.f32.gmra.mrb[0].mxu0 %v2089
    %v2195 = vpop.f32.mrb[0].mxu0
    %v2196 = vadd.f32 0.0, %v2195
    %v2197 = vpop.f32.mrb[0].mxu0
    %2198 = vdwg.mxu0
    %v2200 = vsel %vm797, %v2059, 0
    %v2203 = vsel %vm797, %v2060, 0
    %v2206 = vsel %vm797, %v2061, 0
    %v2209 = vsel %vm797, %v2062, 0
    %v2212 = vsel %vm797, %v2063, 0
    %v2215 = vsel %vm797, %v2064, 0
    %v2218 = vsel %vm797, %v2065, 0
    %v2221 = vsel %vm797, %v2066, 0
    %2223 = vmatprep.subr.mxu0 0.0
    %2224 = vmatpush1.msra.mxu0 %v2092
    %2225 = vmatprep.subr.mxu0 0.0
    %2226 = vmatpush1.msra.mxu0 0.0
    %2227 = vmatprep.subr.mxu0 0.0
    %2228 = vmatpush1.msra.mxu0 0.0
    %2229 = vmatprep.subr.mxu0 0.0
    %2230 = vmatpush1.msra.mxu0 0.0
    %2231 = vmatprep.subr.mxu0 0.0
    %2232 = vmatpush1.msra.mxu0 0.0
    %2233 = vmatprep.subr.mxu0 0.0
    %2234 = vmatpush1.msra.mxu0 0.0
    %2235 = vmatprep.subr.mxu0 0.0
    %2236 = vmatpush1.msra.mxu0 0.0
    %2237 = vmatprep.subr.mxu0 0.0
    %2238 = vmatpush1.msra.mxu0 0.0
    %2239 = vmatprep.subr.mxu0 0.0
    %2240 = vmatpush1.msra.mxu0 0.0
    %2241 = vmatprep.subr.mxu0 0.0
    %2242 = vmatpush1.msra.mxu0 0.0
    %2243 = vmatprep.subr.mxu0 0.0
    %2244 = vmatpush1.msra.mxu0 0.0
    %2245 = vmatprep.subr.mxu0 0.0
    %2246 = vmatpush1.msra.mxu0 0.0
    %2247 = vmatprep.subr.mxu0 0.0
    %2248 = vmatpush1.msra.mxu0 0.0
    %2249 = vmatprep.subr.mxu0 0.0
    %2250 = vmatpush1.msra.mxu0 0.0
    %2251 = vmatprep.subr.mxu0 0.0
    %2252 = vmatpush1.msra.mxu0 0.0
    %2253 = vmatprep.subr.mxu0 0.0
    %2254 = vmatpush1.msra.mxu0 0.0
    %2255 = vmatprep.subr.mxu0 0.0
    %2256 = vmatpush1.msra.mxu0 0.0
    %2257 = vmatprep.subr.mxu0 0.0
    %2258 = vmatpush1.msra.mxu0 0.0
    %2259 = vmatprep.subr.mxu0 0.0
    %2260 = vmatpush1.msra.mxu0 0.0
    %2261 = vmatprep.subr.mxu0 0.0
    %2262 = vmatpush1.msra.mxu0 0.0
    %2263 = vmatprep.subr.mxu0 0.0
    %2264 = vmatpush1.msra.mxu0 0.0
    %2265 = vmatprep.subr.mxu0 0.0
    %2266 = vmatpush1.msra.mxu0 0.0
    %2267 = vmatprep.subr.mxu0 0.0
    %2268 = vmatpush1.msra.mxu0 0.0
    %2269 = vmatprep.subr.mxu0 0.0
    %2270 = vmatpush1.msra.mxu0 0.0
    %2271 = vmatprep.subr.mxu0 0.0
    %2272 = vmatpush1.msra.mxu0 0.0
    %2273 = vmatprep.subr.mxu0 0.0
    %2274 = vmatpush1.msra.mxu0 0.0
    %2275 = vmatprep.subr.mxu0 0.0
    %2276 = vmatpush1.msra.mxu0 0.0
    %2277 = vmatprep.subr.mxu0 0.0
    %2278 = vmatpush1.msra.mxu0 0.0
    %2279 = vmatprep.subr.mxu0 0.0
    %2280 = vmatpush1.msra.mxu0 0.0
    %2281 = vmatprep.subr.mxu0 0.0
    %2282 = vmatpush1.msra.mxu0 0.0
    %2283 = vmatprep.subr.mxu0 0.0
    %2284 = vmatpush1.msra.mxu0 0.0
    %2285 = vmatprep.subr.mxu0 0.0
    %2286 = vmatpush1.msra.mxu0 0.0
    %2287 = vmatprep.mubr.f32.mxu0 0.0
    %2288 = vmatmul.mubr.f32.gmra.mrb[0].mxu0 %v2200
    %v2289 = vpop.f32.mrb[0].mxu0
    %v2290 = vadd.f32 0.0, %v2289
    %v2291 = vpop.f32.mrb[0].mxu0
    %2292 = vmatprep.mubr.f32.mxu0 0.0
    %2293 = vmatmul.mubr.f32.gmra.mrb[0].mxu0 %v2203
    %v2294 = vpop.f32.mrb[0].mxu0
    %v2295 = vadd.f32 0.0, %v2294
    %v2296 = vpop.f32.mrb[0].mxu0
    %2297 = vmatprep.mubr.f32.mxu0 0.0
    %2298 = vmatmul.mubr.f32.gmra.mrb[0].mxu0 %v2206
    %v2299 = vpop.f32.mrb[0].mxu0
    %v2300 = vadd.f32 0.0, %v2299
    %v2301 = vpop.f32.mrb[0].mxu0
    %2302 = vmatprep.mubr.f32.mxu0 0.0
    %2303 = vmatmul.mubr.f32.gmra.mrb[0].mxu0 %v2209
    %v2304 = vpop.f32.mrb[0].mxu0
    %v2305 = vadd.f32 0.0, %v2304
    %v2306 = vpop.f32.mrb[0].mxu0
    %2307 = vmatprep.mubr.f32.mxu0 0.0
    %2308 = vmatmul.mubr.f32.gmra.mrb[0].mxu0 %v2212
    %v2309 = vpop.f32.mrb[0].mxu0
    %v2310 = vadd.f32 0.0, %v2309
    %v2311 = vpop.f32.mrb[0].mxu0
    %2312 = vmatprep.mubr.f32.mxu0 0.0
    %2313 = vmatmul.mubr.f32.gmra.mrb[0].mxu0 %v2215
    %v2314 = vpop.f32.mrb[0].mxu0
    %v2315 = vadd.f32 0.0, %v2314
    %v2316 = vpop.f32.mrb[0].mxu0
    %2317 = vmatprep.mubr.f32.mxu0 0.0
    %2318 = vmatmul.mubr.f32.gmra.mrb[0].mxu0 %v2218
    %v2319 = vpop.f32.mrb[0].mxu0
    %v2320 = vadd.f32 0.0, %v2319
    %v2321 = vpop.f32.mrb[0].mxu0
    %2322 = vmatprep.mubr.f32.mxu0 0.0
    %2323 = vmatmul.mubr.f32.gmra.mrb[0].mxu0 %v2221
    %v2324 = vpop.f32.mrb[0].mxu0
    %v2325 = vadd.f32 0.0, %v2324
    %v2326 = vpop.f32.mrb[0].mxu0
    %2327 = vdwg.mxu0
    %v2328 = vmul.f32 %v1473, %v2161
    %v2329 = vmul.f32 %v1476, %v2166
    %v2330 = vmul.f32 %v1481, %v2171
    %v2331 = vmul.f32 %v1484, %v2176
    %v2332 = vmul.f32 %v1489, %v2181
    %v2333 = vmul.f32 %v1492, %v2186
    %v2334 = vmul.f32 %v1497, %v2191
    %v2335 = vmul.f32 %v1500, %v2196
    %v2336 = vadd.f32 %v2328, %v2290
    %v2337 = vadd.f32 %v2329, %v2295
    %v2338 = vadd.f32 %v2330, %v2300
    %v2339 = vadd.f32 %v2331, %v2305
    %v2340 = vadd.f32 %v2332, %v2310
    %v2341 = vadd.f32 %v2333, %v2315
    %v2342 = vadd.f32 %v2334, %v2320
    %v2343 = vadd.f32 %v2335, %v2325
    %v2344 = vmul.f32 %v1441, %v1441
    %v2345 = vmul.f32 %v1444, %v1444
    %v2346 = vmul.f32 %v1449, %v1449
    %v2347 = vmul.f32 %v1452, %v1452
    %v2348 = vmul.f32 %v1457, %v1457
    %v2349 = vmul.f32 %v1460, %v1460
    %v2350 = vmul.f32 %v1465, %v1465
    %v2351 = vmul.f32 %v1468, %v1468
    %2352 = vmatprep.subr.mxu0 0.0
    %2353 = vmatpush1.msra.mxu0 %v1441
    %2354 = vmatprep.subr.mxu0 0.0
    %2355 = vmatpush1.msra.mxu0 %v1444
    %2356 = vmatprep.subr.mxu0 0.0
    %2357 = vmatpush1.msra.mxu0 %v1449
    %2358 = vmatprep.subr.mxu0 0.0
    %2359 = vmatpush1.msra.mxu0 %v1452
    %2360 = vmatprep.subr.mxu0 0.0
    %2361 = vmatpush1.msra.mxu0 %v1457
    %2362 = vmatprep.subr.mxu0 0.0
    %2363 = vmatpush1.msra.mxu0 %v1460
    %2364 = vmatprep.subr.mxu0 0.0
    %2365 = vmatpush1.msra.mxu0 %v1465
    %2366 = vmatprep.subr.mxu0 0.0
    %2367 = vmatpush1.msra.mxu0 %v1468
    %2368 = vmatprep.subr.mxu0 0.0
    %2369 = vmatpush1.msra.mxu0 %v2344
    %2370 = vmatprep.subr.mxu0 0.0
    %2371 = vmatpush1.msra.mxu0 %v2345
    %2372 = vmatprep.subr.mxu0 0.0
    %2373 = vmatpush1.msra.mxu0 %v2346
    %2374 = vmatprep.subr.mxu0 0.0
    %2375 = vmatpush1.msra.mxu0 %v2347
    %2376 = vmatprep.subr.mxu0 0.0
    %2377 = vmatpush1.msra.mxu0 %v2348
    %2378 = vmatprep.subr.mxu0 0.0
    %2379 = vmatpush1.msra.mxu0 %v2349
    %2380 = vmatprep.subr.mxu0 0.0
    %2381 = vmatpush1.msra.mxu0 %v2350
    %2382 = vmatprep.subr.mxu0 0.0
    %2383 = vmatpush1.msra.mxu0 %v2351
    %2384 = vmatprep.subr.mxu0 0.0
    %2385 = vmatpush1.msra.mxu0 0.0
    %2386 = vmatprep.subr.mxu0 0.0
    %2387 = vmatpush1.msra.mxu0 0.0
    %2388 = vmatprep.subr.mxu0 0.0
    %2389 = vmatpush1.msra.mxu0 0.0
    %2390 = vmatprep.subr.mxu0 0.0
    %2391 = vmatpush1.msra.mxu0 0.0
    %2392 = vmatprep.subr.mxu0 0.0
    %2393 = vmatpush1.msra.mxu0 0.0
    %2394 = vmatprep.subr.mxu0 0.0
    %2395 = vmatpush1.msra.mxu0 0.0
    %2396 = vmatprep.subr.mxu0 0.0
    %2397 = vmatpush1.msra.mxu0 0.0
    %2398 = vmatprep.subr.mxu0 0.0
    %2399 = vmatpush1.msra.mxu0 0.0
    %2400 = vmatprep.subr.mxu0 0.0
    %2401 = vmatpush1.msra.mxu0 0.0
    %2402 = vmatprep.subr.mxu0 0.0
    %2403 = vmatpush1.msra.mxu0 0.0
    %2404 = vmatprep.subr.mxu0 0.0
    %2405 = vmatpush1.msra.mxu0 0.0
    %2406 = vmatprep.subr.mxu0 0.0
    %2407 = vmatpush1.msra.mxu0 0.0
    %2408 = vmatprep.subr.mxu0 0.0
    %2409 = vmatpush1.msra.mxu0 0.0
    %2410 = vmatprep.subr.mxu0 0.0
    %2411 = vmatpush1.msra.mxu0 0.0
    %2412 = vmatprep.subr.mxu0 0.0
    %2413 = vmatpush1.msra.mxu0 0.0
    %2414 = vmatprep.subr.mxu0 0.0
    %2415 = vmatpush1.msra.mxu0 0.0
    %2416 = vmatprep.mubr.f32.mxu0 0.0
    %2417 = vmatmul.mubr.f32.gmra.mrb[0].mxu0 %v267
    %v2418 = vpop.f32.mrb[0].mxu0
    %v2419 = vadd.f32 0.0, %v2418
    %v2420 = vpop.f32.mrb[0].mxu0
    %2421 = vdwg.mxu0
    %v2423 = vsel %vm1212, %v2419, 0
    %2425 = vmatprep.subr.mxu0 0.0
    %2426 = vmatpush1.msra.mxu0 %v1515
    %2427 = vmatprep.subr.mxu0 0.0
    %2428 = vmatpush1.msra.mxu0 %v1516
    %2429 = vmatprep.subr.mxu0 0.0
    %2430 = vmatpush1.msra.mxu0 %v1517
    %2431 = vmatprep.subr.mxu0 0.0
    %2432 = vmatpush1.msra.mxu0 %v1518
    %2433 = vmatprep.subr.mxu0 0.0
    %2434 = vmatpush1.msra.mxu0 %v1519
    %2435 = vmatprep.subr.mxu0 0.0
    %2436 = vmatpush1.msra.mxu0 %v1520
    %2437 = vmatprep.subr.mxu0 0.0
    %2438 = vmatpush1.msra.mxu0 %v1521
    %2439 = vmatprep.subr.mxu0 0.0
    %2440 = vmatpush1.msra.mxu0 %v1522
    %2441 = vmatprep.subr.mxu0 0.0
    %2442 = vmatpush1.msra.mxu0 0.0
    %2443 = vmatprep.subr.mxu0 0.0
    %2444 = vmatpush1.msra.mxu0 0.0
    %2445 = vmatprep.subr.mxu0 0.0
    %2446 = vmatpush1.msra.mxu0 0.0
    %2447 = vmatprep.subr.mxu0 0.0
    %2448 = vmatpush1.msra.mxu0 0.0
    %2449 = vmatprep.subr.mxu0 0.0
    %2450 = vmatpush1.msra.mxu0 0.0
    %2451 = vmatprep.subr.mxu0 0.0
    %2452 = vmatpush1.msra.mxu0 0.0
    %2453 = vmatprep.subr.mxu0 0.0
    %2454 = vmatpush1.msra.mxu0 0.0
    %2455 = vmatprep.subr.mxu0 0.0
    %2456 = vmatpush1.msra.mxu0 0.0
    %2457 = vmatprep.subr.mxu0 0.0
    %2458 = vmatpush1.msra.mxu0 0.0
    %2459 = vmatprep.subr.mxu0 0.0
    %2460 = vmatpush1.msra.mxu0 0.0
    %2461 = vmatprep.subr.mxu0 0.0
    %2462 = vmatpush1.msra.mxu0 0.0
    %2463 = vmatprep.subr.mxu0 0.0
    %2464 = vmatpush1.msra.mxu0 0.0
    %2465 = vmatprep.subr.mxu0 0.0
    %2466 = vmatpush1.msra.mxu0 0.0
    %2467 = vmatprep.subr.mxu0 0.0
    %2468 = vmatpush1.msra.mxu0 0.0
    %2469 = vmatprep.subr.mxu0 0.0
    %2470 = vmatpush1.msra.mxu0 0.0
    %2471 = vmatprep.subr.mxu0 0.0
    %2472 = vmatpush1.msra.mxu0 0.0
    %2473 = vmatprep.subr.mxu0 0.0
    %2474 = vmatpush1.msra.mxu0 0.0
    %2475 = vmatprep.subr.mxu0 0.0
    %2476 = vmatpush1.msra.mxu0 0.0
    %2477 = vmatprep.subr.mxu0 0.0
    %2478 = vmatpush1.msra.mxu0 0.0
    %2479 = vmatprep.subr.mxu0 0.0
    %2480 = vmatpush1.msra.mxu0 0.0
    %2481 = vmatprep.subr.mxu0 0.0
    %2482 = vmatpush1.msra.mxu0 0.0
    %2483 = vmatprep.subr.mxu0 0.0
    %2484 = vmatpush1.msra.mxu0 0.0
    %2485 = vmatprep.subr.mxu0 0.0
    %2486 = vmatpush1.msra.mxu0 0.0
    %2487 = vmatprep.subr.mxu0 0.0
    %2488 = vmatpush1.msra.mxu0 0.0
    %2489 = vmatprep.mubr.f32.mxu0 0.0
    %2490 = vmatmul.mubr.f32.gmra.mrb[0].mxu0 %v2423
    %v2491 = vpop.f32.mrb[0].mxu0
    %v2492 = vadd.f32 0.0, %v2491
    %v2493 = vpop.f32.mrb[0].mxu0
    %2494 = vdwg.mxu0
    %v2495 = vmul.f32 %v2492, 0.0025
    %v2496 = vmul.f32 %v2495, %v2495
    %v2498 = vrot.slane %v2496, 4
    %v2500 = vsub.f32 %v2495, %v2498
    %v2501 = vmax.f32 %v2500, 0.0
    %v2502 = vadd.f32 %v2501, 1e-05
    %v2503 = vrsqrt.pop %v2502
    %v2504 = vld [vmem:[%s11] sm:$0xff]
    %v2505 = vld [vmem:[%s11 + $0x8] sm:$0xff]
    %v2506 = vld [vmem:[%s11 + $0x10] sm:$0xff]
    %v2507 = vld [vmem:[%s11 + $0x18] sm:$0xff]
    %v2508 = vld [vmem:[%s11 + $0x20] sm:$0xff]
    %v2509 = vld [vmem:[%s11 + $0x28] sm:$0xff]
    %v2510 = vld [vmem:[%s11 + $0x30] sm:$0xff]
    %v2511 = vld [vmem:[%s11 + $0x38] sm:$0xff]
    %v2513 = vrot.slane %v2503, 4
    %v2514 = vsel %vm485, %v2513, 0
    %2516 = vmatprep.subr.mxu0 0.0
    %2517 = vmatpush1.msra.mxu0 %v2514
    %2518 = vmatprep.subr.mxu0 0.0
    %2519 = vmatpush1.msra.mxu0 0.0
    %2520 = vmatprep.subr.mxu0 0.0
    %2521 = vmatpush1.msra.mxu0 0.0
    %2522 = vmatprep.subr.mxu0 0.0
    %2523 = vmatpush1.msra.mxu0 0.0
    %2524 = vmatprep.subr.mxu0 0.0
    %2525 = vmatpush1.msra.mxu0 0.0
    %2526 = vmatprep.subr.mxu0 0.0
    %2527 = vmatpush1.msra.mxu0 0.0
    %2528 = vmatprep.subr.mxu0 0.0
    %2529 = vmatpush1.msra.mxu0 0.0
    %2530 = vmatprep.subr.mxu0 0.0
    %2531 = vmatpush1.msra.mxu0 0.0
    %2532 = vmatprep.subr.mxu0 0.0
    %2533 = vmatpush1.msra.mxu0 0.0
    %2534 = vmatprep.subr.mxu0 0.0
    %2535 = vmatpush1.msra.mxu0 0.0
    %2536 = vmatprep.subr.mxu0 0.0
    %2537 = vmatpush1.msra.mxu0 0.0
    %2538 = vmatprep.subr.mxu0 0.0
    %2539 = vmatpush1.msra.mxu0 0.0
    %2540 = vmatprep.subr.mxu0 0.0
    %2541 = vmatpush1.msra.mxu0 0.0
    %2542 = vmatprep.subr.mxu0 0.0
    %2543 = vmatpush1.msra.mxu0 0.0
    %2544 = vmatprep.subr.mxu0 0.0
    %2545 = vmatpush1.msra.mxu0 0.0
    %2546 = vmatprep.subr.mxu0 0.0
    %2547 = vmatpush1.msra.mxu0 0.0
    %2548 = vmatprep.subr.mxu0 0.0
    %2549 = vmatpush1.msra.mxu0 0.0
    %2550 = vmatprep.subr.mxu0 0.0
    %2551 = vmatpush1.msra.mxu0 0.0
    %2552 = vmatprep.subr.mxu0 0.0
    %2553 = vmatpush1.msra.mxu0 0.0
    %2554 = vmatprep.subr.mxu0 0.0
    %2555 = vmatpush1.msra.mxu0 0.0
    %2556 = vmatprep.subr.mxu0 0.0
    %2557 = vmatpush1.msra.mxu0 0.0
    %2558 = vmatprep.subr.mxu0 0.0
    %2559 = vmatpush1.msra.mxu0 0.0
    %2560 = vmatprep.subr.mxu0 0.0
    %2561 = vmatpush1.msra.mxu0 0.0
    %2562 = vmatprep.subr.mxu0 0.0
    %2563 = vmatpush1.msra.mxu0 0.0
    %2564 = vmatprep.subr.mxu0 0.0
    %2565 = vmatpush1.msra.mxu0 0.0
    %2566 = vmatprep.subr.mxu0 0.0
    %2567 = vmatpush1.msra.mxu0 0.0
    %2568 = vmatprep.subr.mxu0 0.0
    %2569 = vmatpush1.msra.mxu0 0.0
    %2570 = vmatprep.subr.mxu0 0.0
    %2571 = vmatpush1.msra.mxu0 0.0
    %2572 = vmatprep.subr.mxu0 0.0
    %2573 = vmatpush1.msra.mxu0 0.0
    %2574 = vmatprep.subr.mxu0 0.0
    %2575 = vmatpush1.msra.mxu0 0.0
    %2576 = vmatprep.subr.mxu0 0.0
    %2577 = vmatpush1.msra.mxu0 0.0
    %2578 = vmatprep.subr.mxu0 0.0
    %2579 = vmatpush1.msra.mxu0 0.0
    %2580 = vmatprep.mubr.f32.mxu0 0.0
    %2581 = vmatmul.mubr.f32.gmra.mrb[0].mxu0 %v462
    %v2582 = vpop.f32.mrb[0].mxu0
    %v2583 = vadd.f32 0.0, %v2582
    %v2584 = vpop.f32.mrb[0].mxu0
    %2585 = vmatprep.mubr.f32.mxu0 0.0
    %2586 = vmatmul.mubr.f32.gmra.mrb[0].mxu0 %v465
    %v2587 = vpop.f32.mrb[0].mxu0
    %v2588 = vadd.f32 0.0, %v2587
    %v2589 = vpop.f32.mrb[0].mxu0
    %2590 = vmatprep.mubr.f32.mxu0 0.0
    %2591 = vmatmul.mubr.f32.gmra.mrb[0].mxu0 %v468
    %v2592 = vpop.f32.mrb[0].mxu0
    %v2593 = vadd.f32 0.0, %v2592
    %v2594 = vpop.f32.mrb[0].mxu0
    %2595 = vmatprep.mubr.f32.mxu0 0.0
    %2596 = vmatmul.mubr.f32.gmra.mrb[0].mxu0 %v471
    %v2597 = vpop.f32.mrb[0].mxu0
    %v2598 = vadd.f32 0.0, %v2597
    %v2599 = vpop.f32.mrb[0].mxu0
    %2600 = vmatprep.mubr.f32.mxu0 0.0
    %2601 = vmatmul.mubr.f32.gmra.mrb[0].mxu0 %v474
    %v2602 = vpop.f32.mrb[0].mxu0
    %v2603 = vadd.f32 0.0, %v2602
    %v2604 = vpop.f32.mrb[0].mxu0
    %2605 = vmatprep.mubr.f32.mxu0 0.0
    %2606 = vmatmul.mubr.f32.gmra.mrb[0].mxu0 %v477
    %v2607 = vpop.f32.mrb[0].mxu0
    %v2608 = vadd.f32 0.0, %v2607
    %v2609 = vpop.f32.mrb[0].mxu0
    %2610 = vmatprep.mubr.f32.mxu0 0.0
    %2611 = vmatmul.mubr.f32.gmra.mrb[0].mxu0 %v480
    %v2612 = vpop.f32.mrb[0].mxu0
    %v2613 = vadd.f32 0.0, %v2612
    %v2614 = vpop.f32.mrb[0].mxu0
    %2615 = vmatprep.mubr.f32.mxu0 0.0
    %2616 = vmatmul.mubr.f32.gmra.mrb[0].mxu0 %v483
    %v2617 = vpop.f32.mrb[0].mxu0
    %v2618 = vadd.f32 0.0, %v2617
    %v2619 = vpop.f32.mrb[0].mxu0
    %2620 = vdwg.mxu0
    %2622 = vset.pattern.permute.xlu0 0
    %2623 = vperm.xlu0 %2622, %v2504
    %v2624 = vpop.permute.xlu0 %2623
    %2627 = vset.pattern.permute.xlu0 0
    %2628 = vperm.xlu0 %2627, %v2505
    %v2629 = vpop.permute.xlu0 %2628
    %2632 = vset.pattern.permute.xlu0 0
    %2633 = vperm.xlu0 %2632, %v2506
    %v2634 = vpop.permute.xlu0 %2633
    %2637 = vset.pattern.permute.xlu0 0
    %2638 = vperm.xlu0 %2637, %v2507
    %v2639 = vpop.permute.xlu0 %2638
    %2642 = vset.pattern.permute.xlu0 0
    %2643 = vperm.xlu0 %2642, %v2508
    %v2644 = vpop.permute.xlu0 %2643
    %2647 = vset.pattern.permute.xlu0 0
    %2648 = vperm.xlu0 %2647, %v2509
    %v2649 = vpop.permute.xlu0 %2648
    %2652 = vset.pattern.permute.xlu0 0
    %2653 = vperm.xlu0 %2652, %v2510
    %v2654 = vpop.permute.xlu0 %2653
    %2657 = vset.pattern.permute.xlu0 0
    %2658 = vperm.xlu0 %2657, %v2511
    %v2659 = vpop.permute.xlu0 %2658
    %v2661 = vmul.f32 %v2583, %v2624
    %v2662 = vmul.f32 %v2588, %v2629
    %v2663 = vmul.f32 %v2593, %v2634
    %v2664 = vmul.f32 %v2598, %v2639
    %v2665 = vmul.f32 %v2603, %v2644
    %v2666 = vmul.f32 %v2608, %v2649
    %v2667 = vmul.f32 %v2613, %v2654
    %v2668 = vmul.f32 %v2618, %v2659
    %v2670 = vsel %vm485, %v2495, 0
    %2672 = vmatprep.subr.mxu0 0.0
    %2673 = vmatpush1.msra.mxu0 %v2670
    %2674 = vmatprep.subr.mxu0 0.0
    %2675 = vmatpush1.msra.mxu0 0.0
    %2676 = vmatprep.subr.mxu0 0.0
    %2677 = vmatpush1.msra.mxu0 0.0
    %2678 = vmatprep.subr.mxu0 0.0
    %2679 = vmatpush1.msra.mxu0 0.0
    %2680 = vmatprep.subr.mxu0 0.0
    %2681 = vmatpush1.msra.mxu0 0.0
    %2682 = vmatprep.subr.mxu0 0.0
    %2683 = vmatpush1.msra.mxu0 0.0
    %2684 = vmatprep.subr.mxu0 0.0
    %2685 = vmatpush1.msra.mxu0 0.0
    %2686 = vmatprep.subr.mxu0 0.0
    %2687 = vmatpush1.msra.mxu0 0.0
    %2688 = vmatprep.subr.mxu0 0.0
    %2689 = vmatpush1.msra.mxu0 0.0
    %2690 = vmatprep.subr.mxu0 0.0
    %2691 = vmatpush1.msra.mxu0 0.0
    %2692 = vmatprep.subr.mxu0 0.0
    %2693 = vmatpush1.msra.mxu0 0.0
    %2694 = vmatprep.subr.mxu0 0.0
    %2695 = vmatpush1.msra.mxu0 0.0
    %2696 = vmatprep.subr.mxu0 0.0
    %2697 = vmatpush1.msra.mxu0 0.0
    %2698 = vmatprep.subr.mxu0 0.0
    %2699 = vmatpush1.msra.mxu0 0.0
    %2700 = vmatprep.subr.mxu0 0.0
    %2701 = vmatpush1.msra.mxu0 0.0
    %2702 = vmatprep.subr.mxu0 0.0
    %2703 = vmatpush1.msra.mxu0 0.0
    %2704 = vmatprep.subr.mxu0 0.0
    %2705 = vmatpush1.msra.mxu0 0.0
    %2706 = vmatprep.subr.mxu0 0.0
    %2707 = vmatpush1.msra.mxu0 0.0
    %2708 = vmatprep.subr.mxu0 0.0
    %2709 = vmatpush1.msra.mxu0 0.0
    %2710 = vmatprep.subr.mxu0 0.0
    %2711 = vmatpush1.msra.mxu0 0.0
    %2712 = vmatprep.subr.mxu0 0.0
    %2713 = vmatpush1.msra.mxu0 0.0
    %2714 = vmatprep.subr.mxu0 0.0
    %2715 = vmatpush1.msra.mxu0 0.0
    %2716 = vmatprep.subr.mxu0 0.0
    %2717 = vmatpush1.msra.mxu0 0.0
    %2718 = vmatprep.subr.mxu0 0.0
    %2719 = vmatpush1.msra.mxu0 0.0
    %2720 = vmatprep.subr.mxu0 0.0
    %2721 = vmatpush1.msra.mxu0 0.0
    %2722 = vmatprep.subr.mxu0 0.0
    %2723 = vmatpush1.msra.mxu0 0.0
    %2724 = vmatprep.subr.mxu0 0.0
    %2725 = vmatpush1.msra.mxu0 0.0
    %2726 = vmatprep.subr.mxu0 0.0
    %2727 = vmatpush1.msra.mxu0 0.0
    %2728 = vmatprep.subr.mxu0 0.0
    %2729 = vmatpush1.msra.mxu0 0.0
    %2730 = vmatprep.subr.mxu0 0.0
    %2731 = vmatpush1.msra.mxu0 0.0
    %2732 = vmatprep.subr.mxu0 0.0
    %2733 = vmatpush1.msra.mxu0 0.0
    %2734 = vmatprep.subr.mxu0 0.0
    %2735 = vmatpush1.msra.mxu0 0.0
    %2736 = vmatprep.mubr.f32.mxu0 0.0
    %2737 = vmatmul.mubr.f32.gmra.mrb[0].mxu0 %v462
    %v2738 = vpop.f32.mrb[0].mxu0
    %v2739 = vadd.f32 0.0, %v2738
    %v2740 = vpop.f32.mrb[0].mxu0
    %2741 = vmatprep.mubr.f32.mxu0 0.0
    %2742 = vmatmul.mubr.f32.gmra.mrb[0].mxu0 %v465
    %v2743 = vpop.f32.mrb[0].mxu0
    %v2744 = vadd.f32 0.0, %v2743
    %v2745 = vpop.f32.mrb[0].mxu0
    %2746 = vmatprep.mubr.f32.mxu0 0.0
    %2747 = vmatmul.mubr.f32.gmra.mrb[0].mxu0 %v468
    %v2748 = vpop.f32.mrb[0].mxu0
    %v2749 = vadd.f32 0.0, %v2748
    %v2750 = vpop.f32.mrb[0].mxu0
    %2751 = vmatprep.mubr.f32.mxu0 0.0
    %2752 = vmatmul.mubr.f32.gmra.mrb[0].mxu0 %v471
    %v2753 = vpop.f32.mrb[0].mxu0
    %v2754 = vadd.f32 0.0, %v2753
    %v2755 = vpop.f32.mrb[0].mxu0
    %2756 = vmatprep.mubr.f32.mxu0 0.0
    %2757 = vmatmul.mubr.f32.gmra.mrb[0].mxu0 %v474
    %v2758 = vpop.f32.mrb[0].mxu0
    %v2759 = vadd.f32 0.0, %v2758
    %v2760 = vpop.f32.mrb[0].mxu0
    %2761 = vmatprep.mubr.f32.mxu0 0.0
    %2762 = vmatmul.mubr.f32.gmra.mrb[0].mxu0 %v477
    %v2763 = vpop.f32.mrb[0].mxu0
    %v2764 = vadd.f32 0.0, %v2763
    %v2765 = vpop.f32.mrb[0].mxu0
    %2766 = vmatprep.mubr.f32.mxu0 0.0
    %2767 = vmatmul.mubr.f32.gmra.mrb[0].mxu0 %v480
    %v2768 = vpop.f32.mrb[0].mxu0
    %v2769 = vadd.f32 0.0, %v2768
    %v2770 = vpop.f32.mrb[0].mxu0
    %2771 = vmatprep.mubr.f32.mxu0 0.0
    %2772 = vmatmul.mubr.f32.gmra.mrb[0].mxu0 %v483
    %v2773 = vpop.f32.mrb[0].mxu0
    %v2774 = vadd.f32 0.0, %v2773
    %v2775 = vpop.f32.mrb[0].mxu0
    %2776 = vdwg.mxu0
    %v2777 = vmul.f32 %v2739, %v2661
    %v2778 = vmul.f32 %v2744, %v2662
    %v2779 = vmul.f32 %v2749, %v2663
    %v2780 = vmul.f32 %v2754, %v2664
    %v2781 = vmul.f32 %v2759, %v2665
    %v2782 = vmul.f32 %v2764, %v2666
    %v2783 = vmul.f32 %v2769, %v2667
    %v2784 = vmul.f32 %v2774, %v2668
    %2785 = vset.pattern.permute.xlu0 1
    %2786 = vperm.xlu0 %2785, %v2504
    %v2787 = vpop.permute.xlu0 %2786
    %2789 = vset.pattern.permute.xlu0 1
    %2790 = vperm.xlu0 %2789, %v2505
    %v2791 = vpop.permute.xlu0 %2790
    %2793 = vset.pattern.permute.xlu0 1
    %2794 = vperm.xlu0 %2793, %v2506
    %v2795 = vpop.permute.xlu0 %2794
    %2797 = vset.pattern.permute.xlu0 1
    %2798 = vperm.xlu0 %2797, %v2507
    %v2799 = vpop.permute.xlu0 %2798
    %2801 = vset.pattern.permute.xlu0 1
    %2802 = vperm.xlu0 %2801, %v2508
    %v2803 = vpop.permute.xlu0 %2802
    %2805 = vset.pattern.permute.xlu0 1
    %2806 = vperm.xlu0 %2805, %v2509
    %v2807 = vpop.permute.xlu0 %2806
    %2809 = vset.pattern.permute.xlu0 1
    %2810 = vperm.xlu0 %2809, %v2510
    %v2811 = vpop.permute.xlu0 %2810
    %2813 = vset.pattern.permute.xlu0 1
    %2814 = vperm.xlu0 %2813, %v2511
    %v2815 = vpop.permute.xlu0 %2814
    %v2817 = vsub.f32 %v2787, %v2777
    %v2818 = vsub.f32 %v2791, %v2778
    %v2819 = vsub.f32 %v2795, %v2779
    %v2820 = vsub.f32 %v2799, %v2780
    %v2821 = vsub.f32 %v2803, %v2781
    %v2822 = vsub.f32 %v2807, %v2782
    %v2823 = vsub.f32 %v2811, %v2783
    %v2824 = vsub.f32 %v2815, %v2784
    %v2826 = vsel %vm797, %v2661, 0
    %v2829 = vsel %vm797, %v2662, 0
    %v2832 = vsel %vm797, %v2663, 0
    %v2835 = vsel %vm797, %v2664, 0
    %v2838 = vsel %vm797, %v2665, 0
    %v2841 = vsel %vm797, %v2666, 0
    %v2844 = vsel %vm797, %v2667, 0
    %v2847 = vsel %vm797, %v2668, 0
    %2849 = vmatprep.subr.mxu0 0.0
    %2850 = vmatpush1.msra.mxu0 %v2092
    %2851 = vmatprep.subr.mxu0 0.0
    %2852 = vmatpush1.msra.mxu0 0.0
    %2853 = vmatprep.subr.mxu0 0.0
    %2854 = vmatpush1.msra.mxu0 0.0
    %2855 = vmatprep.subr.mxu0 0.0
    %2856 = vmatpush1.msra.mxu0 0.0
    %2857 = vmatprep.subr.mxu0 0.0
    %2858 = vmatpush1.msra.mxu0 0.0
    %2859 = vmatprep.subr.mxu0 0.0
    %2860 = vmatpush1.msra.mxu0 0.0
    %2861 = vmatprep.subr.mxu0 0.0
    %2862 = vmatpush1.msra.mxu0 0.0
    %2863 = vmatprep.subr.mxu0 0.0
    %2864 = vmatpush1.msra.mxu0 0.0
    %2865 = vmatprep.subr.mxu0 0.0
    %2866 = vmatpush1.msra.mxu0 0.0
    %2867 = vmatprep.subr.mxu0 0.0
    %2868 = vmatpush1.msra.mxu0 0.0
    %2869 = vmatprep.subr.mxu0 0.0
    %2870 = vmatpush1.msra.mxu0 0.0
    %2871 = vmatprep.subr.mxu0 0.0
    %2872 = vmatpush1.msra.mxu0 0.0
    %2873 = vmatprep.subr.mxu0 0.0
    %2874 = vmatpush1.msra.mxu0 0.0
    %2875 = vmatprep.subr.mxu0 0.0
    %2876 = vmatpush1.msra.mxu0 0.0
    %2877 = vmatprep.subr.mxu0 0.0
    %2878 = vmatpush1.msra.mxu0 0.0
    %2879 = vmatprep.subr.mxu0 0.0
    %2880 = vmatpush1.msra.mxu0 0.0
    %2881 = vmatprep.subr.mxu0 0.0
    %2882 = vmatpush1.msra.mxu0 0.0
    %2883 = vmatprep.subr.mxu0 0.0
    %2884 = vmatpush1.msra.mxu0 0.0
    %2885 = vmatprep.subr.mxu0 0.0
    %2886 = vmatpush1.msra.mxu0 0.0
    %2887 = vmatprep.subr.mxu0 0.0
    %2888 = vmatpush1.msra.mxu0 0.0
    %2889 = vmatprep.subr.mxu0 0.0
    %2890 = vmatpush1.msra.mxu0 0.0
    %2891 = vmatprep.subr.mxu0 0.0
    %2892 = vmatpush1.msra.mxu0 0.0
    %2893 = vmatprep.subr.mxu0 0.0
    %2894 = vmatpush1.msra.mxu0 0.0
    %2895 = vmatprep.subr.mxu0 0.0
    %2896 = vmatpush1.msra.mxu0 0.0
    %2897 = vmatprep.subr.mxu0 0.0
    %2898 = vmatpush1.msra.mxu0 0.0
    %2899 = vmatprep.subr.mxu0 0.0
    %2900 = vmatpush1.msra.mxu0 0.0
    %2901 = vmatprep.subr.mxu0 0.0
    %2902 = vmatpush1.msra.mxu0 0.0
    %2903 = vmatprep.subr.mxu0 0.0
    %2904 = vmatpush1.msra.mxu0 0.0
    %2905 = vmatprep.subr.mxu0 0.0
    %2906 = vmatpush1.msra.mxu0 0.0
    %2907 = vmatprep.subr.mxu0 0.0
    %2908 = vmatpush1.msra.mxu0 0.0
    %2909 = vmatprep.subr.mxu0 0.0
    %2910 = vmatpush1.msra.mxu0 0.0
    %2911 = vmatprep.subr.mxu0 0.0
    %2912 = vmatpush1.msra.mxu0 0.0
    %2913 = vmatprep.mubr.f32.mxu0 0.0
    %2914 = vmatmul.mubr.f32.gmra.mrb[0].mxu0 %v2826
    %v2915 = vpop.f32.mrb[0].mxu0
    %v2916 = vadd.f32 0.0, %v2915
    %v2917 = vpop.f32.mrb[0].mxu0
    %2918 = vmatprep.mubr.f32.mxu0 0.0
    %2919 = vmatmul.mubr.f32.gmra.mrb[0].mxu0 %v2829
    %v2920 = vpop.f32.mrb[0].mxu0
    %v2921 = vadd.f32 0.0, %v2920
    %v2922 = vpop.f32.mrb[0].mxu0
    %2923 = vmatprep.mubr.f32.mxu0 0.0
    %2924 = vmatmul.mubr.f32.gmra.mrb[0].mxu0 %v2832
    %v2925 = vpop.f32.mrb[0].mxu0
    %v2926 = vadd.f32 0.0, %v2925
    %v2927 = vpop.f32.mrb[0].mxu0
    %2928 = vmatprep.mubr.f32.mxu0 0.0
    %2929 = vmatmul.mubr.f32.gmra.mrb[0].mxu0 %v2835
    %v2930 = vpop.f32.mrb[0].mxu0
    %v2931 = vadd.f32 0.0, %v2930
    %v2932 = vpop.f32.mrb[0].mxu0
    %2933 = vmatprep.mubr.f32.mxu0 0.0
    %2934 = vmatmul.mubr.f32.gmra.mrb[0].mxu0 %v2838
    %v2935 = vpop.f32.mrb[0].mxu0
    %v2936 = vadd.f32 0.0, %v2935
    %v2937 = vpop.f32.mrb[0].mxu0
    %2938 = vmatprep.mubr.f32.mxu0 0.0
    %2939 = vmatmul.mubr.f32.gmra.mrb[0].mxu0 %v2841
    %v2940 = vpop.f32.mrb[0].mxu0
    %v2941 = vadd.f32 0.0, %v2940
    %v2942 = vpop.f32.mrb[0].mxu0
    %2943 = vmatprep.mubr.f32.mxu0 0.0
    %2944 = vmatmul.mubr.f32.gmra.mrb[0].mxu0 %v2844
    %v2945 = vpop.f32.mrb[0].mxu0
    %v2946 = vadd.f32 0.0, %v2945
    %v2947 = vpop.f32.mrb[0].mxu0
    %2948 = vmatprep.mubr.f32.mxu0 0.0
    %2949 = vmatmul.mubr.f32.gmra.mrb[0].mxu0 %v2847
    %v2950 = vpop.f32.mrb[0].mxu0
    %v2951 = vadd.f32 0.0, %v2950
    %v2952 = vpop.f32.mrb[0].mxu0
    %2953 = vdwg.mxu0
    %v2955 = vsel %vm797, %v2817, 0
    %v2958 = vsel %vm797, %v2818, 0
    %v2961 = vsel %vm797, %v2819, 0
    %v2964 = vsel %vm797, %v2820, 0
    %v2967 = vsel %vm797, %v2821, 0
    %v2970 = vsel %vm797, %v2822, 0
    %v2973 = vsel %vm797, %v2823, 0
    %v2976 = vsel %vm797, %v2824, 0
    %2978 = vmatprep.subr.mxu0 0.0
    %2979 = vmatpush1.msra.mxu0 %v2092
    %2980 = vmatprep.subr.mxu0 0.0
    %2981 = vmatpush1.msra.mxu0 0.0
    %2982 = vmatprep.subr.mxu0 0.0
    %2983 = vmatpush1.msra.mxu0 0.0
    %2984 = vmatprep.subr.mxu0 0.0
    %2985 = vmatpush1.msra.mxu0 0.0
    %2986 = vmatprep.subr.mxu0 0.0
    %2987 = vmatpush1.msra.mxu0 0.0
    %2988 = vmatprep.subr.mxu0 0.0
    %2989 = vmatpush1.msra.mxu0 0.0
    %2990 = vmatprep.subr.mxu0 0.0
    %2991 = vmatpush1.msra.mxu0 0.0
    %2992 = vmatprep.subr.mxu0 0.0
    %2993 = vmatpush1.msra.mxu0 0.0
    %2994 = vmatprep.subr.mxu0 0.0
    %2995 = vmatpush1.msra.mxu0 0.0
    %2996 = vmatprep.subr.mxu0 0.0
    %2997 = vmatpush1.msra.mxu0 0.0
    %2998 = vmatprep.subr.mxu0 0.0
    %2999 = vmatpush1.msra.mxu0 0.0
    %3000 = vmatprep.subr.mxu0 0.0
    %3001 = vmatpush1.msra.mxu0 0.0
    %3002 = vmatprep.subr.mxu0 0.0
    %3003 = vmatpush1.msra.mxu0 0.0
    %3004 = vmatprep.subr.mxu0 0.0
    %3005 = vmatpush1.msra.mxu0 0.0
    %3006 = vmatprep.subr.mxu0 0.0
    %3007 = vmatpush1.msra.mxu0 0.0
    %3008 = vmatprep.subr.mxu0 0.0
    %3009 = vmatpush1.msra.mxu0 0.0
    %3010 = vmatprep.subr.mxu0 0.0
    %3011 = vmatpush1.msra.mxu0 0.0
    %3012 = vmatprep.subr.mxu0 0.0
    %3013 = vmatpush1.msra.mxu0 0.0
    %3014 = vmatprep.subr.mxu0 0.0
    %3015 = vmatpush1.msra.mxu0 0.0
    %3016 = vmatprep.subr.mxu0 0.0
    %3017 = vmatpush1.msra.mxu0 0.0
    %3018 = vmatprep.subr.mxu0 0.0
    %3019 = vmatpush1.msra.mxu0 0.0
    %3020 = vmatprep.subr.mxu0 0.0
    %3021 = vmatpush1.msra.mxu0 0.0
    %3022 = vmatprep.subr.mxu0 0.0
    %3023 = vmatpush1.msra.mxu0 0.0
    %3024 = vmatprep.subr.mxu0 0.0
    %3025 = vmatpush1.msra.mxu0 0.0
    %3026 = vmatprep.subr.mxu0 0.0
    %3027 = vmatpush1.msra.mxu0 0.0
    %3028 = vmatprep.subr.mxu0 0.0
    %3029 = vmatpush1.msra.mxu0 0.0
    %3030 = vmatprep.subr.mxu0 0.0
    %3031 = vmatpush1.msra.mxu0 0.0
    %3032 = vmatprep.subr.mxu0 0.0
    %3033 = vmatpush1.msra.mxu0 0.0
    %3034 = vmatprep.subr.mxu0 0.0
    %3035 = vmatpush1.msra.mxu0 0.0
    %3036 = vmatprep.subr.mxu0 0.0
    %3037 = vmatpush1.msra.mxu0 0.0
    %3038 = vmatprep.subr.mxu0 0.0
    %3039 = vmatpush1.msra.mxu0 0.0
    %3040 = vmatprep.subr.mxu0 0.0
    %3041 = vmatpush1.msra.mxu0 0.0
    %3042 = vmatprep.mubr.f32.mxu0 0.0
    %3043 = vmatmul.mubr.f32.gmra.mrb[0].mxu0 %v2955
    %v3044 = vpop.f32.mrb[0].mxu0
    %v3045 = vadd.f32 0.0, %v3044
    %v3046 = vpop.f32.mrb[0].mxu0
    %3047 = vmatprep.mubr.f32.mxu0 0.0
    %3048 = vmatmul.mubr.f32.gmra.mrb[0].mxu0 %v2958
    %v3049 = vpop.f32.mrb[0].mxu0
    %v3050 = vadd.f32 0.0, %v3049
    %v3051 = vpop.f32.mrb[0].mxu0
    %3052 = vmatprep.mubr.f32.mxu0 0.0
    %3053 = vmatmul.mubr.f32.gmra.mrb[0].mxu0 %v2961
    %v3054 = vpop.f32.mrb[0].mxu0
    %v3055 = vadd.f32 0.0, %v3054
    %v3056 = vpop.f32.mrb[0].mxu0
    %3057 = vmatprep.mubr.f32.mxu0 0.0
    %3058 = vmatmul.mubr.f32.gmra.mrb[0].mxu0 %v2964
    %v3059 = vpop.f32.mrb[0].mxu0
    %v3060 = vadd.f32 0.0, %v3059
    %v3061 = vpop.f32.mrb[0].mxu0
    %3062 = vmatprep.mubr.f32.mxu0 0.0
    %3063 = vmatmul.mubr.f32.gmra.mrb[0].mxu0 %v2967
    %v3064 = vpop.f32.mrb[0].mxu0
    %v3065 = vadd.f32 0.0, %v3064
    %v3066 = vpop.f32.mrb[0].mxu0
    %3067 = vmatprep.mubr.f32.mxu0 0.0
    %3068 = vmatmul.mubr.f32.gmra.mrb[0].mxu0 %v2970
    %v3069 = vpop.f32.mrb[0].mxu0
    %v3070 = vadd.f32 0.0, %v3069
    %v3071 = vpop.f32.mrb[0].mxu0
    %3072 = vmatprep.mubr.f32.mxu0 0.0
    %3073 = vmatmul.mubr.f32.gmra.mrb[0].mxu0 %v2973
    %v3074 = vpop.f32.mrb[0].mxu0
    %v3075 = vadd.f32 0.0, %v3074
    %v3076 = vpop.f32.mrb[0].mxu0
    %3077 = vmatprep.mubr.f32.mxu0 0.0
    %3078 = vmatmul.mubr.f32.gmra.mrb[0].mxu0 %v2976
    %v3079 = vpop.f32.mrb[0].mxu0
    %v3080 = vadd.f32 0.0, %v3079
    %v3081 = vpop.f32.mrb[0].mxu0
    %3082 = vdwg.mxu0
    %v3083 = vmul.f32 %v1441, %v2916
    %v3084 = vmul.f32 %v1444, %v2921
    %v3085 = vmul.f32 %v1449, %v2926
    %v3086 = vmul.f32 %v1452, %v2931
    %v3087 = vmul.f32 %v1457, %v2936
    %v3088 = vmul.f32 %v1460, %v2941
    %v3089 = vmul.f32 %v1465, %v2946
    %v3090 = vmul.f32 %v1468, %v2951
    %v3091 = vadd.f32 %v3083, %v3045
    %v3092 = vadd.f32 %v3084, %v3050
    %v3093 = vadd.f32 %v3085, %v3055
    %v3094 = vadd.f32 %v3086, %v3060
    %v3095 = vadd.f32 %v3087, %v3065
    %v3096 = vadd.f32 %v3088, %v3070
    %v3097 = vadd.f32 %v3089, %v3075
    %v3098 = vadd.f32 %v3090, %v3080
    %v3099 = vmax.f32 %v3091, 0.0
    %v3100 = vmax.f32 %v3092, 0.0
    %v3101 = vmax.f32 %v3093, 0.0
    %v3102 = vmax.f32 %v3094, 0.0
    %v3103 = vmax.f32 %v3095, 0.0
    %v3104 = vmax.f32 %v3096, 0.0
    %v3105 = vmax.f32 %v3097, 0.0
    %v3106 = vmax.f32 %v3098, 0.0
    %v3107 = vpack.c.bf16 %v3100, %v3099
    %v3108 = vpack.c.bf16 %v3102, %v3101
    %v3109 = vpack.c.bf16 %v3104, %v3103
    %v3110 = vpack.c.bf16 %v3106, %v3105
    %3115 = vrot.lane.b32.xlu0 %v3107, 65
    %v3116 = vpop.permute.xlu0 %3115
    %3117 = vrot.lane.b32.xlu0 %v3108, 65
    %v3118 = vpop.permute.xlu0 %3117
    %3119 = vrot.lane.b32.xlu0 %v3109, 65
    %v3120 = vpop.permute.xlu0 %3119
    %3121 = vrot.lane.b32.xlu0 %v3110, 65
    %v3122 = vpop.permute.xlu0 %3121
    %3123 = vrot.lane.b32.xlu0 %v3107, 1
    %v3124 = vpop.permute.xlu0 %3123
    %3125 = vrot.lane.b32.xlu0 %v3108, 1
    %v3126 = vpop.permute.xlu0 %3125
    %3127 = vrot.lane.b32.xlu0 %v3109, 1
    %v3128 = vpop.permute.xlu0 %3127
    %3129 = vrot.lane.b32.xlu0 %v3110, 1
    %v3130 = vpop.permute.xlu0 %3129
    %v3133 = vsel %vm148, %v3116, %v3124
    %v3137 = vsel %vm148, %v3118, %v3126
    %v3141 = vsel %vm148, %v3120, %v3128
    %v3145 = vsel %vm148, %v3122, %v3130
    %3147 = vrot.lane.b32.xlu0 %v3107, 127
    %v3148 = vpop.permute.xlu0 %3147
    %3149 = vrot.lane.b32.xlu0 %v3108, 127
    %v3150 = vpop.permute.xlu0 %3149
    %3151 = vrot.lane.b32.xlu0 %v3109, 127
    %v3152 = vpop.permute.xlu0 %3151
    %3153 = vrot.lane.b32.xlu0 %v3110, 127
    %v3154 = vpop.permute.xlu0 %3153
    %3155 = vrot.lane.b32.xlu0 %v3107, 63
    %v3156 = vpop.permute.xlu0 %3155
    %3157 = vrot.lane.b32.xlu0 %v3108, 63
    %v3158 = vpop.permute.xlu0 %3157
    %3159 = vrot.lane.b32.xlu0 %v3109, 63
    %v3160 = vpop.permute.xlu0 %3159
    %3161 = vrot.lane.b32.xlu0 %v3110, 63
    %v3162 = vpop.permute.xlu0 %3161
    %vm3163 = vcmask 515072
    %v3166 = vsel %vm3163, %v3148, %v3156
    %v3170 = vsel %vm3163, %v3150, %v3158
    %v3174 = vsel %vm3163, %v3152, %v3160
    %v3178 = vsel %vm3163, %v3154, %v3162
    %v3180 = vld [vmem:[%s13] sm:$0xff]
    %v3181 = vld [vmem:[%s13 + $0x8] sm:$0xff]
    %v3182 = vld [vmem:[%s13 + $0x10] sm:$0xff]
    %v3183 = vld [vmem:[%s13 + $0x18] sm:$0xff]
    %v3184 = vld [vmem:[%s13 + $0x20] sm:$0xff]
    %v3185 = vld [vmem:[%s13 + $0x28] sm:$0xff]
    %v3186 = vld [vmem:[%s13 + $0x30] sm:$0xff]
    %v3187 = vld [vmem:[%s13 + $0x38] sm:$0xff]
    %v3196 = vunpack.c.l.b16 %v3180
    %v3197 = vunpack.c.h.b16 %v3180
    %v3198 = vunpack.c.l.b16 %v3181
    %v3199 = vunpack.c.h.b16 %v3181
    %v3200 = vunpack.c.l.b16 %v3182
    %v3201 = vunpack.c.h.b16 %v3182
    %v3202 = vunpack.c.l.b16 %v3183
    %v3203 = vunpack.c.h.b16 %v3183
    %v3204 = vunpack.c.l.b16 %v3184
    %v3205 = vunpack.c.h.b16 %v3184
    %v3206 = vunpack.c.l.b16 %v3185
    %v3207 = vunpack.c.h.b16 %v3185
    %v3208 = vunpack.c.l.b16 %v3186
    %v3209 = vunpack.c.h.b16 %v3186
    %v3210 = vunpack.c.l.b16 %v3187
    %v3211 = vunpack.c.h.b16 %v3187
    %v3212 = vpack.c.b16 %v3198, %v3196
    %v3213 = vpack.c.b16 %v3199, %v3197
    %v3214 = vpack.c.b16 %v3202, %v3200
    %v3215 = vpack.c.b16 %v3203, %v3201
    %v3216 = vpack.c.b16 %v3206, %v3204
    %v3217 = vpack.c.b16 %v3207, %v3205
    %v3218 = vpack.c.b16 %v3210, %v3208
    %v3219 = vpack.c.b16 %v3211, %v3209
    %v3225 = vsel %vm1212, %v3213, 0
    %v3228 = vsel %vm1212, %v3215, 0
    %v3231 = vsel %vm1212, %v3217, 0
    %v3234 = vsel %vm1212, %v3219, 0
    %3236 = vmatprep.subr.bf16.mxu0 0
    %3237 = vmatpush1.bf16.msra.mxu0 %v3133
    %3238 = vmatprep.subr.bf16.mxu0 0
    %3239 = vmatpush1.bf16.msra.mxu0 %v3137
    %3240 = vmatprep.subr.bf16.mxu0 0
    %3241 = vmatpush1.bf16.msra.mxu0 %v3141
    %3242 = vmatprep.subr.bf16.mxu0 0
    %3243 = vmatpush1.bf16.msra.mxu0 %v3145
    %3244 = vmatprep.subr.bf16.mxu0 0
    %3245 = vmatpush1.bf16.msra.mxu0 %v3107
    %3246 = vmatprep.subr.bf16.mxu0 0
    %3247 = vmatpush1.bf16.msra.mxu0 %v3108
    %3248 = vmatprep.subr.bf16.mxu0 0
    %3249 = vmatpush1.bf16.msra.mxu0 %v3109
    %3250 = vmatprep.subr.bf16.mxu0 0
    %3251 = vmatpush1.bf16.msra.mxu0 %v3110
    %3252 = vmatprep.subr.bf16.mxu0 0
    %3253 = vmatpush1.bf16.msra.mxu0 %v3166
    %3254 = vmatprep.subr.bf16.mxu0 0
    %3255 = vmatpush1.bf16.msra.mxu0 %v3170
    %3256 = vmatprep.subr.bf16.mxu0 0
    %3257 = vmatpush1.bf16.msra.mxu0 %v3174
    %3258 = vmatprep.subr.bf16.mxu0 0
    %3259 = vmatpush1.bf16.msra.mxu0 %v3178
    %3260 = vmatprep.subr.bf16.mxu0 0
    %3261 = vmatpush1.bf16.msra.mxu0 0
    %3262 = vmatprep.subr.bf16.mxu0 0
    %3263 = vmatpush1.bf16.msra.mxu0 0
    %3264 = vmatprep.subr.bf16.mxu0 0
    %3265 = vmatpush1.bf16.msra.mxu0 0
    %3266 = vmatprep.subr.bf16.mxu0 0
    %3267 = vmatpush1.bf16.msra.mxu0 0
    %3268 = vmatprep.mubr.bf16.mxu0 %v3225
    %3269 = vmatmul.mubr.bf16.gmra.mrb[0].mxu0 %v3212
    %v3270 = vpop.f32.mrb[0].mxu0
    %v3271 = vadd.f32 0.0, %v3270
    %v3272 = vpop.f32.mrb[0].mxu0
    %v3273 = vpop.f32.mrb[0].mxu0
    %v3274 = vadd.f32 0.0, %v3273
    %v3275 = vpop.f32.mrb[0].mxu0
    %3276 = vmatprep.mubr.bf16.mxu0 %v3228
    %3277 = vmatmul.mubr.bf16.gmra.mrb[0].mxu0 %v3214
    %v3278 = vpop.f32.mrb[0].mxu0
    %v3279 = vadd.f32 0.0, %v3278
    %v3280 = vpop.f32.mrb[0].mxu0
    %v3281 = vpop.f32.mrb[0].mxu0
    %v3282 = vadd.f32 0.0, %v3281
    %v3283 = vpop.f32.mrb[0].mxu0
    %3284 = vmatprep.mubr.bf16.mxu0 %v3231
    %3285 = vmatmul.mubr.bf16.gmra.mrb[0].mxu0 %v3216
    %v3286 = vpop.f32.mrb[0].mxu0
    %v3287 = vadd.f32 0.0, %v3286
    %v3288 = vpop.f32.mrb[0].mxu0
    %v3289 = vpop.f32.mrb[0].mxu0
    %v3290 = vadd.f32 0.0, %v3289
    %v3291 = vpop.f32.mrb[0].mxu0
    %3292 = vmatprep.mubr.bf16.mxu0 %v3234
    %3293 = vmatmul.mubr.bf16.gmra.mrb[0].mxu0 %v3218
    %v3294 = vpop.f32.mrb[0].mxu0
    %v3295 = vadd.f32 0.0, %v3294
    %v3296 = vpop.f32.mrb[0].mxu0
    %v3297 = vpop.f32.mrb[0].mxu0
    %v3298 = vadd.f32 0.0, %v3297
    %v3299 = vpop.f32.mrb[0].mxu0
    %3300 = vdwg.mxu0
    %v3301 = vmul.f32 %v3271, %v3271
    %v3302 = vmul.f32 %v3274, %v3274
    %v3303 = vmul.f32 %v3279, %v3279
    %v3304 = vmul.f32 %v3282, %v3282
    %v3305 = vmul.f32 %v3287, %v3287
    %v3306 = vmul.f32 %v3290, %v3290
    %v3307 = vmul.f32 %v3295, %v3295
    %v3308 = vmul.f32 %v3298, %v3298
    %3309 = vmatprep.subr.mxu0 0.0
    %3310 = vmatpush1.msra.mxu0 %v3271
    %3311 = vmatprep.subr.mxu0 0.0
    %3312 = vmatpush1.msra.mxu0 %v3274
    %3313 = vmatprep.subr.mxu0 0.0
    %3314 = vmatpush1.msra.mxu0 %v3279
    %3315 = vmatprep.subr.mxu0 0.0
    %3316 = vmatpush1.msra.mxu0 %v3282
    %3317 = vmatprep.subr.mxu0 0.0
    %3318 = vmatpush1.msra.mxu0 %v3287
    %3319 = vmatprep.subr.mxu0 0.0
    %3320 = vmatpush1.msra.mxu0 %v3290
    %3321 = vmatprep.subr.mxu0 0.0
    %3322 = vmatpush1.msra.mxu0 %v3295
    %3323 = vmatprep.subr.mxu0 0.0
    %3324 = vmatpush1.msra.mxu0 %v3298
    %3325 = vmatprep.subr.mxu0 0.0
    %3326 = vmatpush1.msra.mxu0 %v3301
    %3327 = vmatprep.subr.mxu0 0.0
    %3328 = vmatpush1.msra.mxu0 %v3302
    %3329 = vmatprep.subr.mxu0 0.0
    %3330 = vmatpush1.msra.mxu0 %v3303
    %3331 = vmatprep.subr.mxu0 0.0
    %3332 = vmatpush1.msra.mxu0 %v3304
    %3333 = vmatprep.subr.mxu0 0.0
    %3334 = vmatpush1.msra.mxu0 %v3305
    %3335 = vmatprep.subr.mxu0 0.0
    %3336 = vmatpush1.msra.mxu0 %v3306
    %3337 = vmatprep.subr.mxu0 0.0
    %3338 = vmatpush1.msra.mxu0 %v3307
    %3339 = vmatprep.subr.mxu0 0.0
    %3340 = vmatpush1.msra.mxu0 %v3308
    %3341 = vmatprep.subr.mxu0 0.0
    %3342 = vmatpush1.msra.mxu0 0.0
    %3343 = vmatprep.subr.mxu0 0.0
    %3344 = vmatpush1.msra.mxu0 0.0
    %3345 = vmatprep.subr.mxu0 0.0
    %3346 = vmatpush1.msra.mxu0 0.0
    %3347 = vmatprep.subr.mxu0 0.0
    %3348 = vmatpush1.msra.mxu0 0.0
    %3349 = vmatprep.subr.mxu0 0.0
    %3350 = vmatpush1.msra.mxu0 0.0
    %3351 = vmatprep.subr.mxu0 0.0
    %3352 = vmatpush1.msra.mxu0 0.0
    %3353 = vmatprep.subr.mxu0 0.0
    %3354 = vmatpush1.msra.mxu0 0.0
    %3355 = vmatprep.subr.mxu0 0.0
    %3356 = vmatpush1.msra.mxu0 0.0
    %3357 = vmatprep.subr.mxu0 0.0
    %3358 = vmatpush1.msra.mxu0 0.0
    %3359 = vmatprep.subr.mxu0 0.0
    %3360 = vmatpush1.msra.mxu0 0.0
    %3361 = vmatprep.subr.mxu0 0.0
    %3362 = vmatpush1.msra.mxu0 0.0
    %3363 = vmatprep.subr.mxu0 0.0
    %3364 = vmatpush1.msra.mxu0 0.0
    %3365 = vmatprep.subr.mxu0 0.0
    %3366 = vmatpush1.msra.mxu0 0.0
    %3367 = vmatprep.subr.mxu0 0.0
    %3368 = vmatpush1.msra.mxu0 0.0
    %3369 = vmatprep.subr.mxu0 0.0
    %3370 = vmatpush1.msra.mxu0 0.0
    %3371 = vmatprep.subr.mxu0 0.0
    %3372 = vmatpush1.msra.mxu0 0.0
    %3373 = vmatprep.mubr.f32.mxu0 0.0
    %3374 = vmatmul.mubr.f32.gmra.mrb[0].mxu0 %v267
    %v3375 = vpop.f32.mrb[0].mxu0
    %v3376 = vadd.f32 0.0, %v3375
    %v3377 = vpop.f32.mrb[0].mxu0
    %3378 = vdwg.mxu0
    %v3380 = vsel %vm1212, %v3376, 0
    %3382 = vmatprep.subr.mxu0 0.0
    %3383 = vmatpush1.msra.mxu0 %v1515
    %3384 = vmatprep.subr.mxu0 0.0
    %3385 = vmatpush1.msra.mxu0 %v1516
    %3386 = vmatprep.subr.mxu0 0.0
    %3387 = vmatpush1.msra.mxu0 %v1517
    %3388 = vmatprep.subr.mxu0 0.0
    %3389 = vmatpush1.msra.mxu0 %v1518
    %3390 = vmatprep.subr.mxu0 0.0
    %3391 = vmatpush1.msra.mxu0 %v1519
    %3392 = vmatprep.subr.mxu0 0.0
    %3393 = vmatpush1.msra.mxu0 %v1520
    %3394 = vmatprep.subr.mxu0 0.0
    %3395 = vmatpush1.msra.mxu0 %v1521
    %3396 = vmatprep.subr.mxu0 0.0
    %3397 = vmatpush1.msra.mxu0 %v1522
    %3398 = vmatprep.subr.mxu0 0.0
    %3399 = vmatpush1.msra.mxu0 0.0
    %3400 = vmatprep.subr.mxu0 0.0
    %3401 = vmatpush1.msra.mxu0 0.0
    %3402 = vmatprep.subr.mxu0 0.0
    %3403 = vmatpush1.msra.mxu0 0.0
    %3404 = vmatprep.subr.mxu0 0.0
    %3405 = vmatpush1.msra.mxu0 0.0
    %3406 = vmatprep.subr.mxu0 0.0
    %3407 = vmatpush1.msra.mxu0 0.0
    %3408 = vmatprep.subr.mxu0 0.0
    %3409 = vmatpush1.msra.mxu0 0.0
    %3410 = vmatprep.subr.mxu0 0.0
    %3411 = vmatpush1.msra.mxu0 0.0
    %3412 = vmatprep.subr.mxu0 0.0
    %3413 = vmatpush1.msra.mxu0 0.0
    %3414 = vmatprep.subr.mxu0 0.0
    %3415 = vmatpush1.msra.mxu0 0.0
    %3416 = vmatprep.subr.mxu0 0.0
    %3417 = vmatpush1.msra.mxu0 0.0
    %3418 = vmatprep.subr.mxu0 0.0
    %3419 = vmatpush1.msra.mxu0 0.0
    %3420 = vmatprep.subr.mxu0 0.0
    %3421 = vmatpush1.msra.mxu0 0.0
    %3422 = vmatprep.subr.mxu0 0.0
    %3423 = vmatpush1.msra.mxu0 0.0
    %3424 = vmatprep.subr.mxu0 0.0
    %3425 = vmatpush1.msra.mxu0 0.0
    %3426 = vmatprep.subr.mxu0 0.0
    %3427 = vmatpush1.msra.mxu0 0.0
    %3428 = vmatprep.subr.mxu0 0.0
    %3429 = vmatpush1.msra.mxu0 0.0
    %3430 = vmatprep.subr.mxu0 0.0
    %3431 = vmatpush1.msra.mxu0 0.0
    %3432 = vmatprep.subr.mxu0 0.0
    %3433 = vmatpush1.msra.mxu0 0.0
    %3434 = vmatprep.subr.mxu0 0.0
    %3435 = vmatpush1.msra.mxu0 0.0
    %3436 = vmatprep.subr.mxu0 0.0
    %3437 = vmatpush1.msra.mxu0 0.0
    %3438 = vmatprep.subr.mxu0 0.0
    %3439 = vmatpush1.msra.mxu0 0.0
    %3440 = vmatprep.subr.mxu0 0.0
    %3441 = vmatpush1.msra.mxu0 0.0
    %3442 = vmatprep.subr.mxu0 0.0
    %3443 = vmatpush1.msra.mxu0 0.0
    %3444 = vmatprep.subr.mxu0 0.0
    %3445 = vmatpush1.msra.mxu0 0.0
    %3446 = vmatprep.mubr.f32.mxu0 0.0
    %3447 = vmatmul.mubr.f32.gmra.mrb[0].mxu0 %v3380
    %v3448 = vpop.f32.mrb[0].mxu0
    %v3449 = vadd.f32 0.0, %v3448
    %v3450 = vpop.f32.mrb[0].mxu0
    %3451 = vdwg.mxu0
    %v3452 = vmul.f32 %v3449, 0.0025
    %v3453 = vmul.f32 %v3452, %v3452
    %v3455 = vrot.slane %v3453, 4
    %v3457 = vsub.f32 %v3452, %v3455
    %v3458 = vmax.f32 %v3457, 0.0
    %v3459 = vadd.f32 %v3458, 1e-05
    %v3460 = vrsqrt.pop %v3459
    %v3461 = vld [vmem:[%s15] sm:$0xff]
    %v3462 = vld [vmem:[%s15 + $0x8] sm:$0xff]
    %v3463 = vld [vmem:[%s15 + $0x10] sm:$0xff]
    %v3464 = vld [vmem:[%s15 + $0x18] sm:$0xff]
    %v3465 = vld [vmem:[%s15 + $0x20] sm:$0xff]
    %v3466 = vld [vmem:[%s15 + $0x28] sm:$0xff]
    %v3467 = vld [vmem:[%s15 + $0x30] sm:$0xff]
    %v3468 = vld [vmem:[%s15 + $0x38] sm:$0xff]
    %v3470 = vrot.slane %v3460, 4
    %v3471 = vsel %vm485, %v3470, 0
    %3473 = vmatprep.subr.mxu0 0.0
    %3474 = vmatpush1.msra.mxu0 %v3471
    %3475 = vmatprep.subr.mxu0 0.0
    %3476 = vmatpush1.msra.mxu0 0.0
    %3477 = vmatprep.subr.mxu0 0.0
    %3478 = vmatpush1.msra.mxu0 0.0
    %3479 = vmatprep.subr.mxu0 0.0
    %3480 = vmatpush1.msra.mxu0 0.0
    %3481 = vmatprep.subr.mxu0 0.0
    %3482 = vmatpush1.msra.mxu0 0.0
    %3483 = vmatprep.subr.mxu0 0.0
    %3484 = vmatpush1.msra.mxu0 0.0
    %3485 = vmatprep.subr.mxu0 0.0
    %3486 = vmatpush1.msra.mxu0 0.0
    %3487 = vmatprep.subr.mxu0 0.0
    %3488 = vmatpush1.msra.mxu0 0.0
    %3489 = vmatprep.subr.mxu0 0.0
    %3490 = vmatpush1.msra.mxu0 0.0
    %3491 = vmatprep.subr.mxu0 0.0
    %3492 = vmatpush1.msra.mxu0 0.0
    %3493 = vmatprep.subr.mxu0 0.0
    %3494 = vmatpush1.msra.mxu0 0.0
    %3495 = vmatprep.subr.mxu0 0.0
    %3496 = vmatpush1.msra.mxu0 0.0
    %3497 = vmatprep.subr.mxu0 0.0
    %3498 = vmatpush1.msra.mxu0 0.0
    %3499 = vmatprep.subr.mxu0 0.0
    %3500 = vmatpush1.msra.mxu0 0.0
    %3501 = vmatprep.subr.mxu0 0.0
    %3502 = vmatpush1.msra.mxu0 0.0
    %3503 = vmatprep.subr.mxu0 0.0
    %3504 = vmatpush1.msra.mxu0 0.0
    %3505 = vmatprep.subr.mxu0 0.0
    %3506 = vmatpush1.msra.mxu0 0.0
    %3507 = vmatprep.subr.mxu0 0.0
    %3508 = vmatpush1.msra.mxu0 0.0
    %3509 = vmatprep.subr.mxu0 0.0
    %3510 = vmatpush1.msra.mxu0 0.0
    %3511 = vmatprep.subr.mxu0 0.0
    %3512 = vmatpush1.msra.mxu0 0.0
    %3513 = vmatprep.subr.mxu0 0.0
    %3514 = vmatpush1.msra.mxu0 0.0
    %3515 = vmatprep.subr.mxu0 0.0
    %3516 = vmatpush1.msra.mxu0 0.0
    %3517 = vmatprep.subr.mxu0 0.0
    %3518 = vmatpush1.msra.mxu0 0.0
    %3519 = vmatprep.subr.mxu0 0.0
    %3520 = vmatpush1.msra.mxu0 0.0
    %3521 = vmatprep.subr.mxu0 0.0
    %3522 = vmatpush1.msra.mxu0 0.0
    %3523 = vmatprep.subr.mxu0 0.0
    %3524 = vmatpush1.msra.mxu0 0.0
    %3525 = vmatprep.subr.mxu0 0.0
    %3526 = vmatpush1.msra.mxu0 0.0
    %3527 = vmatprep.subr.mxu0 0.0
    %3528 = vmatpush1.msra.mxu0 0.0
    %3529 = vmatprep.subr.mxu0 0.0
    %3530 = vmatpush1.msra.mxu0 0.0
    %3531 = vmatprep.subr.mxu0 0.0
    %3532 = vmatpush1.msra.mxu0 0.0
    %3533 = vmatprep.subr.mxu0 0.0
    %3534 = vmatpush1.msra.mxu0 0.0
    %3535 = vmatprep.subr.mxu0 0.0
    %3536 = vmatpush1.msra.mxu0 0.0
    %3537 = vmatprep.mubr.f32.mxu0 0.0
    %3538 = vmatmul.mubr.f32.gmra.mrb[0].mxu0 %v462
    %v3539 = vpop.f32.mrb[0].mxu0
    %v3540 = vadd.f32 0.0, %v3539
    %v3541 = vpop.f32.mrb[0].mxu0
    %3542 = vmatprep.mubr.f32.mxu0 0.0
    %3543 = vmatmul.mubr.f32.gmra.mrb[0].mxu0 %v465
    %v3544 = vpop.f32.mrb[0].mxu0
    %v3545 = vadd.f32 0.0, %v3544
    %v3546 = vpop.f32.mrb[0].mxu0
    %3547 = vmatprep.mubr.f32.mxu0 0.0
    %3548 = vmatmul.mubr.f32.gmra.mrb[0].mxu0 %v468
    %v3549 = vpop.f32.mrb[0].mxu0
    %v3550 = vadd.f32 0.0, %v3549
    %v3551 = vpop.f32.mrb[0].mxu0
    %3552 = vmatprep.mubr.f32.mxu0 0.0
    %3553 = vmatmul.mubr.f32.gmra.mrb[0].mxu0 %v471
    %v3554 = vpop.f32.mrb[0].mxu0
    %v3555 = vadd.f32 0.0, %v3554
    %v3556 = vpop.f32.mrb[0].mxu0
    %3557 = vmatprep.mubr.f32.mxu0 0.0
    %3558 = vmatmul.mubr.f32.gmra.mrb[0].mxu0 %v474
    %v3559 = vpop.f32.mrb[0].mxu0
    %v3560 = vadd.f32 0.0, %v3559
    %v3561 = vpop.f32.mrb[0].mxu0
    %3562 = vmatprep.mubr.f32.mxu0 0.0
    %3563 = vmatmul.mubr.f32.gmra.mrb[0].mxu0 %v477
    %v3564 = vpop.f32.mrb[0].mxu0
    %v3565 = vadd.f32 0.0, %v3564
    %v3566 = vpop.f32.mrb[0].mxu0
    %3567 = vmatprep.mubr.f32.mxu0 0.0
    %3568 = vmatmul.mubr.f32.gmra.mrb[0].mxu0 %v480
    %v3569 = vpop.f32.mrb[0].mxu0
    %v3570 = vadd.f32 0.0, %v3569
    %v3571 = vpop.f32.mrb[0].mxu0
    %3572 = vmatprep.mubr.f32.mxu0 0.0
    %3573 = vmatmul.mubr.f32.gmra.mrb[0].mxu0 %v483
    %v3574 = vpop.f32.mrb[0].mxu0
    %v3575 = vadd.f32 0.0, %v3574
    %v3576 = vpop.f32.mrb[0].mxu0
    %3577 = vdwg.mxu0
    %3579 = vset.pattern.permute.xlu0 0
    %3580 = vperm.xlu0 %3579, %v3461
    %v3581 = vpop.permute.xlu0 %3580
    %3584 = vset.pattern.permute.xlu0 0
    %3585 = vperm.xlu0 %3584, %v3462
    %v3586 = vpop.permute.xlu0 %3585
    %3589 = vset.pattern.permute.xlu0 0
    %3590 = vperm.xlu0 %3589, %v3463
    %v3591 = vpop.permute.xlu0 %3590
    %3594 = vset.pattern.permute.xlu0 0
    %3595 = vperm.xlu0 %3594, %v3464
    %v3596 = vpop.permute.xlu0 %3595
    %3599 = vset.pattern.permute.xlu0 0
    %3600 = vperm.xlu0 %3599, %v3465
    %v3601 = vpop.permute.xlu0 %3600
    %3604 = vset.pattern.permute.xlu0 0
    %3605 = vperm.xlu0 %3604, %v3466
    %v3606 = vpop.permute.xlu0 %3605
    %3609 = vset.pattern.permute.xlu0 0
    %3610 = vperm.xlu0 %3609, %v3467
    %v3611 = vpop.permute.xlu0 %3610
    %3614 = vset.pattern.permute.xlu0 0
    %3615 = vperm.xlu0 %3614, %v3468
    %v3616 = vpop.permute.xlu0 %3615
    %v3618 = vmul.f32 %v3540, %v3581
    %v3619 = vmul.f32 %v3545, %v3586
    %v3620 = vmul.f32 %v3550, %v3591
    %v3621 = vmul.f32 %v3555, %v3596
    %v3622 = vmul.f32 %v3560, %v3601
    %v3623 = vmul.f32 %v3565, %v3606
    %v3624 = vmul.f32 %v3570, %v3611
    %v3625 = vmul.f32 %v3575, %v3616
    %v3627 = vsel %vm485, %v3452, 0
    %3629 = vmatprep.subr.mxu0 0.0
    %3630 = vmatpush1.msra.mxu0 %v3627
    %3631 = vmatprep.subr.mxu0 0.0
    %3632 = vmatpush1.msra.mxu0 0.0
    %3633 = vmatprep.subr.mxu0 0.0
    %3634 = vmatpush1.msra.mxu0 0.0
    %3635 = vmatprep.subr.mxu0 0.0
    %3636 = vmatpush1.msra.mxu0 0.0
    %3637 = vmatprep.subr.mxu0 0.0
    %3638 = vmatpush1.msra.mxu0 0.0
    %3639 = vmatprep.subr.mxu0 0.0
    %3640 = vmatpush1.msra.mxu0 0.0
    %3641 = vmatprep.subr.mxu0 0.0
    %3642 = vmatpush1.msra.mxu0 0.0
    %3643 = vmatprep.subr.mxu0 0.0
    %3644 = vmatpush1.msra.mxu0 0.0
    %3645 = vmatprep.subr.mxu0 0.0
    %3646 = vmatpush1.msra.mxu0 0.0
    %3647 = vmatprep.subr.mxu0 0.0
    %3648 = vmatpush1.msra.mxu0 0.0
    %3649 = vmatprep.subr.mxu0 0.0
    %3650 = vmatpush1.msra.mxu0 0.0
    %3651 = vmatprep.subr.mxu0 0.0
    %3652 = vmatpush1.msra.mxu0 0.0
    %3653 = vmatprep.subr.mxu0 0.0
    %3654 = vmatpush1.msra.mxu0 0.0
    %3655 = vmatprep.subr.mxu0 0.0
    %3656 = vmatpush1.msra.mxu0 0.0
    %3657 = vmatprep.subr.mxu0 0.0
    %3658 = vmatpush1.msra.mxu0 0.0
    %3659 = vmatprep.subr.mxu0 0.0
    %3660 = vmatpush1.msra.mxu0 0.0
    %3661 = vmatprep.subr.mxu0 0.0
    %3662 = vmatpush1.msra.mxu0 0.0
    %3663 = vmatprep.subr.mxu0 0.0
    %3664 = vmatpush1.msra.mxu0 0.0
    %3665 = vmatprep.subr.mxu0 0.0
    %3666 = vmatpush1.msra.mxu0 0.0
    %3667 = vmatprep.subr.mxu0 0.0
    %3668 = vmatpush1.msra.mxu0 0.0
    %3669 = vmatprep.subr.mxu0 0.0
    %3670 = vmatpush1.msra.mxu0 0.0
    %3671 = vmatprep.subr.mxu0 0.0
    %3672 = vmatpush1.msra.mxu0 0.0
    %3673 = vmatprep.subr.mxu0 0.0
    %3674 = vmatpush1.msra.mxu0 0.0
    %3675 = vmatprep.subr.mxu0 0.0
    %3676 = vmatpush1.msra.mxu0 0.0
    %3677 = vmatprep.subr.mxu0 0.0
    %3678 = vmatpush1.msra.mxu0 0.0
    %3679 = vmatprep.subr.mxu0 0.0
    %3680 = vmatpush1.msra.mxu0 0.0
    %3681 = vmatprep.subr.mxu0 0.0
    %3682 = vmatpush1.msra.mxu0 0.0
    %3683 = vmatprep.subr.mxu0 0.0
    %3684 = vmatpush1.msra.mxu0 0.0
    %3685 = vmatprep.subr.mxu0 0.0
    %3686 = vmatpush1.msra.mxu0 0.0
    %3687 = vmatprep.subr.mxu0 0.0
    %3688 = vmatpush1.msra.mxu0 0.0
    %3689 = vmatprep.subr.mxu0 0.0
    %3690 = vmatpush1.msra.mxu0 0.0
    %3691 = vmatprep.subr.mxu0 0.0
    %3692 = vmatpush1.msra.mxu0 0.0
    %3693 = vmatprep.mubr.f32.mxu0 0.0
    %3694 = vmatmul.mubr.f32.gmra.mrb[0].mxu0 %v462
    %v3695 = vpop.f32.mrb[0].mxu0
    %v3696 = vadd.f32 0.0, %v3695
    %v3697 = vpop.f32.mrb[0].mxu0
    %3698 = vmatprep.mubr.f32.mxu0 0.0
    %3699 = vmatmul.mubr.f32.gmra.mrb[0].mxu0 %v465
    %v3700 = vpop.f32.mrb[0].mxu0
    %v3701 = vadd.f32 0.0, %v3700
    %v3702 = vpop.f32.mrb[0].mxu0
    %3703 = vmatprep.mubr.f32.mxu0 0.0
    %3704 = vmatmul.mubr.f32.gmra.mrb[0].mxu0 %v468
    %v3705 = vpop.f32.mrb[0].mxu0
    %v3706 = vadd.f32 0.0, %v3705
    %v3707 = vpop.f32.mrb[0].mxu0
    %3708 = vmatprep.mubr.f32.mxu0 0.0
    %3709 = vmatmul.mubr.f32.gmra.mrb[0].mxu0 %v471
    %v3710 = vpop.f32.mrb[0].mxu0
    %v3711 = vadd.f32 0.0, %v3710
    %v3712 = vpop.f32.mrb[0].mxu0
    %3713 = vmatprep.mubr.f32.mxu0 0.0
    %3714 = vmatmul.mubr.f32.gmra.mrb[0].mxu0 %v474
    %v3715 = vpop.f32.mrb[0].mxu0
    %v3716 = vadd.f32 0.0, %v3715
    %v3717 = vpop.f32.mrb[0].mxu0
    %3718 = vmatprep.mubr.f32.mxu0 0.0
    %3719 = vmatmul.mubr.f32.gmra.mrb[0].mxu0 %v477
    %v3720 = vpop.f32.mrb[0].mxu0
    %v3721 = vadd.f32 0.0, %v3720
    %v3722 = vpop.f32.mrb[0].mxu0
    %3723 = vmatprep.mubr.f32.mxu0 0.0
    %3724 = vmatmul.mubr.f32.gmra.mrb[0].mxu0 %v480
    %v3725 = vpop.f32.mrb[0].mxu0
    %v3726 = vadd.f32 0.0, %v3725
    %v3727 = vpop.f32.mrb[0].mxu0
    %3728 = vmatprep.mubr.f32.mxu0 0.0
    %3729 = vmatmul.mubr.f32.gmra.mrb[0].mxu0 %v483
    %v3730 = vpop.f32.mrb[0].mxu0
    %v3731 = vadd.f32 0.0, %v3730
    %v3732 = vpop.f32.mrb[0].mxu0
    %3733 = vdwg.mxu0
    %v3734 = vmul.f32 %v3696, %v3618
    %v3735 = vmul.f32 %v3701, %v3619
    %v3736 = vmul.f32 %v3706, %v3620
    %v3737 = vmul.f32 %v3711, %v3621
    %v3738 = vmul.f32 %v3716, %v3622
    %v3739 = vmul.f32 %v3721, %v3623
    %v3740 = vmul.f32 %v3726, %v3624
    %v3741 = vmul.f32 %v3731, %v3625
    %3742 = vset.pattern.permute.xlu0 1
    %3743 = vperm.xlu0 %3742, %v3461
    %v3744 = vpop.permute.xlu0 %3743
    %3746 = vset.pattern.permute.xlu0 1
    %3747 = vperm.xlu0 %3746, %v3462
    %v3748 = vpop.permute.xlu0 %3747
    %3750 = vset.pattern.permute.xlu0 1
    %3751 = vperm.xlu0 %3750, %v3463
    %v3752 = vpop.permute.xlu0 %3751
    %3754 = vset.pattern.permute.xlu0 1
    %3755 = vperm.xlu0 %3754, %v3464
    %v3756 = vpop.permute.xlu0 %3755
    %3758 = vset.pattern.permute.xlu0 1
    %3759 = vperm.xlu0 %3758, %v3465
    %v3760 = vpop.permute.xlu0 %3759
    %3762 = vset.pattern.permute.xlu0 1
    %3763 = vperm.xlu0 %3762, %v3466
    %v3764 = vpop.permute.xlu0 %3763
    %3766 = vset.pattern.permute.xlu0 1
    %3767 = vperm.xlu0 %3766, %v3467
    %v3768 = vpop.permute.xlu0 %3767
    %3770 = vset.pattern.permute.xlu0 1
    %3771 = vperm.xlu0 %3770, %v3468
    %v3772 = vpop.permute.xlu0 %3771
    %v3774 = vsub.f32 %v3744, %v3734
    %v3775 = vsub.f32 %v3748, %v3735
    %v3776 = vsub.f32 %v3752, %v3736
    %v3777 = vsub.f32 %v3756, %v3737
    %v3778 = vsub.f32 %v3760, %v3738
    %v3779 = vsub.f32 %v3764, %v3739
    %v3780 = vsub.f32 %v3768, %v3740
    %v3781 = vsub.f32 %v3772, %v3741
    %v3783 = vsel %vm797, %v3618, 0
    %v3786 = vsel %vm797, %v3619, 0
    %v3789 = vsel %vm797, %v3620, 0
    %v3792 = vsel %vm797, %v3621, 0
    %v3795 = vsel %vm797, %v3622, 0
    %v3798 = vsel %vm797, %v3623, 0
    %v3801 = vsel %vm797, %v3624, 0
    %v3804 = vsel %vm797, %v3625, 0
    %3806 = vmatprep.subr.mxu0 0.0
    %3807 = vmatpush1.msra.mxu0 %v2092
    %3808 = vmatprep.subr.mxu0 0.0
    %3809 = vmatpush1.msra.mxu0 0.0
    %3810 = vmatprep.subr.mxu0 0.0
    %3811 = vmatpush1.msra.mxu0 0.0
    %3812 = vmatprep.subr.mxu0 0.0
    %3813 = vmatpush1.msra.mxu0 0.0
    %3814 = vmatprep.subr.mxu0 0.0
    %3815 = vmatpush1.msra.mxu0 0.0
    %3816 = vmatprep.subr.mxu0 0.0
    %3817 = vmatpush1.msra.mxu0 0.0
    %3818 = vmatprep.subr.mxu0 0.0
    %3819 = vmatpush1.msra.mxu0 0.0
    %3820 = vmatprep.subr.mxu0 0.0
    %3821 = vmatpush1.msra.mxu0 0.0
    %3822 = vmatprep.subr.mxu0 0.0
    %3823 = vmatpush1.msra.mxu0 0.0
    %3824 = vmatprep.subr.mxu0 0.0
    %3825 = vmatpush1.msra.mxu0 0.0
    %3826 = vmatprep.subr.mxu0 0.0
    %3827 = vmatpush1.msra.mxu0 0.0
    %3828 = vmatprep.subr.mxu0 0.0
    %3829 = vmatpush1.msra.mxu0 0.0
    %3830 = vmatprep.subr.mxu0 0.0
    %3831 = vmatpush1.msra.mxu0 0.0
    %3832 = vmatprep.subr.mxu0 0.0
    %3833 = vmatpush1.msra.mxu0 0.0
    %3834 = vmatprep.subr.mxu0 0.0
    %3835 = vmatpush1.msra.mxu0 0.0
    %3836 = vmatprep.subr.mxu0 0.0
    %3837 = vmatpush1.msra.mxu0 0.0
    %3838 = vmatprep.subr.mxu0 0.0
    %3839 = vmatpush1.msra.mxu0 0.0
    %3840 = vmatprep.subr.mxu0 0.0
    %3841 = vmatpush1.msra.mxu0 0.0
    %3842 = vmatprep.subr.mxu0 0.0
    %3843 = vmatpush1.msra.mxu0 0.0
    %3844 = vmatprep.subr.mxu0 0.0
    %3845 = vmatpush1.msra.mxu0 0.0
    %3846 = vmatprep.subr.mxu0 0.0
    %3847 = vmatpush1.msra.mxu0 0.0
    %3848 = vmatprep.subr.mxu0 0.0
    %3849 = vmatpush1.msra.mxu0 0.0
    %3850 = vmatprep.subr.mxu0 0.0
    %3851 = vmatpush1.msra.mxu0 0.0
    %3852 = vmatprep.subr.mxu0 0.0
    %3853 = vmatpush1.msra.mxu0 0.0
    %3854 = vmatprep.subr.mxu0 0.0
    %3855 = vmatpush1.msra.mxu0 0.0
    %3856 = vmatprep.subr.mxu0 0.0
    %3857 = vmatpush1.msra.mxu0 0.0
    %3858 = vmatprep.subr.mxu0 0.0
    %3859 = vmatpush1.msra.mxu0 0.0
    %3860 = vmatprep.subr.mxu0 0.0
    %3861 = vmatpush1.msra.mxu0 0.0
    %3862 = vmatprep.subr.mxu0 0.0
    %3863 = vmatpush1.msra.mxu0 0.0
    %3864 = vmatprep.subr.mxu0 0.0
    %3865 = vmatpush1.msra.mxu0 0.0
    %3866 = vmatprep.subr.mxu0 0.0
    %3867 = vmatpush1.msra.mxu0 0.0
    %3868 = vmatprep.subr.mxu0 0.0
    %3869 = vmatpush1.msra.mxu0 0.0
    %3870 = vmatprep.mubr.f32.mxu0 0.0
    %3871 = vmatmul.mubr.f32.gmra.mrb[0].mxu0 %v3783
    %v3872 = vpop.f32.mrb[0].mxu0
    %v3873 = vadd.f32 0.0, %v3872
    %v3874 = vpop.f32.mrb[0].mxu0
    %3875 = vmatprep.mubr.f32.mxu0 0.0
    %3876 = vmatmul.mubr.f32.gmra.mrb[0].mxu0 %v3786
    %v3877 = vpop.f32.mrb[0].mxu0
    %v3878 = vadd.f32 0.0, %v3877
    %v3879 = vpop.f32.mrb[0].mxu0
    %3880 = vmatprep.mubr.f32.mxu0 0.0
    %3881 = vmatmul.mubr.f32.gmra.mrb[0].mxu0 %v3789
    %v3882 = vpop.f32.mrb[0].mxu0
    %v3883 = vadd.f32 0.0, %v3882
    %v3884 = vpop.f32.mrb[0].mxu0
    %3885 = vmatprep.mubr.f32.mxu0 0.0
    %3886 = vmatmul.mubr.f32.gmra.mrb[0].mxu0 %v3792
    %v3887 = vpop.f32.mrb[0].mxu0
    %v3888 = vadd.f32 0.0, %v3887
    %v3889 = vpop.f32.mrb[0].mxu0
    %3890 = vmatprep.mubr.f32.mxu0 0.0
    %3891 = vmatmul.mubr.f32.gmra.mrb[0].mxu0 %v3795
    %v3892 = vpop.f32.mrb[0].mxu0
    %v3893 = vadd.f32 0.0, %v3892
    %v3894 = vpop.f32.mrb[0].mxu0
    %3895 = vmatprep.mubr.f32.mxu0 0.0
    %3896 = vmatmul.mubr.f32.gmra.mrb[0].mxu0 %v3798
    %v3897 = vpop.f32.mrb[0].mxu0
    %v3898 = vadd.f32 0.0, %v3897
    %v3899 = vpop.f32.mrb[0].mxu0
    %3900 = vmatprep.mubr.f32.mxu0 0.0
    %3901 = vmatmul.mubr.f32.gmra.mrb[0].mxu0 %v3801
    %v3902 = vpop.f32.mrb[0].mxu0
    %v3903 = vadd.f32 0.0, %v3902
    %v3904 = vpop.f32.mrb[0].mxu0
    %3905 = vmatprep.mubr.f32.mxu0 0.0
    %3906 = vmatmul.mubr.f32.gmra.mrb[0].mxu0 %v3804
    %v3907 = vpop.f32.mrb[0].mxu0
    %v3908 = vadd.f32 0.0, %v3907
    %v3909 = vpop.f32.mrb[0].mxu0
    %3910 = vdwg.mxu0
    %v3912 = vsel %vm797, %v3774, 0
    %v3915 = vsel %vm797, %v3775, 0
    %v3918 = vsel %vm797, %v3776, 0
    %v3921 = vsel %vm797, %v3777, 0
    %v3924 = vsel %vm797, %v3778, 0
    %v3927 = vsel %vm797, %v3779, 0
    %v3930 = vsel %vm797, %v3780, 0
    %v3933 = vsel %vm797, %v3781, 0
    %3935 = vmatprep.subr.mxu0 0.0
    %3936 = vmatpush1.msra.mxu0 %v2092
    %3937 = vmatprep.subr.mxu0 0.0
    %3938 = vmatpush1.msra.mxu0 0.0
    %3939 = vmatprep.subr.mxu0 0.0
    %3940 = vmatpush1.msra.mxu0 0.0
    %3941 = vmatprep.subr.mxu0 0.0
    %3942 = vmatpush1.msra.mxu0 0.0
    %3943 = vmatprep.subr.mxu0 0.0
    %3944 = vmatpush1.msra.mxu0 0.0
    %3945 = vmatprep.subr.mxu0 0.0
    %3946 = vmatpush1.msra.mxu0 0.0
    %3947 = vmatprep.subr.mxu0 0.0
    %3948 = vmatpush1.msra.mxu0 0.0
    %3949 = vmatprep.subr.mxu0 0.0
    %3950 = vmatpush1.msra.mxu0 0.0
    %3951 = vmatprep.subr.mxu0 0.0
    %3952 = vmatpush1.msra.mxu0 0.0
    %3953 = vmatprep.subr.mxu0 0.0
    %3954 = vmatpush1.msra.mxu0 0.0
    %3955 = vmatprep.subr.mxu0 0.0
    %3956 = vmatpush1.msra.mxu0 0.0
    %3957 = vmatprep.subr.mxu0 0.0
    %3958 = vmatpush1.msra.mxu0 0.0
    %3959 = vmatprep.subr.mxu0 0.0
    %3960 = vmatpush1.msra.mxu0 0.0
    %3961 = vmatprep.subr.mxu0 0.0
    %3962 = vmatpush1.msra.mxu0 0.0
    %3963 = vmatprep.subr.mxu0 0.0
    %3964 = vmatpush1.msra.mxu0 0.0
    %3965 = vmatprep.subr.mxu0 0.0
    %3966 = vmatpush1.msra.mxu0 0.0
    %3967 = vmatprep.subr.mxu0 0.0
    %3968 = vmatpush1.msra.mxu0 0.0
    %3969 = vmatprep.subr.mxu0 0.0
    %3970 = vmatpush1.msra.mxu0 0.0
    %3971 = vmatprep.subr.mxu0 0.0
    %3972 = vmatpush1.msra.mxu0 0.0
    %3973 = vmatprep.subr.mxu0 0.0
    %3974 = vmatpush1.msra.mxu0 0.0
    %3975 = vmatprep.subr.mxu0 0.0
    %3976 = vmatpush1.msra.mxu0 0.0
    %3977 = vmatprep.subr.mxu0 0.0
    %3978 = vmatpush1.msra.mxu0 0.0
    %3979 = vmatprep.subr.mxu0 0.0
    %3980 = vmatpush1.msra.mxu0 0.0
    %3981 = vmatprep.subr.mxu0 0.0
    %3982 = vmatpush1.msra.mxu0 0.0
    %3983 = vmatprep.subr.mxu0 0.0
    %3984 = vmatpush1.msra.mxu0 0.0
    %3985 = vmatprep.subr.mxu0 0.0
    %3986 = vmatpush1.msra.mxu0 0.0
    %3987 = vmatprep.subr.mxu0 0.0
    %3988 = vmatpush1.msra.mxu0 0.0
    %3989 = vmatprep.subr.mxu0 0.0
    %3990 = vmatpush1.msra.mxu0 0.0
    %3991 = vmatprep.subr.mxu0 0.0
    %3992 = vmatpush1.msra.mxu0 0.0
    %3993 = vmatprep.subr.mxu0 0.0
    %3994 = vmatpush1.msra.mxu0 0.0
    %3995 = vmatprep.subr.mxu0 0.0
    %3996 = vmatpush1.msra.mxu0 0.0
    %3997 = vmatprep.subr.mxu0 0.0
    %3998 = vmatpush1.msra.mxu0 0.0
    %3999 = vmatprep.mubr.f32.mxu0 0.0
    %4000 = vmatmul.mubr.f32.gmra.mrb[0].mxu0 %v3912
    %v4001 = vpop.f32.mrb[0].mxu0
    %v4002 = vadd.f32 0.0, %v4001
    %v4003 = vpop.f32.mrb[0].mxu0
    %4004 = vmatprep.mubr.f32.mxu0 0.0
    %4005 = vmatmul.mubr.f32.gmra.mrb[0].mxu0 %v3915
    %v4006 = vpop.f32.mrb[0].mxu0
    %v4007 = vadd.f32 0.0, %v4006
    %v4008 = vpop.f32.mrb[0].mxu0
    %4009 = vmatprep.mubr.f32.mxu0 0.0
    %4010 = vmatmul.mubr.f32.gmra.mrb[0].mxu0 %v3918
    %v4011 = vpop.f32.mrb[0].mxu0
    %v4012 = vadd.f32 0.0, %v4011
    %v4013 = vpop.f32.mrb[0].mxu0
    %4014 = vmatprep.mubr.f32.mxu0 0.0
    %4015 = vmatmul.mubr.f32.gmra.mrb[0].mxu0 %v3921
    %v4016 = vpop.f32.mrb[0].mxu0
    %v4017 = vadd.f32 0.0, %v4016
    %v4018 = vpop.f32.mrb[0].mxu0
    %4019 = vmatprep.mubr.f32.mxu0 0.0
    %4020 = vmatmul.mubr.f32.gmra.mrb[0].mxu0 %v3924
    %v4021 = vpop.f32.mrb[0].mxu0
    %v4022 = vadd.f32 0.0, %v4021
    %v4023 = vpop.f32.mrb[0].mxu0
    %4024 = vmatprep.mubr.f32.mxu0 0.0
    %4025 = vmatmul.mubr.f32.gmra.mrb[0].mxu0 %v3927
    %v4026 = vpop.f32.mrb[0].mxu0
    %v4027 = vadd.f32 0.0, %v4026
    %v4028 = vpop.f32.mrb[0].mxu0
    %4029 = vmatprep.mubr.f32.mxu0 0.0
    %4030 = vmatmul.mubr.f32.gmra.mrb[0].mxu0 %v3930
    %v4031 = vpop.f32.mrb[0].mxu0
    %v4032 = vadd.f32 0.0, %v4031
    %v4033 = vpop.f32.mrb[0].mxu0
    %4034 = vmatprep.mubr.f32.mxu0 0.0
    %4035 = vmatmul.mubr.f32.gmra.mrb[0].mxu0 %v3933
    %v4036 = vpop.f32.mrb[0].mxu0
    %v4037 = vadd.f32 0.0, %v4036
    %v4038 = vpop.f32.mrb[0].mxu0
    %4039 = vdwg.mxu0
    %v4040 = vmul.f32 %v3271, %v3873
    %v4041 = vmul.f32 %v3274, %v3878
    %v4042 = vmul.f32 %v3279, %v3883
    %v4043 = vmul.f32 %v3282, %v3888
    %v4044 = vmul.f32 %v3287, %v3893
    %v4045 = vmul.f32 %v3290, %v3898
    %v4046 = vmul.f32 %v3295, %v3903
    %v4047 = vmul.f32 %v3298, %v3908
    %v4048 = vadd.f32 %v4040, %v4002
    %v4049 = vadd.f32 %v4041, %v4007
    %v4050 = vadd.f32 %v4042, %v4012
    %v4051 = vadd.f32 %v4043, %v4017
    %v4052 = vadd.f32 %v4044, %v4022
    %v4053 = vadd.f32 %v4045, %v4027
    %v4054 = vadd.f32 %v4046, %v4032
    %v4055 = vadd.f32 %v4047, %v4037
    %v4056 = vadd.f32 %v4048, %v2336
    %v4057 = vadd.f32 %v4049, %v2337
    %v4058 = vadd.f32 %v4050, %v2338
    %v4059 = vadd.f32 %v4051, %v2339
    %v4060 = vadd.f32 %v4052, %v2340
    %v4061 = vadd.f32 %v4053, %v2341
    %v4062 = vadd.f32 %v4054, %v2342
    %v4063 = vadd.f32 %v4055, %v2343
    %v4064 = vmax.f32 %v4056, 0.0
    %v4065 = vmax.f32 %v4057, 0.0
    %v4066 = vmax.f32 %v4058, 0.0
    %v4067 = vmax.f32 %v4059, 0.0
    %v4068 = vmax.f32 %v4060, 0.0
    %v4069 = vmax.f32 %v4061, 0.0
    %v4070 = vmax.f32 %v4062, 0.0
    %v4071 = vmax.f32 %v4063, 0.0
    %v4072 = vpack.c.bf16 %v4065, %v4064
    %v4073 = vpack.c.bf16 %v4067, %v4066
    %v4074 = vpack.c.bf16 %v4069, %v4068
    %v4075 = vpack.c.bf16 %v4071, %v4070
    %4080 = vrot.lane.b32.xlu0 %v4072, 65
    %v4081 = vpop.permute.xlu0 %4080
    %4082 = vrot.lane.b32.xlu0 %v4073, 65
    %v4083 = vpop.permute.xlu0 %4082
    %4084 = vrot.lane.b32.xlu0 %v4074, 65
    %v4085 = vpop.permute.xlu0 %4084
    %4086 = vrot.lane.b32.xlu0 %v4075, 65
    %v4087 = vpop.permute.xlu0 %4086
    %4088 = vrot.lane.b32.xlu0 %v4072, 1
    %v4089 = vpop.permute.xlu0 %4088
    %4090 = vrot.lane.b32.xlu0 %v4073, 1
    %v4091 = vpop.permute.xlu0 %4090
    %4092 = vrot.lane.b32.xlu0 %v4074, 1
    %v4093 = vpop.permute.xlu0 %4092
    %4094 = vrot.lane.b32.xlu0 %v4075, 1
    %v4095 = vpop.permute.xlu0 %4094
    %v4098 = vsel %vm148, %v4081, %v4089
    %v4102 = vsel %vm148, %v4083, %v4091
    %v4106 = vsel %vm148, %v4085, %v4093
    %v4110 = vsel %vm148, %v4087, %v4095
    %4112 = vrot.lane.b32.xlu0 %v4072, 127
    %v4113 = vpop.permute.xlu0 %4112
    %4114 = vrot.lane.b32.xlu0 %v4073, 127
    %v4115 = vpop.permute.xlu0 %4114
    %4116 = vrot.lane.b32.xlu0 %v4074, 127
    %v4117 = vpop.permute.xlu0 %4116
    %4118 = vrot.lane.b32.xlu0 %v4075, 127
    %v4119 = vpop.permute.xlu0 %4118
    %4120 = vrot.lane.b32.xlu0 %v4072, 63
    %v4121 = vpop.permute.xlu0 %4120
    %4122 = vrot.lane.b32.xlu0 %v4073, 63
    %v4123 = vpop.permute.xlu0 %4122
    %4124 = vrot.lane.b32.xlu0 %v4074, 63
    %v4125 = vpop.permute.xlu0 %4124
    %4126 = vrot.lane.b32.xlu0 %v4075, 63
    %v4127 = vpop.permute.xlu0 %4126
    %v4130 = vsel %vm3163, %v4113, %v4121
    %v4134 = vsel %vm3163, %v4115, %v4123
    %v4138 = vsel %vm3163, %v4117, %v4125
    %v4142 = vsel %vm3163, %v4119, %v4127
    %v4144 = vld [vmem:[%s17] sm:$0xff]
    %v4145 = vld [vmem:[%s17 + $0x8] sm:$0xff]
    %v4146 = vld [vmem:[%s17 + $0x10] sm:$0xff]
    %v4147 = vld [vmem:[%s17 + $0x18] sm:$0xff]
    %v4148 = vld [vmem:[%s17 + $0x20] sm:$0xff]
    %v4149 = vld [vmem:[%s17 + $0x28] sm:$0xff]
    %v4150 = vld [vmem:[%s17 + $0x30] sm:$0xff]
    %v4151 = vld [vmem:[%s17 + $0x38] sm:$0xff]
    %v4160 = vunpack.c.l.b16 %v4144
    %v4161 = vunpack.c.h.b16 %v4144
    %v4162 = vunpack.c.l.b16 %v4145
    %v4163 = vunpack.c.h.b16 %v4145
    %v4164 = vunpack.c.l.b16 %v4146
    %v4165 = vunpack.c.h.b16 %v4146
    %v4166 = vunpack.c.l.b16 %v4147
    %v4167 = vunpack.c.h.b16 %v4147
    %v4168 = vunpack.c.l.b16 %v4148
    %v4169 = vunpack.c.h.b16 %v4148
    %v4170 = vunpack.c.l.b16 %v4149
    %v4171 = vunpack.c.h.b16 %v4149
    %v4172 = vunpack.c.l.b16 %v4150
    %v4173 = vunpack.c.h.b16 %v4150
    %v4174 = vunpack.c.l.b16 %v4151
    %v4175 = vunpack.c.h.b16 %v4151
    %v4176 = vpack.c.b16 %v4162, %v4160
    %v4177 = vpack.c.b16 %v4163, %v4161
    %v4178 = vpack.c.b16 %v4166, %v4164
    %v4179 = vpack.c.b16 %v4167, %v4165
    %v4180 = vpack.c.b16 %v4170, %v4168
    %v4181 = vpack.c.b16 %v4171, %v4169
    %v4182 = vpack.c.b16 %v4174, %v4172
    %v4183 = vpack.c.b16 %v4175, %v4173
    %v4189 = vsel %vm1212, %v4177, 0
    %v4192 = vsel %vm1212, %v4179, 0
    %v4195 = vsel %vm1212, %v4181, 0
    %v4198 = vsel %vm1212, %v4183, 0
    %4200 = vmatprep.subr.bf16.mxu0 0
    %4201 = vmatpush1.bf16.msra.mxu0 %v4098
    %4202 = vmatprep.subr.bf16.mxu0 0
    %4203 = vmatpush1.bf16.msra.mxu0 %v4102
    %4204 = vmatprep.subr.bf16.mxu0 0
    %4205 = vmatpush1.bf16.msra.mxu0 %v4106
    %4206 = vmatprep.subr.bf16.mxu0 0
    %4207 = vmatpush1.bf16.msra.mxu0 %v4110
    %4208 = vmatprep.subr.bf16.mxu0 0
    %4209 = vmatpush1.bf16.msra.mxu0 %v4072
    %4210 = vmatprep.subr.bf16.mxu0 0
    %4211 = vmatpush1.bf16.msra.mxu0 %v4073
    %4212 = vmatprep.subr.bf16.mxu0 0
    %4213 = vmatpush1.bf16.msra.mxu0 %v4074
    %4214 = vmatprep.subr.bf16.mxu0 0
    %4215 = vmatpush1.bf16.msra.mxu0 %v4075
    %4216 = vmatprep.subr.bf16.mxu0 0
    %4217 = vmatpush1.bf16.msra.mxu0 %v4130
    %4218 = vmatprep.subr.bf16.mxu0 0
    %4219 = vmatpush1.bf16.msra.mxu0 %v4134
    %4220 = vmatprep.subr.bf16.mxu0 0
    %4221 = vmatpush1.bf16.msra.mxu0 %v4138
    %4222 = vmatprep.subr.bf16.mxu0 0
    %4223 = vmatpush1.bf16.msra.mxu0 %v4142
    %4224 = vmatprep.subr.bf16.mxu0 0
    %4225 = vmatpush1.bf16.msra.mxu0 0
    %4226 = vmatprep.subr.bf16.mxu0 0
    %4227 = vmatpush1.bf16.msra.mxu0 0
    %4228 = vmatprep.subr.bf16.mxu0 0
    %4229 = vmatpush1.bf16.msra.mxu0 0
    %4230 = vmatprep.subr.bf16.mxu0 0
    %4231 = vmatpush1.bf16.msra.mxu0 0
    %4232 = vmatprep.mubr.bf16.mxu0 %v4189
    %4233 = vmatmul.mubr.bf16.gmra.mrb[0].mxu0 %v4176
    %v4234 = vpop.f32.mrb[0].mxu0
    %v4235 = vadd.f32 0.0, %v4234
    %v4236 = vpop.f32.mrb[0].mxu0
    %v4237 = vpop.f32.mrb[0].mxu0
    %v4238 = vadd.f32 0.0, %v4237
    %v4239 = vpop.f32.mrb[0].mxu0
    %4240 = vmatprep.mubr.bf16.mxu0 %v4192
    %4241 = vmatmul.mubr.bf16.gmra.mrb[0].mxu0 %v4178
    %v4242 = vpop.f32.mrb[0].mxu0
    %v4243 = vadd.f32 0.0, %v4242
    %v4244 = vpop.f32.mrb[0].mxu0
    %v4245 = vpop.f32.mrb[0].mxu0
    %v4246 = vadd.f32 0.0, %v4245
    %v4247 = vpop.f32.mrb[0].mxu0
    %4248 = vmatprep.mubr.bf16.mxu0 %v4195
    %4249 = vmatmul.mubr.bf16.gmra.mrb[0].mxu0 %v4180
    %v4250 = vpop.f32.mrb[0].mxu0
    %v4251 = vadd.f32 0.0, %v4250
    %v4252 = vpop.f32.mrb[0].mxu0
    %v4253 = vpop.f32.mrb[0].mxu0
    %v4254 = vadd.f32 0.0, %v4253
    %v4255 = vpop.f32.mrb[0].mxu0
    %4256 = vmatprep.mubr.bf16.mxu0 %v4198
    %4257 = vmatmul.mubr.bf16.gmra.mrb[0].mxu0 %v4182
    %v4258 = vpop.f32.mrb[0].mxu0
    %v4259 = vadd.f32 0.0, %v4258
    %v4260 = vpop.f32.mrb[0].mxu0
    %v4261 = vpop.f32.mrb[0].mxu0
    %v4262 = vadd.f32 0.0, %v4261
    %v4263 = vpop.f32.mrb[0].mxu0
    %4264 = vdwg.mxu0
    %v4265 = vpack.c.bf16 %v4238, %v4235
    %v4266 = vpack.c.bf16 %v4246, %v4243
    %v4267 = vpack.c.bf16 %v4254, %v4251
    %v4268 = vpack.c.bf16 %v4262, %v4259
    %v4269 = vld [vmem:[%s57] sm:$0xf]
    %v4270 = vld [vmem:[%s57 + $0x4] sm:$0xf]
    %v4271 = vld [vmem:[%s57 + $0x8] sm:$0xf]
    %v4272 = vld [vmem:[%s57 + $0xc] sm:$0xf]
    %v4273 = vld [vmem:[%s57 + $0x10] sm:$0xf]
    %v4274 = vld [vmem:[%s57 + $0x14] sm:$0xf]
    %v4275 = vld [vmem:[%s57 + $0x18] sm:$0xf]
    %v4276 = vld [vmem:[%s57 + $0x1c] sm:$0xf]
    %v4285 = vunpack.c.l.b16 %v4269
    %v4286 = vunpack.c.l.b16 %v4270
    %v4287 = vunpack.c.l.b16 %v4271
    %v4288 = vunpack.c.l.b16 %v4272
    %v4289 = vunpack.c.l.b16 %v4273
    %v4290 = vunpack.c.l.b16 %v4274
    %v4291 = vunpack.c.l.b16 %v4275
    %v4292 = vunpack.c.l.b16 %v4276
    %v4293 = vpack.c.b16 %v4286, %v4285
    %v4294 = vpack.c.b16 %v4288, %v4287
    %v4295 = vpack.c.b16 %v4290, %v4289
    %v4296 = vpack.c.b16 %v4292, %v4291
    %v4302 = vsel %vm1212, %v4265, 0
    %v4305 = vsel %vm1212, %v4266, 0
    %v4308 = vsel %vm1212, %v4267, 0
    %v4311 = vsel %vm1212, %v4268, 0
    %4313 = vmatprep.subr.bf16.mxu0 0
    %4314 = vmatpush1.bf16.msra.mxu0 %v4293
    %4315 = vmatprep.subr.bf16.mxu0 0
    %4316 = vmatpush1.bf16.msra.mxu0 %v4294
    %4317 = vmatprep.subr.bf16.mxu0 0
    %4318 = vmatpush1.bf16.msra.mxu0 %v4295
    %4319 = vmatprep.subr.bf16.mxu0 0
    %4320 = vmatpush1.bf16.msra.mxu0 %v4296
    %4321 = vmatprep.subr.bf16.mxu0 0
    %4322 = vmatpush1.bf16.msra.mxu0 0
    %4323 = vmatprep.subr.bf16.mxu0 0
    %4324 = vmatpush1.bf16.msra.mxu0 0
    %4325 = vmatprep.subr.bf16.mxu0 0
    %4326 = vmatpush1.bf16.msra.mxu0 0
    %4327 = vmatprep.subr.bf16.mxu0 0
    %4328 = vmatpush1.bf16.msra.mxu0 0
    %4329 = vmatprep.subr.bf16.mxu0 0
    %4330 = vmatpush1.bf16.msra.mxu0 0
    %4331 = vmatprep.subr.bf16.mxu0 0
    %4332 = vmatpush1.bf16.msra.mxu0 0
    %4333 = vmatprep.subr.bf16.mxu0 0
    %4334 = vmatpush1.bf16.msra.mxu0 0
    %4335 = vmatprep.subr.bf16.mxu0 0
    %4336 = vmatpush1.bf16.msra.mxu0 0
    %4337 = vmatprep.subr.bf16.mxu0 0
    %4338 = vmatpush1.bf16.msra.mxu0 0
    %4339 = vmatprep.subr.bf16.mxu0 0
    %4340 = vmatpush1.bf16.msra.mxu0 0
    %4341 = vmatprep.subr.bf16.mxu0 0
    %4342 = vmatpush1.bf16.msra.mxu0 0
    %4343 = vmatprep.subr.bf16.mxu0 0
    %4344 = vmatpush1.bf16.msra.mxu0 0
    %4345 = vmatprep.mubr.bf16.mxu0 0
    %4346 = vmatmul.mubr.bf16.gmra.mrb[0].mxu0 %v4302
    %v4347 = vpop.f32.mrb[0].mxu0
    %v4348 = vadd.f32 0.0, %v4347
    %v4349 = vpop.f32.mrb[0].mxu0
    %v4350 = vpop.f32.mrb[0].mxu0
    %v4351 = vadd.f32 0.0, %v4350
    %v4352 = vpop.f32.mrb[0].mxu0
    %4353 = vmatprep.mubr.bf16.mxu0 0
    %4354 = vmatmul.mubr.bf16.gmra.mrb[0].mxu0 %v4305
    %v4355 = vpop.f32.mrb[0].mxu0
    %v4356 = vadd.f32 0.0, %v4355
    %v4357 = vpop.f32.mrb[0].mxu0
    %v4358 = vpop.f32.mrb[0].mxu0
    %v4359 = vadd.f32 0.0, %v4358
    %v4360 = vpop.f32.mrb[0].mxu0
    %4361 = vmatprep.mubr.bf16.mxu0 0
    %4362 = vmatmul.mubr.bf16.gmra.mrb[0].mxu0 %v4308
    %v4363 = vpop.f32.mrb[0].mxu0
    %v4364 = vadd.f32 0.0, %v4363
    %v4365 = vpop.f32.mrb[0].mxu0
    %v4366 = vpop.f32.mrb[0].mxu0
    %v4367 = vadd.f32 0.0, %v4366
    %v4368 = vpop.f32.mrb[0].mxu0
    %4369 = vmatprep.mubr.bf16.mxu0 0
    %4370 = vmatmul.mubr.bf16.gmra.mrb[0].mxu0 %v4311
    %v4371 = vpop.f32.mrb[0].mxu0
    %v4372 = vadd.f32 0.0, %v4371
    %v4373 = vpop.f32.mrb[0].mxu0
    %v4374 = vpop.f32.mrb[0].mxu0
    %v4375 = vadd.f32 0.0, %v4374
    %v4376 = vpop.f32.mrb[0].mxu0
    %4377 = vdwg.mxu0
    %v4378 = vld [vmem:[%s49] sm:$0xff]
    %v4379 = vld [vmem:[%s49 + $0x8] sm:$0xff]
    %v4380 = vld [vmem:[%s49 + $0x10] sm:$0xff]
    %v4381 = vld [vmem:[%s49 + $0x18] sm:$0xff]
    %v4382 = vld [vmem:[%s51] sm:$0xff]
    %v4383 = vld [vmem:[%s51 + $0x8] sm:$0xff]
    %v4384 = vld [vmem:[%s51 + $0x10] sm:$0xff]
    %v4385 = vld [vmem:[%s51 + $0x18] sm:$0xff]
    %v4386 = vld [vmem:[%s29] sm:$0xff]
    %v4387 = vld [vmem:[%s29 + $0x8] sm:$0xff]
    %v4388 = vld [vmem:[%s29 + $0x10] sm:$0xff]
    %v4389 = vld [vmem:[%s29 + $0x18] sm:$0xff]
    %v4390 = vld [vmem:[%s31] sm:$0x3]
    %v4391 = vmul.f32 %v4364, %v4364
    %v4392 = vmul.f32 %v4367, %v4367
    %v4393 = vmul.f32 %v4372, %v4372
    %v4394 = vmul.f32 %v4375, %v4375
    %v4396 = vsel %vm1212, %v4378, 0
    %v4399 = vsel %vm1212, %v4379, 0
    %v4402 = vsel %vm1212, %v4380, 0
    %v4405 = vsel %vm1212, %v4381, 0
    %4407 = vmatprep.subr.mxu0 0.0
    %4408 = vmatpush1.msra.mxu0 %v4364
    %4409 = vmatprep.subr.mxu0 0.0
    %4410 = vmatpush1.msra.mxu0 %v4367
    %4411 = vmatprep.subr.mxu0 0.0
    %4412 = vmatpush1.msra.mxu0 %v4372
    %4413 = vmatprep.subr.mxu0 0.0
    %4414 = vmatpush1.msra.mxu0 %v4375
    %4415 = vmatprep.subr.mxu0 0.0
    %4416 = vmatpush1.msra.mxu0 %v4391
    %4417 = vmatprep.subr.mxu0 0.0
    %4418 = vmatpush1.msra.mxu0 %v4392
    %4419 = vmatprep.subr.mxu0 0.0
    %4420 = vmatpush1.msra.mxu0 %v4393
    %4421 = vmatprep.subr.mxu0 0.0
    %4422 = vmatpush1.msra.mxu0 %v4394
    %4423 = vmatprep.subr.mxu0 0.0
    %4424 = vmatpush1.msra.mxu0 0.0
    %4425 = vmatprep.subr.mxu0 0.0
    %4426 = vmatpush1.msra.mxu0 0.0
    %4427 = vmatprep.subr.mxu0 0.0
    %4428 = vmatpush1.msra.mxu0 0.0
    %4429 = vmatprep.subr.mxu0 0.0
    %4430 = vmatpush1.msra.mxu0 0.0
    %4431 = vmatprep.subr.mxu0 0.0
    %4432 = vmatpush1.msra.mxu0 0.0
    %4433 = vmatprep.subr.mxu0 0.0
    %4434 = vmatpush1.msra.mxu0 0.0
    %4435 = vmatprep.subr.mxu0 0.0
    %4436 = vmatpush1.msra.mxu0 0.0
    %4437 = vmatprep.subr.mxu0 0.0
    %4438 = vmatpush1.msra.mxu0 0.0
    %4439 = vmatprep.subr.mxu0 0.0
    %4440 = vmatpush1.msra.mxu0 0.0
    %4441 = vmatprep.subr.mxu0 0.0
    %4442 = vmatpush1.msra.mxu0 0.0
    %4443 = vmatprep.subr.mxu0 0.0
    %4444 = vmatpush1.msra.mxu0 0.0
    %4445 = vmatprep.subr.mxu0 0.0
    %4446 = vmatpush1.msra.mxu0 0.0
    %4447 = vmatprep.subr.mxu0 0.0
    %4448 = vmatpush1.msra.mxu0 0.0
    %4449 = vmatprep.subr.mxu0 0.0
    %4450 = vmatpush1.msra.mxu0 0.0
    %4451 = vmatprep.subr.mxu0 0.0
    %4452 = vmatpush1.msra.mxu0 0.0
    %4453 = vmatprep.subr.mxu0 0.0
    %4454 = vmatpush1.msra.mxu0 0.0
    %4455 = vmatprep.subr.mxu0 0.0
    %4456 = vmatpush1.msra.mxu0 0.0
    %4457 = vmatprep.subr.mxu0 0.0
    %4458 = vmatpush1.msra.mxu0 0.0
    %4459 = vmatprep.subr.mxu0 0.0
    %4460 = vmatpush1.msra.mxu0 0.0
    %4461 = vmatprep.subr.mxu0 0.0
    %4462 = vmatpush1.msra.mxu0 0.0
    %4463 = vmatprep.subr.mxu0 0.0
    %4464 = vmatpush1.msra.mxu0 0.0
    %4465 = vmatprep.subr.mxu0 0.0
    %4466 = vmatpush1.msra.mxu0 0.0
    %4467 = vmatprep.subr.mxu0 0.0
    %4468 = vmatpush1.msra.mxu0 0.0
    %4469 = vmatprep.subr.mxu0 0.0
    %4470 = vmatpush1.msra.mxu0 0.0
    %4471 = vmatprep.mubr.f32.mxu0 0.0
    %4472 = vmatmul.mubr.f32.gmra.mrb[0].mxu0 %v4396
    %v4473 = vpop.f32.mrb[0].mxu0
    %v4474 = vadd.f32 0.0, %v4473
    %v4475 = vpop.f32.mrb[0].mxu0
    %4476 = vmatprep.mubr.f32.mxu0 0.0
    %4477 = vmatmul.mubr.f32.gmra.mrb[0].mxu0 %v4399
    %v4478 = vpop.f32.mrb[0].mxu0
    %v4479 = vadd.f32 0.0, %v4478
    %v4480 = vpop.f32.mrb[0].mxu0
    %4481 = vmatprep.mubr.f32.mxu0 0.0
    %4482 = vmatmul.mubr.f32.gmra.mrb[0].mxu0 %v4402
    %v4483 = vpop.f32.mrb[0].mxu0
    %v4484 = vadd.f32 0.0, %v4483
    %v4485 = vpop.f32.mrb[0].mxu0
    %4486 = vmatprep.mubr.f32.mxu0 0.0
    %4487 = vmatmul.mubr.f32.gmra.mrb[0].mxu0 %v4405
    %v4488 = vpop.f32.mrb[0].mxu0
    %v4489 = vadd.f32 0.0, %v4488
    %v4490 = vpop.f32.mrb[0].mxu0
    %4491 = vdwg.mxu0
    %vm4492 = vcmask 261120
    %v4494 = vsel %vm4492, %v4474, 0
    %v4497 = vsel %vm4492, %v4479, 0
    %v4500 = vsel %vm4492, %v4484, 0
    %v4503 = vsel %vm4492, %v4489, 0
    %4505 = vmatprep.subr.mxu0 0.0
    %4506 = vmatpush1.msra.mxu0 %v4386
    %4507 = vmatprep.subr.mxu0 0.0
    %4508 = vmatpush1.msra.mxu0 %v4387
    %4509 = vmatprep.subr.mxu0 0.0
    %4510 = vmatpush1.msra.mxu0 %v4388
    %4511 = vmatprep.subr.mxu0 0.0
    %4512 = vmatpush1.msra.mxu0 %v4389
    %4513 = vmatprep.subr.mxu0 0.0
    %4514 = vmatpush1.msra.mxu0 0.0
    %4515 = vmatprep.subr.mxu0 0.0
    %4516 = vmatpush1.msra.mxu0 0.0
    %4517 = vmatprep.subr.mxu0 0.0
    %4518 = vmatpush1.msra.mxu0 0.0
    %4519 = vmatprep.subr.mxu0 0.0
    %4520 = vmatpush1.msra.mxu0 0.0
    %4521 = vmatprep.subr.mxu0 0.0
    %4522 = vmatpush1.msra.mxu0 0.0
    %4523 = vmatprep.subr.mxu0 0.0
    %4524 = vmatpush1.msra.mxu0 0.0
    %4525 = vmatprep.subr.mxu0 0.0
    %4526 = vmatpush1.msra.mxu0 0.0
    %4527 = vmatprep.subr.mxu0 0.0
    %4528 = vmatpush1.msra.mxu0 0.0
    %4529 = vmatprep.subr.mxu0 0.0
    %4530 = vmatpush1.msra.mxu0 0.0
    %4531 = vmatprep.subr.mxu0 0.0
    %4532 = vmatpush1.msra.mxu0 0.0
    %4533 = vmatprep.subr.mxu0 0.0
    %4534 = vmatpush1.msra.mxu0 0.0
    %4535 = vmatprep.subr.mxu0 0.0
    %4536 = vmatpush1.msra.mxu0 0.0
    %4537 = vmatprep.subr.mxu0 0.0
    %4538 = vmatpush1.msra.mxu0 0.0
    %4539 = vmatprep.subr.mxu0 0.0
    %4540 = vmatpush1.msra.mxu0 0.0
    %4541 = vmatprep.subr.mxu0 0.0
    %4542 = vmatpush1.msra.mxu0 0.0
    %4543 = vmatprep.subr.mxu0 0.0
    %4544 = vmatpush1.msra.mxu0 0.0
    %4545 = vmatprep.subr.mxu0 0.0
    %4546 = vmatpush1.msra.mxu0 0.0
    %4547 = vmatprep.subr.mxu0 0.0
    %4548 = vmatpush1.msra.mxu0 0.0
    %4549 = vmatprep.subr.mxu0 0.0
    %4550 = vmatpush1.msra.mxu0 0.0
    %4551 = vmatprep.subr.mxu0 0.0
    %4552 = vmatpush1.msra.mxu0 0.0
    %4553 = vmatprep.subr.mxu0 0.0
    %4554 = vmatpush1.msra.mxu0 0.0
    %4555 = vmatprep.subr.mxu0 0.0
    %4556 = vmatpush1.msra.mxu0 0.0
    %4557 = vmatprep.subr.mxu0 0.0
    %4558 = vmatpush1.msra.mxu0 0.0
    %4559 = vmatprep.subr.mxu0 0.0
    %4560 = vmatpush1.msra.mxu0 0.0
    %4561 = vmatprep.subr.mxu0 0.0
    %4562 = vmatpush1.msra.mxu0 0.0
    %4563 = vmatprep.subr.mxu0 0.0
    %4564 = vmatpush1.msra.mxu0 0.0
    %4565 = vmatprep.subr.mxu0 0.0
    %4566 = vmatpush1.msra.mxu0 0.0
    %4567 = vmatprep.subr.mxu0 0.0
    %4568 = vmatpush1.msra.mxu0 0.0
    %4569 = vmatprep.mubr.f32.mxu0 0.0
    %4570 = vmatmul.mubr.f32.gmra.mrb[0].mxu0 %v4494
    %v4571 = vpop.f32.mrb[0].mxu0
    %v4572 = vadd.f32 0.0, %v4571
    %v4573 = vpop.f32.mrb[0].mxu0
    %4574 = vmatprep.mubr.f32.mxu0 0.0
    %4575 = vmatmul.mubr.f32.gmra.mrb[0].mxu0 %v4497
    %v4576 = vpop.f32.mrb[0].mxu0
    %v4577 = vadd.f32 0.0, %v4576
    %v4578 = vpop.f32.mrb[0].mxu0
    %4579 = vmatprep.mubr.f32.mxu0 0.0
    %4580 = vmatmul.mubr.f32.gmra.mrb[0].mxu0 %v4500
    %v4581 = vpop.f32.mrb[0].mxu0
    %v4582 = vadd.f32 0.0, %v4581
    %v4583 = vpop.f32.mrb[0].mxu0
    %4584 = vmatprep.mubr.f32.mxu0 0.0
    %4585 = vmatmul.mubr.f32.gmra.mrb[0].mxu0 %v4503
    %v4586 = vpop.f32.mrb[0].mxu0
    %v4587 = vadd.f32 0.0, %v4586
    %v4588 = vpop.f32.mrb[0].mxu0
    %4589 = vdwg.mxu0
    %v4590 = vmul.f32 %v4572, 0.03846154
    %v4591 = vmul.f32 %v4577, 0.03846154
    %v4592 = vmul.f32 %v4582, 0.03846154
    %v4593 = vmul.f32 %v4587, 0.03846154
    %v4594 = vmul.f32 %v4590, %v4590
    %v4595 = vmul.f32 %v4591, %v4591
    %v4596 = vsub.f32 %v4592, %v4594
    %v4597 = vsub.f32 %v4593, %v4595
    %v4598 = vmax.f32 %v4596, 0.0
    %v4599 = vmax.f32 %v4597, 0.0
    %v4600 = vadd.f32 %v4598, 1e-05
    %v4601 = vadd.f32 %v4599, 1e-05
    %v4602 = vrsqrt.pop %v4600
    %v4603 = vrsqrt.pop %v4601
    %v4604 = vld [vmem:[%s19] sm:$0xff]
    %v4605 = vld [vmem:[%s19 + $0x8] sm:$0xff]
    %v4606 = vld [vmem:[%s19 + $0x10] sm:$0xff]
    %v4607 = vld [vmem:[%s19 + $0x18] sm:$0xff]
    %v4609 = vsel %vm1736, %v4382, 0
    %v4612 = vsel %vm1736, %v4383, 0
    %v4615 = vsel %vm1736, %v4384, 0
    %v4618 = vsel %vm1736, %v4385, 0
    %4620 = vmatprep.subr.mxu0 0.0
    %4621 = vmatpush1.msra.mxu0 %v4602
    %4622 = vmatprep.subr.mxu0 0.0
    %4623 = vmatpush1.msra.mxu0 %v4603
    %4624 = vmatprep.subr.mxu0 0.0
    %4625 = vmatpush1.msra.mxu0 0.0
    %4626 = vmatprep.subr.mxu0 0.0
    %4627 = vmatpush1.msra.mxu0 0.0
    %4628 = vmatprep.subr.mxu0 0.0
    %4629 = vmatpush1.msra.mxu0 0.0
    %4630 = vmatprep.subr.mxu0 0.0
    %4631 = vmatpush1.msra.mxu0 0.0
    %4632 = vmatprep.subr.mxu0 0.0
    %4633 = vmatpush1.msra.mxu0 0.0
    %4634 = vmatprep.subr.mxu0 0.0
    %4635 = vmatpush1.msra.mxu0 0.0
    %4636 = vmatprep.subr.mxu0 0.0
    %4637 = vmatpush1.msra.mxu0 0.0
    %4638 = vmatprep.subr.mxu0 0.0
    %4639 = vmatpush1.msra.mxu0 0.0
    %4640 = vmatprep.subr.mxu0 0.0
    %4641 = vmatpush1.msra.mxu0 0.0
    %4642 = vmatprep.subr.mxu0 0.0
    %4643 = vmatpush1.msra.mxu0 0.0
    %4644 = vmatprep.subr.mxu0 0.0
    %4645 = vmatpush1.msra.mxu0 0.0
    %4646 = vmatprep.subr.mxu0 0.0
    %4647 = vmatpush1.msra.mxu0 0.0
    %4648 = vmatprep.subr.mxu0 0.0
    %4649 = vmatpush1.msra.mxu0 0.0
    %4650 = vmatprep.subr.mxu0 0.0
    %4651 = vmatpush1.msra.mxu0 0.0
    %4652 = vmatprep.subr.mxu0 0.0
    %4653 = vmatpush1.msra.mxu0 0.0
    %4654 = vmatprep.subr.mxu0 0.0
    %4655 = vmatpush1.msra.mxu0 0.0
    %4656 = vmatprep.subr.mxu0 0.0
    %4657 = vmatpush1.msra.mxu0 0.0
    %4658 = vmatprep.subr.mxu0 0.0
    %4659 = vmatpush1.msra.mxu0 0.0
    %4660 = vmatprep.subr.mxu0 0.0
    %4661 = vmatpush1.msra.mxu0 0.0
    %4662 = vmatprep.subr.mxu0 0.0
    %4663 = vmatpush1.msra.mxu0 0.0
    %4664 = vmatprep.subr.mxu0 0.0
    %4665 = vmatpush1.msra.mxu0 0.0
    %4666 = vmatprep.subr.mxu0 0.0
    %4667 = vmatpush1.msra.mxu0 0.0
    %4668 = vmatprep.subr.mxu0 0.0
    %4669 = vmatpush1.msra.mxu0 0.0
    %4670 = vmatprep.subr.mxu0 0.0
    %4671 = vmatpush1.msra.mxu0 0.0
    %4672 = vmatprep.subr.mxu0 0.0
    %4673 = vmatpush1.msra.mxu0 0.0
    %4674 = vmatprep.subr.mxu0 0.0
    %4675 = vmatpush1.msra.mxu0 0.0
    %4676 = vmatprep.subr.mxu0 0.0
    %4677 = vmatpush1.msra.mxu0 0.0
    %4678 = vmatprep.subr.mxu0 0.0
    %4679 = vmatpush1.msra.mxu0 0.0
    %4680 = vmatprep.subr.mxu0 0.0
    %4681 = vmatpush1.msra.mxu0 0.0
    %4682 = vmatprep.subr.mxu0 0.0
    %4683 = vmatpush1.msra.mxu0 0.0
    %4684 = vmatprep.mubr.f32.mxu0 0.0
    %4685 = vmatmul.mubr.f32.gmra.mrb[0].mxu0 %v4609
    %v4686 = vpop.f32.mrb[0].mxu0
    %v4687 = vadd.f32 0.0, %v4686
    %v4688 = vpop.f32.mrb[0].mxu0
    %4689 = vmatprep.mubr.f32.mxu0 0.0
    %4690 = vmatmul.mubr.f32.gmra.mrb[0].mxu0 %v4612
    %v4691 = vpop.f32.mrb[0].mxu0
    %v4692 = vadd.f32 0.0, %v4691
    %v4693 = vpop.f32.mrb[0].mxu0
    %4694 = vmatprep.mubr.f32.mxu0 0.0
    %4695 = vmatmul.mubr.f32.gmra.mrb[0].mxu0 %v4615
    %v4696 = vpop.f32.mrb[0].mxu0
    %v4697 = vadd.f32 0.0, %v4696
    %v4698 = vpop.f32.mrb[0].mxu0
    %4699 = vmatprep.mubr.f32.mxu0 0.0
    %4700 = vmatmul.mubr.f32.gmra.mrb[0].mxu0 %v4618
    %v4701 = vpop.f32.mrb[0].mxu0
    %v4702 = vadd.f32 0.0, %v4701
    %v4703 = vpop.f32.mrb[0].mxu0
    %4704 = vdwg.mxu0
    %4706 = vset.pattern.permute.xlu0 0
    %4707 = vperm.xlu0 %4706, %v4604
    %v4708 = vpop.permute.xlu0 %4707
    %4711 = vset.pattern.permute.xlu0 0
    %4712 = vperm.xlu0 %4711, %v4605
    %v4713 = vpop.permute.xlu0 %4712
    %4716 = vset.pattern.permute.xlu0 0
    %4717 = vperm.xlu0 %4716, %v4606
    %v4718 = vpop.permute.xlu0 %4717
    %4721 = vset.pattern.permute.xlu0 0
    %4722 = vperm.xlu0 %4721, %v4607
    %v4723 = vpop.permute.xlu0 %4722
    %v4725 = vmul.f32 %v4687, %v4708
    %v4726 = vmul.f32 %v4692, %v4713
    %v4727 = vmul.f32 %v4697, %v4718
    %v4728 = vmul.f32 %v4702, %v4723
    %4729 = vmatprep.subr.mxu0 0.0
    %4730 = vmatpush1.msra.mxu0 %v4590
    %4731 = vmatprep.subr.mxu0 0.0
    %4732 = vmatpush1.msra.mxu0 %v4591
    %4733 = vmatprep.subr.mxu0 0.0
    %4734 = vmatpush1.msra.mxu0 0.0
    %4735 = vmatprep.subr.mxu0 0.0
    %4736 = vmatpush1.msra.mxu0 0.0
    %4737 = vmatprep.subr.mxu0 0.0
    %4738 = vmatpush1.msra.mxu0 0.0
    %4739 = vmatprep.subr.mxu0 0.0
    %4740 = vmatpush1.msra.mxu0 0.0
    %4741 = vmatprep.subr.mxu0 0.0
    %4742 = vmatpush1.msra.mxu0 0.0
    %4743 = vmatprep.subr.mxu0 0.0
    %4744 = vmatpush1.msra.mxu0 0.0
    %4745 = vmatprep.subr.mxu0 0.0
    %4746 = vmatpush1.msra.mxu0 0.0
    %4747 = vmatprep.subr.mxu0 0.0
    %4748 = vmatpush1.msra.mxu0 0.0
    %4749 = vmatprep.subr.mxu0 0.0
    %4750 = vmatpush1.msra.mxu0 0.0
    %4751 = vmatprep.subr.mxu0 0.0
    %4752 = vmatpush1.msra.mxu0 0.0
    %4753 = vmatprep.subr.mxu0 0.0
    %4754 = vmatpush1.msra.mxu0 0.0
    %4755 = vmatprep.subr.mxu0 0.0
    %4756 = vmatpush1.msra.mxu0 0.0
    %4757 = vmatprep.subr.mxu0 0.0
    %4758 = vmatpush1.msra.mxu0 0.0
    %4759 = vmatprep.subr.mxu0 0.0
    %4760 = vmatpush1.msra.mxu0 0.0
    %4761 = vmatprep.subr.mxu0 0.0
    %4762 = vmatpush1.msra.mxu0 0.0
    %4763 = vmatprep.subr.mxu0 0.0
    %4764 = vmatpush1.msra.mxu0 0.0
    %4765 = vmatprep.subr.mxu0 0.0
    %4766 = vmatpush1.msra.mxu0 0.0
    %4767 = vmatprep.subr.mxu0 0.0
    %4768 = vmatpush1.msra.mxu0 0.0
    %4769 = vmatprep.subr.mxu0 0.0
    %4770 = vmatpush1.msra.mxu0 0.0
    %4771 = vmatprep.subr.mxu0 0.0
    %4772 = vmatpush1.msra.mxu0 0.0
    %4773 = vmatprep.subr.mxu0 0.0
    %4774 = vmatpush1.msra.mxu0 0.0
    %4775 = vmatprep.subr.mxu0 0.0
    %4776 = vmatpush1.msra.mxu0 0.0
    %4777 = vmatprep.subr.mxu0 0.0
    %4778 = vmatpush1.msra.mxu0 0.0
    %4779 = vmatprep.subr.mxu0 0.0
    %4780 = vmatpush1.msra.mxu0 0.0
    %4781 = vmatprep.subr.mxu0 0.0
    %4782 = vmatpush1.msra.mxu0 0.0
    %4783 = vmatprep.subr.mxu0 0.0
    %4784 = vmatpush1.msra.mxu0 0.0
    %4785 = vmatprep.subr.mxu0 0.0
    %4786 = vmatpush1.msra.mxu0 0.0
    %4787 = vmatprep.subr.mxu0 0.0
    %4788 = vmatpush1.msra.mxu0 0.0
    %4789 = vmatprep.subr.mxu0 0.0
    %4790 = vmatpush1.msra.mxu0 0.0
    %4791 = vmatprep.subr.mxu0 0.0
    %4792 = vmatpush1.msra.mxu0 0.0
    %4793 = vmatprep.mubr.f32.mxu0 0.0
    %4794 = vmatmul.mubr.f32.gmra.mrb[0].mxu0 %v4609
    %v4795 = vpop.f32.mrb[0].mxu0
    %v4796 = vadd.f32 0.0, %v4795
    %v4797 = vpop.f32.mrb[0].mxu0
    %4798 = vmatprep.mubr.f32.mxu0 0.0
    %4799 = vmatmul.mubr.f32.gmra.mrb[0].mxu0 %v4612
    %v4800 = vpop.f32.mrb[0].mxu0
    %v4801 = vadd.f32 0.0, %v4800
    %v4802 = vpop.f32.mrb[0].mxu0
    %4803 = vmatprep.mubr.f32.mxu0 0.0
    %4804 = vmatmul.mubr.f32.gmra.mrb[0].mxu0 %v4615
    %v4805 = vpop.f32.mrb[0].mxu0
    %v4806 = vadd.f32 0.0, %v4805
    %v4807 = vpop.f32.mrb[0].mxu0
    %4808 = vmatprep.mubr.f32.mxu0 0.0
    %4809 = vmatmul.mubr.f32.gmra.mrb[0].mxu0 %v4618
    %v4810 = vpop.f32.mrb[0].mxu0
    %v4811 = vadd.f32 0.0, %v4810
    %v4812 = vpop.f32.mrb[0].mxu0
    %4813 = vdwg.mxu0
    %v4814 = vmul.f32 %v4796, %v4725
    %v4815 = vmul.f32 %v4801, %v4726
    %v4816 = vmul.f32 %v4806, %v4727
    %v4817 = vmul.f32 %v4811, %v4728
    %4818 = vset.pattern.permute.xlu0 1
    %4819 = vperm.xlu0 %4818, %v4604
    %v4820 = vpop.permute.xlu0 %4819
    %4822 = vset.pattern.permute.xlu0 1
    %4823 = vperm.xlu0 %4822, %v4605
    %v4824 = vpop.permute.xlu0 %4823
    %4826 = vset.pattern.permute.xlu0 1
    %4827 = vperm.xlu0 %4826, %v4606
    %v4828 = vpop.permute.xlu0 %4827
    %4830 = vset.pattern.permute.xlu0 1
    %4831 = vperm.xlu0 %4830, %v4607
    %v4832 = vpop.permute.xlu0 %4831
    %v4834 = vsub.f32 %v4820, %v4814
    %v4835 = vsub.f32 %v4824, %v4815
    %v4836 = vsub.f32 %v4828, %v4816
    %v4837 = vsub.f32 %v4832, %v4817
    %v4839 = vsel %vm797, %v4725, 0
    %v4842 = vsel %vm797, %v4726, 0
    %v4845 = vsel %vm797, %v4727, 0
    %v4848 = vsel %vm797, %v4728, 0
    %v4851 = vsel %vm822, %v4390, 0
    %4853 = vmatprep.subr.mxu0 0.0
    %4854 = vmatpush1.msra.mxu0 %v4851
    %4855 = vmatprep.subr.mxu0 0.0
    %4856 = vmatpush1.msra.mxu0 0.0
    %4857 = vmatprep.subr.mxu0 0.0
    %4858 = vmatpush1.msra.mxu0 0.0
    %4859 = vmatprep.subr.mxu0 0.0
    %4860 = vmatpush1.msra.mxu0 0.0
    %4861 = vmatprep.subr.mxu0 0.0
    %4862 = vmatpush1.msra.mxu0 0.0
    %4863 = vmatprep.subr.mxu0 0.0
    %4864 = vmatpush1.msra.mxu0 0.0
    %4865 = vmatprep.subr.mxu0 0.0
    %4866 = vmatpush1.msra.mxu0 0.0
    %4867 = vmatprep.subr.mxu0 0.0
    %4868 = vmatpush1.msra.mxu0 0.0
    %4869 = vmatprep.subr.mxu0 0.0
    %4870 = vmatpush1.msra.mxu0 0.0
    %4871 = vmatprep.subr.mxu0 0.0
    %4872 = vmatpush1.msra.mxu0 0.0
    %4873 = vmatprep.subr.mxu0 0.0
    %4874 = vmatpush1.msra.mxu0 0.0
    %4875 = vmatprep.subr.mxu0 0.0
    %4876 = vmatpush1.msra.mxu0 0.0
    %4877 = vmatprep.subr.mxu0 0.0
    %4878 = vmatpush1.msra.mxu0 0.0
    %4879 = vmatprep.subr.mxu0 0.0
    %4880 = vmatpush1.msra.mxu0 0.0
    %4881 = vmatprep.subr.mxu0 0.0
    %4882 = vmatpush1.msra.mxu0 0.0
    %4883 = vmatprep.subr.mxu0 0.0
    %4884 = vmatpush1.msra.mxu0 0.0
    %4885 = vmatprep.subr.mxu0 0.0
    %4886 = vmatpush1.msra.mxu0 0.0
    %4887 = vmatprep.subr.mxu0 0.0
    %4888 = vmatpush1.msra.mxu0 0.0
    %4889 = vmatprep.subr.mxu0 0.0
    %4890 = vmatpush1.msra.mxu0 0.0
    %4891 = vmatprep.subr.mxu0 0.0
    %4892 = vmatpush1.msra.mxu0 0.0
    %4893 = vmatprep.subr.mxu0 0.0
    %4894 = vmatpush1.msra.mxu0 0.0
    %4895 = vmatprep.subr.mxu0 0.0
    %4896 = vmatpush1.msra.mxu0 0.0
    %4897 = vmatprep.subr.mxu0 0.0
    %4898 = vmatpush1.msra.mxu0 0.0
    %4899 = vmatprep.subr.mxu0 0.0
    %4900 = vmatpush1.msra.mxu0 0.0
    %4901 = vmatprep.subr.mxu0 0.0
    %4902 = vmatpush1.msra.mxu0 0.0
    %4903 = vmatprep.subr.mxu0 0.0
    %4904 = vmatpush1.msra.mxu0 0.0
    %4905 = vmatprep.subr.mxu0 0.0
    %4906 = vmatpush1.msra.mxu0 0.0
    %4907 = vmatprep.subr.mxu0 0.0
    %4908 = vmatpush1.msra.mxu0 0.0
    %4909 = vmatprep.subr.mxu0 0.0
    %4910 = vmatpush1.msra.mxu0 0.0
    %4911 = vmatprep.subr.mxu0 0.0
    %4912 = vmatpush1.msra.mxu0 0.0
    %4913 = vmatprep.subr.mxu0 0.0
    %4914 = vmatpush1.msra.mxu0 0.0
    %4915 = vmatprep.subr.mxu0 0.0
    %4916 = vmatpush1.msra.mxu0 0.0
    %4917 = vmatprep.mubr.f32.mxu0 0.0
    %4918 = vmatmul.mubr.f32.gmra.mrb[0].mxu0 %v4839
    %v4919 = vpop.f32.mrb[0].mxu0
    %v4920 = vadd.f32 0.0, %v4919
    %v4921 = vpop.f32.mrb[0].mxu0
    %4922 = vmatprep.mubr.f32.mxu0 0.0
    %4923 = vmatmul.mubr.f32.gmra.mrb[0].mxu0 %v4842
    %v4924 = vpop.f32.mrb[0].mxu0
    %v4925 = vadd.f32 0.0, %v4924
    %v4926 = vpop.f32.mrb[0].mxu0
    %4927 = vmatprep.mubr.f32.mxu0 0.0
    %4928 = vmatmul.mubr.f32.gmra.mrb[0].mxu0 %v4845
    %v4929 = vpop.f32.mrb[0].mxu0
    %v4930 = vadd.f32 0.0, %v4929
    %v4931 = vpop.f32.mrb[0].mxu0
    %4932 = vmatprep.mubr.f32.mxu0 0.0
    %4933 = vmatmul.mubr.f32.gmra.mrb[0].mxu0 %v4848
    %v4934 = vpop.f32.mrb[0].mxu0
    %v4935 = vadd.f32 0.0, %v4934
    %v4936 = vpop.f32.mrb[0].mxu0
    %4937 = vdwg.mxu0
    %v4939 = vsel %vm797, %v4834, 0
    %v4942 = vsel %vm797, %v4835, 0
    %v4945 = vsel %vm797, %v4836, 0
    %v4948 = vsel %vm797, %v4837, 0
    %4950 = vmatprep.subr.mxu0 0.0
    %4951 = vmatpush1.msra.mxu0 %v4851
    %4952 = vmatprep.subr.mxu0 0.0
    %4953 = vmatpush1.msra.mxu0 0.0
    %4954 = vmatprep.subr.mxu0 0.0
    %4955 = vmatpush1.msra.mxu0 0.0
    %4956 = vmatprep.subr.mxu0 0.0
    %4957 = vmatpush1.msra.mxu0 0.0
    %4958 = vmatprep.subr.mxu0 0.0
    %4959 = vmatpush1.msra.mxu0 0.0
    %4960 = vmatprep.subr.mxu0 0.0
    %4961 = vmatpush1.msra.mxu0 0.0
    %4962 = vmatprep.subr.mxu0 0.0
    %4963 = vmatpush1.msra.mxu0 0.0
    %4964 = vmatprep.subr.mxu0 0.0
    %4965 = vmatpush1.msra.mxu0 0.0
    %4966 = vmatprep.subr.mxu0 0.0
    %4967 = vmatpush1.msra.mxu0 0.0
    %4968 = vmatprep.subr.mxu0 0.0
    %4969 = vmatpush1.msra.mxu0 0.0
    %4970 = vmatprep.subr.mxu0 0.0
    %4971 = vmatpush1.msra.mxu0 0.0
    %4972 = vmatprep.subr.mxu0 0.0
    %4973 = vmatpush1.msra.mxu0 0.0
    %4974 = vmatprep.subr.mxu0 0.0
    %4975 = vmatpush1.msra.mxu0 0.0
    %4976 = vmatprep.subr.mxu0 0.0
    %4977 = vmatpush1.msra.mxu0 0.0
    %4978 = vmatprep.subr.mxu0 0.0
    %4979 = vmatpush1.msra.mxu0 0.0
    %4980 = vmatprep.subr.mxu0 0.0
    %4981 = vmatpush1.msra.mxu0 0.0
    %4982 = vmatprep.subr.mxu0 0.0
    %4983 = vmatpush1.msra.mxu0 0.0
    %4984 = vmatprep.subr.mxu0 0.0
    %4985 = vmatpush1.msra.mxu0 0.0
    %4986 = vmatprep.subr.mxu0 0.0
    %4987 = vmatpush1.msra.mxu0 0.0
    %4988 = vmatprep.subr.mxu0 0.0
    %4989 = vmatpush1.msra.mxu0 0.0
    %4990 = vmatprep.subr.mxu0 0.0
    %4991 = vmatpush1.msra.mxu0 0.0
    %4992 = vmatprep.subr.mxu0 0.0
    %4993 = vmatpush1.msra.mxu0 0.0
    %4994 = vmatprep.subr.mxu0 0.0
    %4995 = vmatpush1.msra.mxu0 0.0
    %4996 = vmatprep.subr.mxu0 0.0
    %4997 = vmatpush1.msra.mxu0 0.0
    %4998 = vmatprep.subr.mxu0 0.0
    %4999 = vmatpush1.msra.mxu0 0.0
    %5000 = vmatprep.subr.mxu0 0.0
    %5001 = vmatpush1.msra.mxu0 0.0
    %5002 = vmatprep.subr.mxu0 0.0
    %5003 = vmatpush1.msra.mxu0 0.0
    %5004 = vmatprep.subr.mxu0 0.0
    %5005 = vmatpush1.msra.mxu0 0.0
    %5006 = vmatprep.subr.mxu0 0.0
    %5007 = vmatpush1.msra.mxu0 0.0
    %5008 = vmatprep.subr.mxu0 0.0
    %5009 = vmatpush1.msra.mxu0 0.0
    %5010 = vmatprep.subr.mxu0 0.0
    %5011 = vmatpush1.msra.mxu0 0.0
    %5012 = vmatprep.subr.mxu0 0.0
    %5013 = vmatpush1.msra.mxu0 0.0
    %5014 = vmatprep.mubr.f32.mxu0 0.0
    %5015 = vmatmul.mubr.f32.gmra.mrb[0].mxu0 %v4939
    %v5016 = vpop.f32.mrb[0].mxu0
    %v5017 = vadd.f32 0.0, %v5016
    %v5018 = vpop.f32.mrb[0].mxu0
    %5019 = vmatprep.mubr.f32.mxu0 0.0
    %5020 = vmatmul.mubr.f32.gmra.mrb[0].mxu0 %v4942
    %v5021 = vpop.f32.mrb[0].mxu0
    %v5022 = vadd.f32 0.0, %v5021
    %v5023 = vpop.f32.mrb[0].mxu0
    %5024 = vmatprep.mubr.f32.mxu0 0.0
    %5025 = vmatmul.mubr.f32.gmra.mrb[0].mxu0 %v4945
    %v5026 = vpop.f32.mrb[0].mxu0
    %v5027 = vadd.f32 0.0, %v5026
    %v5028 = vpop.f32.mrb[0].mxu0
    %5029 = vmatprep.mubr.f32.mxu0 0.0
    %5030 = vmatmul.mubr.f32.gmra.mrb[0].mxu0 %v4948
    %v5031 = vpop.f32.mrb[0].mxu0
    %v5032 = vadd.f32 0.0, %v5031
    %v5033 = vpop.f32.mrb[0].mxu0
    %5034 = vdwg.mxu0
    %v5035 = vmul.f32 %v4364, %v4920
    %v5036 = vmul.f32 %v4367, %v4925
    %v5037 = vmul.f32 %v4372, %v4930
    %v5038 = vmul.f32 %v4375, %v4935
    %v5039 = vadd.f32 %v5035, %v5017
    %v5040 = vadd.f32 %v5036, %v5022
    %v5041 = vadd.f32 %v5037, %v5027
    %v5042 = vadd.f32 %v5038, %v5032
    %v5043 = vld [vmem:[%s41] sm:$0xff]
    %v5044 = vld [vmem:[%s43] sm:$0xff]
    %v5045 = vld [vmem:[%s43 + $0x8] sm:$0xff]
    %v5046 = vld [vmem:[%s43 + $0x10] sm:$0xff]
    %v5047 = vld [vmem:[%s43 + $0x18] sm:$0xff]
    %v5048 = vmul.f32 %v4348, %v4348
    %v5049 = vmul.f32 %v4351, %v4351
    %v5050 = vmul.f32 %v4356, %v4356
    %v5051 = vmul.f32 %v4359, %v4359
    %v5053 = vsel %vm1212, %v5043, 0
    %5055 = vmatprep.subr.mxu0 0.0
    %5056 = vmatpush1.msra.mxu0 %v4348
    %5057 = vmatprep.subr.mxu0 0.0
    %5058 = vmatpush1.msra.mxu0 %v4351
    %5059 = vmatprep.subr.mxu0 0.0
    %5060 = vmatpush1.msra.mxu0 %v4356
    %5061 = vmatprep.subr.mxu0 0.0
    %5062 = vmatpush1.msra.mxu0 %v4359
    %5063 = vmatprep.subr.mxu0 0.0
    %5064 = vmatpush1.msra.mxu0 %v5048
    %5065 = vmatprep.subr.mxu0 0.0
    %5066 = vmatpush1.msra.mxu0 %v5049
    %5067 = vmatprep.subr.mxu0 0.0
    %5068 = vmatpush1.msra.mxu0 %v5050
    %5069 = vmatprep.subr.mxu0 0.0
    %5070 = vmatpush1.msra.mxu0 %v5051
    %5071 = vmatprep.subr.mxu0 0.0
    %5072 = vmatpush1.msra.mxu0 0.0
    %5073 = vmatprep.subr.mxu0 0.0
    %5074 = vmatpush1.msra.mxu0 0.0
    %5075 = vmatprep.subr.mxu0 0.0
    %5076 = vmatpush1.msra.mxu0 0.0
    %5077 = vmatprep.subr.mxu0 0.0
    %5078 = vmatpush1.msra.mxu0 0.0
    %5079 = vmatprep.subr.mxu0 0.0
    %5080 = vmatpush1.msra.mxu0 0.0
    %5081 = vmatprep.subr.mxu0 0.0
    %5082 = vmatpush1.msra.mxu0 0.0
    %5083 = vmatprep.subr.mxu0 0.0
    %5084 = vmatpush1.msra.mxu0 0.0
    %5085 = vmatprep.subr.mxu0 0.0
    %5086 = vmatpush1.msra.mxu0 0.0
    %5087 = vmatprep.subr.mxu0 0.0
    %5088 = vmatpush1.msra.mxu0 0.0
    %5089 = vmatprep.subr.mxu0 0.0
    %5090 = vmatpush1.msra.mxu0 0.0
    %5091 = vmatprep.subr.mxu0 0.0
    %5092 = vmatpush1.msra.mxu0 0.0
    %5093 = vmatprep.subr.mxu0 0.0
    %5094 = vmatpush1.msra.mxu0 0.0
    %5095 = vmatprep.subr.mxu0 0.0
    %5096 = vmatpush1.msra.mxu0 0.0
    %5097 = vmatprep.subr.mxu0 0.0
    %5098 = vmatpush1.msra.mxu0 0.0
    %5099 = vmatprep.subr.mxu0 0.0
    %5100 = vmatpush1.msra.mxu0 0.0
    %5101 = vmatprep.subr.mxu0 0.0
    %5102 = vmatpush1.msra.mxu0 0.0
    %5103 = vmatprep.subr.mxu0 0.0
    %5104 = vmatpush1.msra.mxu0 0.0
    %5105 = vmatprep.subr.mxu0 0.0
    %5106 = vmatpush1.msra.mxu0 0.0
    %5107 = vmatprep.subr.mxu0 0.0
    %5108 = vmatpush1.msra.mxu0 0.0
    %5109 = vmatprep.subr.mxu0 0.0
    %5110 = vmatpush1.msra.mxu0 0.0
    %5111 = vmatprep.subr.mxu0 0.0
    %5112 = vmatpush1.msra.mxu0 0.0
    %5113 = vmatprep.subr.mxu0 0.0
    %5114 = vmatpush1.msra.mxu0 0.0
    %5115 = vmatprep.subr.mxu0 0.0
    %5116 = vmatpush1.msra.mxu0 0.0
    %5117 = vmatprep.subr.mxu0 0.0
    %5118 = vmatpush1.msra.mxu0 0.0
    %5119 = vmatprep.mubr.f32.mxu0 0.0
    %5120 = vmatmul.mubr.f32.gmra.mrb[0].mxu0 %v5053
    %v5121 = vpop.f32.mrb[0].mxu0
    %v5122 = vadd.f32 0.0, %v5121
    %v5123 = vpop.f32.mrb[0].mxu0
    %5124 = vdwg.mxu0
    %v5126 = vsel %vm4492, %v5122, 0
    %5128 = vmatprep.subr.mxu0 0.0
    %5129 = vmatpush1.msra.mxu0 %v4386
    %5130 = vmatprep.subr.mxu0 0.0
    %5131 = vmatpush1.msra.mxu0 %v4387
    %5132 = vmatprep.subr.mxu0 0.0
    %5133 = vmatpush1.msra.mxu0 %v4388
    %5134 = vmatprep.subr.mxu0 0.0
    %5135 = vmatpush1.msra.mxu0 %v4389
    %5136 = vmatprep.subr.mxu0 0.0
    %5137 = vmatpush1.msra.mxu0 0.0
    %5138 = vmatprep.subr.mxu0 0.0
    %5139 = vmatpush1.msra.mxu0 0.0
    %5140 = vmatprep.subr.mxu0 0.0
    %5141 = vmatpush1.msra.mxu0 0.0
    %5142 = vmatprep.subr.mxu0 0.0
    %5143 = vmatpush1.msra.mxu0 0.0
    %5144 = vmatprep.subr.mxu0 0.0
    %5145 = vmatpush1.msra.mxu0 0.0
    %5146 = vmatprep.subr.mxu0 0.0
    %5147 = vmatpush1.msra.mxu0 0.0
    %5148 = vmatprep.subr.mxu0 0.0
    %5149 = vmatpush1.msra.mxu0 0.0
    %5150 = vmatprep.subr.mxu0 0.0
    %5151 = vmatpush1.msra.mxu0 0.0
    %5152 = vmatprep.subr.mxu0 0.0
    %5153 = vmatpush1.msra.mxu0 0.0
    %5154 = vmatprep.subr.mxu0 0.0
    %5155 = vmatpush1.msra.mxu0 0.0
    %5156 = vmatprep.subr.mxu0 0.0
    %5157 = vmatpush1.msra.mxu0 0.0
    %5158 = vmatprep.subr.mxu0 0.0
    %5159 = vmatpush1.msra.mxu0 0.0
    %5160 = vmatprep.subr.mxu0 0.0
    %5161 = vmatpush1.msra.mxu0 0.0
    %5162 = vmatprep.subr.mxu0 0.0
    %5163 = vmatpush1.msra.mxu0 0.0
    %5164 = vmatprep.subr.mxu0 0.0
    %5165 = vmatpush1.msra.mxu0 0.0
    %5166 = vmatprep.subr.mxu0 0.0
    %5167 = vmatpush1.msra.mxu0 0.0
    %5168 = vmatprep.subr.mxu0 0.0
    %5169 = vmatpush1.msra.mxu0 0.0
    %5170 = vmatprep.subr.mxu0 0.0
    %5171 = vmatpush1.msra.mxu0 0.0
    %5172 = vmatprep.subr.mxu0 0.0
    %5173 = vmatpush1.msra.mxu0 0.0
    %5174 = vmatprep.subr.mxu0 0.0
    %5175 = vmatpush1.msra.mxu0 0.0
    %5176 = vmatprep.subr.mxu0 0.0
    %5177 = vmatpush1.msra.mxu0 0.0
    %5178 = vmatprep.subr.mxu0 0.0
    %5179 = vmatpush1.msra.mxu0 0.0
    %5180 = vmatprep.subr.mxu0 0.0
    %5181 = vmatpush1.msra.mxu0 0.0
    %5182 = vmatprep.subr.mxu0 0.0
    %5183 = vmatpush1.msra.mxu0 0.0
    %5184 = vmatprep.subr.mxu0 0.0
    %5185 = vmatpush1.msra.mxu0 0.0
    %5186 = vmatprep.subr.mxu0 0.0
    %5187 = vmatpush1.msra.mxu0 0.0
    %5188 = vmatprep.subr.mxu0 0.0
    %5189 = vmatpush1.msra.mxu0 0.0
    %5190 = vmatprep.subr.mxu0 0.0
    %5191 = vmatpush1.msra.mxu0 0.0
    %5192 = vmatprep.mubr.f32.mxu0 0.0
    %5193 = vmatmul.mubr.f32.gmra.mrb[0].mxu0 %v5126
    %v5194 = vpop.f32.mrb[0].mxu0
    %v5195 = vadd.f32 0.0, %v5194
    %v5196 = vpop.f32.mrb[0].mxu0
    %5197 = vdwg.mxu0
    %v5198 = vmul.f32 %v5195, 0.009615385
    %v5199 = vmul.f32 %v5198, %v5198
    %v5201 = vrot.slane %v5199, 4
    %v5203 = vsub.f32 %v5198, %v5201
    %v5204 = vmax.f32 %v5203, 0.0
    %v5205 = vadd.f32 %v5204, 1e-05
    %v5206 = vrsqrt.pop %v5205
    %v5207 = vld [vmem:[%s21] sm:$0xff]
    %v5208 = vld [vmem:[%s21 + $0x8] sm:$0xff]
    %v5209 = vld [vmem:[%s21 + $0x10] sm:$0xff]
    %v5210 = vld [vmem:[%s21 + $0x18] sm:$0xff]
    %v5212 = vrot.slane %v5206, 4
    %v5214 = vsel %vm460, %v5044, 0
    %v5217 = vsel %vm460, %v5045, 0
    %v5220 = vsel %vm460, %v5046, 0
    %v5223 = vsel %vm460, %v5047, 0
    %v5225 = vsel %vm485, %v5212, 0
    %5227 = vmatprep.subr.mxu0 0.0
    %5228 = vmatpush1.msra.mxu0 %v5225
    %5229 = vmatprep.subr.mxu0 0.0
    %5230 = vmatpush1.msra.mxu0 0.0
    %5231 = vmatprep.subr.mxu0 0.0
    %5232 = vmatpush1.msra.mxu0 0.0
    %5233 = vmatprep.subr.mxu0 0.0
    %5234 = vmatpush1.msra.mxu0 0.0
    %5235 = vmatprep.subr.mxu0 0.0
    %5236 = vmatpush1.msra.mxu0 0.0
    %5237 = vmatprep.subr.mxu0 0.0
    %5238 = vmatpush1.msra.mxu0 0.0
    %5239 = vmatprep.subr.mxu0 0.0
    %5240 = vmatpush1.msra.mxu0 0.0
    %5241 = vmatprep.subr.mxu0 0.0
    %5242 = vmatpush1.msra.mxu0 0.0
    %5243 = vmatprep.subr.mxu0 0.0
    %5244 = vmatpush1.msra.mxu0 0.0
    %5245 = vmatprep.subr.mxu0 0.0
    %5246 = vmatpush1.msra.mxu0 0.0
    %5247 = vmatprep.subr.mxu0 0.0
    %5248 = vmatpush1.msra.mxu0 0.0
    %5249 = vmatprep.subr.mxu0 0.0
    %5250 = vmatpush1.msra.mxu0 0.0
    %5251 = vmatprep.subr.mxu0 0.0
    %5252 = vmatpush1.msra.mxu0 0.0
    %5253 = vmatprep.subr.mxu0 0.0
    %5254 = vmatpush1.msra.mxu0 0.0
    %5255 = vmatprep.subr.mxu0 0.0
    %5256 = vmatpush1.msra.mxu0 0.0
    %5257 = vmatprep.subr.mxu0 0.0
    %5258 = vmatpush1.msra.mxu0 0.0
    %5259 = vmatprep.subr.mxu0 0.0
    %5260 = vmatpush1.msra.mxu0 0.0
    %5261 = vmatprep.subr.mxu0 0.0
    %5262 = vmatpush1.msra.mxu0 0.0
    %5263 = vmatprep.subr.mxu0 0.0
    %5264 = vmatpush1.msra.mxu0 0.0
    %5265 = vmatprep.subr.mxu0 0.0
    %5266 = vmatpush1.msra.mxu0 0.0
    %5267 = vmatprep.subr.mxu0 0.0
    %5268 = vmatpush1.msra.mxu0 0.0
    %5269 = vmatprep.subr.mxu0 0.0
    %5270 = vmatpush1.msra.mxu0 0.0
    %5271 = vmatprep.subr.mxu0 0.0
    %5272 = vmatpush1.msra.mxu0 0.0
    %5273 = vmatprep.subr.mxu0 0.0
    %5274 = vmatpush1.msra.mxu0 0.0
    %5275 = vmatprep.subr.mxu0 0.0
    %5276 = vmatpush1.msra.mxu0 0.0
    %5277 = vmatprep.subr.mxu0 0.0
    %5278 = vmatpush1.msra.mxu0 0.0
    %5279 = vmatprep.subr.mxu0 0.0
    %5280 = vmatpush1.msra.mxu0 0.0
    %5281 = vmatprep.subr.mxu0 0.0
    %5282 = vmatpush1.msra.mxu0 0.0
    %5283 = vmatprep.subr.mxu0 0.0
    %5284 = vmatpush1.msra.mxu0 0.0
    %5285 = vmatprep.subr.mxu0 0.0
    %5286 = vmatpush1.msra.mxu0 0.0
    %5287 = vmatprep.subr.mxu0 0.0
    %5288 = vmatpush1.msra.mxu0 0.0
    %5289 = vmatprep.subr.mxu0 0.0
    %5290 = vmatpush1.msra.mxu0 0.0
    %5291 = vmatprep.mubr.f32.mxu0 0.0
    %5292 = vmatmul.mubr.f32.gmra.mrb[0].mxu0 %v5214
    %v5293 = vpop.f32.mrb[0].mxu0
    %v5294 = vadd.f32 0.0, %v5293
    %v5295 = vpop.f32.mrb[0].mxu0
    %5296 = vmatprep.mubr.f32.mxu0 0.0
    %5297 = vmatmul.mubr.f32.gmra.mrb[0].mxu0 %v5217
    %v5298 = vpop.f32.mrb[0].mxu0
    %v5299 = vadd.f32 0.0, %v5298
    %v5300 = vpop.f32.mrb[0].mxu0
    %5301 = vmatprep.mubr.f32.mxu0 0.0
    %5302 = vmatmul.mubr.f32.gmra.mrb[0].mxu0 %v5220
    %v5303 = vpop.f32.mrb[0].mxu0
    %v5304 = vadd.f32 0.0, %v5303
    %v5305 = vpop.f32.mrb[0].mxu0
    %5306 = vmatprep.mubr.f32.mxu0 0.0
    %5307 = vmatmul.mubr.f32.gmra.mrb[0].mxu0 %v5223
    %v5308 = vpop.f32.mrb[0].mxu0
    %v5309 = vadd.f32 0.0, %v5308
    %v5310 = vpop.f32.mrb[0].mxu0
    %5311 = vdwg.mxu0
    %5313 = vset.pattern.permute.xlu0 0
    %5314 = vperm.xlu0 %5313, %v5207
    %v5315 = vpop.permute.xlu0 %5314
    %5318 = vset.pattern.permute.xlu0 0
    %5319 = vperm.xlu0 %5318, %v5208
    %v5320 = vpop.permute.xlu0 %5319
    %5323 = vset.pattern.permute.xlu0 0
    %5324 = vperm.xlu0 %5323, %v5209
    %v5325 = vpop.permute.xlu0 %5324
    %5328 = vset.pattern.permute.xlu0 0
    %5329 = vperm.xlu0 %5328, %v5210
    %v5330 = vpop.permute.xlu0 %5329
    %v5332 = vmul.f32 %v5294, %v5315
    %v5333 = vmul.f32 %v5299, %v5320
    %v5334 = vmul.f32 %v5304, %v5325
    %v5335 = vmul.f32 %v5309, %v5330
    %v5337 = vsel %vm485, %v5198, 0
    %5339 = vmatprep.subr.mxu0 0.0
    %5340 = vmatpush1.msra.mxu0 %v5337
    %5341 = vmatprep.subr.mxu0 0.0
    %5342 = vmatpush1.msra.mxu0 0.0
    %5343 = vmatprep.subr.mxu0 0.0
    %5344 = vmatpush1.msra.mxu0 0.0
    %5345 = vmatprep.subr.mxu0 0.0
    %5346 = vmatpush1.msra.mxu0 0.0
    %5347 = vmatprep.subr.mxu0 0.0
    %5348 = vmatpush1.msra.mxu0 0.0
    %5349 = vmatprep.subr.mxu0 0.0
    %5350 = vmatpush1.msra.mxu0 0.0
    %5351 = vmatprep.subr.mxu0 0.0
    %5352 = vmatpush1.msra.mxu0 0.0
    %5353 = vmatprep.subr.mxu0 0.0
    %5354 = vmatpush1.msra.mxu0 0.0
    %5355 = vmatprep.subr.mxu0 0.0
    %5356 = vmatpush1.msra.mxu0 0.0
    %5357 = vmatprep.subr.mxu0 0.0
    %5358 = vmatpush1.msra.mxu0 0.0
    %5359 = vmatprep.subr.mxu0 0.0
    %5360 = vmatpush1.msra.mxu0 0.0
    %5361 = vmatprep.subr.mxu0 0.0
    %5362 = vmatpush1.msra.mxu0 0.0
    %5363 = vmatprep.subr.mxu0 0.0
    %5364 = vmatpush1.msra.mxu0 0.0
    %5365 = vmatprep.subr.mxu0 0.0
    %5366 = vmatpush1.msra.mxu0 0.0
    %5367 = vmatprep.subr.mxu0 0.0
    %5368 = vmatpush1.msra.mxu0 0.0
    %5369 = vmatprep.subr.mxu0 0.0
    %5370 = vmatpush1.msra.mxu0 0.0
    %5371 = vmatprep.subr.mxu0 0.0
    %5372 = vmatpush1.msra.mxu0 0.0
    %5373 = vmatprep.subr.mxu0 0.0
    %5374 = vmatpush1.msra.mxu0 0.0
    %5375 = vmatprep.subr.mxu0 0.0
    %5376 = vmatpush1.msra.mxu0 0.0
    %5377 = vmatprep.subr.mxu0 0.0
    %5378 = vmatpush1.msra.mxu0 0.0
    %5379 = vmatprep.subr.mxu0 0.0
    %5380 = vmatpush1.msra.mxu0 0.0
    %5381 = vmatprep.subr.mxu0 0.0
    %5382 = vmatpush1.msra.mxu0 0.0
    %5383 = vmatprep.subr.mxu0 0.0
    %5384 = vmatpush1.msra.mxu0 0.0
    %5385 = vmatprep.subr.mxu0 0.0
    %5386 = vmatpush1.msra.mxu0 0.0
    %5387 = vmatprep.subr.mxu0 0.0
    %5388 = vmatpush1.msra.mxu0 0.0
    %5389 = vmatprep.subr.mxu0 0.0
    %5390 = vmatpush1.msra.mxu0 0.0
    %5391 = vmatprep.subr.mxu0 0.0
    %5392 = vmatpush1.msra.mxu0 0.0
    %5393 = vmatprep.subr.mxu0 0.0
    %5394 = vmatpush1.msra.mxu0 0.0
    %5395 = vmatprep.subr.mxu0 0.0
    %5396 = vmatpush1.msra.mxu0 0.0
    %5397 = vmatprep.subr.mxu0 0.0
    %5398 = vmatpush1.msra.mxu0 0.0
    %5399 = vmatprep.subr.mxu0 0.0
    %5400 = vmatpush1.msra.mxu0 0.0
    %5401 = vmatprep.subr.mxu0 0.0
    %5402 = vmatpush1.msra.mxu0 0.0
    %5403 = vmatprep.mubr.f32.mxu0 0.0
    %5404 = vmatmul.mubr.f32.gmra.mrb[0].mxu0 %v5214
    %v5405 = vpop.f32.mrb[0].mxu0
    %v5406 = vadd.f32 0.0, %v5405
    %v5407 = vpop.f32.mrb[0].mxu0
    %5408 = vmatprep.mubr.f32.mxu0 0.0
    %5409 = vmatmul.mubr.f32.gmra.mrb[0].mxu0 %v5217
    %v5410 = vpop.f32.mrb[0].mxu0
    %v5411 = vadd.f32 0.0, %v5410
    %v5412 = vpop.f32.mrb[0].mxu0
    %5413 = vmatprep.mubr.f32.mxu0 0.0
    %5414 = vmatmul.mubr.f32.gmra.mrb[0].mxu0 %v5220
    %v5415 = vpop.f32.mrb[0].mxu0
    %v5416 = vadd.f32 0.0, %v5415
    %v5417 = vpop.f32.mrb[0].mxu0
    %5418 = vmatprep.mubr.f32.mxu0 0.0
    %5419 = vmatmul.mubr.f32.gmra.mrb[0].mxu0 %v5223
    %v5420 = vpop.f32.mrb[0].mxu0
    %v5421 = vadd.f32 0.0, %v5420
    %v5422 = vpop.f32.mrb[0].mxu0
    %5423 = vdwg.mxu0
    %v5424 = vmul.f32 %v5406, %v5332
    %v5425 = vmul.f32 %v5411, %v5333
    %v5426 = vmul.f32 %v5416, %v5334
    %v5427 = vmul.f32 %v5421, %v5335
    %5428 = vset.pattern.permute.xlu0 1
    %5429 = vperm.xlu0 %5428, %v5207
    %v5430 = vpop.permute.xlu0 %5429
    %5432 = vset.pattern.permute.xlu0 1
    %5433 = vperm.xlu0 %5432, %v5208
    %v5434 = vpop.permute.xlu0 %5433
    %5436 = vset.pattern.permute.xlu0 1
    %5437 = vperm.xlu0 %5436, %v5209
    %v5438 = vpop.permute.xlu0 %5437
    %5440 = vset.pattern.permute.xlu0 1
    %5441 = vperm.xlu0 %5440, %v5210
    %v5442 = vpop.permute.xlu0 %5441
    %v5444 = vsub.f32 %v5430, %v5424
    %v5445 = vsub.f32 %v5434, %v5425
    %v5446 = vsub.f32 %v5438, %v5426
    %v5447 = vsub.f32 %v5442, %v5427
    %v5449 = vsel %vm797, %v5332, 0
    %v5452 = vsel %vm797, %v5333, 0
    %v5455 = vsel %vm797, %v5334, 0
    %v5458 = vsel %vm797, %v5335, 0
    %5460 = vmatprep.subr.mxu0 0.0
    %5461 = vmatpush1.msra.mxu0 %v4851
    %5462 = vmatprep.subr.mxu0 0.0
    %5463 = vmatpush1.msra.mxu0 0.0
    %5464 = vmatprep.subr.mxu0 0.0
    %5465 = vmatpush1.msra.mxu0 0.0
    %5466 = vmatprep.subr.mxu0 0.0
    %5467 = vmatpush1.msra.mxu0 0.0
    %5468 = vmatprep.subr.mxu0 0.0
    %5469 = vmatpush1.msra.mxu0 0.0
    %5470 = vmatprep.subr.mxu0 0.0
    %5471 = vmatpush1.msra.mxu0 0.0
    %5472 = vmatprep.subr.mxu0 0.0
    %5473 = vmatpush1.msra.mxu0 0.0
    %5474 = vmatprep.subr.mxu0 0.0
    %5475 = vmatpush1.msra.mxu0 0.0
    %5476 = vmatprep.subr.mxu0 0.0
    %5477 = vmatpush1.msra.mxu0 0.0
    %5478 = vmatprep.subr.mxu0 0.0
    %5479 = vmatpush1.msra.mxu0 0.0
    %5480 = vmatprep.subr.mxu0 0.0
    %5481 = vmatpush1.msra.mxu0 0.0
    %5482 = vmatprep.subr.mxu0 0.0
    %5483 = vmatpush1.msra.mxu0 0.0
    %5484 = vmatprep.subr.mxu0 0.0
    %5485 = vmatpush1.msra.mxu0 0.0
    %5486 = vmatprep.subr.mxu0 0.0
    %5487 = vmatpush1.msra.mxu0 0.0
    %5488 = vmatprep.subr.mxu0 0.0
    %5489 = vmatpush1.msra.mxu0 0.0
    %5490 = vmatprep.subr.mxu0 0.0
    %5491 = vmatpush1.msra.mxu0 0.0
    %5492 = vmatprep.subr.mxu0 0.0
    %5493 = vmatpush1.msra.mxu0 0.0
    %5494 = vmatprep.subr.mxu0 0.0
    %5495 = vmatpush1.msra.mxu0 0.0
    %5496 = vmatprep.subr.mxu0 0.0
    %5497 = vmatpush1.msra.mxu0 0.0
    %5498 = vmatprep.subr.mxu0 0.0
    %5499 = vmatpush1.msra.mxu0 0.0
    %5500 = vmatprep.subr.mxu0 0.0
    %5501 = vmatpush1.msra.mxu0 0.0
    %5502 = vmatprep.subr.mxu0 0.0
    %5503 = vmatpush1.msra.mxu0 0.0
    %5504 = vmatprep.subr.mxu0 0.0
    %5505 = vmatpush1.msra.mxu0 0.0
    %5506 = vmatprep.subr.mxu0 0.0
    %5507 = vmatpush1.msra.mxu0 0.0
    %5508 = vmatprep.subr.mxu0 0.0
    %5509 = vmatpush1.msra.mxu0 0.0
    %5510 = vmatprep.subr.mxu0 0.0
    %5511 = vmatpush1.msra.mxu0 0.0
    %5512 = vmatprep.subr.mxu0 0.0
    %5513 = vmatpush1.msra.mxu0 0.0
    %5514 = vmatprep.subr.mxu0 0.0
    %5515 = vmatpush1.msra.mxu0 0.0
    %5516 = vmatprep.subr.mxu0 0.0
    %5517 = vmatpush1.msra.mxu0 0.0
    %5518 = vmatprep.subr.mxu0 0.0
    %5519 = vmatpush1.msra.mxu0 0.0
    %5520 = vmatprep.subr.mxu0 0.0
    %5521 = vmatpush1.msra.mxu0 0.0
    %5522 = vmatprep.subr.mxu0 0.0
    %5523 = vmatpush1.msra.mxu0 0.0
    %5524 = vmatprep.mubr.f32.mxu0 0.0
    %5525 = vmatmul.mubr.f32.gmra.mrb[0].mxu0 %v5449
    %v5526 = vpop.f32.mrb[0].mxu0
    %v5527 = vadd.f32 0.0, %v5526
    %v5528 = vpop.f32.mrb[0].mxu0
    %5529 = vmatprep.mubr.f32.mxu0 0.0
    %5530 = vmatmul.mubr.f32.gmra.mrb[0].mxu0 %v5452
    %v5531 = vpop.f32.mrb[0].mxu0
    %v5532 = vadd.f32 0.0, %v5531
    %v5533 = vpop.f32.mrb[0].mxu0
    %5534 = vmatprep.mubr.f32.mxu0 0.0
    %5535 = vmatmul.mubr.f32.gmra.mrb[0].mxu0 %v5455
    %v5536 = vpop.f32.mrb[0].mxu0
    %v5537 = vadd.f32 0.0, %v5536
    %v5538 = vpop.f32.mrb[0].mxu0
    %5539 = vmatprep.mubr.f32.mxu0 0.0
    %5540 = vmatmul.mubr.f32.gmra.mrb[0].mxu0 %v5458
    %v5541 = vpop.f32.mrb[0].mxu0
    %v5542 = vadd.f32 0.0, %v5541
    %v5543 = vpop.f32.mrb[0].mxu0
    %5544 = vdwg.mxu0
    %v5546 = vsel %vm797, %v5444, 0
    %v5549 = vsel %vm797, %v5445, 0
    %v5552 = vsel %vm797, %v5446, 0
    %v5555 = vsel %vm797, %v5447, 0
    %5557 = vmatprep.subr.mxu0 0.0
    %5558 = vmatpush1.msra.mxu0 %v4851
    %5559 = vmatprep.subr.mxu0 0.0
    %5560 = vmatpush1.msra.mxu0 0.0
    %5561 = vmatprep.subr.mxu0 0.0
    %5562 = vmatpush1.msra.mxu0 0.0
    %5563 = vmatprep.subr.mxu0 0.0
    %5564 = vmatpush1.msra.mxu0 0.0
    %5565 = vmatprep.subr.mxu0 0.0
    %5566 = vmatpush1.msra.mxu0 0.0
    %5567 = vmatprep.subr.mxu0 0.0
    %5568 = vmatpush1.msra.mxu0 0.0
    %5569 = vmatprep.subr.mxu0 0.0
    %5570 = vmatpush1.msra.mxu0 0.0
    %5571 = vmatprep.subr.mxu0 0.0
    %5572 = vmatpush1.msra.mxu0 0.0
    %5573 = vmatprep.subr.mxu0 0.0
    %5574 = vmatpush1.msra.mxu0 0.0
    %5575 = vmatprep.subr.mxu0 0.0
    %5576 = vmatpush1.msra.mxu0 0.0
    %5577 = vmatprep.subr.mxu0 0.0
    %5578 = vmatpush1.msra.mxu0 0.0
    %5579 = vmatprep.subr.mxu0 0.0
    %5580 = vmatpush1.msra.mxu0 0.0
    %5581 = vmatprep.subr.mxu0 0.0
    %5582 = vmatpush1.msra.mxu0 0.0
    %5583 = vmatprep.subr.mxu0 0.0
    %5584 = vmatpush1.msra.mxu0 0.0
    %5585 = vmatprep.subr.mxu0 0.0
    %5586 = vmatpush1.msra.mxu0 0.0
    %5587 = vmatprep.subr.mxu0 0.0
    %5588 = vmatpush1.msra.mxu0 0.0
    %5589 = vmatprep.subr.mxu0 0.0
    %5590 = vmatpush1.msra.mxu0 0.0
    %5591 = vmatprep.subr.mxu0 0.0
    %5592 = vmatpush1.msra.mxu0 0.0
    %5593 = vmatprep.subr.mxu0 0.0
    %5594 = vmatpush1.msra.mxu0 0.0
    %5595 = vmatprep.subr.mxu0 0.0
    %5596 = vmatpush1.msra.mxu0 0.0
    %5597 = vmatprep.subr.mxu0 0.0
    %5598 = vmatpush1.msra.mxu0 0.0
    %5599 = vmatprep.subr.mxu0 0.0
    %5600 = vmatpush1.msra.mxu0 0.0
    %5601 = vmatprep.subr.mxu0 0.0
    %5602 = vmatpush1.msra.mxu0 0.0
    %5603 = vmatprep.subr.mxu0 0.0
    %5604 = vmatpush1.msra.mxu0 0.0
    %5605 = vmatprep.subr.mxu0 0.0
    %5606 = vmatpush1.msra.mxu0 0.0
    %5607 = vmatprep.subr.mxu0 0.0
    %5608 = vmatpush1.msra.mxu0 0.0
    %5609 = vmatprep.subr.mxu0 0.0
    %5610 = vmatpush1.msra.mxu0 0.0
    %5611 = vmatprep.subr.mxu0 0.0
    %5612 = vmatpush1.msra.mxu0 0.0
    %5613 = vmatprep.subr.mxu0 0.0
    %5614 = vmatpush1.msra.mxu0 0.0
    %5615 = vmatprep.subr.mxu0 0.0
    %5616 = vmatpush1.msra.mxu0 0.0
    %5617 = vmatprep.subr.mxu0 0.0
    %5618 = vmatpush1.msra.mxu0 0.0
    %5619 = vmatprep.subr.mxu0 0.0
    %5620 = vmatpush1.msra.mxu0 0.0
    %5621 = vmatprep.mubr.f32.mxu0 0.0
    %5622 = vmatmul.mubr.f32.gmra.mrb[0].mxu0 %v5546
    %v5623 = vpop.f32.mrb[0].mxu0
    %v5624 = vadd.f32 0.0, %v5623
    %v5625 = vpop.f32.mrb[0].mxu0
    %5626 = vmatprep.mubr.f32.mxu0 0.0
    %5627 = vmatmul.mubr.f32.gmra.mrb[0].mxu0 %v5549
    %v5628 = vpop.f32.mrb[0].mxu0
    %v5629 = vadd.f32 0.0, %v5628
    %v5630 = vpop.f32.mrb[0].mxu0
    %5631 = vmatprep.mubr.f32.mxu0 0.0
    %5632 = vmatmul.mubr.f32.gmra.mrb[0].mxu0 %v5552
    %v5633 = vpop.f32.mrb[0].mxu0
    %v5634 = vadd.f32 0.0, %v5633
    %v5635 = vpop.f32.mrb[0].mxu0
    %5636 = vmatprep.mubr.f32.mxu0 0.0
    %5637 = vmatmul.mubr.f32.gmra.mrb[0].mxu0 %v5555
    %v5638 = vpop.f32.mrb[0].mxu0
    %v5639 = vadd.f32 0.0, %v5638
    %v5640 = vpop.f32.mrb[0].mxu0
    %5641 = vdwg.mxu0
    %v5642 = vmul.f32 %v4348, %v5527
    %v5643 = vmul.f32 %v4351, %v5532
    %v5644 = vmul.f32 %v4356, %v5537
    %v5645 = vmul.f32 %v4359, %v5542
    %v5646 = vadd.f32 %v5642, %v5624
    %v5647 = vadd.f32 %v5643, %v5629
    %v5648 = vadd.f32 %v5644, %v5634
    %v5649 = vadd.f32 %v5645, %v5639
    %v5650 = vmax.f32 %v5646, 0.0
    %v5651 = vmax.f32 %v5647, 0.0
    %v5652 = vmax.f32 %v5648, 0.0
    %v5653 = vmax.f32 %v5649, 0.0
    %v5654 = vpack.c.bf16 %v5651, %v5650
    %v5655 = vpack.c.bf16 %v5653, %v5652
    %5658 = vrot.lane.b32.xlu0 %v5654, 97
    %v5659 = vpop.permute.xlu0 %5658
    %5660 = vrot.lane.b32.xlu0 %v5655, 97
    %v5661 = vpop.permute.xlu0 %5660
    %5662 = vrot.lane.b32.xlu0 %v5654, 1
    %v5663 = vpop.permute.xlu0 %5662
    %5664 = vrot.lane.b32.xlu0 %v5655, 1
    %v5665 = vpop.permute.xlu0 %5664
    %v5668 = vsel %vm148, %v5659, %v5663
    %v5672 = vsel %vm148, %v5661, %v5665
    %5674 = vrot.lane.b32.xlu0 %v5654, 127
    %v5675 = vpop.permute.xlu0 %5674
    %5676 = vrot.lane.b32.xlu0 %v5655, 127
    %v5677 = vpop.permute.xlu0 %5676
    %5678 = vrot.lane.b32.xlu0 %v5654, 31
    %v5679 = vpop.permute.xlu0 %5678
    %5680 = vrot.lane.b32.xlu0 %v5655, 31
    %v5681 = vpop.permute.xlu0 %5680
    %vm5682 = vcmask 252928
    %v5685 = vsel %vm5682, %v5675, %v5679
    %v5689 = vsel %vm5682, %v5677, %v5681
    %v5691 = vld [vmem:[%s23] sm:$0xf]
    %v5692 = vld [vmem:[%s23 + $0x4] sm:$0xf]
    %v5693 = vld [vmem:[%s23 + $0x8] sm:$0xf]
    %v5694 = vld [vmem:[%s23 + $0xc] sm:$0xf]
    %v5699 = vunpack.c.l.b16 %v5691
    %v5700 = vunpack.c.l.b16 %v5692
    %v5701 = vunpack.c.l.b16 %v5693
    %v5702 = vunpack.c.l.b16 %v5694
    %v5703 = vpack.c.b16 %v5700, %v5699
    %v5704 = vpack.c.b16 %v5702, %v5701
    %v5706 = vsel %vm189, %v5703, 0
    %v5709 = vsel %vm189, %v5704, 0
    %5711 = vmatprep.subr.bf16.mxu0 0
    %5712 = vmatpush1.bf16.msra.mxu0 %v5668
    %5713 = vmatprep.subr.bf16.mxu0 0
    %5714 = vmatpush1.bf16.msra.mxu0 %v5672
    %5715 = vmatprep.subr.bf16.mxu0 0
    %5716 = vmatpush1.bf16.msra.mxu0 %v5654
    %5717 = vmatprep.subr.bf16.mxu0 0
    %5718 = vmatpush1.bf16.msra.mxu0 %v5655
    %5719 = vmatprep.subr.bf16.mxu0 0
    %5720 = vmatpush1.bf16.msra.mxu0 %v5685
    %5721 = vmatprep.subr.bf16.mxu0 0
    %5722 = vmatpush1.bf16.msra.mxu0 %v5689
    %5723 = vmatprep.subr.bf16.mxu0 0
    %5724 = vmatpush1.bf16.msra.mxu0 0
    %5725 = vmatprep.subr.bf16.mxu0 0
    %5726 = vmatpush1.bf16.msra.mxu0 0
    %5727 = vmatprep.subr.bf16.mxu0 0
    %5728 = vmatpush1.bf16.msra.mxu0 0
    %5729 = vmatprep.subr.bf16.mxu0 0
    %5730 = vmatpush1.bf16.msra.mxu0 0
    %5731 = vmatprep.subr.bf16.mxu0 0
    %5732 = vmatpush1.bf16.msra.mxu0 0
    %5733 = vmatprep.subr.bf16.mxu0 0
    %5734 = vmatpush1.bf16.msra.mxu0 0
    %5735 = vmatprep.subr.bf16.mxu0 0
    %5736 = vmatpush1.bf16.msra.mxu0 0
    %5737 = vmatprep.subr.bf16.mxu0 0
    %5738 = vmatpush1.bf16.msra.mxu0 0
    %5739 = vmatprep.subr.bf16.mxu0 0
    %5740 = vmatpush1.bf16.msra.mxu0 0
    %5741 = vmatprep.subr.bf16.mxu0 0
    %5742 = vmatpush1.bf16.msra.mxu0 0
    %5743 = vmatprep.mubr.bf16.mxu0 0
    %5744 = vmatmul.mubr.bf16.gmra.mrb[0].mxu0 %v5706
    %v5745 = vpop.f32.mrb[0].mxu0
    %v5746 = vadd.f32 0.0, %v5745
    %v5747 = vpop.f32.mrb[0].mxu0
    %v5748 = vpop.f32.mrb[0].mxu0
    %v5749 = vadd.f32 0.0, %v5748
    %v5750 = vpop.f32.mrb[0].mxu0
    %5751 = vmatprep.mubr.bf16.mxu0 0
    %5752 = vmatmul.mubr.bf16.gmra.mrb[0].mxu0 %v5709
    %v5753 = vpop.f32.mrb[0].mxu0
    %v5754 = vadd.f32 0.0, %v5753
    %v5755 = vpop.f32.mrb[0].mxu0
    %v5756 = vpop.f32.mrb[0].mxu0
    %v5757 = vadd.f32 0.0, %v5756
    %v5758 = vpop.f32.mrb[0].mxu0
    %5759 = vdwg.mxu0
    %v5760 = vmul.f32 %v5746, %v5746
    %v5761 = vmul.f32 %v5749, %v5749
    %v5762 = vmul.f32 %v5754, %v5754
    %v5763 = vmul.f32 %v5757, %v5757
    %5764 = vmatprep.subr.mxu0 0.0
    %5765 = vmatpush1.msra.mxu0 %v5746
    %5766 = vmatprep.subr.mxu0 0.0
    %5767 = vmatpush1.msra.mxu0 %v5749
    %5768 = vmatprep.subr.mxu0 0.0
    %5769 = vmatpush1.msra.mxu0 %v5754
    %5770 = vmatprep.subr.mxu0 0.0
    %5771 = vmatpush1.msra.mxu0 %v5757
    %5772 = vmatprep.subr.mxu0 0.0
    %5773 = vmatpush1.msra.mxu0 %v5760
    %5774 = vmatprep.subr.mxu0 0.0
    %5775 = vmatpush1.msra.mxu0 %v5761
    %5776 = vmatprep.subr.mxu0 0.0
    %5777 = vmatpush1.msra.mxu0 %v5762
    %5778 = vmatprep.subr.mxu0 0.0
    %5779 = vmatpush1.msra.mxu0 %v5763
    %5780 = vmatprep.subr.mxu0 0.0
    %5781 = vmatpush1.msra.mxu0 0.0
    %5782 = vmatprep.subr.mxu0 0.0
    %5783 = vmatpush1.msra.mxu0 0.0
    %5784 = vmatprep.subr.mxu0 0.0
    %5785 = vmatpush1.msra.mxu0 0.0
    %5786 = vmatprep.subr.mxu0 0.0
    %5787 = vmatpush1.msra.mxu0 0.0
    %5788 = vmatprep.subr.mxu0 0.0
    %5789 = vmatpush1.msra.mxu0 0.0
    %5790 = vmatprep.subr.mxu0 0.0
    %5791 = vmatpush1.msra.mxu0 0.0
    %5792 = vmatprep.subr.mxu0 0.0
    %5793 = vmatpush1.msra.mxu0 0.0
    %5794 = vmatprep.subr.mxu0 0.0
    %5795 = vmatpush1.msra.mxu0 0.0
    %5796 = vmatprep.subr.mxu0 0.0
    %5797 = vmatpush1.msra.mxu0 0.0
    %5798 = vmatprep.subr.mxu0 0.0
    %5799 = vmatpush1.msra.mxu0 0.0
    %5800 = vmatprep.subr.mxu0 0.0
    %5801 = vmatpush1.msra.mxu0 0.0
    %5802 = vmatprep.subr.mxu0 0.0
    %5803 = vmatpush1.msra.mxu0 0.0
    %5804 = vmatprep.subr.mxu0 0.0
    %5805 = vmatpush1.msra.mxu0 0.0
    %5806 = vmatprep.subr.mxu0 0.0
    %5807 = vmatpush1.msra.mxu0 0.0
    %5808 = vmatprep.subr.mxu0 0.0
    %5809 = vmatpush1.msra.mxu0 0.0
    %5810 = vmatprep.subr.mxu0 0.0
    %5811 = vmatpush1.msra.mxu0 0.0
    %5812 = vmatprep.subr.mxu0 0.0
    %5813 = vmatpush1.msra.mxu0 0.0
    %5814 = vmatprep.subr.mxu0 0.0
    %5815 = vmatpush1.msra.mxu0 0.0
    %5816 = vmatprep.subr.mxu0 0.0
    %5817 = vmatpush1.msra.mxu0 0.0
    %5818 = vmatprep.subr.mxu0 0.0
    %5819 = vmatpush1.msra.mxu0 0.0
    %5820 = vmatprep.subr.mxu0 0.0
    %5821 = vmatpush1.msra.mxu0 0.0
    %5822 = vmatprep.subr.mxu0 0.0
    %5823 = vmatpush1.msra.mxu0 0.0
    %5824 = vmatprep.subr.mxu0 0.0
    %5825 = vmatpush1.msra.mxu0 0.0
    %5826 = vmatprep.subr.mxu0 0.0
    %5827 = vmatpush1.msra.mxu0 0.0
    %5828 = vmatprep.mubr.f32.mxu0 0.0
    %5829 = vmatmul.mubr.f32.gmra.mrb[0].mxu0 %v5053
    %v5830 = vpop.f32.mrb[0].mxu0
    %v5831 = vadd.f32 0.0, %v5830
    %v5832 = vpop.f32.mrb[0].mxu0
    %5833 = vdwg.mxu0
    %v5835 = vsel %vm4492, %v5831, 0
    %5837 = vmatprep.subr.mxu0 0.0
    %5838 = vmatpush1.msra.mxu0 %v4386
    %5839 = vmatprep.subr.mxu0 0.0
    %5840 = vmatpush1.msra.mxu0 %v4387
    %5841 = vmatprep.subr.mxu0 0.0
    %5842 = vmatpush1.msra.mxu0 %v4388
    %5843 = vmatprep.subr.mxu0 0.0
    %5844 = vmatpush1.msra.mxu0 %v4389
    %5845 = vmatprep.subr.mxu0 0.0
    %5846 = vmatpush1.msra.mxu0 0.0
    %5847 = vmatprep.subr.mxu0 0.0
    %5848 = vmatpush1.msra.mxu0 0.0
    %5849 = vmatprep.subr.mxu0 0.0
    %5850 = vmatpush1.msra.mxu0 0.0
    %5851 = vmatprep.subr.mxu0 0.0
    %5852 = vmatpush1.msra.mxu0 0.0
    %5853 = vmatprep.subr.mxu0 0.0
    %5854 = vmatpush1.msra.mxu0 0.0
    %5855 = vmatprep.subr.mxu0 0.0
    %5856 = vmatpush1.msra.mxu0 0.0
    %5857 = vmatprep.subr.mxu0 0.0
    %5858 = vmatpush1.msra.mxu0 0.0
    %5859 = vmatprep.subr.mxu0 0.0
    %5860 = vmatpush1.msra.mxu0 0.0
    %5861 = vmatprep.subr.mxu0 0.0
    %5862 = vmatpush1.msra.mxu0 0.0
    %5863 = vmatprep.subr.mxu0 0.0
    %5864 = vmatpush1.msra.mxu0 0.0
    %5865 = vmatprep.subr.mxu0 0.0
    %5866 = vmatpush1.msra.mxu0 0.0
    %5867 = vmatprep.subr.mxu0 0.0
    %5868 = vmatpush1.msra.mxu0 0.0
    %5869 = vmatprep.subr.mxu0 0.0
    %5870 = vmatpush1.msra.mxu0 0.0
    %5871 = vmatprep.subr.mxu0 0.0
    %5872 = vmatpush1.msra.mxu0 0.0
    %5873 = vmatprep.subr.mxu0 0.0
    %5874 = vmatpush1.msra.mxu0 0.0
    %5875 = vmatprep.subr.mxu0 0.0
    %5876 = vmatpush1.msra.mxu0 0.0
    %5877 = vmatprep.subr.mxu0 0.0
    %5878 = vmatpush1.msra.mxu0 0.0
    %5879 = vmatprep.subr.mxu0 0.0
    %5880 = vmatpush1.msra.mxu0 0.0
    %5881 = vmatprep.subr.mxu0 0.0
    %5882 = vmatpush1.msra.mxu0 0.0
    %5883 = vmatprep.subr.mxu0 0.0
    %5884 = vmatpush1.msra.mxu0 0.0
    %5885 = vmatprep.subr.mxu0 0.0
    %5886 = vmatpush1.msra.mxu0 0.0
    %5887 = vmatprep.subr.mxu0 0.0
    %5888 = vmatpush1.msra.mxu0 0.0
    %5889 = vmatprep.subr.mxu0 0.0
    %5890 = vmatpush1.msra.mxu0 0.0
    %5891 = vmatprep.subr.mxu0 0.0
    %5892 = vmatpush1.msra.mxu0 0.0
    %5893 = vmatprep.subr.mxu0 0.0
    %5894 = vmatpush1.msra.mxu0 0.0
    %5895 = vmatprep.subr.mxu0 0.0
    %5896 = vmatpush1.msra.mxu0 0.0
    %5897 = vmatprep.subr.mxu0 0.0
    %5898 = vmatpush1.msra.mxu0 0.0
    %5899 = vmatprep.subr.mxu0 0.0
    %5900 = vmatpush1.msra.mxu0 0.0
    %5901 = vmatprep.mubr.f32.mxu0 0.0
    %5902 = vmatmul.mubr.f32.gmra.mrb[0].mxu0 %v5835
    %v5903 = vpop.f32.mrb[0].mxu0
    %v5904 = vadd.f32 0.0, %v5903
    %v5905 = vpop.f32.mrb[0].mxu0
    %5906 = vdwg.mxu0
    %v5907 = vmul.f32 %v5904, 0.009615385
    %v5908 = vmul.f32 %v5907, %v5907
    %v5910 = vrot.slane %v5908, 4
    %v5912 = vsub.f32 %v5907, %v5910
    %v5913 = vmax.f32 %v5912, 0.0
    %v5914 = vadd.f32 %v5913, 1e-05
    %v5915 = vrsqrt.pop %v5914
    %v5916 = vld [vmem:[%s25] sm:$0xff]
    %v5917 = vld [vmem:[%s25 + $0x8] sm:$0xff]
    %v5918 = vld [vmem:[%s25 + $0x10] sm:$0xff]
    %v5919 = vld [vmem:[%s25 + $0x18] sm:$0xff]
    %v5921 = vrot.slane %v5915, 4
    %v5922 = vsel %vm485, %v5921, 0
    %5924 = vmatprep.subr.mxu0 0.0
    %5925 = vmatpush1.msra.mxu0 %v5922
    %5926 = vmatprep.subr.mxu0 0.0
    %5927 = vmatpush1.msra.mxu0 0.0
    %5928 = vmatprep.subr.mxu0 0.0
    %5929 = vmatpush1.msra.mxu0 0.0
    %5930 = vmatprep.subr.mxu0 0.0
    %5931 = vmatpush1.msra.mxu0 0.0
    %5932 = vmatprep.subr.mxu0 0.0
    %5933 = vmatpush1.msra.mxu0 0.0
    %5934 = vmatprep.subr.mxu0 0.0
    %5935 = vmatpush1.msra.mxu0 0.0
    %5936 = vmatprep.subr.mxu0 0.0
    %5937 = vmatpush1.msra.mxu0 0.0
    %5938 = vmatprep.subr.mxu0 0.0
    %5939 = vmatpush1.msra.mxu0 0.0
    %5940 = vmatprep.subr.mxu0 0.0
    %5941 = vmatpush1.msra.mxu0 0.0
    %5942 = vmatprep.subr.mxu0 0.0
    %5943 = vmatpush1.msra.mxu0 0.0
    %5944 = vmatprep.subr.mxu0 0.0
    %5945 = vmatpush1.msra.mxu0 0.0
    %5946 = vmatprep.subr.mxu0 0.0
    %5947 = vmatpush1.msra.mxu0 0.0
    %5948 = vmatprep.subr.mxu0 0.0
    %5949 = vmatpush1.msra.mxu0 0.0
    %5950 = vmatprep.subr.mxu0 0.0
    %5951 = vmatpush1.msra.mxu0 0.0
    %5952 = vmatprep.subr.mxu0 0.0
    %5953 = vmatpush1.msra.mxu0 0.0
    %5954 = vmatprep.subr.mxu0 0.0
    %5955 = vmatpush1.msra.mxu0 0.0
    %5956 = vmatprep.subr.mxu0 0.0
    %5957 = vmatpush1.msra.mxu0 0.0
    %5958 = vmatprep.subr.mxu0 0.0
    %5959 = vmatpush1.msra.mxu0 0.0
    %5960 = vmatprep.subr.mxu0 0.0
    %5961 = vmatpush1.msra.mxu0 0.0
    %5962 = vmatprep.subr.mxu0 0.0
    %5963 = vmatpush1.msra.mxu0 0.0
    %5964 = vmatprep.subr.mxu0 0.0
    %5965 = vmatpush1.msra.mxu0 0.0
    %5966 = vmatprep.subr.mxu0 0.0
    %5967 = vmatpush1.msra.mxu0 0.0
    %5968 = vmatprep.subr.mxu0 0.0
    %5969 = vmatpush1.msra.mxu0 0.0
    %5970 = vmatprep.subr.mxu0 0.0
    %5971 = vmatpush1.msra.mxu0 0.0
    %5972 = vmatprep.subr.mxu0 0.0
    %5973 = vmatpush1.msra.mxu0 0.0
    %5974 = vmatprep.subr.mxu0 0.0
    %5975 = vmatpush1.msra.mxu0 0.0
    %5976 = vmatprep.subr.mxu0 0.0
    %5977 = vmatpush1.msra.mxu0 0.0
    %5978 = vmatprep.subr.mxu0 0.0
    %5979 = vmatpush1.msra.mxu0 0.0
    %5980 = vmatprep.subr.mxu0 0.0
    %5981 = vmatpush1.msra.mxu0 0.0
    %5982 = vmatprep.subr.mxu0 0.0
    %5983 = vmatpush1.msra.mxu0 0.0
    %5984 = vmatprep.subr.mxu0 0.0
    %5985 = vmatpush1.msra.mxu0 0.0
    %5986 = vmatprep.subr.mxu0 0.0
    %5987 = vmatpush1.msra.mxu0 0.0
    %5988 = vmatprep.mubr.f32.mxu0 0.0
    %5989 = vmatmul.mubr.f32.gmra.mrb[0].mxu0 %v5214
    %v5990 = vpop.f32.mrb[0].mxu0
    %v5991 = vadd.f32 0.0, %v5990
    %v5992 = vpop.f32.mrb[0].mxu0
    %5993 = vmatprep.mubr.f32.mxu0 0.0
    %5994 = vmatmul.mubr.f32.gmra.mrb[0].mxu0 %v5217
    %v5995 = vpop.f32.mrb[0].mxu0
    %v5996 = vadd.f32 0.0, %v5995
    %v5997 = vpop.f32.mrb[0].mxu0
    %5998 = vmatprep.mubr.f32.mxu0 0.0
    %5999 = vmatmul.mubr.f32.gmra.mrb[0].mxu0 %v5220
    %v6000 = vpop.f32.mrb[0].mxu0
    %v6001 = vadd.f32 0.0, %v6000
    %v6002 = vpop.f32.mrb[0].mxu0
    %6003 = vmatprep.mubr.f32.mxu0 0.0
    %6004 = vmatmul.mubr.f32.gmra.mrb[0].mxu0 %v5223
    %v6005 = vpop.f32.mrb[0].mxu0
    %v6006 = vadd.f32 0.0, %v6005
    %v6007 = vpop.f32.mrb[0].mxu0
    %6008 = vdwg.mxu0
    %6010 = vset.pattern.permute.xlu0 0
    %6011 = vperm.xlu0 %6010, %v5916
    %v6012 = vpop.permute.xlu0 %6011
    %6015 = vset.pattern.permute.xlu0 0
    %6016 = vperm.xlu0 %6015, %v5917
    %v6017 = vpop.permute.xlu0 %6016
    %6020 = vset.pattern.permute.xlu0 0
    %6021 = vperm.xlu0 %6020, %v5918
    %v6022 = vpop.permute.xlu0 %6021
    %6025 = vset.pattern.permute.xlu0 0
    %6026 = vperm.xlu0 %6025, %v5919
    %v6027 = vpop.permute.xlu0 %6026
    %v6029 = vmul.f32 %v5991, %v6012
    %v6030 = vmul.f32 %v5996, %v6017
    %v6031 = vmul.f32 %v6001, %v6022
    %v6032 = vmul.f32 %v6006, %v6027
    %v6034 = vsel %vm485, %v5907, 0
    %6036 = vmatprep.subr.mxu0 0.0
    %6037 = vmatpush1.msra.mxu0 %v6034
    %6038 = vmatprep.subr.mxu0 0.0
    %6039 = vmatpush1.msra.mxu0 0.0
    %6040 = vmatprep.subr.mxu0 0.0
    %6041 = vmatpush1.msra.mxu0 0.0
    %6042 = vmatprep.subr.mxu0 0.0
    %6043 = vmatpush1.msra.mxu0 0.0
    %6044 = vmatprep.subr.mxu0 0.0
    %6045 = vmatpush1.msra.mxu0 0.0
    %6046 = vmatprep.subr.mxu0 0.0
    %6047 = vmatpush1.msra.mxu0 0.0
    %6048 = vmatprep.subr.mxu0 0.0
    %6049 = vmatpush1.msra.mxu0 0.0
    %6050 = vmatprep.subr.mxu0 0.0
    %6051 = vmatpush1.msra.mxu0 0.0
    %6052 = vmatprep.subr.mxu0 0.0
    %6053 = vmatpush1.msra.mxu0 0.0
    %6054 = vmatprep.subr.mxu0 0.0
    %6055 = vmatpush1.msra.mxu0 0.0
    %6056 = vmatprep.subr.mxu0 0.0
    %6057 = vmatpush1.msra.mxu0 0.0
    %6058 = vmatprep.subr.mxu0 0.0
    %6059 = vmatpush1.msra.mxu0 0.0
    %6060 = vmatprep.subr.mxu0 0.0
    %6061 = vmatpush1.msra.mxu0 0.0
    %6062 = vmatprep.subr.mxu0 0.0
    %6063 = vmatpush1.msra.mxu0 0.0
    %6064 = vmatprep.subr.mxu0 0.0
    %6065 = vmatpush1.msra.mxu0 0.0
    %6066 = vmatprep.subr.mxu0 0.0
    %6067 = vmatpush1.msra.mxu0 0.0
    %6068 = vmatprep.subr.mxu0 0.0
    %6069 = vmatpush1.msra.mxu0 0.0
    %6070 = vmatprep.subr.mxu0 0.0
    %6071 = vmatpush1.msra.mxu0 0.0
    %6072 = vmatprep.subr.mxu0 0.0
    %6073 = vmatpush1.msra.mxu0 0.0
    %6074 = vmatprep.subr.mxu0 0.0
    %6075 = vmatpush1.msra.mxu0 0.0
    %6076 = vmatprep.subr.mxu0 0.0
    %6077 = vmatpush1.msra.mxu0 0.0
    %6078 = vmatprep.subr.mxu0 0.0
    %6079 = vmatpush1.msra.mxu0 0.0
    %6080 = vmatprep.subr.mxu0 0.0
    %6081 = vmatpush1.msra.mxu0 0.0
    %6082 = vmatprep.subr.mxu0 0.0
    %6083 = vmatpush1.msra.mxu0 0.0
    %6084 = vmatprep.subr.mxu0 0.0
    %6085 = vmatpush1.msra.mxu0 0.0
    %6086 = vmatprep.subr.mxu0 0.0
    %6087 = vmatpush1.msra.mxu0 0.0
    %6088 = vmatprep.subr.mxu0 0.0
    %6089 = vmatpush1.msra.mxu0 0.0
    %6090 = vmatprep.subr.mxu0 0.0
    %6091 = vmatpush1.msra.mxu0 0.0
    %6092 = vmatprep.subr.mxu0 0.0
    %6093 = vmatpush1.msra.mxu0 0.0
    %6094 = vmatprep.subr.mxu0 0.0
    %6095 = vmatpush1.msra.mxu0 0.0
    %6096 = vmatprep.subr.mxu0 0.0
    %6097 = vmatpush1.msra.mxu0 0.0
    %6098 = vmatprep.subr.mxu0 0.0
    %6099 = vmatpush1.msra.mxu0 0.0
    %6100 = vmatprep.mubr.f32.mxu0 0.0
    %6101 = vmatmul.mubr.f32.gmra.mrb[0].mxu0 %v5214
    %v6102 = vpop.f32.mrb[0].mxu0
    %v6103 = vadd.f32 0.0, %v6102
    %v6104 = vpop.f32.mrb[0].mxu0
    %6105 = vmatprep.mubr.f32.mxu0 0.0
    %6106 = vmatmul.mubr.f32.gmra.mrb[0].mxu0 %v5217
    %v6107 = vpop.f32.mrb[0].mxu0
    %v6108 = vadd.f32 0.0, %v6107
    %v6109 = vpop.f32.mrb[0].mxu0
    %6110 = vmatprep.mubr.f32.mxu0 0.0
    %6111 = vmatmul.mubr.f32.gmra.mrb[0].mxu0 %v5220
    %v6112 = vpop.f32.mrb[0].mxu0
    %v6113 = vadd.f32 0.0, %v6112
    %v6114 = vpop.f32.mrb[0].mxu0
    %6115 = vmatprep.mubr.f32.mxu0 0.0
    %6116 = vmatmul.mubr.f32.gmra.mrb[0].mxu0 %v5223
    %v6117 = vpop.f32.mrb[0].mxu0
    %v6118 = vadd.f32 0.0, %v6117
    %v6119 = vpop.f32.mrb[0].mxu0
    %6120 = vdwg.mxu0
    %v6121 = vmul.f32 %v6103, %v6029
    %v6122 = vmul.f32 %v6108, %v6030
    %v6123 = vmul.f32 %v6113, %v6031
    %v6124 = vmul.f32 %v6118, %v6032
    %6125 = vset.pattern.permute.xlu0 1
    %6126 = vperm.xlu0 %6125, %v5916
    %v6127 = vpop.permute.xlu0 %6126
    %6129 = vset.pattern.permute.xlu0 1
    %6130 = vperm.xlu0 %6129, %v5917
    %v6131 = vpop.permute.xlu0 %6130
    %6133 = vset.pattern.permute.xlu0 1
    %6134 = vperm.xlu0 %6133, %v5918
    %v6135 = vpop.permute.xlu0 %6134
    %6137 = vset.pattern.permute.xlu0 1
    %6138 = vperm.xlu0 %6137, %v5919
    %v6139 = vpop.permute.xlu0 %6138
    %v6141 = vsub.f32 %v6127, %v6121
    %v6142 = vsub.f32 %v6131, %v6122
    %v6143 = vsub.f32 %v6135, %v6123
    %v6144 = vsub.f32 %v6139, %v6124
    %v6146 = vsel %vm797, %v6029, 0
    %v6149 = vsel %vm797, %v6030, 0
    %v6152 = vsel %vm797, %v6031, 0
    %v6155 = vsel %vm797, %v6032, 0
    %6157 = vmatprep.subr.mxu0 0.0
    %6158 = vmatpush1.msra.mxu0 %v4851
    %6159 = vmatprep.subr.mxu0 0.0
    %6160 = vmatpush1.msra.mxu0 0.0
    %6161 = vmatprep.subr.mxu0 0.0
    %6162 = vmatpush1.msra.mxu0 0.0
    %6163 = vmatprep.subr.mxu0 0.0
    %6164 = vmatpush1.msra.mxu0 0.0
    %6165 = vmatprep.subr.mxu0 0.0
    %6166 = vmatpush1.msra.mxu0 0.0
    %6167 = vmatprep.subr.mxu0 0.0
    %6168 = vmatpush1.msra.mxu0 0.0
    %6169 = vmatprep.subr.mxu0 0.0
    %6170 = vmatpush1.msra.mxu0 0.0
    %6171 = vmatprep.subr.mxu0 0.0
    %6172 = vmatpush1.msra.mxu0 0.0
    %6173 = vmatprep.subr.mxu0 0.0
    %6174 = vmatpush1.msra.mxu0 0.0
    %6175 = vmatprep.subr.mxu0 0.0
    %6176 = vmatpush1.msra.mxu0 0.0
    %6177 = vmatprep.subr.mxu0 0.0
    %6178 = vmatpush1.msra.mxu0 0.0
    %6179 = vmatprep.subr.mxu0 0.0
    %6180 = vmatpush1.msra.mxu0 0.0
    %6181 = vmatprep.subr.mxu0 0.0
    %6182 = vmatpush1.msra.mxu0 0.0
    %6183 = vmatprep.subr.mxu0 0.0
    %6184 = vmatpush1.msra.mxu0 0.0
    %6185 = vmatprep.subr.mxu0 0.0
    %6186 = vmatpush1.msra.mxu0 0.0
    %6187 = vmatprep.subr.mxu0 0.0
    %6188 = vmatpush1.msra.mxu0 0.0
    %6189 = vmatprep.subr.mxu0 0.0
    %6190 = vmatpush1.msra.mxu0 0.0
    %6191 = vmatprep.subr.mxu0 0.0
    %6192 = vmatpush1.msra.mxu0 0.0
    %6193 = vmatprep.subr.mxu0 0.0
    %6194 = vmatpush1.msra.mxu0 0.0
    %6195 = vmatprep.subr.mxu0 0.0
    %6196 = vmatpush1.msra.mxu0 0.0
    %6197 = vmatprep.subr.mxu0 0.0
    %6198 = vmatpush1.msra.mxu0 0.0
    %6199 = vmatprep.subr.mxu0 0.0
    %6200 = vmatpush1.msra.mxu0 0.0
    %6201 = vmatprep.subr.mxu0 0.0
    %6202 = vmatpush1.msra.mxu0 0.0
    %6203 = vmatprep.subr.mxu0 0.0
    %6204 = vmatpush1.msra.mxu0 0.0
    %6205 = vmatprep.subr.mxu0 0.0
    %6206 = vmatpush1.msra.mxu0 0.0
    %6207 = vmatprep.subr.mxu0 0.0
    %6208 = vmatpush1.msra.mxu0 0.0
    %6209 = vmatprep.subr.mxu0 0.0
    %6210 = vmatpush1.msra.mxu0 0.0
    %6211 = vmatprep.subr.mxu0 0.0
    %6212 = vmatpush1.msra.mxu0 0.0
    %6213 = vmatprep.subr.mxu0 0.0
    %6214 = vmatpush1.msra.mxu0 0.0
    %6215 = vmatprep.subr.mxu0 0.0
    %6216 = vmatpush1.msra.mxu0 0.0
    %6217 = vmatprep.subr.mxu0 0.0
    %6218 = vmatpush1.msra.mxu0 0.0
    %6219 = vmatprep.subr.mxu0 0.0
    %6220 = vmatpush1.msra.mxu0 0.0
    %6221 = vmatprep.mubr.f32.mxu0 0.0
    %6222 = vmatmul.mubr.f32.gmra.mrb[0].mxu0 %v6146
    %v6223 = vpop.f32.mrb[0].mxu0
    %v6224 = vadd.f32 0.0, %v6223
    %v6225 = vpop.f32.mrb[0].mxu0
    %6226 = vmatprep.mubr.f32.mxu0 0.0
    %6227 = vmatmul.mubr.f32.gmra.mrb[0].mxu0 %v6149
    %v6228 = vpop.f32.mrb[0].mxu0
    %v6229 = vadd.f32 0.0, %v6228
    %v6230 = vpop.f32.mrb[0].mxu0
    %6231 = vmatprep.mubr.f32.mxu0 0.0
    %6232 = vmatmul.mubr.f32.gmra.mrb[0].mxu0 %v6152
    %v6233 = vpop.f32.mrb[0].mxu0
    %v6234 = vadd.f32 0.0, %v6233
    %v6235 = vpop.f32.mrb[0].mxu0
    %6236 = vmatprep.mubr.f32.mxu0 0.0
    %6237 = vmatmul.mubr.f32.gmra.mrb[0].mxu0 %v6155
    %v6238 = vpop.f32.mrb[0].mxu0
    %v6239 = vadd.f32 0.0, %v6238
    %v6240 = vpop.f32.mrb[0].mxu0
    %6241 = vdwg.mxu0
    %v6243 = vsel %vm797, %v6141, 0
    %v6246 = vsel %vm797, %v6142, 0
    %v6249 = vsel %vm797, %v6143, 0
    %v6252 = vsel %vm797, %v6144, 0
    %6254 = vmatprep.subr.mxu0 0.0
    %6255 = vmatpush1.msra.mxu0 %v4851
    %6256 = vmatprep.subr.mxu0 0.0
    %6257 = vmatpush1.msra.mxu0 0.0
    %6258 = vmatprep.subr.mxu0 0.0
    %6259 = vmatpush1.msra.mxu0 0.0
    %6260 = vmatprep.subr.mxu0 0.0
    %6261 = vmatpush1.msra.mxu0 0.0
    %6262 = vmatprep.subr.mxu0 0.0
    %6263 = vmatpush1.msra.mxu0 0.0
    %6264 = vmatprep.subr.mxu0 0.0
    %6265 = vmatpush1.msra.mxu0 0.0
    %6266 = vmatprep.subr.mxu0 0.0
    %6267 = vmatpush1.msra.mxu0 0.0
    %6268 = vmatprep.subr.mxu0 0.0
    %6269 = vmatpush1.msra.mxu0 0.0
    %6270 = vmatprep.subr.mxu0 0.0
    %6271 = vmatpush1.msra.mxu0 0.0
    %6272 = vmatprep.subr.mxu0 0.0
    %6273 = vmatpush1.msra.mxu0 0.0
    %6274 = vmatprep.subr.mxu0 0.0
    %6275 = vmatpush1.msra.mxu0 0.0
    %6276 = vmatprep.subr.mxu0 0.0
    %6277 = vmatpush1.msra.mxu0 0.0
    %6278 = vmatprep.subr.mxu0 0.0
    %6279 = vmatpush1.msra.mxu0 0.0
    %6280 = vmatprep.subr.mxu0 0.0
    %6281 = vmatpush1.msra.mxu0 0.0
    %6282 = vmatprep.subr.mxu0 0.0
    %6283 = vmatpush1.msra.mxu0 0.0
    %6284 = vmatprep.subr.mxu0 0.0
    %6285 = vmatpush1.msra.mxu0 0.0
    %6286 = vmatprep.subr.mxu0 0.0
    %6287 = vmatpush1.msra.mxu0 0.0
    %6288 = vmatprep.subr.mxu0 0.0
    %6289 = vmatpush1.msra.mxu0 0.0
    %6290 = vmatprep.subr.mxu0 0.0
    %6291 = vmatpush1.msra.mxu0 0.0
    %6292 = vmatprep.subr.mxu0 0.0
    %6293 = vmatpush1.msra.mxu0 0.0
    %6294 = vmatprep.subr.mxu0 0.0
    %6295 = vmatpush1.msra.mxu0 0.0
    %6296 = vmatprep.subr.mxu0 0.0
    %6297 = vmatpush1.msra.mxu0 0.0
    %6298 = vmatprep.subr.mxu0 0.0
    %6299 = vmatpush1.msra.mxu0 0.0
    %6300 = vmatprep.subr.mxu0 0.0
    %6301 = vmatpush1.msra.mxu0 0.0
    %6302 = vmatprep.subr.mxu0 0.0
    %6303 = vmatpush1.msra.mxu0 0.0
    %6304 = vmatprep.subr.mxu0 0.0
    %6305 = vmatpush1.msra.mxu0 0.0
    %6306 = vmatprep.subr.mxu0 0.0
    %6307 = vmatpush1.msra.mxu0 0.0
    %6308 = vmatprep.subr.mxu0 0.0
    %6309 = vmatpush1.msra.mxu0 0.0
    %6310 = vmatprep.subr.mxu0 0.0
    %6311 = vmatpush1.msra.mxu0 0.0
    %6312 = vmatprep.subr.mxu0 0.0
    %6313 = vmatpush1.msra.mxu0 0.0
    %6314 = vmatprep.subr.mxu0 0.0
    %6315 = vmatpush1.msra.mxu0 0.0
    %6316 = vmatprep.subr.mxu0 0.0
    %6317 = vmatpush1.msra.mxu0 0.0
    %6318 = vmatprep.mubr.f32.mxu0 0.0
    %6319 = vmatmul.mubr.f32.gmra.mrb[0].mxu0 %v6243
    %v6320 = vpop.f32.mrb[0].mxu0
    %v6321 = vadd.f32 0.0, %v6320
    %v6322 = vpop.f32.mrb[0].mxu0
    %6323 = vmatprep.mubr.f32.mxu0 0.0
    %6324 = vmatmul.mubr.f32.gmra.mrb[0].mxu0 %v6246
    %v6325 = vpop.f32.mrb[0].mxu0
    %v6326 = vadd.f32 0.0, %v6325
    %v6327 = vpop.f32.mrb[0].mxu0
    %6328 = vmatprep.mubr.f32.mxu0 0.0
    %6329 = vmatmul.mubr.f32.gmra.mrb[0].mxu0 %v6249
    %v6330 = vpop.f32.mrb[0].mxu0
    %v6331 = vadd.f32 0.0, %v6330
    %v6332 = vpop.f32.mrb[0].mxu0
    %6333 = vmatprep.mubr.f32.mxu0 0.0
    %6334 = vmatmul.mubr.f32.gmra.mrb[0].mxu0 %v6252
    %v6335 = vpop.f32.mrb[0].mxu0
    %v6336 = vadd.f32 0.0, %v6335
    %v6337 = vpop.f32.mrb[0].mxu0
    %6338 = vdwg.mxu0
    %v6339 = vmul.f32 %v5746, %v6224
    %v6340 = vmul.f32 %v5749, %v6229
    %v6341 = vmul.f32 %v5754, %v6234
    %v6342 = vmul.f32 %v5757, %v6239
    %v6343 = vadd.f32 %v6339, %v6321
    %v6344 = vadd.f32 %v6340, %v6326
    %v6345 = vadd.f32 %v6341, %v6331
    %v6346 = vadd.f32 %v6342, %v6336
    %v6347 = vadd.f32 %v6343, %v5039
    %v6348 = vadd.f32 %v6344, %v5040
    %v6349 = vadd.f32 %v6345, %v5041
    %v6350 = vadd.f32 %v6346, %v5042
    %v6351 = vmax.f32 %v6347, 0.0
    %v6352 = vmax.f32 %v6348, 0.0
    %v6353 = vmax.f32 %v6349, 0.0
    %v6354 = vmax.f32 %v6350, 0.0
    %6355 = vst.msk [vmem:[#allocation4] sm:$0xff] %vm4492, %v6351
    %6356 = vst.msk [vmem:[#allocation4 + $0x8] sm:$0xff] %vm4492, %v6352
    %6357 = vst.msk [vmem:[#allocation4 + $0x10] sm:$0xff] %vm4492, %v6353
    %6358 = vst.msk [vmem:[#allocation4 + $0x18] sm:$0xff] %vm4492, %v6354
    %v6359 = vld [vmem:[%s27] sm:$0xff]
    %v6360 = vld [vmem:[%s27 + $0x8] sm:$0xff]
    %v6361 = vld [vmem:[%s27 + $0x10] sm:$0xff]
    %v6362 = vld [vmem:[%s27 + $0x18] sm:$0xff]
    %v6363 = vld [vmem:[%s61] sm:$0xff]
    %v6364 = vld [vmem:[%s61 + $0x8] sm:$0xff]
    %v6365 = vld [vmem:[%s61 + $0x10] sm:$0xff]
    %v6366 = vld [vmem:[%s61 + $0x18] sm:$0xff]
    %6371 = vrot.lane.b32.xlu0 %v6359, 16
    %v6372 = vpop.permute.xlu0 %6371
    %6373 = vrot.lane.b32.xlu0 %v6360, 16
    %v6374 = vpop.permute.xlu0 %6373
    %6375 = vrot.lane.b32.xlu0 %v6361, 16
    %v6376 = vpop.permute.xlu0 %6375
    %6377 = vrot.lane.b32.xlu0 %v6362, 16
    %v6378 = vpop.permute.xlu0 %6377
    %v6383 = vsel %vm1736, %v6359, %v6372
    %v6384 = vsel %vm1736, %v6360, %v6374
    %v6385 = vsel %vm1736, %v6361, %v6376
    %v6386 = vsel %vm1736, %v6362, %v6378
    %v6387 = vmul.f32 %v6351, %v6383
    %v6388 = vmul.f32 %v6352, %v6384
    %v6389 = vmul.f32 %v6353, %v6385
    %v6390 = vmul.f32 %v6354, %v6386
    %v6391 = vsel %vm4492, %v6387, 0.0
    %v6392 = vsel %vm4492, %v6388, 0.0
    %v6393 = vadd.f32 %v6391, %v6392
    %v6394 = vsel %vm4492, %v6389, 0.0
    %v6395 = vadd.f32 %v6393, %v6394
    %v6396 = vsel %vm4492, %v6390, 0.0
    %v6397 = vadd.f32 %v6395, %v6396
    %v6398 = vrot.slane %v6397, 4
    %v6399 = vadd.f32 %v6397, %v6398
    %v6400 = vrot.slane %v6399, 2
    %v6401 = vadd.f32 %v6399, %v6400
    %v6402 = vrot.slane %v6401, 1
    %v6403 = vadd.f32 %v6401, %v6402
    %v6405 = vsel %vm4492, %v6403, 0
    %6407 = vmatprep.subr.mxu0 0.0
    %6408 = vmatpush1.msra.mxu0 %v6363
    %6409 = vmatprep.subr.mxu0 0.0
    %6410 = vmatpush1.msra.mxu0 %v6364
    %6411 = vmatprep.subr.mxu0 0.0
    %6412 = vmatpush1.msra.mxu0 %v6365
    %6413 = vmatprep.subr.mxu0 0.0
    %6414 = vmatpush1.msra.mxu0 %v6366
    %6415 = vmatprep.subr.mxu0 0.0
    %6416 = vmatpush1.msra.mxu0 0.0
    %6417 = vmatprep.subr.mxu0 0.0
    %6418 = vmatpush1.msra.mxu0 0.0
    %6419 = vmatprep.subr.mxu0 0.0
    %6420 = vmatpush1.msra.mxu0 0.0
    %6421 = vmatprep.subr.mxu0 0.0
    %6422 = vmatpush1.msra.mxu0 0.0
    %6423 = vmatprep.subr.mxu0 0.0
    %6424 = vmatpush1.msra.mxu0 0.0
    %6425 = vmatprep.subr.mxu0 0.0
    %6426 = vmatpush1.msra.mxu0 0.0
    %6427 = vmatprep.subr.mxu0 0.0
    %6428 = vmatpush1.msra.mxu0 0.0
    %6429 = vmatprep.subr.mxu0 0.0
    %6430 = vmatpush1.msra.mxu0 0.0
    %6431 = vmatprep.subr.mxu0 0.0
    %6432 = vmatpush1.msra.mxu0 0.0
    %6433 = vmatprep.subr.mxu0 0.0
    %6434 = vmatpush1.msra.mxu0 0.0
    %6435 = vmatprep.subr.mxu0 0.0
    %6436 = vmatpush1.msra.mxu0 0.0
    %6437 = vmatprep.subr.mxu0 0.0
    %6438 = vmatpush1.msra.mxu0 0.0
    %6439 = vmatprep.subr.mxu0 0.0
    %6440 = vmatpush1.msra.mxu0 0.0
    %6441 = vmatprep.subr.mxu0 0.0
    %6442 = vmatpush1.msra.mxu0 0.0
    %6443 = vmatprep.subr.mxu0 0.0
    %6444 = vmatpush1.msra.mxu0 0.0
    %6445 = vmatprep.subr.mxu0 0.0
    %6446 = vmatpush1.msra.mxu0 0.0
    %6447 = vmatprep.subr.mxu0 0.0
    %6448 = vmatpush1.msra.mxu0 0.0
    %6449 = vmatprep.subr.mxu0 0.0
    %6450 = vmatpush1.msra.mxu0 0.0
    %6451 = vmatprep.subr.mxu0 0.0
    %6452 = vmatpush1.msra.mxu0 0.0
    %6453 = vmatprep.subr.mxu0 0.0
    %6454 = vmatpush1.msra.mxu0 0.0
    %6455 = vmatprep.subr.mxu0 0.0
    %6456 = vmatpush1.msra.mxu0 0.0
    %6457 = vmatprep.subr.mxu0 0.0
    %6458 = vmatpush1.msra.mxu0 0.0
    %6459 = vmatprep.subr.mxu0 0.0
    %6460 = vmatpush1.msra.mxu0 0.0
    %6461 = vmatprep.subr.mxu0 0.0
    %6462 = vmatpush1.msra.mxu0 0.0
    %6463 = vmatprep.subr.mxu0 0.0
    %6464 = vmatpush1.msra.mxu0 0.0
    %6465 = vmatprep.subr.mxu0 0.0
    %6466 = vmatpush1.msra.mxu0 0.0
    %6467 = vmatprep.subr.mxu0 0.0
    %6468 = vmatpush1.msra.mxu0 0.0
    %6469 = vmatprep.subr.mxu0 0.0
    %6470 = vmatpush1.msra.mxu0 0.0
    %6471 = vmatprep.mubr.f32.mxu0 0.0
    %6472 = vmatmul.mubr.f32.gmra.mrb[0].mxu0 %v6405
    %v6473 = vpop.f32.mrb[0].mxu0
    %v6474 = vadd.f32 0.0, %v6473
    %v6475 = vpop.f32.mrb[0].mxu0
    %6476 = vdwg.mxu0
    %6477 = vst [vmem:[#allocation2] sm:$0x1] %v6474
    // Predicated region
    $region126: #{tpu_custom_call.1} parent=1 // pred_check
      _
    $region127: #{tpu_custom_call.1} parent=1 // pred_check_branch
      %6479 = sbr.rel (0) target = $region129
    $region128: #{tpu_custom_call.1} parent=1 // pred_region
      %s6481 = ssub.s32 16, 16
      %6482 = vsyncadd [#allocation3], %s6481
      %s6484 = sshll.u32 [#allocation2], 4
      %s6485 = int_to_ptr.vmem [resolvable:$true] %s6484
      %6487 = dma.vmem_to_hbm [thread:$0]  %s6485, 16, %s63, [#allocation3]
    $region129: #{tpu_custom_call.1} parent=1 // pred_fallthru
      _
    // Predicated region
    $region130: #{tpu_custom_call.1} parent=1 // pred_check
      _
    $region131: #{tpu_custom_call.1} parent=1 // pred_check_branch
      %6489 = sbr.rel (0) target = $region133
    $region132: #{tpu_custom_call.1} parent=1 // pred_region
      %s6491 = ssub.s32 512, 512
      %6492 = vsyncadd [#allocation5], %s6491
      %s6493 = sshll.u32 [#allocation4], 4
      %s6494 = int_to_ptr.vmem [resolvable:$true] %s6493
      %6499 = dma.vmem_to_hbm [thread:$0]  %s6494, 512, %s65, [#allocation5], 128, 128, 8
    $region133: #{tpu_custom_call.1} parent=1 // pred_fallthru
      _
    // Predicated region
    $region134: #{tpu_custom_call.1} parent=1 // pred_check
      _
    $region135: #{tpu_custom_call.1} parent=1 // pred_check_branch
      %6501 = sbr.rel (0) target = $region137
    $region136: #{tpu_custom_call.1} parent=1 // pred_region
      %6502 = dma.done [#allocation3], 16
    $region137: #{tpu_custom_call.1} parent=1 // pred_fallthru
      _
    // Predicated region
    $region138: #{tpu_custom_call.1} parent=1 // pred_check
      _
    $region139: #{tpu_custom_call.1} parent=1 // pred_check_branch
      %6504 = sbr.rel (0) target = $region141
    $region140: #{tpu_custom_call.1} parent=1 // pred_region
      %6505 = dma.done [#allocation5], 512
    $region141: #{tpu_custom_call.1} parent=1 // pred_fallthru
      _
    %6506 = vsyncpa [#allocation3], 1
    %6507 = vsyncpa [#allocation5], 1

</llo_original>
